<compile_context>
chip_gen: v7x
topology: tpu7x:2x2x1
jax: 0.10.0
libtpu: 0.0.40
codegen_flags: <defaults>
</compile_context>

<pallas_src>
import jax
import jax.numpy as jnp
from jax.experimental import pallas as pl
from jax.experimental.pallas import tpu as pltpu

NEG_SLOPE = 0.01  # nn.LeakyReLU default negative_slope


# ---------------------------------------------------------------------------
# Pallas kernels
# ---------------------------------------------------------------------------
def _stage_kernel(p_ref, wa_ref, ba_ref, wb_ref, bb_ref, o_ref):
    """Fused: patch-matmul (2x2/s2 conv) + bias + LeakyReLU + 1x1 conv + bias
    + LeakyReLU.  bf16 operands, f32 accumulate/epilogue."""
    a = jnp.dot(p_ref[...], wa_ref[...], preferred_element_type=jnp.float32)
    a = a + ba_ref[...]
    a = jnp.where(a >= 0.0, a, a * NEG_SLOPE).astype(jnp.bfloat16)

    o = jnp.dot(a, wb_ref[...], preferred_element_type=jnp.float32)
    o = o + bb_ref[...]
    o = jnp.where(o >= 0.0, o, o * NEG_SLOPE)
    o_ref[...] = o.astype(o_ref.dtype)


def _head_kernel(p_ref, wa_ref, ba_ref, wb_ref, bb_ref,
                 x_ref, w6x_ref, w6y_ref, b6_ref, o_ref):
    """Fused: conv5 (2x2/s2 + LeakyReLU + 1x1 + LeakyReLU), channel concat
    with x, and conv6 (1x1, no activation)."""
    # conv5a
    a = jnp.dot(p_ref[...], wa_ref[...], preferred_element_type=jnp.float32)
    a = a + ba_ref[...]
    a = jnp.where(a >= 0.0, a, a * NEG_SLOPE).astype(jnp.bfloat16)
    # conv5b
    y = jnp.dot(a, wb_ref[...], preferred_element_type=jnp.float32)
    y = y + bb_ref[...]
    y = jnp.where(y >= 0.0, y, y * NEG_SLOPE)
    y = y.astype(jnp.bfloat16).astype(jnp.float32)   # inter-layer bf16 rounding
    # conv6 on concat([x, y], channel=-1): the (6,1) weight is pre-split into
    # its x / y halves so no in-kernel concat is needed; the 3-channel
    # contraction is done as multiply + lane-reduce on the VPU.
    x = x_ref[...].astype(jnp.float32)
    o = (jnp.sum(x * w6x_ref[...], axis=-1, keepdims=True)
         + jnp.sum(y * w6y_ref[...], axis=-1, keepdims=True)
         + b6_ref[...])
    o_ref[...] = o.astype(o_ref.dtype)


# ---------------------------------------------------------------------------
# pallas_call wrappers
# ---------------------------------------------------------------------------
def _row_tile(P):
    # >= 2 grid blocks whenever the (8,128) tiling allows it, so both v7x
    # TensorCores get a block; otherwise one full-size block (min overhead).
    return P // 2 if (P >= 16 and (P // 2) % 8 == 0) else P


def fused_stage(patches, wa, ba, wb, bb):
    """patches: (P, K) bf16; wa: (K, Cm) bf16; ba: (1, Cm) f32;
    wb: (Cm, Co) bf16; bb: (1, Co) f32  ->  (P, Co) bf16."""
    P, K = patches.shape
    Cm = wa.shape[1]
    Co = wb.shape[1]
    tm = _row_tile(P)
    return pl.pallas_call(
        _stage_kernel,
        out_shape=jax.ShapeDtypeStruct((P, Co), jnp.bfloat16),
        grid_spec=pltpu.PrefetchScalarGridSpec(
            num_scalar_prefetch=0,
            grid=(P // tm,),
            in_specs=[
                pl.BlockSpec((tm, K), lambda i: (i, 0)),    # activation patches
                pl.BlockSpec((K, Cm), lambda i: (0, 0)),    # conv_a weights
                pl.BlockSpec((1, Cm), lambda i: (0, 0)),    # conv_a bias
                pl.BlockSpec((Cm, Co), lambda i: (0, 0)),   # conv_b weights
                pl.BlockSpec((1, Co), lambda i: (0, 0)),    # conv_b bias
            ],
            out_specs=pl.BlockSpec((tm, Co), lambda i: (i, 0)),
        ),
        compiler_params=pltpu.CompilerParams(
            dimension_semantics=("parallel",)),
    )(patches, wa, ba, wb, bb)


def fused_head(patches, wa, ba, wb, bb, x_flat, w6x, w6y, b6):
    """Stage 5 + concat + conv6.  Everything fits in one grid step."""
    P, K = patches.shape
    Cm = wa.shape[1]
    Co = wb.shape[1]
    Cx = x_flat.shape[1]
    return pl.pallas_call(
        _head_kernel,
        out_shape=jax.ShapeDtypeStruct((P, 1), jnp.float32),
        grid_spec=pltpu.PrefetchScalarGridSpec(
            num_scalar_prefetch=0,
            grid=(1,),
            in_specs=[
                pl.BlockSpec((P, K), lambda i: (0, 0)),
                pl.BlockSpec((K, Cm), lambda i: (0, 0)),
                pl.BlockSpec((1, Cm), lambda i: (0, 0)),
                pl.BlockSpec((Cm, Co), lambda i: (0, 0)),
                pl.BlockSpec((1, Co), lambda i: (0, 0)),
                pl.BlockSpec((P, Cx), lambda i: (0, 0)),
                pl.BlockSpec((1, Cx), lambda i: (0, 0)),
                pl.BlockSpec((1, Co), lambda i: (0, 0)),
                pl.BlockSpec((1, 1), lambda i: (0, 0)),
            ],
            out_specs=pl.BlockSpec((P, 1), lambda i: (0, 0)),
        ),
        compiler_params=pltpu.CompilerParams(
            dimension_semantics=("arbitrary",)),
    )(patches, wa, ba, wb, bb, x_flat, w6x, w6y, b6)


# ---------------------------------------------------------------------------
# Glue: space-to-depth for the 2x2 / stride-2 convs (tiny bf16 tensors)
# ---------------------------------------------------------------------------
def space_to_depth2(x_nhwc):
    """NHWC -> (N*Ho*Wo, 4*C) patch matrix; row order (n, ho, wo), channel
    order (kh, kw, c) matching the packed weights."""
    N, H, W, C = x_nhwc.shape
    Ho, Wo = H // 2, W // 2
    p = (x_nhwc.reshape(N, Ho, 2, Wo, 2, C)
         .transpose(0, 1, 3, 2, 4, 5)
         .reshape(N * Ho * Wo, 4 * C))
    return p, (N, Ho, Wo)


# ---------------------------------------------------------------------------
# Parameters (deterministic, PyTorch-default-style uniform init) + packing
# ---------------------------------------------------------------------------
_CONV_SPECS = [
    # (c_out, c_in, k)
    (64, 3, 2), (64, 64, 1),        # conv1
    (128, 64, 2), (128, 128, 1),    # conv2  (Dropout(0.3): identity at eval)
    (256, 128, 2), (256, 256, 1),   # conv3
    (512, 256, 2), (512, 512, 1),   # conv4  (Dropout(0.48): identity at eval)
    (32, 512, 2), (3, 32, 1),       # conv5
    (1, 6, 1),                      # conv6
]


def _init_conv(key, c_out, c_in, k):
    fan_in = c_in * k * k
    bound = 1.0 / (fan_in ** 0.5)
    kw_, kb = jax.random.split(key)
    w = jax.random.uniform(kw_, (c_out, c_in, k, k), jnp.float32, -bound, bound)
    b = jax.random.uniform(kb, (c_out,), jnp.float32, -bound, bound)
    return w, b


def make_params(key):
    keys = jax.random.split(key, len(_CONV_SPECS))
    return [_init_conv(k, *s) for k, s in zip(keys, _CONV_SPECS)]


def pack_params(raw):
    """Pre-pack PyTorch-layout conv weights ONCE into MXU-ready matrices:
    bf16 (kh*kw*cin, cout) weights and f32 (1, cout) bias rows."""
    def pack(w, b):
        c_out = w.shape[0]
        w_mat = jnp.transpose(w, (2, 3, 1, 0)).reshape(-1, c_out)
        return w_mat.astype(jnp.bfloat16), b.reshape(1, c_out).astype(jnp.float32)

    stages = []
    for s in range(5):
        wa, ba = pack(*raw[2 * s])
        wb, bb = pack(*raw[2 * s + 1])
        stages.append((wa, ba, wb, bb))

    w6, b6 = raw[10]
    w6_mat = jnp.transpose(w6, (2, 3, 1, 0)).reshape(6, 1)
    w6_q = w6_mat.astype(jnp.bfloat16).astype(jnp.float32)   # bf16-rounded, f32
    return {
        "stages": stages,
        "w6x": w6_q[:3, :].reshape(1, 3),   # multiplies the x half of concat
        "w6y": w6_q[3:, :].reshape(1, 3),   # multiplies the conv5 half
        "b6": b6.reshape(1, 1).astype(jnp.float32),
    }


# ---------------------------------------------------------------------------
# Forward pass (inputs / output in PyTorch NCHW convention)
# ---------------------------------------------------------------------------
def _backbone(packed, y_nhwc_bf16):
    """Stages 1..4 (conv1..conv4)."""
    y = y_nhwc_bf16
    for s in range(4):
        wa, ba, wb, bb = packed["stages"][s]
        p, (N, Ho, Wo) = space_to_depth2(y)
        y = fused_stage(p, wa, ba, wb, bb).reshape(N, Ho, Wo, -1)
        # TODO(synk): Dropout (conv2: p=0.3, conv4: p=0.48) is identity at
        # inference; training-mode dropout is not implemented.
    return y


def discriminator_forward(packed, x_nchw, y_nchw):
    """x: (B, 3, H/32, W/32), y: (B, 3, H, W)  ->  (B, 1, H/32, W/32)."""
    x = jnp.transpose(x_nchw, (0, 2, 3, 1)).astype(jnp.bfloat16)
    y = jnp.transpose(y_nchw, (0, 2, 3, 1)).astype(jnp.bfloat16)

    y = _backbone(packed, y)

    wa, ba, wb, bb = packed["stages"][4]
    p, (N, Ho, Wo) = space_to_depth2(y)
    x_flat = x.reshape(N * Ho * Wo, -1)
    out = fused_head(p, wa, ba, wb, bb, x_flat,
                     packed["w6x"], packed["w6y"], packed["b6"])
    out = out.reshape(N, Ho, Wo, 1)
    return jnp.transpose(out, (0, 3, 1, 2))


# ---------------------------------------------------------------------------
# Quantization-matched pure-JAX reference (lax.conv) for correctness check
# ---------------------------------------------------------------------------
def _ref_forward(raw, x_nchw, y_nchw):
    """Same math, same bf16 rounding points (weights + inter-layer
    activations), f32 accumulation.  Returns (output, conv4 activation)."""
    def q(v):
        return v.astype(jnp.bfloat16).astype(jnp.float32)

    def leaky(o):
        return jnp.where(o >= 0.0, o, o * NEG_SLOPE)

    def conv(v, w, b, stride):
        o = jax.lax.conv_general_dilated(
            v, q(w), window_strides=(stride, stride), padding="VALID",
            dimension_numbers=("NCHW", "OIHW", "NCHW"))
        return o + b.reshape(1, -1, 1, 1)

    x = q(x_nchw)
    y = q(y_nchw)
    y4 = None
    for s in range(5):
        w, b = raw[2 * s]
        y = q(leaky(conv(y, w, b, 2)))
        w, b = raw[2 * s + 1]
        y = q(leaky(conv(y, w, b, 1)))
        if s == 3:
            y4 = y
    cat = jnp.concatenate([x, y], axis=1)
    w, b = raw[10]
    return conv(cat, w, b, 1), y4


if __name__ == "__main__":
    key = jax.random.PRNGKey(0)
    kp, kx, ky = jax.random.split(key, 3)

    raw = make_params(kp)
    packed = pack_params(raw)

    B, H, W = 2, 64, 64
    y_in = jax.random.normal(ky, (B, 3, H, W), jnp.float32)            # image
    x_in = jax.random.normal(kx, (B, 3, H // 32, W // 32), jnp.float32)

    fwd = jax.jit(discriminator_forward)
    out = jax.block_until_ready(fwd(packed, x_in, y_in))
    assert out.shape == (B, 1, H // 32, W // 32), out.shape

    # Correctness: compare against the quantization-matched lax.conv reference,
    # both at the conv4 activation and at the final output.
    ref_out, ref_y4 = _ref_forward(raw, x_in, y_in)
    ref_out = jax.block_until_ready(ref_out)

    y4 = _backbone(packed, jnp.transpose(y_in, (0, 2, 3, 1)).astype(jnp.bfloat16))
    y4 = jnp.transpose(y4.astype(jnp.float32), (0, 3, 1, 2))

    def check(a, b, name, tol=2e-2):
        a = jnp.asarray(a, jnp.float32)
        b = jnp.asarray(b, jnp.float32)
        scale = float(jnp.maximum(jnp.max(jnp.abs(b)), 1e-6))
        err = float(jnp.max(jnp.abs(a - b)))
        assert err <= tol * scale, (name, err, scale)

    check(y4, ref_y4, "conv4 activation")
    check(out, ref_out, "final output")

    print("KERNEL_OK")
</pallas_src>

<mosaic_0001>
module attributes {stable_mosaic.version = 11 : i64} {
  func.func @_stage_kernel(%arg0: i32, %arg1: memref<1024x12xbf16, #tpu.memory_space<vmem>>, %arg2: memref<12x64xbf16, #tpu.memory_space<vmem>>, %arg3: memref<1x64xf32, #tpu.memory_space<vmem>>, %arg4: memref<64x64xbf16, #tpu.memory_space<vmem>>, %arg5: memref<1x64xf32, #tpu.memory_space<vmem>>, %arg6: memref<1024x64xbf16, #tpu.memory_space<vmem>>) attributes {dimension_semantics = [#tpu.dimension_semantics<parallel>], iteration_bounds = array<i64: 2>, scalar_prefetch = 0 : i64, scratch_operands = 0 : i64, tpu.core_type = #tpu.core_type<tc>, window_params = [{transform_indices = @transform_0, window_bounds = array<i64: 1024, 12>}, {pipeline_mode = #tpu.pipeline_mode<synchronous>, transform_indices = @transform_1, window_bounds = array<i64: 12, 64>}, {pipeline_mode = #tpu.pipeline_mode<synchronous>, transform_indices = @transform_2, window_bounds = array<i64: 1, 64>}, {pipeline_mode = #tpu.pipeline_mode<synchronous>, transform_indices = @transform_3, window_bounds = array<i64: 64, 64>}, {pipeline_mode = #tpu.pipeline_mode<synchronous>, transform_indices = @transform_4, window_bounds = array<i64: 1, 64>}, {transform_indices = @transform_5, window_bounds = array<i64: 1024, 64>}]} {
    %c0 = arith.constant 0 : index
    %c0_0 = arith.constant 0 : index
    %0 = vector.load %arg1[%c0, %c0_0] : memref<1024x12xbf16, #tpu.memory_space<vmem>>, vector<1024x12xbf16>
    %c0_1 = arith.constant 0 : index
    %c0_2 = arith.constant 0 : index
    %1 = vector.load %arg2[%c0_1, %c0_2] : memref<12x64xbf16, #tpu.memory_space<vmem>>, vector<12x64xbf16>
    %cst = arith.constant dense<0.000000e+00> : vector<1024x64xf32>
    %2 = tpu.matmul %0, %1, %cst {dimension_numbers = #tpu.dot_dimension_numbers<[1], [0], [0], [1], [0, 0, 1, 1], [], []>} : vector<1024x12xbf16>, vector<12x64xbf16>, vector<1024x64xf32> -> vector<1024x64xf32>
    %c0_3 = arith.constant 0 : index
    %c0_4 = arith.constant 0 : index
    %3 = vector.load %arg3[%c0_3, %c0_4] : memref<1x64xf32, #tpu.memory_space<vmem>>, vector<1x64xf32>
    %4 = vector.broadcast %3 : vector<1x64xf32> to vector<1024x64xf32>
    %5 = arith.addf %2, %4 : vector<1024x64xf32>
    %cst_5 = arith.constant 0.000000e+00 : f32
    %6 = vector.broadcast %cst_5 : f32 to vector<1024x64xf32>
    %7 = arith.cmpf oge, %5, %6 : vector<1024x64xf32>
    %cst_6 = arith.constant 0.00999999977 : f32
    %8 = vector.broadcast %cst_6 : f32 to vector<1024x64xf32>
    %9 = arith.mulf %5, %8 : vector<1024x64xf32>
    %10 = arith.select %7, %5, %9 : vector<1024x64xi1>, vector<1024x64xf32>
    %11 = arith.truncf %10 : vector<1024x64xf32> to vector<1024x64xbf16>
    %c0_7 = arith.constant 0 : index
    %c0_8 = arith.constant 0 : index
    %12 = vector.load %arg4[%c0_7, %c0_8] : memref<64x64xbf16, #tpu.memory_space<vmem>>, vector<64x64xbf16>
    %cst_9 = arith.constant dense<0.000000e+00> : vector<1024x64xf32>
    %13 = tpu.matmul %11, %12, %cst_9 {dimension_numbers = #tpu.dot_dimension_numbers<[1], [0], [0], [1], [0, 0, 1, 1], [], []>} : vector<1024x64xbf16>, vector<64x64xbf16>, vector<1024x64xf32> -> vector<1024x64xf32>
    %c0_10 = arith.constant 0 : index
    %c0_11 = arith.constant 0 : index
    %14 = vector.load %arg5[%c0_10, %c0_11] : memref<1x64xf32, #tpu.memory_space<vmem>>, vector<1x64xf32>
    %15 = vector.broadcast %14 : vector<1x64xf32> to vector<1024x64xf32>
    %16 = arith.addf %13, %15 : vector<1024x64xf32>
    %cst_12 = arith.constant 0.000000e+00 : f32
    %17 = vector.broadcast %cst_12 : f32 to vector<1024x64xf32>
    %18 = arith.cmpf oge, %16, %17 : vector<1024x64xf32>
    %cst_13 = arith.constant 0.00999999977 : f32
    %19 = vector.broadcast %cst_13 : f32 to vector<1024x64xf32>
    %20 = arith.mulf %16, %19 : vector<1024x64xf32>
    %21 = arith.select %18, %16, %20 : vector<1024x64xi1>, vector<1024x64xf32>
    %22 = arith.truncf %21 : vector<1024x64xf32> to vector<1024x64xbf16>
    %c0_14 = arith.constant 0 : index
    %c0_15 = arith.constant 0 : index
    %23 = vector.load %arg6[%c0_14, %c0_15] : memref<1024x64xbf16, #tpu.memory_space<vmem>>, vector<1024x64xbf16>
    tpu.vector_store %arg6[%c0_14, %c0_15], %22 {strides = array<i32>} : memref<1024x64xbf16, #tpu.memory_space<vmem>>, vector<1024x64xbf16>,
    return
  }
  func.func @transform_0(%arg0: i32) -> (i32, i32) {
    %c0_i32 = arith.constant 0 : i32
    %c0_i32_0 = arith.constant 0 : i32
    return %arg0, %c0_i32 : i32, i32
  }
  func.func @transform_1(%arg0: i32) -> (i32, i32) {
    %c0_i32 = arith.constant 0 : i32
    %c0_i32_0 = arith.constant 0 : i32
    %c0_i32_1 = arith.constant 0 : i32
    return %c0_i32, %c0_i32_0 : i32, i32
  }
  func.func @transform_2(%arg0: i32) -> (i32, i32) {
    %c0_i32 = arith.constant 0 : i32
    %c0_i32_0 = arith.constant 0 : i32
    %c0_i32_1 = arith.constant 0 : i32
    return %c0_i32, %c0_i32_0 : i32, i32
  }
  func.func @transform_3(%arg0: i32) -> (i32, i32) {
    %c0_i32 = arith.constant 0 : i32
    %c0_i32_0 = arith.constant 0 : i32
    %c0_i32_1 = arith.constant 0 : i32
    return %c0_i32, %c0_i32_0 : i32, i32
  }
  func.func @transform_4(%arg0: i32) -> (i32, i32) {
    %c0_i32 = arith.constant 0 : i32
    %c0_i32_0 = arith.constant 0 : i32
    %c0_i32_1 = arith.constant 0 : i32
    return %c0_i32, %c0_i32_0 : i32, i32
  }
  func.func @transform_5(%arg0: i32) -> (i32, i32) {
    %c0_i32 = arith.constant 0 : i32
    %c0_i32_0 = arith.constant 0 : i32
    return %arg0, %c0_i32 : i32, i32
  }
}

module attributes {stable_mosaic.version = 11 : i64} {
  func.func @_stage_kernel(%arg0: i32, %arg1: memref<256x256xbf16, #tpu.memory_space<vmem>>, %arg2: memref<256x128xbf16, #tpu.memory_space<vmem>>, %arg3: memref<1x128xf32, #tpu.memory_space<vmem>>, %arg4: memref<128x128xbf16, #tpu.memory_space<vmem>>, %arg5: memref<1x128xf32, #tpu.memory_space<vmem>>, %arg6: memref<256x128xbf16, #tpu.memory_space<vmem>>) attributes {dimension_semantics = [#tpu.dimension_semantics<parallel>], iteration_bounds = array<i64: 2>, scalar_prefetch = 0 : i64, scratch_operands = 0 : i64, tpu.core_type = #tpu.core_type<tc>, window_params = [{transform_indices = @transform_0, window_bounds = array<i64: 256, 256>}, {pipeline_mode = #tpu.pipeline_mode<synchronous>, transform_indices = @transform_1, window_bounds = array<i64: 256, 128>}, {pipeline_mode = #tpu.pipeline_mode<synchronous>, transform_indices = @transform_2, window_bounds = array<i64: 1, 128>}, {pipeline_mode = #tpu.pipeline_mode<synchronous>, transform_indices = @transform_3, window_bounds = array<i64: 128, 128>}, {pipeline_mode = #tpu.pipeline_mode<synchronous>, transform_indices = @transform_4, window_bounds = array<i64: 1, 128>}, {transform_indices = @transform_5, window_bounds = array<i64: 256, 128>}]} {
    %c0 = arith.constant 0 : index
    %c0_0 = arith.constant 0 : index
    %0 = vector.load %arg1[%c0, %c0_0] : memref<256x256xbf16, #tpu.memory_space<vmem>>, vector<256x256xbf16>
    %c0_1 = arith.constant 0 : index
    %c0_2 = arith.constant 0 : index
    %1 = vector.load %arg2[%c0_1, %c0_2] : memref<256x128xbf16, #tpu.memory_space<vmem>>, vector<256x128xbf16>
    %cst = arith.constant dense<0.000000e+00> : vector<256x128xf32>
    %2 = tpu.matmul %0, %1, %cst {dimension_numbers = #tpu.dot_dimension_numbers<[1], [0], [0], [1], [0, 0, 1, 1], [], []>} : vector<256x256xbf16>, vector<256x128xbf16>, vector<256x128xf32> -> vector<256x128xf32>
    %c0_3 = arith.constant 0 : index
    %c0_4 = arith.constant 0 : index
    %3 = vector.load %arg3[%c0_3, %c0_4] : memref<1x128xf32, #tpu.memory_space<vmem>>, vector<1x128xf32>
    %4 = vector.broadcast %3 : vector<1x128xf32> to vector<256x128xf32>
    %5 = arith.addf %2, %4 : vector<256x128xf32>
    %cst_5 = arith.constant 0.000000e+00 : f32
    %6 = vector.broadcast %cst_5 : f32 to vector<256x128xf32>
    %7 = arith.cmpf oge, %5, %6 : vector<256x128xf32>
    %cst_6 = arith.constant 0.00999999977 : f32
    %8 = vector.broadcast %cst_6 : f32 to vector<256x128xf32>
    %9 = arith.mulf %5, %8 : vector<256x128xf32>
    %10 = arith.select %7, %5, %9 : vector<256x128xi1>, vector<256x128xf32>
    %11 = arith.truncf %10 : vector<256x128xf32> to vector<256x128xbf16>
    %c0_7 = arith.constant 0 : index
    %c0_8 = arith.constant 0 : index
    %12 = vector.load %arg4[%c0_7, %c0_8] : memref<128x128xbf16, #tpu.memory_space<vmem>>, vector<128x128xbf16>
    %cst_9 = arith.constant dense<0.000000e+00> : vector<256x128xf32>
    %13 = tpu.matmul %11, %12, %cst_9 {dimension_numbers = #tpu.dot_dimension_numbers<[1], [0], [0], [1], [0, 0, 1, 1], [], []>} : vector<256x128xbf16>, vector<128x128xbf16>, vector<256x128xf32> -> vector<256x128xf32>
    %c0_10 = arith.constant 0 : index
    %c0_11 = arith.constant 0 : index
    %14 = vector.load %arg5[%c0_10, %c0_11] : memref<1x128xf32, #tpu.memory_space<vmem>>, vector<1x128xf32>
    %15 = vector.broadcast %14 : vector<1x128xf32> to vector<256x128xf32>
    %16 = arith.addf %13, %15 : vector<256x128xf32>
    %cst_12 = arith.constant 0.000000e+00 : f32
    %17 = vector.broadcast %cst_12 : f32 to vector<256x128xf32>
    %18 = arith.cmpf oge, %16, %17 : vector<256x128xf32>
    %cst_13 = arith.constant 0.00999999977 : f32
    %19 = vector.broadcast %cst_13 : f32 to vector<256x128xf32>
    %20 = arith.mulf %16, %19 : vector<256x128xf32>
    %21 = arith.select %18, %16, %20 : vector<256x128xi1>, vector<256x128xf32>
    %22 = arith.truncf %21 : vector<256x128xf32> to vector<256x128xbf16>
    %c0_14 = arith.constant 0 : index
    %c0_15 = arith.constant 0 : index
    %23 = vector.load %arg6[%c0_14, %c0_15] : memref<256x128xbf16, #tpu.memory_space<vmem>>, vector<256x128xbf16>
    tpu.vector_store %arg6[%c0_14, %c0_15], %22 {strides = array<i32>} : memref<256x128xbf16, #tpu.memory_space<vmem>>, vector<256x128xbf16>,
    return
  }
  func.func @transform_0(%arg0: i32) -> (i32, i32) {
    %c0_i32 = arith.constant 0 : i32
    %c0_i32_0 = arith.constant 0 : i32
    return %arg0, %c0_i32 : i32, i32
  }
  func.func @transform_1(%arg0: i32) -> (i32, i32) {
    %c0_i32 = arith.constant 0 : i32
    %c0_i32_0 = arith.constant 0 : i32
    %c0_i32_1 = arith.constant 0 : i32
    return %c0_i32, %c0_i32_0 : i32, i32
  }
  func.func @transform_2(%arg0: i32) -> (i32, i32) {
    %c0_i32 = arith.constant 0 : i32
    %c0_i32_0 = arith.constant 0 : i32
    %c0_i32_1 = arith.constant 0 : i32
    return %c0_i32, %c0_i32_0 : i32, i32
  }
  func.func @transform_3(%arg0: i32) -> (i32, i32) {
    %c0_i32 = arith.constant 0 : i32
    %c0_i32_0 = arith.constant 0 : i32
    %c0_i32_1 = arith.constant 0 : i32
    return %c0_i32, %c0_i32_0 : i32, i32
  }
  func.func @transform_4(%arg0: i32) -> (i32, i32) {
    %c0_i32 = arith.constant 0 : i32
    %c0_i32_0 = arith.constant 0 : i32
    %c0_i32_1 = arith.constant 0 : i32
    return %c0_i32, %c0_i32_0 : i32, i32
  }
  func.func @transform_5(%arg0: i32) -> (i32, i32) {
    %c0_i32 = arith.constant 0 : i32
    %c0_i32_0 = arith.constant 0 : i32
    return %arg0, %c0_i32 : i32, i32
  }
}

module attributes {stable_mosaic.version = 11 : i64} {
  func.func @_stage_kernel(%arg0: i32, %arg1: memref<64x512xbf16, #tpu.memory_space<vmem>>, %arg2: memref<512x256xbf16, #tpu.memory_space<vmem>>, %arg3: memref<1x256xf32, #tpu.memory_space<vmem>>, %arg4: memref<256x256xbf16, #tpu.memory_space<vmem>>, %arg5: memref<1x256xf32, #tpu.memory_space<vmem>>, %arg6: memref<64x256xbf16, #tpu.memory_space<vmem>>) attributes {dimension_semantics = [#tpu.dimension_semantics<parallel>], iteration_bounds = array<i64: 2>, scalar_prefetch = 0 : i64, scratch_operands = 0 : i64, tpu.core_type = #tpu.core_type<tc>, window_params = [{transform_indices = @transform_0, window_bounds = array<i64: 64, 512>}, {pipeline_mode = #tpu.pipeline_mode<synchronous>, transform_indices = @transform_1, window_bounds = array<i64: 512, 256>}, {pipeline_mode = #tpu.pipeline_mode<synchronous>, transform_indices = @transform_2, window_bounds = array<i64: 1, 256>}, {pipeline_mode = #tpu.pipeline_mode<synchronous>, transform_indices = @transform_3, window_bounds = array<i64: 256, 256>}, {pipeline_mode = #tpu.pipeline_mode<synchronous>, transform_indices = @transform_4, window_bounds = array<i64: 1, 256>}, {transform_indices = @transform_5, window_bounds = array<i64: 64, 256>}]} {
    %c0 = arith.constant 0 : index
    %c0_0 = arith.constant 0 : index
    %0 = vector.load %arg1[%c0, %c0_0] : memref<64x512xbf16, #tpu.memory_space<vmem>>, vector<64x512xbf16>
    %c0_1 = arith.constant 0 : index
    %c0_2 = arith.constant 0 : index
    %1 = vector.load %arg2[%c0_1, %c0_2] : memref<512x256xbf16, #tpu.memory_space<vmem>>, vector<512x256xbf16>
    %cst = arith.constant dense<0.000000e+00> : vector<64x256xf32>
    %2 = tpu.matmul %0, %1, %cst {dimension_numbers = #tpu.dot_dimension_numbers<[1], [0], [0], [1], [0, 0, 1, 1], [], []>} : vector<64x512xbf16>, vector<512x256xbf16>, vector<64x256xf32> -> vector<64x256xf32>
    %c0_3 = arith.constant 0 : index
    %c0_4 = arith.constant 0 : index
    %3 = vector.load %arg3[%c0_3, %c0_4] : memref<1x256xf32, #tpu.memory_space<vmem>>, vector<1x256xf32>
    %4 = vector.broadcast %3 : vector<1x256xf32> to vector<64x256xf32>
    %5 = arith.addf %2, %4 : vector<64x256xf32>
    %cst_5 = arith.constant 0.000000e+00 : f32
    %6 = vector.broadcast %cst_5 : f32 to vector<64x256xf32>
    %7 = arith.cmpf oge, %5, %6 : vector<64x256xf32>
    %cst_6 = arith.constant 0.00999999977 : f32
    %8 = vector.broadcast %cst_6 : f32 to vector<64x256xf32>
    %9 = arith.mulf %5, %8 : vector<64x256xf32>
    %10 = arith.select %7, %5, %9 : vector<64x256xi1>, vector<64x256xf32>
    %11 = arith.truncf %10 : vector<64x256xf32> to vector<64x256xbf16>
    %c0_7 = arith.constant 0 : index
    %c0_8 = arith.constant 0 : index
    %12 = vector.load %arg4[%c0_7, %c0_8] : memref<256x256xbf16, #tpu.memory_space<vmem>>, vector<256x256xbf16>
    %cst_9 = arith.constant dense<0.000000e+00> : vector<64x256xf32>
    %13 = tpu.matmul %11, %12, %cst_9 {dimension_numbers = #tpu.dot_dimension_numbers<[1], [0], [0], [1], [0, 0, 1, 1], [], []>} : vector<64x256xbf16>, vector<256x256xbf16>, vector<64x256xf32> -> vector<64x256xf32>
    %c0_10 = arith.constant 0 : index
    %c0_11 = arith.constant 0 : index
    %14 = vector.load %arg5[%c0_10, %c0_11] : memref<1x256xf32, #tpu.memory_space<vmem>>, vector<1x256xf32>
    %15 = vector.broadcast %14 : vector<1x256xf32> to vector<64x256xf32>
    %16 = arith.addf %13, %15 : vector<64x256xf32>
    %cst_12 = arith.constant 0.000000e+00 : f32
    %17 = vector.broadcast %cst_12 : f32 to vector<64x256xf32>
    %18 = arith.cmpf oge, %16, %17 : vector<64x256xf32>
    %cst_13 = arith.constant 0.00999999977 : f32
    %19 = vector.broadcast %cst_13 : f32 to vector<64x256xf32>
    %20 = arith.mulf %16, %19 : vector<64x256xf32>
    %21 = arith.select %18, %16, %20 : vector<64x256xi1>, vector<64x256xf32>
    %22 = arith.truncf %21 : vector<64x256xf32> to vector<64x256xbf16>
    %c0_14 = arith.constant 0 : index
    %c0_15 = arith.constant 0 : index
    %23 = vector.load %arg6[%c0_14, %c0_15] : memref<64x256xbf16, #tpu.memory_space<vmem>>, vector<64x256xbf16>
    tpu.vector_store %arg6[%c0_14, %c0_15], %22 {strides = array<i32>} : memref<64x256xbf16, #tpu.memory_space<vmem>>, vector<64x256xbf16>,
    return
  }
  func.func @transform_0(%arg0: i32) -> (i32, i32) {
    %c0_i32 = arith.constant 0 : i32
    %c0_i32_0 = arith.constant 0 : i32
    return %arg0, %c0_i32 : i32, i32
  }
  func.func @transform_1(%arg0: i32) -> (i32, i32) {
    %c0_i32 = arith.constant 0 : i32
    %c0_i32_0 = arith.constant 0 : i32
    %c0_i32_1 = arith.constant 0 : i32
    return %c0_i32, %c0_i32_0 : i32, i32
  }
  func.func @transform_2(%arg0: i32) -> (i32, i32) {
    %c0_i32 = arith.constant 0 : i32
    %c0_i32_0 = arith.constant 0 : i32
    %c0_i32_1 = arith.constant 0 : i32
    return %c0_i32, %c0_i32_0 : i32, i32
  }
  func.func @transform_3(%arg0: i32) -> (i32, i32) {
    %c0_i32 = arith.constant 0 : i32
    %c0_i32_0 = arith.constant 0 : i32
    %c0_i32_1 = arith.constant 0 : i32
    return %c0_i32, %c0_i32_0 : i32, i32
  }
  func.func @transform_4(%arg0: i32) -> (i32, i32) {
    %c0_i32 = arith.constant 0 : i32
    %c0_i32_0 = arith.constant 0 : i32
    %c0_i32_1 = arith.constant 0 : i32
    return %c0_i32, %c0_i32_0 : i32, i32
  }
  func.func @transform_5(%arg0: i32) -> (i32, i32) {
    %c0_i32 = arith.constant 0 : i32
    %c0_i32_0 = arith.constant 0 : i32
    return %arg0, %c0_i32 : i32, i32
  }
}

module attributes {stable_mosaic.version = 11 : i64} {
  func.func @_stage_kernel(%arg0: i32, %arg1: memref<16x1024xbf16, #tpu.memory_space<vmem>>, %arg2: memref<1024x512xbf16, #tpu.memory_space<vmem>>, %arg3: memref<1x512xf32, #tpu.memory_space<vmem>>, %arg4: memref<512x512xbf16, #tpu.memory_space<vmem>>, %arg5: memref<1x512xf32, #tpu.memory_space<vmem>>, %arg6: memref<16x512xbf16, #tpu.memory_space<vmem>>) attributes {dimension_semantics = [#tpu.dimension_semantics<parallel>], iteration_bounds = array<i64: 2>, scalar_prefetch = 0 : i64, scratch_operands = 0 : i64, tpu.core_type = #tpu.core_type<tc>, window_params = [{transform_indices = @transform_0, window_bounds = array<i64: 16, 1024>}, {pipeline_mode = #tpu.pipeline_mode<synchronous>, transform_indices = @transform_1, window_bounds = array<i64: 1024, 512>}, {pipeline_mode = #tpu.pipeline_mode<synchronous>, transform_indices = @transform_2, window_bounds = array<i64: 1, 512>}, {pipeline_mode = #tpu.pipeline_mode<synchronous>, transform_indices = @transform_3, window_bounds = array<i64: 512, 512>}, {pipeline_mode = #tpu.pipeline_mode<synchronous>, transform_indices = @transform_4, window_bounds = array<i64: 1, 512>}, {transform_indices = @transform_5, window_bounds = array<i64: 16, 512>}]} {
    %c0 = arith.constant 0 : index
    %c0_0 = arith.constant 0 : index
    %0 = vector.load %arg1[%c0, %c0_0] : memref<16x1024xbf16, #tpu.memory_space<vmem>>, vector<16x1024xbf16>
    %c0_1 = arith.constant 0 : index
    %c0_2 = arith.constant 0 : index
    %1 = vector.load %arg2[%c0_1, %c0_2] : memref<1024x512xbf16, #tpu.memory_space<vmem>>, vector<1024x512xbf16>
    %cst = arith.constant dense<0.000000e+00> : vector<16x512xf32>
    %2 = tpu.matmul %0, %1, %cst {dimension_numbers = #tpu.dot_dimension_numbers<[1], [0], [0], [1], [0, 0, 1, 1], [], []>} : vector<16x1024xbf16>, vector<1024x512xbf16>, vector<16x512xf32> -> vector<16x512xf32>
    %c0_3 = arith.constant 0 : index
    %c0_4 = arith.constant 0 : index
    %3 = vector.load %arg3[%c0_3, %c0_4] : memref<1x512xf32, #tpu.memory_space<vmem>>, vector<1x512xf32>
    %4 = vector.broadcast %3 : vector<1x512xf32> to vector<16x512xf32>
    %5 = arith.addf %2, %4 : vector<16x512xf32>
    %cst_5 = arith.constant 0.000000e+00 : f32
    %6 = vector.broadcast %cst_5 : f32 to vector<16x512xf32>
    %7 = arith.cmpf oge, %5, %6 : vector<16x512xf32>
    %cst_6 = arith.constant 0.00999999977 : f32
    %8 = vector.broadcast %cst_6 : f32 to vector<16x512xf32>
    %9 = arith.mulf %5, %8 : vector<16x512xf32>
    %10 = arith.select %7, %5, %9 : vector<16x512xi1>, vector<16x512xf32>
    %11 = arith.truncf %10 : vector<16x512xf32> to vector<16x512xbf16>
    %c0_7 = arith.constant 0 : index
    %c0_8 = arith.constant 0 : index
    %12 = vector.load %arg4[%c0_7, %c0_8] : memref<512x512xbf16, #tpu.memory_space<vmem>>, vector<512x512xbf16>
    %cst_9 = arith.constant dense<0.000000e+00> : vector<16x512xf32>
    %13 = tpu.matmul %11, %12, %cst_9 {dimension_numbers = #tpu.dot_dimension_numbers<[1], [0], [0], [1], [0, 0, 1, 1], [], []>} : vector<16x512xbf16>, vector<512x512xbf16>, vector<16x512xf32> -> vector<16x512xf32>
    %c0_10 = arith.constant 0 : index
    %c0_11 = arith.constant 0 : index
    %14 = vector.load %arg5[%c0_10, %c0_11] : memref<1x512xf32, #tpu.memory_space<vmem>>, vector<1x512xf32>
    %15 = vector.broadcast %14 : vector<1x512xf32> to vector<16x512xf32>
    %16 = arith.addf %13, %15 : vector<16x512xf32>
    %cst_12 = arith.constant 0.000000e+00 : f32
    %17 = vector.broadcast %cst_12 : f32 to vector<16x512xf32>
    %18 = arith.cmpf oge, %16, %17 : vector<16x512xf32>
    %cst_13 = arith.constant 0.00999999977 : f32
    %19 = vector.broadcast %cst_13 : f32 to vector<16x512xf32>
    %20 = arith.mulf %16, %19 : vector<16x512xf32>
    %21 = arith.select %18, %16, %20 : vector<16x512xi1>, vector<16x512xf32>
    %22 = arith.truncf %21 : vector<16x512xf32> to vector<16x512xbf16>
    %c0_14 = arith.constant 0 : index
    %c0_15 = arith.constant 0 : index
    %23 = vector.load %arg6[%c0_14, %c0_15] : memref<16x512xbf16, #tpu.memory_space<vmem>>, vector<16x512xbf16>
    tpu.vector_store %arg6[%c0_14, %c0_15], %22 {strides = array<i32>} : memref<16x512xbf16, #tpu.memory_space<vmem>>, vector<16x512xbf16>,
    return
  }
  func.func @transform_0(%arg0: i32) -> (i32, i32) {
    %c0_i32 = arith.constant 0 : i32
    %c0_i32_0 = arith.constant 0 : i32
    return %arg0, %c0_i32 : i32, i32
  }
  func.func @transform_1(%arg0: i32) -> (i32, i32) {
    %c0_i32 = arith.constant 0 : i32
    %c0_i32_0 = arith.constant 0 : i32
    %c0_i32_1 = arith.constant 0 : i32
    return %c0_i32, %c0_i32_0 : i32, i32
  }
  func.func @transform_2(%arg0: i32) -> (i32, i32) {
    %c0_i32 = arith.constant 0 : i32
    %c0_i32_0 = arith.constant 0 : i32
    %c0_i32_1 = arith.constant 0 : i32
    return %c0_i32, %c0_i32_0 : i32, i32
  }
  func.func @transform_3(%arg0: i32) -> (i32, i32) {
    %c0_i32 = arith.constant 0 : i32
    %c0_i32_0 = arith.constant 0 : i32
    %c0_i32_1 = arith.constant 0 : i32
    return %c0_i32, %c0_i32_0 : i32, i32
  }
  func.func @transform_4(%arg0: i32) -> (i32, i32) {
    %c0_i32 = arith.constant 0 : i32
    %c0_i32_0 = arith.constant 0 : i32
    %c0_i32_1 = arith.constant 0 : i32
    return %c0_i32, %c0_i32_0 : i32, i32
  }
  func.func @transform_5(%arg0: i32) -> (i32, i32) {
    %c0_i32 = arith.constant 0 : i32
    %c0_i32_0 = arith.constant 0 : i32
    return %arg0, %c0_i32 : i32, i32
  }
}

module attributes {stable_mosaic.version = 11 : i64} {
  func.func @_head_kernel(%arg0: i32, %arg1: memref<8x2048xbf16, #tpu.memory_space<vmem>>, %arg2: memref<2048x32xbf16, #tpu.memory_space<vmem>>, %arg3: memref<1x32xf32, #tpu.memory_space<vmem>>, %arg4: memref<32x3xbf16, #tpu.memory_space<vmem>>, %arg5: memref<1x3xf32, #tpu.memory_space<vmem>>, %arg6: memref<8x3xbf16, #tpu.memory_space<vmem>>, %arg7: memref<1x3xf32, #tpu.memory_space<vmem>>, %arg8: memref<1x3xf32, #tpu.memory_space<vmem>>, %arg9: memref<1x1xf32, #tpu.memory_space<vmem>>, %arg10: memref<8x1xf32, #tpu.memory_space<vmem>>) attributes {dimension_semantics = [#tpu.dimension_semantics<arbitrary>], iteration_bounds = array<i64: 1>, scalar_prefetch = 0 : i64, scratch_operands = 0 : i64, tpu.core_type = #tpu.core_type<tc>, window_params = [{pipeline_mode = #tpu.pipeline_mode<synchronous>, transform_indices = @transform_0, window_bounds = array<i64: 8, 2048>}, {pipeline_mode = #tpu.pipeline_mode<synchronous>, transform_indices = @transform_1, window_bounds = array<i64: 2048, 32>}, {pipeline_mode = #tpu.pipeline_mode<synchronous>, transform_indices = @transform_2, window_bounds = array<i64: 1, 32>}, {pipeline_mode = #tpu.pipeline_mode<synchronous>, transform_indices = @transform_3, window_bounds = array<i64: 32, 3>}, {pipeline_mode = #tpu.pipeline_mode<synchronous>, transform_indices = @transform_4, window_bounds = array<i64: 1, 3>}, {pipeline_mode = #tpu.pipeline_mode<synchronous>, transform_indices = @transform_5, window_bounds = array<i64: 8, 3>}, {pipeline_mode = #tpu.pipeline_mode<synchronous>, transform_indices = @transform_6, window_bounds = array<i64: 1, 3>}, {pipeline_mode = #tpu.pipeline_mode<synchronous>, transform_indices = @transform_7, window_bounds = array<i64: 1, 3>}, {pipeline_mode = #tpu.pipeline_mode<synchronous>, transform_indices = @transform_8, window_bounds = array<i64: 1, 1>}, {pipeline_mode = #tpu.pipeline_mode<synchronous>, transform_indices = @transform_9, window_bounds = array<i64: 8, 1>}]} {
    %c0 = arith.constant 0 : index
    %c0_0 = arith.constant 0 : index
    %0 = vector.load %arg1[%c0, %c0_0] : memref<8x2048xbf16, #tpu.memory_space<vmem>>, vector<8x2048xbf16>
    %c0_1 = arith.constant 0 : index
    %c0_2 = arith.constant 0 : index
    %1 = vector.load %arg2[%c0_1, %c0_2] : memref<2048x32xbf16, #tpu.memory_space<vmem>>, vector<2048x32xbf16>
    %cst = arith.constant dense<0.000000e+00> : vector<8x32xf32>
    %2 = tpu.matmul %0, %1, %cst {dimension_numbers = #tpu.dot_dimension_numbers<[1], [0], [0], [1], [0, 0, 1, 1], [], []>} : vector<8x2048xbf16>, vector<2048x32xbf16>, vector<8x32xf32> -> vector<8x32xf32>
    %c0_3 = arith.constant 0 : index
    %c0_4 = arith.constant 0 : index
    %3 = vector.load %arg3[%c0_3, %c0_4] : memref<1x32xf32, #tpu.memory_space<vmem>>, vector<1x32xf32>
    %4 = vector.broadcast %3 : vector<1x32xf32> to vector<8x32xf32>
    %5 = arith.addf %2, %4 : vector<8x32xf32>
    %cst_5 = arith.constant 0.000000e+00 : f32
    %6 = vector.broadcast %cst_5 : f32 to vector<8x32xf32>
    %7 = arith.cmpf oge, %5, %6 : vector<8x32xf32>
    %cst_6 = arith.constant 0.00999999977 : f32
    %8 = vector.broadcast %cst_6 : f32 to vector<8x32xf32>
    %9 = arith.mulf %5, %8 : vector<8x32xf32>
    %10 = arith.select %7, %5, %9 : vector<8x32xi1>, vector<8x32xf32>
    %11 = arith.truncf %10 : vector<8x32xf32> to vector<8x32xbf16>
    %c0_7 = arith.constant 0 : index
    %c0_8 = arith.constant 0 : index
    %12 = vector.load %arg4[%c0_7, %c0_8] : memref<32x3xbf16, #tpu.memory_space<vmem>>, vector<32x3xbf16>
    %cst_9 = arith.constant dense<0.000000e+00> : vector<8x3xf32>
    %13 = tpu.matmul %11, %12, %cst_9 {dimension_numbers = #tpu.dot_dimension_numbers<[1], [0], [0], [1], [0, 0, 1, 1], [], []>} : vector<8x32xbf16>, vector<32x3xbf16>, vector<8x3xf32> -> vector<8x3xf32>
    %c0_10 = arith.constant 0 : index
    %c0_11 = arith.constant 0 : index
    %14 = vector.load %arg5[%c0_10, %c0_11] : memref<1x3xf32, #tpu.memory_space<vmem>>, vector<1x3xf32>
    %15 = vector.broadcast %14 : vector<1x3xf32> to vector<8x3xf32>
    %16 = arith.addf %13, %15 : vector<8x3xf32>
    %cst_12 = arith.constant 0.000000e+00 : f32
    %17 = vector.broadcast %cst_12 : f32 to vector<8x3xf32>
    %18 = arith.cmpf oge, %16, %17 : vector<8x3xf32>
    %cst_13 = arith.constant 0.00999999977 : f32
    %19 = vector.broadcast %cst_13 : f32 to vector<8x3xf32>
    %20 = arith.mulf %16, %19 : vector<8x3xf32>
    %21 = arith.select %18, %16, %20 : vector<8x3xi1>, vector<8x3xf32>
    %22 = arith.truncf %21 : vector<8x3xf32> to vector<8x3xbf16>
    %23 = arith.extf %22 : vector<8x3xbf16> to vector<8x3xf32>
    %c0_14 = arith.constant 0 : index
    %c0_15 = arith.constant 0 : index
    %24 = vector.load %arg6[%c0_14, %c0_15] : memref<8x3xbf16, #tpu.memory_space<vmem>>, vector<8x3xbf16>
    %25 = arith.extf %24 : vector<8x3xbf16> to vector<8x3xf32>
    %c0_16 = arith.constant 0 : index
    %c0_17 = arith.constant 0 : index
    %26 = vector.load %arg7[%c0_16, %c0_17] : memref<1x3xf32, #tpu.memory_space<vmem>>, vector<1x3xf32>
    %27 = vector.broadcast %26 : vector<1x3xf32> to vector<8x3xf32>
    %28 = arith.mulf %25, %27 : vector<8x3xf32>
    %cst_18 = arith.constant dense<0.000000e+00> : vector<8xf32>
    %29 = vector.multi_reduction <add>, %28, %cst_18 [1] : vector<8x3xf32> to vector<8xf32>
    %30 = vector.shape_cast %29 : vector<8xf32> to vector<8x1xf32>
    %c0_19 = arith.constant 0 : index
    %c0_20 = arith.constant 0 : index
    %31 = vector.load %arg8[%c0_19, %c0_20] : memref<1x3xf32, #tpu.memory_space<vmem>>, vector<1x3xf32>
    %32 = vector.broadcast %31 : vector<1x3xf32> to vector<8x3xf32>
    %33 = arith.mulf %23, %32 : vector<8x3xf32>
    %cst_21 = arith.constant dense<0.000000e+00> : vector<8xf32>
    %34 = vector.multi_reduction <add>, %33, %cst_21 [1] : vector<8x3xf32> to vector<8xf32>
    %35 = vector.shape_cast %34 : vector<8xf32> to vector<8x1xf32>
    %36 = arith.addf %30, %35 : vector<8x1xf32>
    %c0_22 = arith.constant 0 : index
    %c0_23 = arith.constant 0 : index
    %37 = vector.load %arg9[%c0_22, %c0_23] : memref<1x1xf32, #tpu.memory_space<vmem>>, vector<1x1xf32>
    %38 = vector.broadcast %37 : vector<1x1xf32> to vector<8x1xf32>
    %39 = arith.addf %36, %38 : vector<8x1xf32>
    %c0_24 = arith.constant 0 : index
    %c0_25 = arith.constant 0 : index
    %40 = vector.load %arg10[%c0_24, %c0_25] : memref<8x1xf32, #tpu.memory_space<vmem>>, vector<8x1xf32>
    tpu.vector_store %arg10[%c0_24, %c0_25], %39 {strides = array<i32>} : memref<8x1xf32, #tpu.memory_space<vmem>>, vector<8x1xf32>,
    return
  }
  func.func @transform_0(%arg0: i32) -> (i32, i32) {
    %c0_i32 = arith.constant 0 : i32
    %c0_i32_0 = arith.constant 0 : i32
    %c0_i32_1 = arith.constant 0 : i32
    return %c0_i32, %c0_i32_0 : i32, i32
  }
  func.func @transform_1(%arg0: i32) -> (i32, i32) {
    %c0_i32 = arith.constant 0 : i32
    %c0_i32_0 = arith.constant 0 : i32
    %c0_i32_1 = arith.constant 0 : i32
    return %c0_i32, %c0_i32_0 : i32, i32
  }
  func.func @transform_2(%arg0: i32) -> (i32, i32) {
    %c0_i32 = arith.constant 0 : i32
    %c0_i32_0 = arith.constant 0 : i32
    %c0_i32_1 = arith.constant 0 : i32
    return %c0_i32, %c0_i32_0 : i32, i32
  }
  func.func @transform_3(%arg0: i32) -> (i32, i32) {
    %c0_i32 = arith.constant 0 : i32
    %c0_i32_0 = arith.constant 0 : i32
    %c0_i32_1 = arith.constant 0 : i32
    return %c0_i32, %c0_i32_0 : i32, i32
  }
  func.func @transform_4(%arg0: i32) -> (i32, i32) {
    %c0_i32 = arith.constant 0 : i32
    %c0_i32_0 = arith.constant 0 : i32
    %c0_i32_1 = arith.constant 0 : i32
    return %c0_i32, %c0_i32_0 : i32, i32
  }
  func.func @transform_5(%arg0: i32) -> (i32, i32) {
    %c0_i32 = arith.constant 0 : i32
    %c0_i32_0 = arith.constant 0 : i32
    %c0_i32_1 = arith.constant 0 : i32
    return %c0_i32, %c0_i32_0 : i32, i32
  }
  func.func @transform_6(%arg0: i32) -> (i32, i32) {
    %c0_i32 = arith.constant 0 : i32
    %c0_i32_0 = arith.constant 0 : i32
    %c0_i32_1 = arith.constant 0 : i32
    return %c0_i32, %c0_i32_0 : i32, i32
  }
  func.func @transform_7(%arg0: i32) -> (i32, i32) {
    %c0_i32 = arith.constant 0 : i32
    %c0_i32_0 = arith.constant 0 : i32
    %c0_i32_1 = arith.constant 0 : i32
    return %c0_i32, %c0_i32_0 : i32, i32
  }
  func.func @transform_8(%arg0: i32) -> (i32, i32) {
    %c0_i32 = arith.constant 0 : i32
    %c0_i32_0 = arith.constant 0 : i32
    %c0_i32_1 = arith.constant 0 : i32
    return %c0_i32, %c0_i32_0 : i32, i32
  }
  func.func @transform_9(%arg0: i32) -> (i32, i32) {
    %c0_i32 = arith.constant 0 : i32
    %c0_i32_0 = arith.constant 0 : i32
    %c0_i32_1 = arith.constant 0 : i32
    return %c0_i32, %c0_i32_0 : i32, i32
  }
}

</mosaic_0001>

<llo_original>
// kernel: discriminator_forward.5
$region0: #{discriminator_forward.5}
  #allocation0 [shape = 'u32[]', space=smem, size = 0x4, offset = 0x4, fixed_abs, tag = 'smem constant byte address 0x4 - core index']
  #allocation1 [shape = 'u32[144,128]{1,0:T(1,128)}', space=vmem, size = 0x12000, scoped, tag = 'internal scratch']
  %s0 = inlined_call_operand.vmem [shape: bf16[2048,12], index: 0, kind: input, shape index: {}]
  %s1 = inlined_call_operand.vmem [shape: bf16[12,64], index: 1, kind: input, shape index: {}]
  %s2 = inlined_call_operand.vmem [shape: f32[1,64], index: 2, kind: input, shape index: {}]
  %s3 = inlined_call_operand.vmem [shape: bf16[64,64], index: 3, kind: input, shape index: {}]
  %s4 = inlined_call_operand.vmem [shape: f32[1,64], index: 4, kind: input, shape index: {}]
  %s5 = inlined_call_operand.vmem [shape: bf16[2048,64], index: 5, kind: output, shape index: {}]
  %s6 = sld [smem:[#allocation0]]
  $region53: #{discriminator_forward.5} parent=0
    _
  %s8 = ssub.s32 1, %s6
  %s9 = scalar_select 0, %s8, %s6
  loop: start=0, step=1, limit=4
  $region2: #{discriminator_forward.5} parent=0 // loop_pre_header
    _
  $region3: #{discriminator_forward.5} parent=0 // loop_header
    %s11 = sphi 0, %s15
    %p12 = scmp.ge.s32.totalorder %s11, 4
    %s21 = sphi 0, %s23
    %s24 = sphi 0, %s21
    %s25 = sphi 0, %s24
    %s41 = sphi 0, %s25
    %s45 = sphi 0, %s45
    %s47 = sphi 0, %s45
    %s48 = sphi 0, %s47
    %s62 = sphi 0, %s48
    %s66 = sphi 0, %s66
    %s68 = sphi 0, %s66
    %s69 = sphi 0, %s68
    %s83 = sphi 0, %s69
    %s87 = sphi 0, %s87
    %s89 = sphi 0, %s87
    %s90 = sphi 0, %s89
    %s104 = sphi 0, %s90
    %s108 = sphi 0, %s108
    %s110 = sphi 0, %s108
    %s111 = sphi 0, %s110
    %s125 = sphi 0, %s111
    %s131 = sphi 0, %s133
    %s134 = sphi 0, %s131
    %s135 = sphi 0, %s134
    %s151 = sphi 0, %s135
  $region4: #{discriminator_forward.5} parent=0 // loop_header_branch
    %14 = sbr.rel (%p12) target = $region8
  $region5: #{discriminator_forward.5} parent=0 // loop_body
    %s16 = ssub.s32 %s11, 1
    %s17 = ssub.s32 %s11, 2
    %s18 = sadd.s32 %s11, 1
    %s19 = ssub.s32 %s11, %s18
    %p20 = scmp.eq.s32.totalorder %s19, 0
    %s22 = sadd.s32 %s21, 1
    %s23 = scalar_select %p20, %s21, %s22
    %p26 = pneg %p20
    %p27 = scmp.eq.s32.totalorder %s11, 1
    %p28 = por %p26, %p27
    %p29 = scmp.ne.s32.totalorder %s21, %s24
    %p30 = scmp.eq.s32.totalorder %s11, 0
    %p31 = por %p29, %p30
    %p32 = scmp.ne.s32.totalorder %s21, %s24
    %p33 = scmp.eq.s32.totalorder %s16, 1
    %p34 = por %p32, %p33
    %p35 = scmp.ne.s32.totalorder %s24, %s25
    %p36 = scmp.eq.s32.totalorder %s16, 0
    %p37 = por %p35, %p36
    %p38 = scmp.ne.s32.totalorder %s24, %s25
    %p39 = scmp.eq.s32.totalorder %s17, 1
    %p40 = por %p38, %p39
    %p42 = scmp.ne.s32.totalorder %s25, %s41
    %p43 = scmp.eq.s32.totalorder %s17, 0
    %p44 = por %p42, %p43
    %s46 = sadd.s32 %s45, 1
    %p49 = scmp.eq.s32.totalorder %s11, 1
    %p50 = scmp.ne.s32.totalorder %s45, %s47
    %p51 = scmp.eq.s32.totalorder %s11, 0
    %p52 = por %p50, %p51
    %p53 = scmp.ne.s32.totalorder %s45, %s47
    %p54 = scmp.eq.s32.totalorder %s16, 1
    %p55 = por %p53, %p54
    %p56 = scmp.ne.s32.totalorder %s47, %s48
    %p57 = scmp.eq.s32.totalorder %s16, 0
    %p58 = por %p56, %p57
    %p59 = scmp.ne.s32.totalorder %s47, %s48
    %p60 = scmp.eq.s32.totalorder %s17, 1
    %p61 = por %p59, %p60
    %p63 = scmp.ne.s32.totalorder %s48, %s62
    %p64 = scmp.eq.s32.totalorder %s17, 0
    %p65 = por %p63, %p64
    %s67 = sadd.s32 %s66, 1
    %p70 = scmp.eq.s32.totalorder %s11, 1
    %p71 = scmp.ne.s32.totalorder %s66, %s68
    %p72 = scmp.eq.s32.totalorder %s11, 0
    %p73 = por %p71, %p72
    %p74 = scmp.ne.s32.totalorder %s66, %s68
    %p75 = scmp.eq.s32.totalorder %s16, 1
    %p76 = por %p74, %p75
    %p77 = scmp.ne.s32.totalorder %s68, %s69
    %p78 = scmp.eq.s32.totalorder %s16, 0
    %p79 = por %p77, %p78
    %p80 = scmp.ne.s32.totalorder %s68, %s69
    %p81 = scmp.eq.s32.totalorder %s17, 1
    %p82 = por %p80, %p81
    %p84 = scmp.ne.s32.totalorder %s69, %s83
    %p85 = scmp.eq.s32.totalorder %s17, 0
    %p86 = por %p84, %p85
    %s88 = sadd.s32 %s87, 1
    %p91 = scmp.eq.s32.totalorder %s11, 1
    %p92 = scmp.ne.s32.totalorder %s87, %s89
    %p93 = scmp.eq.s32.totalorder %s11, 0
    %p94 = por %p92, %p93
    %p95 = scmp.ne.s32.totalorder %s87, %s89
    %p96 = scmp.eq.s32.totalorder %s16, 1
    %p97 = por %p95, %p96
    %p98 = scmp.ne.s32.totalorder %s89, %s90
    %p99 = scmp.eq.s32.totalorder %s16, 0
    %p100 = por %p98, %p99
    %p101 = scmp.ne.s32.totalorder %s89, %s90
    %p102 = scmp.eq.s32.totalorder %s17, 1
    %p103 = por %p101, %p102
    %p105 = scmp.ne.s32.totalorder %s90, %s104
    %p106 = scmp.eq.s32.totalorder %s17, 0
    %p107 = por %p105, %p106
    %s109 = sadd.s32 %s108, 1
    %p112 = scmp.eq.s32.totalorder %s11, 1
    %p113 = scmp.ne.s32.totalorder %s108, %s110
    %p114 = scmp.eq.s32.totalorder %s11, 0
    %p115 = por %p113, %p114
    %p116 = scmp.ne.s32.totalorder %s108, %s110
    %p117 = scmp.eq.s32.totalorder %s16, 1
    %p118 = por %p116, %p117
    %p119 = scmp.ne.s32.totalorder %s110, %s111
    %p120 = scmp.eq.s32.totalorder %s16, 0
    %p121 = por %p119, %p120
    %p122 = scmp.ne.s32.totalorder %s110, %s111
    %p123 = scmp.eq.s32.totalorder %s17, 1
    %p124 = por %p122, %p123
    %p126 = scmp.ne.s32.totalorder %s111, %s125
    %p127 = scmp.eq.s32.totalorder %s17, 0
    %p128 = por %p126, %p127
    %s129 = ssub.s32 %s11, %s18
    %p130 = scmp.eq.s32.totalorder %s129, 0
    %s132 = sadd.s32 %s131, 1
    %s133 = scalar_select %p130, %s131, %s132
    %p136 = pneg %p130
    %p137 = scmp.eq.s32.totalorder %s11, 1
    %p138 = por %p136, %p137
    %p139 = scmp.ne.s32.totalorder %s131, %s134
    %p140 = scmp.eq.s32.totalorder %s11, 0
    %p141 = por %p139, %p140
    %p142 = scmp.ne.s32.totalorder %s131, %s134
    %p143 = scmp.eq.s32.totalorder %s16, 1
    %p144 = por %p142, %p143
    %p145 = scmp.ne.s32.totalorder %s134, %s135
    %p146 = scmp.eq.s32.totalorder %s16, 0
    %p147 = por %p145, %p146
    %p148 = scmp.ne.s32.totalorder %s134, %s135
    %p149 = scmp.eq.s32.totalorder %s17, 1
    %p150 = por %p148, %p149
    %p152 = scmp.ne.s32.totalorder %s135, %s151
    %p153 = scmp.eq.s32.totalorder %s17, 0
    %p154 = por %p152, %p153
    %p155 = scmp.le.s32.totalorder 1, %s11
    %p156 = scmp.lt.s32.totalorder %s11, 3
    %p157 = pnand %p155, %p156
    %p158 = pneg %p157
    // Predicated region
    $region9: #{discriminator_forward.5} parent=5 // pred_check
      _
    $region10: #{discriminator_forward.5} parent=5 // pred_check_branch
      %160 = sbr.rel (%p157) target = $region12
    $region11: #{discriminator_forward.5} parent=5 // pred_region
      %s161 = ssub.s32 %s11, 1
      // Predicated region
      $region13: #{discriminator_forward.5} parent=11 // pred_check
        %p162 = pneg %p58
      $region14: #{discriminator_forward.5} parent=11 // pred_check_branch
        %164 = sbr.rel (%p162) target = $region16
      $region15: #{discriminator_forward.5} parent=11 // pred_region
        _
      $region16: #{discriminator_forward.5} parent=11 // pred_fallthru
        _
      // Predicated region
      $region17: #{discriminator_forward.5} parent=11 // pred_check
        %p165 = pneg %p79
      $region18: #{discriminator_forward.5} parent=11 // pred_check_branch
        %167 = sbr.rel (%p165) target = $region20
      $region19: #{discriminator_forward.5} parent=11 // pred_region
        _
      $region20: #{discriminator_forward.5} parent=11 // pred_fallthru
        _
      // Predicated region
      $region21: #{discriminator_forward.5} parent=11 // pred_check
        %p168 = pneg %p100
      $region22: #{discriminator_forward.5} parent=11 // pred_check_branch
        %170 = sbr.rel (%p168) target = $region24
      $region23: #{discriminator_forward.5} parent=11 // pred_region
        _
      $region24: #{discriminator_forward.5} parent=11 // pred_fallthru
        _
      // Predicated region
      $region25: #{discriminator_forward.5} parent=11 // pred_check
        %p171 = pneg %p121
      $region26: #{discriminator_forward.5} parent=11 // pred_check_branch
        %173 = sbr.rel (%p171) target = $region28
      $region27: #{discriminator_forward.5} parent=11 // pred_region
        _
      $region28: #{discriminator_forward.5} parent=11 // pred_fallthru
        _
    $region12: #{discriminator_forward.5} parent=5 // pred_fallthru
      _
    %p174 = scmp.lt.s32.totalorder %s11, 2
    // Predicated region
    $region29: #{discriminator_forward.5} parent=5 // pred_check
      %p175 = pneg %p174
    $region30: #{discriminator_forward.5} parent=5 // pred_check_branch
      %177 = sbr.rel (%p175) target = $region32
    $region31: #{discriminator_forward.5} parent=5 // pred_region
      // Predicated region
      $region33: #{discriminator_forward.5} parent=31 // pred_check
        %p178 = pneg %p31
      $region34: #{discriminator_forward.5} parent=31 // pred_check_branch
        %180 = sbr.rel (%p178) target = $region36
      $region35: #{discriminator_forward.5} parent=31 // pred_region
        %s181 = smul.u32 128, %s11
        %p182 = scmp.lt.s32.totalorder %s181, 255
        %s183 = scalar_select %p182, %s181, 255
        %s184 = smul.addr %s183, 4
        %s185 = scalar_lea.vmem %s0, %s184
        %s186 = smul.u32 128, %s11
      $region36: #{discriminator_forward.5} parent=31 // pred_fallthru
        _
    $region32: #{discriminator_forward.5} parent=5 // pred_fallthru
      _
    %p187 = scmp.le.s32.totalorder 1, %s11
    %p188 = scmp.lt.s32.totalorder %s11, 3
    %p189 = pnand %p187, %p188
    %p190 = pneg %p189
    // Predicated region
    $region37: #{discriminator_forward.5} parent=5 // pred_check
      _
    $region38: #{discriminator_forward.5} parent=5 // pred_check_branch
      %192 = sbr.rel (%p189) target = $region40
    $region39: #{discriminator_forward.5} parent=5 // pred_region
      %s193 = ssub.s32 %s11, 1
      %s194 = smul.u32 128, %s16
      %p195 = scmp.lt.s32.totalorder %s194, 255
      %s196 = scalar_select %p195, %s194, 255
      %s197 = smul.addr %s196, 4
      %s198 = scalar_lea.vmem %s0, %s197
      %p199 = pneg %p37
      %p200 = pneg %p34
      %p201 = pneg %p58
      %p202 = pneg %p55
      %p203 = pneg %p79
      %p204 = pneg %p76
      %p205 = pneg %p100
      %p206 = pneg %p97
      %p207 = pneg %p121
      %p208 = pneg %p118
      %p209 = pneg %p147
      %p210 = pneg %p144
      %s211 = smul.u32 128, %s16
      %p212 = scmp.lt.s32.totalorder %s211, 255
      %s213 = scalar_select %p212, %s211, 255
      %s214 = smul.addr %s213, 4
      %s215 = scalar_lea.vmem %s5, %s214
      %s216 = smul.u32 128, %s16
      %p217 = scmp.lt.s32.totalorder %s216, 255
      %s218 = scalar_select %p217, %s216, 255
      %s219 = smul.addr %s218, 4
      %s220 = scalar_lea.vmem %s0, %s219
      %s221 = smul.u32 128, %s16
      %s222 = smul.u32 128, %s16
      %p223 = scmp.lt.s32.totalorder %s222, 255
      %s224 = scalar_select %p223, %s222, 255
      %s225 = smul.addr %s224, 4
      %s226 = scalar_lea.vmem %s5, %s225
      %s227 = smul.u32 128, %s16
      %v229 = vld [vmem:[%s220] sm:$0xf]
      %v230 = vld [vmem:[%s220 + $0x4] sm:$0xf]
      %v231 = vld [vmem:[%s220 + $0x8] sm:$0xf]
      %v232 = vld [vmem:[%s220 + $0xc] sm:$0xf]
      %v233 = vld [vmem:[%s220 + $0x10] sm:$0xf]
      %v234 = vld [vmem:[%s220 + $0x14] sm:$0xf]
      %v235 = vld [vmem:[%s220 + $0x18] sm:$0xf]
      %v236 = vld [vmem:[%s220 + $0x1c] sm:$0xf]
      %v237 = vld [vmem:[%s220 + $0x20] sm:$0xf]
      %v238 = vld [vmem:[%s220 + $0x24] sm:$0xf]
      %v239 = vld [vmem:[%s220 + $0x28] sm:$0xf]
      %v240 = vld [vmem:[%s220 + $0x2c] sm:$0xf]
      %v241 = vld [vmem:[%s220 + $0x30] sm:$0xf]
      %v242 = vld [vmem:[%s220 + $0x34] sm:$0xf]
      %v243 = vld [vmem:[%s220 + $0x38] sm:$0xf]
      %v244 = vld [vmem:[%s220 + $0x3c] sm:$0xf]
      %v245 = vld [vmem:[%s220 + $0x40] sm:$0xf]
      %v246 = vld [vmem:[%s220 + $0x44] sm:$0xf]
      %v247 = vld [vmem:[%s220 + $0x48] sm:$0xf]
      %v248 = vld [vmem:[%s220 + $0x4c] sm:$0xf]
      %v249 = vld [vmem:[%s220 + $0x50] sm:$0xf]
      %v250 = vld [vmem:[%s220 + $0x54] sm:$0xf]
      %v251 = vld [vmem:[%s220 + $0x58] sm:$0xf]
      %v252 = vld [vmem:[%s220 + $0x5c] sm:$0xf]
      %v253 = vld [vmem:[%s220 + $0x60] sm:$0xf]
      %v254 = vld [vmem:[%s220 + $0x64] sm:$0xf]
      %v255 = vld [vmem:[%s220 + $0x68] sm:$0xf]
      %v256 = vld [vmem:[%s220 + $0x6c] sm:$0xf]
      %v257 = vld [vmem:[%s220 + $0x70] sm:$0xf]
      %v258 = vld [vmem:[%s220 + $0x74] sm:$0xf]
      %v259 = vld [vmem:[%s220 + $0x78] sm:$0xf]
      %v260 = vld [vmem:[%s220 + $0x7c] sm:$0xf]
      %v261 = vld [vmem:[%s220 + $0x80] sm:$0xf]
      %v262 = vld [vmem:[%s220 + $0x84] sm:$0xf]
      %v263 = vld [vmem:[%s220 + $0x88] sm:$0xf]
      %v264 = vld [vmem:[%s220 + $0x8c] sm:$0xf]
      %v265 = vld [vmem:[%s220 + $0x90] sm:$0xf]
      %v266 = vld [vmem:[%s220 + $0x94] sm:$0xf]
      %v267 = vld [vmem:[%s220 + $0x98] sm:$0xf]
      %v268 = vld [vmem:[%s220 + $0x9c] sm:$0xf]
      %v269 = vld [vmem:[%s220 + $0xa0] sm:$0xf]
      %v270 = vld [vmem:[%s220 + $0xa4] sm:$0xf]
      %v271 = vld [vmem:[%s220 + $0xa8] sm:$0xf]
      %v272 = vld [vmem:[%s220 + $0xac] sm:$0xf]
      %v273 = vld [vmem:[%s220 + $0xb0] sm:$0xf]
      %v274 = vld [vmem:[%s220 + $0xb4] sm:$0xf]
      %v275 = vld [vmem:[%s220 + $0xb8] sm:$0xf]
      %v276 = vld [vmem:[%s220 + $0xbc] sm:$0xf]
      %v277 = vld [vmem:[%s220 + $0xc0] sm:$0xf]
      %v278 = vld [vmem:[%s220 + $0xc4] sm:$0xf]
      %v279 = vld [vmem:[%s220 + $0xc8] sm:$0xf]
      %v280 = vld [vmem:[%s220 + $0xcc] sm:$0xf]
      %v281 = vld [vmem:[%s220 + $0xd0] sm:$0xf]
      %v282 = vld [vmem:[%s220 + $0xd4] sm:$0xf]
      %v283 = vld [vmem:[%s220 + $0xd8] sm:$0xf]
      %v284 = vld [vmem:[%s220 + $0xdc] sm:$0xf]
      %v285 = vld [vmem:[%s220 + $0xe0] sm:$0xf]
      %v286 = vld [vmem:[%s220 + $0xe4] sm:$0xf]
      %v287 = vld [vmem:[%s220 + $0xe8] sm:$0xf]
      %v288 = vld [vmem:[%s220 + $0xec] sm:$0xf]
      %v289 = vld [vmem:[%s220 + $0xf0] sm:$0xf]
      %v290 = vld [vmem:[%s220 + $0xf4] sm:$0xf]
      %v291 = vld [vmem:[%s220 + $0xf8] sm:$0xf]
      %v292 = vld [vmem:[%s220 + $0xfc] sm:$0xf]
      %v293 = vld [vmem:[%s220 + $0x100] sm:$0xf]
      %v294 = vld [vmem:[%s220 + $0x104] sm:$0xf]
      %v295 = vld [vmem:[%s220 + $0x108] sm:$0xf]
      %v296 = vld [vmem:[%s220 + $0x10c] sm:$0xf]
      %v297 = vld [vmem:[%s220 + $0x110] sm:$0xf]
      %v298 = vld [vmem:[%s220 + $0x114] sm:$0xf]
      %v299 = vld [vmem:[%s220 + $0x118] sm:$0xf]
      %v300 = vld [vmem:[%s220 + $0x11c] sm:$0xf]
      %v301 = vld [vmem:[%s220 + $0x120] sm:$0xf]
      %v302 = vld [vmem:[%s220 + $0x124] sm:$0xf]
      %v303 = vld [vmem:[%s220 + $0x128] sm:$0xf]
      %v304 = vld [vmem:[%s220 + $0x12c] sm:$0xf]
      %v305 = vld [vmem:[%s220 + $0x130] sm:$0xf]
      %v306 = vld [vmem:[%s220 + $0x134] sm:$0xf]
      %v307 = vld [vmem:[%s220 + $0x138] sm:$0xf]
      %v308 = vld [vmem:[%s220 + $0x13c] sm:$0xf]
      %v309 = vld [vmem:[%s220 + $0x140] sm:$0xf]
      %v310 = vld [vmem:[%s220 + $0x144] sm:$0xf]
      %v311 = vld [vmem:[%s220 + $0x148] sm:$0xf]
      %v312 = vld [vmem:[%s220 + $0x14c] sm:$0xf]
      %v313 = vld [vmem:[%s220 + $0x150] sm:$0xf]
      %v314 = vld [vmem:[%s220 + $0x154] sm:$0xf]
      %v315 = vld [vmem:[%s220 + $0x158] sm:$0xf]
      %v316 = vld [vmem:[%s220 + $0x15c] sm:$0xf]
      %v317 = vld [vmem:[%s220 + $0x160] sm:$0xf]
      %v318 = vld [vmem:[%s220 + $0x164] sm:$0xf]
      %v319 = vld [vmem:[%s220 + $0x168] sm:$0xf]
      %v320 = vld [vmem:[%s220 + $0x16c] sm:$0xf]
      %v321 = vld [vmem:[%s220 + $0x170] sm:$0xf]
      %v322 = vld [vmem:[%s220 + $0x174] sm:$0xf]
      %v323 = vld [vmem:[%s220 + $0x178] sm:$0xf]
      %v324 = vld [vmem:[%s220 + $0x17c] sm:$0xf]
      %v325 = vld [vmem:[%s220 + $0x180] sm:$0xf]
      %v326 = vld [vmem:[%s220 + $0x184] sm:$0xf]
      %v327 = vld [vmem:[%s220 + $0x188] sm:$0xf]
      %v328 = vld [vmem:[%s220 + $0x18c] sm:$0xf]
      %v329 = vld [vmem:[%s220 + $0x190] sm:$0xf]
      %v330 = vld [vmem:[%s220 + $0x194] sm:$0xf]
      %v331 = vld [vmem:[%s220 + $0x198] sm:$0xf]
      %v332 = vld [vmem:[%s220 + $0x19c] sm:$0xf]
      %v333 = vld [vmem:[%s220 + $0x1a0] sm:$0xf]
      %v334 = vld [vmem:[%s220 + $0x1a4] sm:$0xf]
      %v335 = vld [vmem:[%s220 + $0x1a8] sm:$0xf]
      %v336 = vld [vmem:[%s220 + $0x1ac] sm:$0xf]
      %v337 = vld [vmem:[%s220 + $0x1b0] sm:$0xf]
      %v338 = vld [vmem:[%s220 + $0x1b4] sm:$0xf]
      %v339 = vld [vmem:[%s220 + $0x1b8] sm:$0xf]
      %v340 = vld [vmem:[%s220 + $0x1bc] sm:$0xf]
      %v341 = vld [vmem:[%s220 + $0x1c0] sm:$0xf]
      %v342 = vld [vmem:[%s220 + $0x1c4] sm:$0xf]
      %v343 = vld [vmem:[%s220 + $0x1c8] sm:$0xf]
      %v344 = vld [vmem:[%s220 + $0x1cc] sm:$0xf]
      %v345 = vld [vmem:[%s220 + $0x1d0] sm:$0xf]
      %v346 = vld [vmem:[%s220 + $0x1d4] sm:$0xf]
      %v347 = vld [vmem:[%s220 + $0x1d8] sm:$0xf]
      %v348 = vld [vmem:[%s220 + $0x1dc] sm:$0xf]
      %v349 = vld [vmem:[%s220 + $0x1e0] sm:$0xf]
      %v350 = vld [vmem:[%s220 + $0x1e4] sm:$0xf]
      %v351 = vld [vmem:[%s220 + $0x1e8] sm:$0xf]
      %v352 = vld [vmem:[%s220 + $0x1ec] sm:$0xf]
      %v353 = vld [vmem:[%s220 + $0x1f0] sm:$0xf]
      %v354 = vld [vmem:[%s220 + $0x1f4] sm:$0xf]
      %v355 = vld [vmem:[%s220 + $0x1f8] sm:$0xf]
      %v356 = vld [vmem:[%s220 + $0x1fc] sm:$0xf]
      %v357 = vld [vmem:[%s1] sm:$0xf]
      %v358 = vld [vmem:[%s1 + $0x4] sm:$0x3]
      %v359 = vld [vmem:[%s2] sm:$0x1]
      %v361 = vlaneseq
      %v362 = vshrl.u32 %v361, 7
      %v363 = vsub.s32 0, %v362
      %v364 = vrot.slane %v359, %v363
      %v494 = vunpack.c.l.b16 %v229
      %v495 = vunpack.c.l.b16 %v230
      %v496 = vunpack.c.l.b16 %v231
      %v497 = vunpack.c.l.b16 %v232
      %v498 = vunpack.c.l.b16 %v233
      %v499 = vunpack.c.l.b16 %v234
      %v500 = vunpack.c.l.b16 %v235
      %v501 = vunpack.c.l.b16 %v236
      %v502 = vunpack.c.l.b16 %v237
      %v503 = vunpack.c.l.b16 %v238
      %v504 = vunpack.c.l.b16 %v239
      %v505 = vunpack.c.l.b16 %v240
      %v506 = vunpack.c.l.b16 %v241
      %v507 = vunpack.c.l.b16 %v242
      %v508 = vunpack.c.l.b16 %v243
      %v509 = vunpack.c.l.b16 %v244
      %v510 = vunpack.c.l.b16 %v245
      %v511 = vunpack.c.l.b16 %v246
      %v512 = vunpack.c.l.b16 %v247
      %v513 = vunpack.c.l.b16 %v248
      %v514 = vunpack.c.l.b16 %v249
      %v515 = vunpack.c.l.b16 %v250
      %v516 = vunpack.c.l.b16 %v251
      %v517 = vunpack.c.l.b16 %v252
      %v518 = vunpack.c.l.b16 %v253
      %v519 = vunpack.c.l.b16 %v254
      %v520 = vunpack.c.l.b16 %v255
      %v521 = vunpack.c.l.b16 %v256
      %v522 = vunpack.c.l.b16 %v257
      %v523 = vunpack.c.l.b16 %v258
      %v524 = vunpack.c.l.b16 %v259
      %v525 = vunpack.c.l.b16 %v260
      %v526 = vunpack.c.l.b16 %v261
      %v527 = vunpack.c.l.b16 %v262
      %v528 = vunpack.c.l.b16 %v263
      %v529 = vunpack.c.l.b16 %v264
      %v530 = vunpack.c.l.b16 %v265
      %v531 = vunpack.c.l.b16 %v266
      %v532 = vunpack.c.l.b16 %v267
      %v533 = vunpack.c.l.b16 %v268
      %v534 = vunpack.c.l.b16 %v269
      %v535 = vunpack.c.l.b16 %v270
      %v536 = vunpack.c.l.b16 %v271
      %v537 = vunpack.c.l.b16 %v272
      %v538 = vunpack.c.l.b16 %v273
      %v539 = vunpack.c.l.b16 %v274
      %v540 = vunpack.c.l.b16 %v275
      %v541 = vunpack.c.l.b16 %v276
      %v542 = vunpack.c.l.b16 %v277
      %v543 = vunpack.c.l.b16 %v278
      %v544 = vunpack.c.l.b16 %v279
      %v545 = vunpack.c.l.b16 %v280
      %v546 = vunpack.c.l.b16 %v281
      %v547 = vunpack.c.l.b16 %v282
      %v548 = vunpack.c.l.b16 %v283
      %v549 = vunpack.c.l.b16 %v284
      %v550 = vunpack.c.l.b16 %v285
      %v551 = vunpack.c.l.b16 %v286
      %v552 = vunpack.c.l.b16 %v287
      %v553 = vunpack.c.l.b16 %v288
      %v554 = vunpack.c.l.b16 %v289
      %v555 = vunpack.c.l.b16 %v290
      %v556 = vunpack.c.l.b16 %v291
      %v557 = vunpack.c.l.b16 %v292
      %v558 = vunpack.c.l.b16 %v293
      %v559 = vunpack.c.l.b16 %v294
      %v560 = vunpack.c.l.b16 %v295
      %v561 = vunpack.c.l.b16 %v296
      %v562 = vunpack.c.l.b16 %v297
      %v563 = vunpack.c.l.b16 %v298
      %v564 = vunpack.c.l.b16 %v299
      %v565 = vunpack.c.l.b16 %v300
      %v566 = vunpack.c.l.b16 %v301
      %v567 = vunpack.c.l.b16 %v302
      %v568 = vunpack.c.l.b16 %v303
      %v569 = vunpack.c.l.b16 %v304
      %v570 = vunpack.c.l.b16 %v305
      %v571 = vunpack.c.l.b16 %v306
      %v572 = vunpack.c.l.b16 %v307
      %v573 = vunpack.c.l.b16 %v308
      %v574 = vunpack.c.l.b16 %v309
      %v575 = vunpack.c.l.b16 %v310
      %v576 = vunpack.c.l.b16 %v311
      %v577 = vunpack.c.l.b16 %v312
      %v578 = vunpack.c.l.b16 %v313
      %v579 = vunpack.c.l.b16 %v314
      %v580 = vunpack.c.l.b16 %v315
      %v581 = vunpack.c.l.b16 %v316
      %v582 = vunpack.c.l.b16 %v317
      %v583 = vunpack.c.l.b16 %v318
      %v584 = vunpack.c.l.b16 %v319
      %v585 = vunpack.c.l.b16 %v320
      %v586 = vunpack.c.l.b16 %v321
      %v587 = vunpack.c.l.b16 %v322
      %v588 = vunpack.c.l.b16 %v323
      %v589 = vunpack.c.l.b16 %v324
      %v590 = vunpack.c.l.b16 %v325
      %v591 = vunpack.c.l.b16 %v326
      %v592 = vunpack.c.l.b16 %v327
      %v593 = vunpack.c.l.b16 %v328
      %v594 = vunpack.c.l.b16 %v329
      %v595 = vunpack.c.l.b16 %v330
      %v596 = vunpack.c.l.b16 %v331
      %v597 = vunpack.c.l.b16 %v332
      %v598 = vunpack.c.l.b16 %v333
      %v599 = vunpack.c.l.b16 %v334
      %v600 = vunpack.c.l.b16 %v335
      %v601 = vunpack.c.l.b16 %v336
      %v602 = vunpack.c.l.b16 %v337
      %v603 = vunpack.c.l.b16 %v338
      %v604 = vunpack.c.l.b16 %v339
      %v605 = vunpack.c.l.b16 %v340
      %v606 = vunpack.c.l.b16 %v341
      %v607 = vunpack.c.l.b16 %v342
      %v608 = vunpack.c.l.b16 %v343
      %v609 = vunpack.c.l.b16 %v344
      %v610 = vunpack.c.l.b16 %v345
      %v611 = vunpack.c.l.b16 %v346
      %v612 = vunpack.c.l.b16 %v347
      %v613 = vunpack.c.l.b16 %v348
      %v614 = vunpack.c.l.b16 %v349
      %v615 = vunpack.c.l.b16 %v350
      %v616 = vunpack.c.l.b16 %v351
      %v617 = vunpack.c.l.b16 %v352
      %v618 = vunpack.c.l.b16 %v353
      %v619 = vunpack.c.l.b16 %v354
      %v620 = vunpack.c.l.b16 %v355
      %v621 = vunpack.c.l.b16 %v356
      %v622 = vpack.c.b16 %v495, %v494
      %v623 = vpack.c.b16 %v497, %v496
      %v624 = vpack.c.b16 %v499, %v498
      %v625 = vpack.c.b16 %v501, %v500
      %v626 = vpack.c.b16 %v503, %v502
      %v627 = vpack.c.b16 %v505, %v504
      %v628 = vpack.c.b16 %v507, %v506
      %v629 = vpack.c.b16 %v509, %v508
      %v630 = vpack.c.b16 %v511, %v510
      %v631 = vpack.c.b16 %v513, %v512
      %v632 = vpack.c.b16 %v515, %v514
      %v633 = vpack.c.b16 %v517, %v516
      %v634 = vpack.c.b16 %v519, %v518
      %v635 = vpack.c.b16 %v521, %v520
      %v636 = vpack.c.b16 %v523, %v522
      %v637 = vpack.c.b16 %v525, %v524
      %v638 = vpack.c.b16 %v527, %v526
      %v639 = vpack.c.b16 %v529, %v528
      %v640 = vpack.c.b16 %v531, %v530
      %v641 = vpack.c.b16 %v533, %v532
      %v642 = vpack.c.b16 %v535, %v534
      %v643 = vpack.c.b16 %v537, %v536
      %v644 = vpack.c.b16 %v539, %v538
      %v645 = vpack.c.b16 %v541, %v540
      %v646 = vpack.c.b16 %v543, %v542
      %v647 = vpack.c.b16 %v545, %v544
      %v648 = vpack.c.b16 %v547, %v546
      %v649 = vpack.c.b16 %v549, %v548
      %v650 = vpack.c.b16 %v551, %v550
      %v651 = vpack.c.b16 %v553, %v552
      %v652 = vpack.c.b16 %v555, %v554
      %v653 = vpack.c.b16 %v557, %v556
      %v654 = vpack.c.b16 %v559, %v558
      %v655 = vpack.c.b16 %v561, %v560
      %v656 = vpack.c.b16 %v563, %v562
      %v657 = vpack.c.b16 %v565, %v564
      %v658 = vpack.c.b16 %v567, %v566
      %v659 = vpack.c.b16 %v569, %v568
      %v660 = vpack.c.b16 %v571, %v570
      %v661 = vpack.c.b16 %v573, %v572
      %v662 = vpack.c.b16 %v575, %v574
      %v663 = vpack.c.b16 %v577, %v576
      %v664 = vpack.c.b16 %v579, %v578
      %v665 = vpack.c.b16 %v581, %v580
      %v666 = vpack.c.b16 %v583, %v582
      %v667 = vpack.c.b16 %v585, %v584
      %v668 = vpack.c.b16 %v587, %v586
      %v669 = vpack.c.b16 %v589, %v588
      %v670 = vpack.c.b16 %v591, %v590
      %v671 = vpack.c.b16 %v593, %v592
      %v672 = vpack.c.b16 %v595, %v594
      %v673 = vpack.c.b16 %v597, %v596
      %v674 = vpack.c.b16 %v599, %v598
      %v675 = vpack.c.b16 %v601, %v600
      %v676 = vpack.c.b16 %v603, %v602
      %v677 = vpack.c.b16 %v605, %v604
      %v678 = vpack.c.b16 %v607, %v606
      %v679 = vpack.c.b16 %v609, %v608
      %v680 = vpack.c.b16 %v611, %v610
      %v681 = vpack.c.b16 %v613, %v612
      %v682 = vpack.c.b16 %v615, %v614
      %v683 = vpack.c.b16 %v617, %v616
      %v684 = vpack.c.b16 %v619, %v618
      %v685 = vpack.c.b16 %v621, %v620
      %v688 = vunpack.c.l.b16 %v357
      %v689 = vunpack.c.l.b16 %v358
      %v690 = vpack.c.b16 %v689, %v688
      %vm691 = vcmask 97280
      %v693 = vsel %vm691, %v622, 0
      %v696 = vsel %vm691, %v623, 0
      %v699 = vsel %vm691, %v624, 0
      %v702 = vsel %vm691, %v625, 0
      %v705 = vsel %vm691, %v626, 0
      %v708 = vsel %vm691, %v627, 0
      %v711 = vsel %vm691, %v628, 0
      %v714 = vsel %vm691, %v629, 0
      %v717 = vsel %vm691, %v630, 0
      %v720 = vsel %vm691, %v631, 0
      %v723 = vsel %vm691, %v632, 0
      %v726 = vsel %vm691, %v633, 0
      %v729 = vsel %vm691, %v634, 0
      %v732 = vsel %vm691, %v635, 0
      %v735 = vsel %vm691, %v636, 0
      %v738 = vsel %vm691, %v637, 0
      %v741 = vsel %vm691, %v638, 0
      %v744 = vsel %vm691, %v639, 0
      %v747 = vsel %vm691, %v640, 0
      %v750 = vsel %vm691, %v641, 0
      %v753 = vsel %vm691, %v642, 0
      %v756 = vsel %vm691, %v643, 0
      %v759 = vsel %vm691, %v644, 0
      %v762 = vsel %vm691, %v645, 0
      %v765 = vsel %vm691, %v646, 0
      %v768 = vsel %vm691, %v647, 0
      %v771 = vsel %vm691, %v648, 0
      %v774 = vsel %vm691, %v649, 0
      %v777 = vsel %vm691, %v650, 0
      %v780 = vsel %vm691, %v651, 0
      %v783 = vsel %vm691, %v652, 0
      %v786 = vsel %vm691, %v653, 0
      %v789 = vsel %vm691, %v654, 0
      %v792 = vsel %vm691, %v655, 0
      %v795 = vsel %vm691, %v656, 0
      %v798 = vsel %vm691, %v657, 0
      %v801 = vsel %vm691, %v658, 0
      %v804 = vsel %vm691, %v659, 0
      %v807 = vsel %vm691, %v660, 0
      %v810 = vsel %vm691, %v661, 0
      %v813 = vsel %vm691, %v662, 0
      %v816 = vsel %vm691, %v663, 0
      %v819 = vsel %vm691, %v664, 0
      %v822 = vsel %vm691, %v665, 0
      %v825 = vsel %vm691, %v666, 0
      %v828 = vsel %vm691, %v667, 0
      %v831 = vsel %vm691, %v668, 0
      %v834 = vsel %vm691, %v669, 0
      %v837 = vsel %vm691, %v670, 0
      %v840 = vsel %vm691, %v671, 0
      %v843 = vsel %vm691, %v672, 0
      %v846 = vsel %vm691, %v673, 0
      %v849 = vsel %vm691, %v674, 0
      %v852 = vsel %vm691, %v675, 0
      %v855 = vsel %vm691, %v676, 0
      %v858 = vsel %vm691, %v677, 0
      %v861 = vsel %vm691, %v678, 0
      %v864 = vsel %vm691, %v679, 0
      %v867 = vsel %vm691, %v680, 0
      %v870 = vsel %vm691, %v681, 0
      %v873 = vsel %vm691, %v682, 0
      %v876 = vsel %vm691, %v683, 0
      %v879 = vsel %vm691, %v684, 0
      %v882 = vsel %vm691, %v685, 0
      %vm884 = vcmask 1045504
      %v886 = vsel %vm884, %v690, 0
      %888 = vmatprep.subr.bf16.mxu0 0
      %889 = vmatpush1.bf16.msra.mxu0 %v886
      %890 = vmatprep.subr.bf16.mxu0 0
      %891 = vmatpush1.bf16.msra.mxu0 0
      %892 = vmatprep.subr.bf16.mxu0 0
      %893 = vmatpush1.bf16.msra.mxu0 0
      %894 = vmatprep.subr.bf16.mxu0 0
      %895 = vmatpush1.bf16.msra.mxu0 0
      %896 = vmatprep.subr.bf16.mxu0 0
      %897 = vmatpush1.bf16.msra.mxu0 0
      %898 = vmatprep.subr.bf16.mxu0 0
      %899 = vmatpush1.bf16.msra.mxu0 0
      %900 = vmatprep.subr.bf16.mxu0 0
      %901 = vmatpush1.bf16.msra.mxu0 0
      %902 = vmatprep.subr.bf16.mxu0 0
      %903 = vmatpush1.bf16.msra.mxu0 0
      %904 = vmatprep.subr.bf16.mxu0 0
      %905 = vmatpush1.bf16.msra.mxu0 0
      %906 = vmatprep.subr.bf16.mxu0 0
      %907 = vmatpush1.bf16.msra.mxu0 0
      %908 = vmatprep.subr.bf16.mxu0 0
      %909 = vmatpush1.bf16.msra.mxu0 0
      %910 = vmatprep.subr.bf16.mxu0 0
      %911 = vmatpush1.bf16.msra.mxu0 0
      %912 = vmatprep.subr.bf16.mxu0 0
      %913 = vmatpush1.bf16.msra.mxu0 0
      %914 = vmatprep.subr.bf16.mxu0 0
      %915 = vmatpush1.bf16.msra.mxu0 0
      %916 = vmatprep.subr.bf16.mxu0 0
      %917 = vmatpush1.bf16.msra.mxu0 0
      %918 = vmatprep.subr.bf16.mxu0 0
      %919 = vmatpush1.bf16.msra.mxu0 0
      %920 = vmatprep.mubr.bf16.mxu0 0
      %921 = vmatmul.mubr.bf16.gmra.mrb[0].mxu0 %v693
      %v922 = vpop.f32.mrb[0].mxu0
      %v923 = vadd.f32 %v364, %v922
      %v924 = vpop.f32.mrb[0].mxu0
      %v925 = vpop.f32.mrb[0].mxu0
      %v926 = vadd.f32 %v364, %v925
      %v927 = vpop.f32.mrb[0].mxu0
      %928 = vmatprep.mubr.bf16.mxu0 0
      %929 = vmatmul.mubr.bf16.gmra.mrb[0].mxu0 %v696
      %v930 = vpop.f32.mrb[0].mxu0
      %v931 = vadd.f32 %v364, %v930
      %v932 = vpop.f32.mrb[0].mxu0
      %v933 = vpop.f32.mrb[0].mxu0
      %v934 = vadd.f32 %v364, %v933
      %v935 = vpop.f32.mrb[0].mxu0
      %936 = vmatprep.mubr.bf16.mxu0 0
      %937 = vmatmul.mubr.bf16.gmra.mrb[0].mxu0 %v699
      %v938 = vpop.f32.mrb[0].mxu0
      %v939 = vadd.f32 %v364, %v938
      %v940 = vpop.f32.mrb[0].mxu0
      %v941 = vpop.f32.mrb[0].mxu0
      %v942 = vadd.f32 %v364, %v941
      %v943 = vpop.f32.mrb[0].mxu0
      %944 = vmatprep.mubr.bf16.mxu0 0
      %945 = vmatmul.mubr.bf16.gmra.mrb[0].mxu0 %v702
      %v946 = vpop.f32.mrb[0].mxu0
      %v947 = vadd.f32 %v364, %v946
      %v948 = vpop.f32.mrb[0].mxu0
      %v949 = vpop.f32.mrb[0].mxu0
      %v950 = vadd.f32 %v364, %v949
      %v951 = vpop.f32.mrb[0].mxu0
      %952 = vmatprep.mubr.bf16.mxu0 0
      %953 = vmatmul.mubr.bf16.gmra.mrb[0].mxu0 %v705
      %v954 = vpop.f32.mrb[0].mxu0
      %v955 = vadd.f32 %v364, %v954
      %v956 = vpop.f32.mrb[0].mxu0
      %v957 = vpop.f32.mrb[0].mxu0
      %v958 = vadd.f32 %v364, %v957
      %v959 = vpop.f32.mrb[0].mxu0
      %960 = vmatprep.mubr.bf16.mxu0 0
      %961 = vmatmul.mubr.bf16.gmra.mrb[0].mxu0 %v708
      %v962 = vpop.f32.mrb[0].mxu0
      %v963 = vadd.f32 %v364, %v962
      %v964 = vpop.f32.mrb[0].mxu0
      %v965 = vpop.f32.mrb[0].mxu0
      %v966 = vadd.f32 %v364, %v965
      %v967 = vpop.f32.mrb[0].mxu0
      %968 = vmatprep.mubr.bf16.mxu0 0
      %969 = vmatmul.mubr.bf16.gmra.mrb[0].mxu0 %v711
      %v970 = vpop.f32.mrb[0].mxu0
      %v971 = vadd.f32 %v364, %v970
      %v972 = vpop.f32.mrb[0].mxu0
      %v973 = vpop.f32.mrb[0].mxu0
      %v974 = vadd.f32 %v364, %v973
      %v975 = vpop.f32.mrb[0].mxu0
      %976 = vmatprep.mubr.bf16.mxu0 0
      %977 = vmatmul.mubr.bf16.gmra.mrb[0].mxu0 %v714
      %v978 = vpop.f32.mrb[0].mxu0
      %v979 = vadd.f32 %v364, %v978
      %v980 = vpop.f32.mrb[0].mxu0
      %v981 = vpop.f32.mrb[0].mxu0
      %v982 = vadd.f32 %v364, %v981
      %v983 = vpop.f32.mrb[0].mxu0
      %984 = vmatprep.mubr.bf16.mxu0 0
      %985 = vmatmul.mubr.bf16.gmra.mrb[0].mxu0 %v717
      %v986 = vpop.f32.mrb[0].mxu0
      %v987 = vadd.f32 %v364, %v986
      %v988 = vpop.f32.mrb[0].mxu0
      %v989 = vpop.f32.mrb[0].mxu0
      %v990 = vadd.f32 %v364, %v989
      %v991 = vpop.f32.mrb[0].mxu0
      %992 = vmatprep.mubr.bf16.mxu0 0
      %993 = vmatmul.mubr.bf16.gmra.mrb[0].mxu0 %v720
      %v994 = vpop.f32.mrb[0].mxu0
      %v995 = vadd.f32 %v364, %v994
      %v996 = vpop.f32.mrb[0].mxu0
      %v997 = vpop.f32.mrb[0].mxu0
      %v998 = vadd.f32 %v364, %v997
      %v999 = vpop.f32.mrb[0].mxu0
      %1000 = vmatprep.mubr.bf16.mxu0 0
      %1001 = vmatmul.mubr.bf16.gmra.mrb[0].mxu0 %v723
      %v1002 = vpop.f32.mrb[0].mxu0
      %v1003 = vadd.f32 %v364, %v1002
      %v1004 = vpop.f32.mrb[0].mxu0
      %v1005 = vpop.f32.mrb[0].mxu0
      %v1006 = vadd.f32 %v364, %v1005
      %v1007 = vpop.f32.mrb[0].mxu0
      %1008 = vmatprep.mubr.bf16.mxu0 0
      %1009 = vmatmul.mubr.bf16.gmra.mrb[0].mxu0 %v726
      %v1010 = vpop.f32.mrb[0].mxu0
      %v1011 = vadd.f32 %v364, %v1010
      %v1012 = vpop.f32.mrb[0].mxu0
      %v1013 = vpop.f32.mrb[0].mxu0
      %v1014 = vadd.f32 %v364, %v1013
      %v1015 = vpop.f32.mrb[0].mxu0
      %1016 = vmatprep.mubr.bf16.mxu0 0
      %1017 = vmatmul.mubr.bf16.gmra.mrb[0].mxu0 %v729
      %v1018 = vpop.f32.mrb[0].mxu0
      %v1019 = vadd.f32 %v364, %v1018
      %v1020 = vpop.f32.mrb[0].mxu0
      %v1021 = vpop.f32.mrb[0].mxu0
      %v1022 = vadd.f32 %v364, %v1021
      %v1023 = vpop.f32.mrb[0].mxu0
      %1024 = vmatprep.mubr.bf16.mxu0 0
      %1025 = vmatmul.mubr.bf16.gmra.mrb[0].mxu0 %v732
      %v1026 = vpop.f32.mrb[0].mxu0
      %v1027 = vadd.f32 %v364, %v1026
      %v1028 = vpop.f32.mrb[0].mxu0
      %v1029 = vpop.f32.mrb[0].mxu0
      %v1030 = vadd.f32 %v364, %v1029
      %v1031 = vpop.f32.mrb[0].mxu0
      %1032 = vmatprep.mubr.bf16.mxu0 0
      %1033 = vmatmul.mubr.bf16.gmra.mrb[0].mxu0 %v735
      %v1034 = vpop.f32.mrb[0].mxu0
      %v1035 = vadd.f32 %v364, %v1034
      %v1036 = vpop.f32.mrb[0].mxu0
      %v1037 = vpop.f32.mrb[0].mxu0
      %v1038 = vadd.f32 %v364, %v1037
      %v1039 = vpop.f32.mrb[0].mxu0
      %1040 = vmatprep.mubr.bf16.mxu0 0
      %1041 = vmatmul.mubr.bf16.gmra.mrb[0].mxu0 %v738
      %v1042 = vpop.f32.mrb[0].mxu0
      %v1043 = vadd.f32 %v364, %v1042
      %v1044 = vpop.f32.mrb[0].mxu0
      %v1045 = vpop.f32.mrb[0].mxu0
      %v1046 = vadd.f32 %v364, %v1045
      %v1047 = vpop.f32.mrb[0].mxu0
      %1048 = vmatprep.mubr.bf16.mxu0 0
      %1049 = vmatmul.mubr.bf16.gmra.mrb[0].mxu0 %v741
      %v1050 = vpop.f32.mrb[0].mxu0
      %v1051 = vadd.f32 %v364, %v1050
      %v1052 = vpop.f32.mrb[0].mxu0
      %v1053 = vpop.f32.mrb[0].mxu0
      %v1054 = vadd.f32 %v364, %v1053
      %v1055 = vpop.f32.mrb[0].mxu0
      %1056 = vmatprep.mubr.bf16.mxu0 0
      %1057 = vmatmul.mubr.bf16.gmra.mrb[0].mxu0 %v744
      %v1058 = vpop.f32.mrb[0].mxu0
      %v1059 = vadd.f32 %v364, %v1058
      %v1060 = vpop.f32.mrb[0].mxu0
      %v1061 = vpop.f32.mrb[0].mxu0
      %v1062 = vadd.f32 %v364, %v1061
      %v1063 = vpop.f32.mrb[0].mxu0
      %1064 = vmatprep.mubr.bf16.mxu0 0
      %1065 = vmatmul.mubr.bf16.gmra.mrb[0].mxu0 %v747
      %v1066 = vpop.f32.mrb[0].mxu0
      %v1067 = vadd.f32 %v364, %v1066
      %v1068 = vpop.f32.mrb[0].mxu0
      %v1069 = vpop.f32.mrb[0].mxu0
      %v1070 = vadd.f32 %v364, %v1069
      %v1071 = vpop.f32.mrb[0].mxu0
      %1072 = vmatprep.mubr.bf16.mxu0 0
      %1073 = vmatmul.mubr.bf16.gmra.mrb[0].mxu0 %v750
      %v1074 = vpop.f32.mrb[0].mxu0
      %v1075 = vadd.f32 %v364, %v1074
      %v1076 = vpop.f32.mrb[0].mxu0
      %v1077 = vpop.f32.mrb[0].mxu0
      %v1078 = vadd.f32 %v364, %v1077
      %v1079 = vpop.f32.mrb[0].mxu0
      %1080 = vmatprep.mubr.bf16.mxu0 0
      %1081 = vmatmul.mubr.bf16.gmra.mrb[0].mxu0 %v753
      %v1082 = vpop.f32.mrb[0].mxu0
      %v1083 = vadd.f32 %v364, %v1082
      %v1084 = vpop.f32.mrb[0].mxu0
      %v1085 = vpop.f32.mrb[0].mxu0
      %v1086 = vadd.f32 %v364, %v1085
      %v1087 = vpop.f32.mrb[0].mxu0
      %1088 = vmatprep.mubr.bf16.mxu0 0
      %1089 = vmatmul.mubr.bf16.gmra.mrb[0].mxu0 %v756
      %v1090 = vpop.f32.mrb[0].mxu0
      %v1091 = vadd.f32 %v364, %v1090
      %v1092 = vpop.f32.mrb[0].mxu0
      %v1093 = vpop.f32.mrb[0].mxu0
      %v1094 = vadd.f32 %v364, %v1093
      %v1095 = vpop.f32.mrb[0].mxu0
      %1096 = vmatprep.mubr.bf16.mxu0 0
      %1097 = vmatmul.mubr.bf16.gmra.mrb[0].mxu0 %v759
      %v1098 = vpop.f32.mrb[0].mxu0
      %v1099 = vadd.f32 %v364, %v1098
      %v1100 = vpop.f32.mrb[0].mxu0
      %v1101 = vpop.f32.mrb[0].mxu0
      %v1102 = vadd.f32 %v364, %v1101
      %v1103 = vpop.f32.mrb[0].mxu0
      %1104 = vmatprep.mubr.bf16.mxu0 0
      %1105 = vmatmul.mubr.bf16.gmra.mrb[0].mxu0 %v762
      %v1106 = vpop.f32.mrb[0].mxu0
      %v1107 = vadd.f32 %v364, %v1106
      %v1108 = vpop.f32.mrb[0].mxu0
      %v1109 = vpop.f32.mrb[0].mxu0
      %v1110 = vadd.f32 %v364, %v1109
      %v1111 = vpop.f32.mrb[0].mxu0
      %1112 = vmatprep.mubr.bf16.mxu0 0
      %1113 = vmatmul.mubr.bf16.gmra.mrb[0].mxu0 %v765
      %v1114 = vpop.f32.mrb[0].mxu0
      %v1115 = vadd.f32 %v364, %v1114
      %v1116 = vpop.f32.mrb[0].mxu0
      %v1117 = vpop.f32.mrb[0].mxu0
      %v1118 = vadd.f32 %v364, %v1117
      %v1119 = vpop.f32.mrb[0].mxu0
      %1120 = vmatprep.mubr.bf16.mxu0 0
      %1121 = vmatmul.mubr.bf16.gmra.mrb[0].mxu0 %v768
      %v1122 = vpop.f32.mrb[0].mxu0
      %v1123 = vadd.f32 %v364, %v1122
      %v1124 = vpop.f32.mrb[0].mxu0
      %v1125 = vpop.f32.mrb[0].mxu0
      %v1126 = vadd.f32 %v364, %v1125
      %v1127 = vpop.f32.mrb[0].mxu0
      %1128 = vmatprep.mubr.bf16.mxu0 0
      %1129 = vmatmul.mubr.bf16.gmra.mrb[0].mxu0 %v771
      %v1130 = vpop.f32.mrb[0].mxu0
      %v1131 = vadd.f32 %v364, %v1130
      %v1132 = vpop.f32.mrb[0].mxu0
      %v1133 = vpop.f32.mrb[0].mxu0
      %v1134 = vadd.f32 %v364, %v1133
      %v1135 = vpop.f32.mrb[0].mxu0
      %1136 = vmatprep.mubr.bf16.mxu0 0
      %1137 = vmatmul.mubr.bf16.gmra.mrb[0].mxu0 %v774
      %v1138 = vpop.f32.mrb[0].mxu0
      %v1139 = vadd.f32 %v364, %v1138
      %v1140 = vpop.f32.mrb[0].mxu0
      %v1141 = vpop.f32.mrb[0].mxu0
      %v1142 = vadd.f32 %v364, %v1141
      %v1143 = vpop.f32.mrb[0].mxu0
      %1144 = vmatprep.mubr.bf16.mxu0 0
      %1145 = vmatmul.mubr.bf16.gmra.mrb[0].mxu0 %v777
      %v1146 = vpop.f32.mrb[0].mxu0
      %v1147 = vadd.f32 %v364, %v1146
      %v1148 = vpop.f32.mrb[0].mxu0
      %v1149 = vpop.f32.mrb[0].mxu0
      %v1150 = vadd.f32 %v364, %v1149
      %v1151 = vpop.f32.mrb[0].mxu0
      %1152 = vmatprep.mubr.bf16.mxu0 0
      %1153 = vmatmul.mubr.bf16.gmra.mrb[0].mxu0 %v780
      %v1154 = vpop.f32.mrb[0].mxu0
      %v1155 = vadd.f32 %v364, %v1154
      %v1156 = vpop.f32.mrb[0].mxu0
      %v1157 = vpop.f32.mrb[0].mxu0
      %v1158 = vadd.f32 %v364, %v1157
      %v1159 = vpop.f32.mrb[0].mxu0
      %1160 = vmatprep.mubr.bf16.mxu0 0
      %1161 = vmatmul.mubr.bf16.gmra.mrb[0].mxu0 %v783
      %v1162 = vpop.f32.mrb[0].mxu0
      %v1163 = vadd.f32 %v364, %v1162
      %v1164 = vpop.f32.mrb[0].mxu0
      %v1165 = vpop.f32.mrb[0].mxu0
      %v1166 = vadd.f32 %v364, %v1165
      %v1167 = vpop.f32.mrb[0].mxu0
      %1168 = vmatprep.mubr.bf16.mxu0 0
      %1169 = vmatmul.mubr.bf16.gmra.mrb[0].mxu0 %v786
      %v1170 = vpop.f32.mrb[0].mxu0
      %v1171 = vadd.f32 %v364, %v1170
      %v1172 = vpop.f32.mrb[0].mxu0
      %v1173 = vpop.f32.mrb[0].mxu0
      %v1174 = vadd.f32 %v364, %v1173
      %v1175 = vpop.f32.mrb[0].mxu0
      %1176 = vmatprep.mubr.bf16.mxu0 0
      %1177 = vmatmul.mubr.bf16.gmra.mrb[0].mxu0 %v789
      %v1178 = vpop.f32.mrb[0].mxu0
      %v1179 = vadd.f32 %v364, %v1178
      %v1180 = vpop.f32.mrb[0].mxu0
      %v1181 = vpop.f32.mrb[0].mxu0
      %v1182 = vadd.f32 %v364, %v1181
      %v1183 = vpop.f32.mrb[0].mxu0
      %1184 = vmatprep.mubr.bf16.mxu0 0
      %1185 = vmatmul.mubr.bf16.gmra.mrb[0].mxu0 %v792
      %v1186 = vpop.f32.mrb[0].mxu0
      %v1187 = vadd.f32 %v364, %v1186
      %v1188 = vpop.f32.mrb[0].mxu0
      %v1189 = vpop.f32.mrb[0].mxu0
      %v1190 = vadd.f32 %v364, %v1189
      %v1191 = vpop.f32.mrb[0].mxu0
      %1192 = vmatprep.mubr.bf16.mxu0 0
      %1193 = vmatmul.mubr.bf16.gmra.mrb[0].mxu0 %v795
      %v1194 = vpop.f32.mrb[0].mxu0
      %v1195 = vadd.f32 %v364, %v1194
      %v1196 = vpop.f32.mrb[0].mxu0
      %v1197 = vpop.f32.mrb[0].mxu0
      %v1198 = vadd.f32 %v364, %v1197
      %v1199 = vpop.f32.mrb[0].mxu0
      %1200 = vmatprep.mubr.bf16.mxu0 0
      %1201 = vmatmul.mubr.bf16.gmra.mrb[0].mxu0 %v798
      %v1202 = vpop.f32.mrb[0].mxu0
      %v1203 = vadd.f32 %v364, %v1202
      %v1204 = vpop.f32.mrb[0].mxu0
      %v1205 = vpop.f32.mrb[0].mxu0
      %v1206 = vadd.f32 %v364, %v1205
      %v1207 = vpop.f32.mrb[0].mxu0
      %1208 = vmatprep.mubr.bf16.mxu0 0
      %1209 = vmatmul.mubr.bf16.gmra.mrb[0].mxu0 %v801
      %v1210 = vpop.f32.mrb[0].mxu0
      %v1211 = vadd.f32 %v364, %v1210
      %v1212 = vpop.f32.mrb[0].mxu0
      %v1213 = vpop.f32.mrb[0].mxu0
      %v1214 = vadd.f32 %v364, %v1213
      %v1215 = vpop.f32.mrb[0].mxu0
      %1216 = vmatprep.mubr.bf16.mxu0 0
      %1217 = vmatmul.mubr.bf16.gmra.mrb[0].mxu0 %v804
      %v1218 = vpop.f32.mrb[0].mxu0
      %v1219 = vadd.f32 %v364, %v1218
      %v1220 = vpop.f32.mrb[0].mxu0
      %v1221 = vpop.f32.mrb[0].mxu0
      %v1222 = vadd.f32 %v364, %v1221
      %v1223 = vpop.f32.mrb[0].mxu0
      %1224 = vmatprep.mubr.bf16.mxu0 0
      %1225 = vmatmul.mubr.bf16.gmra.mrb[0].mxu0 %v807
      %v1226 = vpop.f32.mrb[0].mxu0
      %v1227 = vadd.f32 %v364, %v1226
      %v1228 = vpop.f32.mrb[0].mxu0
      %v1229 = vpop.f32.mrb[0].mxu0
      %v1230 = vadd.f32 %v364, %v1229
      %v1231 = vpop.f32.mrb[0].mxu0
      %1232 = vmatprep.mubr.bf16.mxu0 0
      %1233 = vmatmul.mubr.bf16.gmra.mrb[0].mxu0 %v810
      %v1234 = vpop.f32.mrb[0].mxu0
      %v1235 = vadd.f32 %v364, %v1234
      %v1236 = vpop.f32.mrb[0].mxu0
      %v1237 = vpop.f32.mrb[0].mxu0
      %v1238 = vadd.f32 %v364, %v1237
      %v1239 = vpop.f32.mrb[0].mxu0
      %1240 = vmatprep.mubr.bf16.mxu0 0
      %1241 = vmatmul.mubr.bf16.gmra.mrb[0].mxu0 %v813
      %v1242 = vpop.f32.mrb[0].mxu0
      %v1243 = vadd.f32 %v364, %v1242
      %v1244 = vpop.f32.mrb[0].mxu0
      %v1245 = vpop.f32.mrb[0].mxu0
      %v1246 = vadd.f32 %v364, %v1245
      %v1247 = vpop.f32.mrb[0].mxu0
      %1248 = vmatprep.mubr.bf16.mxu0 0
      %1249 = vmatmul.mubr.bf16.gmra.mrb[0].mxu0 %v816
      %v1250 = vpop.f32.mrb[0].mxu0
      %v1251 = vadd.f32 %v364, %v1250
      %v1252 = vpop.f32.mrb[0].mxu0
      %v1253 = vpop.f32.mrb[0].mxu0
      %v1254 = vadd.f32 %v364, %v1253
      %v1255 = vpop.f32.mrb[0].mxu0
      %1256 = vmatprep.mubr.bf16.mxu0 0
      %1257 = vmatmul.mubr.bf16.gmra.mrb[0].mxu0 %v819
      %v1258 = vpop.f32.mrb[0].mxu0
      %v1259 = vadd.f32 %v364, %v1258
      %v1260 = vpop.f32.mrb[0].mxu0
      %v1261 = vpop.f32.mrb[0].mxu0
      %v1262 = vadd.f32 %v364, %v1261
      %v1263 = vpop.f32.mrb[0].mxu0
      %1264 = vmatprep.mubr.bf16.mxu0 0
      %1265 = vmatmul.mubr.bf16.gmra.mrb[0].mxu0 %v822
      %v1266 = vpop.f32.mrb[0].mxu0
      %v1267 = vadd.f32 %v364, %v1266
      %v1268 = vpop.f32.mrb[0].mxu0
      %v1269 = vpop.f32.mrb[0].mxu0
      %v1270 = vadd.f32 %v364, %v1269
      %v1271 = vpop.f32.mrb[0].mxu0
      %1272 = vmatprep.mubr.bf16.mxu0 0
      %1273 = vmatmul.mubr.bf16.gmra.mrb[0].mxu0 %v825
      %v1274 = vpop.f32.mrb[0].mxu0
      %v1275 = vadd.f32 %v364, %v1274
      %v1276 = vpop.f32.mrb[0].mxu0
      %v1277 = vpop.f32.mrb[0].mxu0
      %v1278 = vadd.f32 %v364, %v1277
      %v1279 = vpop.f32.mrb[0].mxu0
      %1280 = vmatprep.mubr.bf16.mxu0 0
      %1281 = vmatmul.mubr.bf16.gmra.mrb[0].mxu0 %v828
      %v1282 = vpop.f32.mrb[0].mxu0
      %v1283 = vadd.f32 %v364, %v1282
      %v1284 = vpop.f32.mrb[0].mxu0
      %v1285 = vpop.f32.mrb[0].mxu0
      %v1286 = vadd.f32 %v364, %v1285
      %v1287 = vpop.f32.mrb[0].mxu0
      %1288 = vmatprep.mubr.bf16.mxu0 0
      %1289 = vmatmul.mubr.bf16.gmra.mrb[0].mxu0 %v831
      %v1290 = vpop.f32.mrb[0].mxu0
      %v1291 = vadd.f32 %v364, %v1290
      %v1292 = vpop.f32.mrb[0].mxu0
      %v1293 = vpop.f32.mrb[0].mxu0
      %v1294 = vadd.f32 %v364, %v1293
      %v1295 = vpop.f32.mrb[0].mxu0
      %1296 = vmatprep.mubr.bf16.mxu0 0
      %1297 = vmatmul.mubr.bf16.gmra.mrb[0].mxu0 %v834
      %v1298 = vpop.f32.mrb[0].mxu0
      %v1299 = vadd.f32 %v364, %v1298
      %v1300 = vpop.f32.mrb[0].mxu0
      %v1301 = vpop.f32.mrb[0].mxu0
      %v1302 = vadd.f32 %v364, %v1301
      %v1303 = vpop.f32.mrb[0].mxu0
      %1304 = vmatprep.mubr.bf16.mxu0 0
      %1305 = vmatmul.mubr.bf16.gmra.mrb[0].mxu0 %v837
      %v1306 = vpop.f32.mrb[0].mxu0
      %v1307 = vadd.f32 %v364, %v1306
      %v1308 = vpop.f32.mrb[0].mxu0
      %v1309 = vpop.f32.mrb[0].mxu0
      %v1310 = vadd.f32 %v364, %v1309
      %v1311 = vpop.f32.mrb[0].mxu0
      %1312 = vmatprep.mubr.bf16.mxu0 0
      %1313 = vmatmul.mubr.bf16.gmra.mrb[0].mxu0 %v840
      %v1314 = vpop.f32.mrb[0].mxu0
      %v1315 = vadd.f32 %v364, %v1314
      %v1316 = vpop.f32.mrb[0].mxu0
      %v1317 = vpop.f32.mrb[0].mxu0
      %v1318 = vadd.f32 %v364, %v1317
      %v1319 = vpop.f32.mrb[0].mxu0
      %1320 = vmatprep.mubr.bf16.mxu0 0
      %1321 = vmatmul.mubr.bf16.gmra.mrb[0].mxu0 %v843
      %v1322 = vpop.f32.mrb[0].mxu0
      %v1323 = vadd.f32 %v364, %v1322
      %v1324 = vpop.f32.mrb[0].mxu0
      %v1325 = vpop.f32.mrb[0].mxu0
      %v1326 = vadd.f32 %v364, %v1325
      %v1327 = vpop.f32.mrb[0].mxu0
      %1328 = vmatprep.mubr.bf16.mxu0 0
      %1329 = vmatmul.mubr.bf16.gmra.mrb[0].mxu0 %v846
      %v1330 = vpop.f32.mrb[0].mxu0
      %v1331 = vadd.f32 %v364, %v1330
      %v1332 = vpop.f32.mrb[0].mxu0
      %v1333 = vpop.f32.mrb[0].mxu0
      %v1334 = vadd.f32 %v364, %v1333
      %v1335 = vpop.f32.mrb[0].mxu0
      %1336 = vmatprep.mubr.bf16.mxu0 0
      %1337 = vmatmul.mubr.bf16.gmra.mrb[0].mxu0 %v849
      %v1338 = vpop.f32.mrb[0].mxu0
      %v1339 = vadd.f32 %v364, %v1338
      %v1340 = vpop.f32.mrb[0].mxu0
      %v1341 = vpop.f32.mrb[0].mxu0
      %v1342 = vadd.f32 %v364, %v1341
      %v1343 = vpop.f32.mrb[0].mxu0
      %1344 = vmatprep.mubr.bf16.mxu0 0
      %1345 = vmatmul.mubr.bf16.gmra.mrb[0].mxu0 %v852
      %v1346 = vpop.f32.mrb[0].mxu0
      %v1347 = vadd.f32 %v364, %v1346
      %v1348 = vpop.f32.mrb[0].mxu0
      %v1349 = vpop.f32.mrb[0].mxu0
      %v1350 = vadd.f32 %v364, %v1349
      %v1351 = vpop.f32.mrb[0].mxu0
      %1352 = vmatprep.mubr.bf16.mxu0 0
      %1353 = vmatmul.mubr.bf16.gmra.mrb[0].mxu0 %v855
      %v1354 = vpop.f32.mrb[0].mxu0
      %v1355 = vadd.f32 %v364, %v1354
      %v1356 = vpop.f32.mrb[0].mxu0
      %v1357 = vpop.f32.mrb[0].mxu0
      %v1358 = vadd.f32 %v364, %v1357
      %v1359 = vpop.f32.mrb[0].mxu0
      %1360 = vmatprep.mubr.bf16.mxu0 0
      %1361 = vmatmul.mubr.bf16.gmra.mrb[0].mxu0 %v858
      %v1362 = vpop.f32.mrb[0].mxu0
      %v1363 = vadd.f32 %v364, %v1362
      %v1364 = vpop.f32.mrb[0].mxu0
      %v1365 = vpop.f32.mrb[0].mxu0
      %v1366 = vadd.f32 %v364, %v1365
      %v1367 = vpop.f32.mrb[0].mxu0
      %1368 = vmatprep.mubr.bf16.mxu0 0
      %1369 = vmatmul.mubr.bf16.gmra.mrb[0].mxu0 %v861
      %v1370 = vpop.f32.mrb[0].mxu0
      %v1371 = vadd.f32 %v364, %v1370
      %v1372 = vpop.f32.mrb[0].mxu0
      %v1373 = vpop.f32.mrb[0].mxu0
      %v1374 = vadd.f32 %v364, %v1373
      %v1375 = vpop.f32.mrb[0].mxu0
      %1376 = vmatprep.mubr.bf16.mxu0 0
      %1377 = vmatmul.mubr.bf16.gmra.mrb[0].mxu0 %v864
      %v1378 = vpop.f32.mrb[0].mxu0
      %v1379 = vadd.f32 %v364, %v1378
      %v1380 = vpop.f32.mrb[0].mxu0
      %v1381 = vpop.f32.mrb[0].mxu0
      %v1382 = vadd.f32 %v364, %v1381
      %v1383 = vpop.f32.mrb[0].mxu0
      %1384 = vmatprep.mubr.bf16.mxu0 0
      %1385 = vmatmul.mubr.bf16.gmra.mrb[0].mxu0 %v867
      %v1386 = vpop.f32.mrb[0].mxu0
      %v1387 = vadd.f32 %v364, %v1386
      %v1388 = vpop.f32.mrb[0].mxu0
      %v1389 = vpop.f32.mrb[0].mxu0
      %v1390 = vadd.f32 %v364, %v1389
      %v1391 = vpop.f32.mrb[0].mxu0
      %1392 = vmatprep.mubr.bf16.mxu0 0
      %1393 = vmatmul.mubr.bf16.gmra.mrb[0].mxu0 %v870
      %v1394 = vpop.f32.mrb[0].mxu0
      %v1395 = vadd.f32 %v364, %v1394
      %v1396 = vpop.f32.mrb[0].mxu0
      %v1397 = vpop.f32.mrb[0].mxu0
      %v1398 = vadd.f32 %v364, %v1397
      %v1399 = vpop.f32.mrb[0].mxu0
      %1400 = vmatprep.mubr.bf16.mxu0 0
      %1401 = vmatmul.mubr.bf16.gmra.mrb[0].mxu0 %v873
      %v1402 = vpop.f32.mrb[0].mxu0
      %v1403 = vadd.f32 %v364, %v1402
      %v1404 = vpop.f32.mrb[0].mxu0
      %v1405 = vpop.f32.mrb[0].mxu0
      %v1406 = vadd.f32 %v364, %v1405
      %v1407 = vpop.f32.mrb[0].mxu0
      %1408 = vmatprep.mubr.bf16.mxu0 0
      %1409 = vmatmul.mubr.bf16.gmra.mrb[0].mxu0 %v876
      %v1410 = vpop.f32.mrb[0].mxu0
      %v1411 = vadd.f32 %v364, %v1410
      %v1412 = vpop.f32.mrb[0].mxu0
      %v1413 = vpop.f32.mrb[0].mxu0
      %v1414 = vadd.f32 %v364, %v1413
      %v1415 = vpop.f32.mrb[0].mxu0
      %1416 = vmatprep.mubr.bf16.mxu0 0
      %1417 = vmatmul.mubr.bf16.gmra.mrb[0].mxu0 %v879
      %v1418 = vpop.f32.mrb[0].mxu0
      %v1419 = vadd.f32 %v364, %v1418
      %v1420 = vpop.f32.mrb[0].mxu0
      %v1421 = vpop.f32.mrb[0].mxu0
      %v1422 = vadd.f32 %v364, %v1421
      %v1423 = vpop.f32.mrb[0].mxu0
      %1424 = vmatprep.mubr.bf16.mxu0 0
      %1425 = vmatmul.mubr.bf16.gmra.mrb[0].mxu0 %v882
      %v1426 = vpop.f32.mrb[0].mxu0
      %v1427 = vadd.f32 %v364, %v1426
      %v1428 = vpop.f32.mrb[0].mxu0
      %v1429 = vpop.f32.mrb[0].mxu0
      %v1430 = vadd.f32 %v364, %v1429
      %v1431 = vpop.f32.mrb[0].mxu0
      %1432 = vdwg.mxu0
      %vm1433 = vcmp.ge.f32.partialorder %v923, 0.0
      %vm1434 = vcmp.ge.f32.partialorder %v926, 0.0
      %vm1435 = vcmp.ge.f32.partialorder %v931, 0.0
      %vm1436 = vcmp.ge.f32.partialorder %v934, 0.0
      %vm1437 = vcmp.ge.f32.partialorder %v939, 0.0
      %vm1438 = vcmp.ge.f32.partialorder %v942, 0.0
      %vm1439 = vcmp.ge.f32.partialorder %v947, 0.0
      %vm1440 = vcmp.ge.f32.partialorder %v950, 0.0
      %vm1441 = vcmp.ge.f32.partialorder %v955, 0.0
      %vm1442 = vcmp.ge.f32.partialorder %v958, 0.0
      %vm1443 = vcmp.ge.f32.partialorder %v963, 0.0
      %vm1444 = vcmp.ge.f32.partialorder %v966, 0.0
      %vm1445 = vcmp.ge.f32.partialorder %v971, 0.0
      %vm1446 = vcmp.ge.f32.partialorder %v974, 0.0
      %vm1447 = vcmp.ge.f32.partialorder %v979, 0.0
      %vm1448 = vcmp.ge.f32.partialorder %v982, 0.0
      %vm1449 = vcmp.ge.f32.partialorder %v987, 0.0
      %vm1450 = vcmp.ge.f32.partialorder %v990, 0.0
      %vm1451 = vcmp.ge.f32.partialorder %v995, 0.0
      %vm1452 = vcmp.ge.f32.partialorder %v998, 0.0
      %vm1453 = vcmp.ge.f32.partialorder %v1003, 0.0
      %vm1454 = vcmp.ge.f32.partialorder %v1006, 0.0
      %vm1455 = vcmp.ge.f32.partialorder %v1011, 0.0
      %vm1456 = vcmp.ge.f32.partialorder %v1014, 0.0
      %vm1457 = vcmp.ge.f32.partialorder %v1019, 0.0
      %vm1458 = vcmp.ge.f32.partialorder %v1022, 0.0
      %vm1459 = vcmp.ge.f32.partialorder %v1027, 0.0
      %vm1460 = vcmp.ge.f32.partialorder %v1030, 0.0
      %vm1461 = vcmp.ge.f32.partialorder %v1035, 0.0
      %vm1462 = vcmp.ge.f32.partialorder %v1038, 0.0
      %vm1463 = vcmp.ge.f32.partialorder %v1043, 0.0
      %vm1464 = vcmp.ge.f32.partialorder %v1046, 0.0
      %vm1465 = vcmp.ge.f32.partialorder %v1051, 0.0
      %vm1466 = vcmp.ge.f32.partialorder %v1054, 0.0
      %vm1467 = vcmp.ge.f32.partialorder %v1059, 0.0
      %vm1468 = vcmp.ge.f32.partialorder %v1062, 0.0
      %vm1469 = vcmp.ge.f32.partialorder %v1067, 0.0
      %vm1470 = vcmp.ge.f32.partialorder %v1070, 0.0
      %vm1471 = vcmp.ge.f32.partialorder %v1075, 0.0
      %vm1472 = vcmp.ge.f32.partialorder %v1078, 0.0
      %vm1473 = vcmp.ge.f32.partialorder %v1083, 0.0
      %vm1474 = vcmp.ge.f32.partialorder %v1086, 0.0
      %vm1475 = vcmp.ge.f32.partialorder %v1091, 0.0
      %vm1476 = vcmp.ge.f32.partialorder %v1094, 0.0
      %vm1477 = vcmp.ge.f32.partialorder %v1099, 0.0
      %vm1478 = vcmp.ge.f32.partialorder %v1102, 0.0
      %vm1479 = vcmp.ge.f32.partialorder %v1107, 0.0
      %vm1480 = vcmp.ge.f32.partialorder %v1110, 0.0
      %vm1481 = vcmp.ge.f32.partialorder %v1115, 0.0
      %vm1482 = vcmp.ge.f32.partialorder %v1118, 0.0
      %vm1483 = vcmp.ge.f32.partialorder %v1123, 0.0
      %vm1484 = vcmp.ge.f32.partialorder %v1126, 0.0
      %vm1485 = vcmp.ge.f32.partialorder %v1131, 0.0
      %vm1486 = vcmp.ge.f32.partialorder %v1134, 0.0
      %vm1487 = vcmp.ge.f32.partialorder %v1139, 0.0
      %vm1488 = vcmp.ge.f32.partialorder %v1142, 0.0
      %vm1489 = vcmp.ge.f32.partialorder %v1147, 0.0
      %vm1490 = vcmp.ge.f32.partialorder %v1150, 0.0
      %vm1491 = vcmp.ge.f32.partialorder %v1155, 0.0
      %vm1492 = vcmp.ge.f32.partialorder %v1158, 0.0
      %vm1493 = vcmp.ge.f32.partialorder %v1163, 0.0
      %vm1494 = vcmp.ge.f32.partialorder %v1166, 0.0
      %vm1495 = vcmp.ge.f32.partialorder %v1171, 0.0
      %vm1496 = vcmp.ge.f32.partialorder %v1174, 0.0
      %vm1497 = vcmp.ge.f32.partialorder %v1179, 0.0
      %vm1498 = vcmp.ge.f32.partialorder %v1182, 0.0
      %vm1499 = vcmp.ge.f32.partialorder %v1187, 0.0
      %vm1500 = vcmp.ge.f32.partialorder %v1190, 0.0
      %vm1501 = vcmp.ge.f32.partialorder %v1195, 0.0
      %vm1502 = vcmp.ge.f32.partialorder %v1198, 0.0
      %vm1503 = vcmp.ge.f32.partialorder %v1203, 0.0
      %vm1504 = vcmp.ge.f32.partialorder %v1206, 0.0
      %vm1505 = vcmp.ge.f32.partialorder %v1211, 0.0
      %vm1506 = vcmp.ge.f32.partialorder %v1214, 0.0
      %vm1507 = vcmp.ge.f32.partialorder %v1219, 0.0
      %vm1508 = vcmp.ge.f32.partialorder %v1222, 0.0
      %vm1509 = vcmp.ge.f32.partialorder %v1227, 0.0
      %vm1510 = vcmp.ge.f32.partialorder %v1230, 0.0
      %vm1511 = vcmp.ge.f32.partialorder %v1235, 0.0
      %vm1512 = vcmp.ge.f32.partialorder %v1238, 0.0
      %vm1513 = vcmp.ge.f32.partialorder %v1243, 0.0
      %vm1514 = vcmp.ge.f32.partialorder %v1246, 0.0
      %vm1515 = vcmp.ge.f32.partialorder %v1251, 0.0
      %vm1516 = vcmp.ge.f32.partialorder %v1254, 0.0
      %vm1517 = vcmp.ge.f32.partialorder %v1259, 0.0
      %vm1518 = vcmp.ge.f32.partialorder %v1262, 0.0
      %vm1519 = vcmp.ge.f32.partialorder %v1267, 0.0
      %vm1520 = vcmp.ge.f32.partialorder %v1270, 0.0
      %vm1521 = vcmp.ge.f32.partialorder %v1275, 0.0
      %vm1522 = vcmp.ge.f32.partialorder %v1278, 0.0
      %vm1523 = vcmp.ge.f32.partialorder %v1283, 0.0
      %vm1524 = vcmp.ge.f32.partialorder %v1286, 0.0
      %vm1525 = vcmp.ge.f32.partialorder %v1291, 0.0
      %vm1526 = vcmp.ge.f32.partialorder %v1294, 0.0
      %vm1527 = vcmp.ge.f32.partialorder %v1299, 0.0
      %vm1528 = vcmp.ge.f32.partialorder %v1302, 0.0
      %vm1529 = vcmp.ge.f32.partialorder %v1307, 0.0
      %vm1530 = vcmp.ge.f32.partialorder %v1310, 0.0
      %vm1531 = vcmp.ge.f32.partialorder %v1315, 0.0
      %vm1532 = vcmp.ge.f32.partialorder %v1318, 0.0
      %vm1533 = vcmp.ge.f32.partialorder %v1323, 0.0
      %vm1534 = vcmp.ge.f32.partialorder %v1326, 0.0
      %vm1535 = vcmp.ge.f32.partialorder %v1331, 0.0
      %vm1536 = vcmp.ge.f32.partialorder %v1334, 0.0
      %vm1537 = vcmp.ge.f32.partialorder %v1339, 0.0
      %vm1538 = vcmp.ge.f32.partialorder %v1342, 0.0
      %vm1539 = vcmp.ge.f32.partialorder %v1347, 0.0
      %vm1540 = vcmp.ge.f32.partialorder %v1350, 0.0
      %vm1541 = vcmp.ge.f32.partialorder %v1355, 0.0
      %vm1542 = vcmp.ge.f32.partialorder %v1358, 0.0
      %vm1543 = vcmp.ge.f32.partialorder %v1363, 0.0
      %vm1544 = vcmp.ge.f32.partialorder %v1366, 0.0
      %vm1545 = vcmp.ge.f32.partialorder %v1371, 0.0
      %vm1546 = vcmp.ge.f32.partialorder %v1374, 0.0
      %vm1547 = vcmp.ge.f32.partialorder %v1379, 0.0
      %vm1548 = vcmp.ge.f32.partialorder %v1382, 0.0
      %vm1549 = vcmp.ge.f32.partialorder %v1387, 0.0
      %vm1550 = vcmp.ge.f32.partialorder %v1390, 0.0
      %vm1551 = vcmp.ge.f32.partialorder %v1395, 0.0
      %vm1552 = vcmp.ge.f32.partialorder %v1398, 0.0
      %vm1553 = vcmp.ge.f32.partialorder %v1403, 0.0
      %vm1554 = vcmp.ge.f32.partialorder %v1406, 0.0
      %vm1555 = vcmp.ge.f32.partialorder %v1411, 0.0
      %vm1556 = vcmp.ge.f32.partialorder %v1414, 0.0
      %vm1557 = vcmp.ge.f32.partialorder %v1419, 0.0
      %vm1558 = vcmp.ge.f32.partialorder %v1422, 0.0
      %vm1559 = vcmp.ge.f32.partialorder %v1427, 0.0
      %vm1560 = vcmp.ge.f32.partialorder %v1430, 0.0
      %v1561 = vmul.f32 %v923, 0.01
      %v1562 = vmul.f32 %v926, 0.01
      %v1563 = vmul.f32 %v931, 0.01
      %v1564 = vmul.f32 %v934, 0.01
      %v1565 = vmul.f32 %v939, 0.01
      %v1566 = vmul.f32 %v942, 0.01
      %v1567 = vmul.f32 %v947, 0.01
      %v1568 = vmul.f32 %v950, 0.01
      %v1569 = vmul.f32 %v955, 0.01
      %v1570 = vmul.f32 %v958, 0.01
      %v1571 = vmul.f32 %v963, 0.01
      %v1572 = vmul.f32 %v966, 0.01
      %v1573 = vmul.f32 %v971, 0.01
      %v1574 = vmul.f32 %v974, 0.01
      %v1575 = vmul.f32 %v979, 0.01
      %v1576 = vmul.f32 %v982, 0.01
      %v1577 = vmul.f32 %v987, 0.01
      %v1578 = vmul.f32 %v990, 0.01
      %v1579 = vmul.f32 %v995, 0.01
      %v1580 = vmul.f32 %v998, 0.01
      %v1581 = vmul.f32 %v1003, 0.01
      %v1582 = vmul.f32 %v1006, 0.01
      %v1583 = vmul.f32 %v1011, 0.01
      %v1584 = vmul.f32 %v1014, 0.01
      %v1585 = vmul.f32 %v1019, 0.01
      %v1586 = vmul.f32 %v1022, 0.01
      %v1587 = vmul.f32 %v1027, 0.01
      %v1588 = vmul.f32 %v1030, 0.01
      %v1589 = vmul.f32 %v1035, 0.01
      %v1590 = vmul.f32 %v1038, 0.01
      %v1591 = vmul.f32 %v1043, 0.01
      %v1592 = vmul.f32 %v1046, 0.01
      %v1593 = vmul.f32 %v1051, 0.01
      %v1594 = vmul.f32 %v1054, 0.01
      %v1595 = vmul.f32 %v1059, 0.01
      %v1596 = vmul.f32 %v1062, 0.01
      %v1597 = vmul.f32 %v1067, 0.01
      %v1598 = vmul.f32 %v1070, 0.01
      %v1599 = vmul.f32 %v1075, 0.01
      %v1600 = vmul.f32 %v1078, 0.01
      %v1601 = vmul.f32 %v1083, 0.01
      %v1602 = vmul.f32 %v1086, 0.01
      %v1603 = vmul.f32 %v1091, 0.01
      %v1604 = vmul.f32 %v1094, 0.01
      %v1605 = vmul.f32 %v1099, 0.01
      %v1606 = vmul.f32 %v1102, 0.01
      %v1607 = vmul.f32 %v1107, 0.01
      %v1608 = vmul.f32 %v1110, 0.01
      %v1609 = vmul.f32 %v1115, 0.01
      %v1610 = vmul.f32 %v1118, 0.01
      %v1611 = vmul.f32 %v1123, 0.01
      %v1612 = vmul.f32 %v1126, 0.01
      %v1613 = vmul.f32 %v1131, 0.01
      %v1614 = vmul.f32 %v1134, 0.01
      %v1615 = vmul.f32 %v1139, 0.01
      %v1616 = vmul.f32 %v1142, 0.01
      %v1617 = vmul.f32 %v1147, 0.01
      %v1618 = vmul.f32 %v1150, 0.01
      %v1619 = vmul.f32 %v1155, 0.01
      %v1620 = vmul.f32 %v1158, 0.01
      %v1621 = vmul.f32 %v1163, 0.01
      %v1622 = vmul.f32 %v1166, 0.01
      %v1623 = vmul.f32 %v1171, 0.01
      %v1624 = vmul.f32 %v1174, 0.01
      %v1625 = vmul.f32 %v1179, 0.01
      %v1626 = vmul.f32 %v1182, 0.01
      %v1627 = vmul.f32 %v1187, 0.01
      %v1628 = vmul.f32 %v1190, 0.01
      %v1629 = vmul.f32 %v1195, 0.01
      %v1630 = vmul.f32 %v1198, 0.01
      %v1631 = vmul.f32 %v1203, 0.01
      %v1632 = vmul.f32 %v1206, 0.01
      %v1633 = vmul.f32 %v1211, 0.01
      %v1634 = vmul.f32 %v1214, 0.01
      %v1635 = vmul.f32 %v1219, 0.01
      %v1636 = vmul.f32 %v1222, 0.01
      %v1637 = vmul.f32 %v1227, 0.01
      %v1638 = vmul.f32 %v1230, 0.01
      %v1639 = vmul.f32 %v1235, 0.01
      %v1640 = vmul.f32 %v1238, 0.01
      %v1641 = vmul.f32 %v1243, 0.01
      %v1642 = vmul.f32 %v1246, 0.01
      %v1643 = vmul.f32 %v1251, 0.01
      %v1644 = vmul.f32 %v1254, 0.01
      %v1645 = vmul.f32 %v1259, 0.01
      %v1646 = vmul.f32 %v1262, 0.01
      %v1647 = vmul.f32 %v1267, 0.01
      %v1648 = vmul.f32 %v1270, 0.01
      %v1649 = vmul.f32 %v1275, 0.01
      %v1650 = vmul.f32 %v1278, 0.01
      %v1651 = vmul.f32 %v1283, 0.01
      %v1652 = vmul.f32 %v1286, 0.01
      %v1653 = vmul.f32 %v1291, 0.01
      %v1654 = vmul.f32 %v1294, 0.01
      %v1655 = vmul.f32 %v1299, 0.01
      %v1656 = vmul.f32 %v1302, 0.01
      %v1657 = vmul.f32 %v1307, 0.01
      %v1658 = vmul.f32 %v1310, 0.01
      %v1659 = vmul.f32 %v1315, 0.01
      %v1660 = vmul.f32 %v1318, 0.01
      %v1661 = vmul.f32 %v1323, 0.01
      %v1662 = vmul.f32 %v1326, 0.01
      %v1663 = vmul.f32 %v1331, 0.01
      %v1664 = vmul.f32 %v1334, 0.01
      %v1665 = vmul.f32 %v1339, 0.01
      %v1666 = vmul.f32 %v1342, 0.01
      %v1667 = vmul.f32 %v1347, 0.01
      %v1668 = vmul.f32 %v1350, 0.01
      %v1669 = vmul.f32 %v1355, 0.01
      %v1670 = vmul.f32 %v1358, 0.01
      %v1671 = vmul.f32 %v1363, 0.01
      %v1672 = vmul.f32 %v1366, 0.01
      %v1673 = vmul.f32 %v1371, 0.01
      %v1674 = vmul.f32 %v1374, 0.01
      %v1675 = vmul.f32 %v1379, 0.01
      %v1676 = vmul.f32 %v1382, 0.01
      %v1677 = vmul.f32 %v1387, 0.01
      %v1678 = vmul.f32 %v1390, 0.01
      %v1679 = vmul.f32 %v1395, 0.01
      %v1680 = vmul.f32 %v1398, 0.01
      %v1681 = vmul.f32 %v1403, 0.01
      %v1682 = vmul.f32 %v1406, 0.01
      %v1683 = vmul.f32 %v1411, 0.01
      %v1684 = vmul.f32 %v1414, 0.01
      %v1685 = vmul.f32 %v1419, 0.01
      %v1686 = vmul.f32 %v1422, 0.01
      %v1687 = vmul.f32 %v1427, 0.01
      %v1688 = vmul.f32 %v1430, 0.01
      %v1689 = vsel %vm1433, %v923, %v1561
      %v1690 = vsel %vm1434, %v926, %v1562
      %v1691 = vsel %vm1435, %v931, %v1563
      %v1692 = vsel %vm1436, %v934, %v1564
      %v1693 = vsel %vm1437, %v939, %v1565
      %v1694 = vsel %vm1438, %v942, %v1566
      %v1695 = vsel %vm1439, %v947, %v1567
      %v1696 = vsel %vm1440, %v950, %v1568
      %v1697 = vsel %vm1441, %v955, %v1569
      %v1698 = vsel %vm1442, %v958, %v1570
      %v1699 = vsel %vm1443, %v963, %v1571
      %v1700 = vsel %vm1444, %v966, %v1572
      %v1701 = vsel %vm1445, %v971, %v1573
      %v1702 = vsel %vm1446, %v974, %v1574
      %v1703 = vsel %vm1447, %v979, %v1575
      %v1704 = vsel %vm1448, %v982, %v1576
      %v1705 = vsel %vm1449, %v987, %v1577
      %v1706 = vsel %vm1450, %v990, %v1578
      %v1707 = vsel %vm1451, %v995, %v1579
      %v1708 = vsel %vm1452, %v998, %v1580
      %v1709 = vsel %vm1453, %v1003, %v1581
      %v1710 = vsel %vm1454, %v1006, %v1582
      %v1711 = vsel %vm1455, %v1011, %v1583
      %v1712 = vsel %vm1456, %v1014, %v1584
      %v1713 = vsel %vm1457, %v1019, %v1585
      %v1714 = vsel %vm1458, %v1022, %v1586
      %v1715 = vsel %vm1459, %v1027, %v1587
      %v1716 = vsel %vm1460, %v1030, %v1588
      %v1717 = vsel %vm1461, %v1035, %v1589
      %v1718 = vsel %vm1462, %v1038, %v1590
      %v1719 = vsel %vm1463, %v1043, %v1591
      %v1720 = vsel %vm1464, %v1046, %v1592
      %v1721 = vsel %vm1465, %v1051, %v1593
      %v1722 = vsel %vm1466, %v1054, %v1594
      %v1723 = vsel %vm1467, %v1059, %v1595
      %v1724 = vsel %vm1468, %v1062, %v1596
      %v1725 = vsel %vm1469, %v1067, %v1597
      %v1726 = vsel %vm1470, %v1070, %v1598
      %v1727 = vsel %vm1471, %v1075, %v1599
      %v1728 = vsel %vm1472, %v1078, %v1600
      %v1729 = vsel %vm1473, %v1083, %v1601
      %v1730 = vsel %vm1474, %v1086, %v1602
      %v1731 = vsel %vm1475, %v1091, %v1603
      %v1732 = vsel %vm1476, %v1094, %v1604
      %v1733 = vsel %vm1477, %v1099, %v1605
      %v1734 = vsel %vm1478, %v1102, %v1606
      %v1735 = vsel %vm1479, %v1107, %v1607
      %v1736 = vsel %vm1480, %v1110, %v1608
      %v1737 = vsel %vm1481, %v1115, %v1609
      %v1738 = vsel %vm1482, %v1118, %v1610
      %v1739 = vsel %vm1483, %v1123, %v1611
      %v1740 = vsel %vm1484, %v1126, %v1612
      %v1741 = vsel %vm1485, %v1131, %v1613
      %v1742 = vsel %vm1486, %v1134, %v1614
      %v1743 = vsel %vm1487, %v1139, %v1615
      %v1744 = vsel %vm1488, %v1142, %v1616
      %v1745 = vsel %vm1489, %v1147, %v1617
      %v1746 = vsel %vm1490, %v1150, %v1618
      %v1747 = vsel %vm1491, %v1155, %v1619
      %v1748 = vsel %vm1492, %v1158, %v1620
      %v1749 = vsel %vm1493, %v1163, %v1621
      %v1750 = vsel %vm1494, %v1166, %v1622
      %v1751 = vsel %vm1495, %v1171, %v1623
      %v1752 = vsel %vm1496, %v1174, %v1624
      %v1753 = vsel %vm1497, %v1179, %v1625
      %v1754 = vsel %vm1498, %v1182, %v1626
      %v1755 = vsel %vm1499, %v1187, %v1627
      %v1756 = vsel %vm1500, %v1190, %v1628
      %v1757 = vsel %vm1501, %v1195, %v1629
      %v1758 = vsel %vm1502, %v1198, %v1630
      %v1759 = vsel %vm1503, %v1203, %v1631
      %v1760 = vsel %vm1504, %v1206, %v1632
      %v1761 = vsel %vm1505, %v1211, %v1633
      %v1762 = vsel %vm1506, %v1214, %v1634
      %v1763 = vsel %vm1507, %v1219, %v1635
      %v1764 = vsel %vm1508, %v1222, %v1636
      %v1765 = vsel %vm1509, %v1227, %v1637
      %v1766 = vsel %vm1510, %v1230, %v1638
      %v1767 = vsel %vm1511, %v1235, %v1639
      %v1768 = vsel %vm1512, %v1238, %v1640
      %v1769 = vsel %vm1513, %v1243, %v1641
      %v1770 = vsel %vm1514, %v1246, %v1642
      %v1771 = vsel %vm1515, %v1251, %v1643
      %v1772 = vsel %vm1516, %v1254, %v1644
      %v1773 = vsel %vm1517, %v1259, %v1645
      %v1774 = vsel %vm1518, %v1262, %v1646
      %v1775 = vsel %vm1519, %v1267, %v1647
      %v1776 = vsel %vm1520, %v1270, %v1648
      %v1777 = vsel %vm1521, %v1275, %v1649
      %v1778 = vsel %vm1522, %v1278, %v1650
      %v1779 = vsel %vm1523, %v1283, %v1651
      %v1780 = vsel %vm1524, %v1286, %v1652
      %v1781 = vsel %vm1525, %v1291, %v1653
      %v1782 = vsel %vm1526, %v1294, %v1654
      %v1783 = vsel %vm1527, %v1299, %v1655
      %v1784 = vsel %vm1528, %v1302, %v1656
      %v1785 = vsel %vm1529, %v1307, %v1657
      %v1786 = vsel %vm1530, %v1310, %v1658
      %v1787 = vsel %vm1531, %v1315, %v1659
      %v1788 = vsel %vm1532, %v1318, %v1660
      %v1789 = vsel %vm1533, %v1323, %v1661
      %v1790 = vsel %vm1534, %v1326, %v1662
      %v1791 = vsel %vm1535, %v1331, %v1663
      %v1792 = vsel %vm1536, %v1334, %v1664
      %v1793 = vsel %vm1537, %v1339, %v1665
      %v1794 = vsel %vm1538, %v1342, %v1666
      %v1795 = vsel %vm1539, %v1347, %v1667
      %v1796 = vsel %vm1540, %v1350, %v1668
      %v1797 = vsel %vm1541, %v1355, %v1669
      %v1798 = vsel %vm1542, %v1358, %v1670
      %v1799 = vsel %vm1543, %v1363, %v1671
      %v1800 = vsel %vm1544, %v1366, %v1672
      %v1801 = vsel %vm1545, %v1371, %v1673
      %v1802 = vsel %vm1546, %v1374, %v1674
      %v1803 = vsel %vm1547, %v1379, %v1675
      %v1804 = vsel %vm1548, %v1382, %v1676
      %v1805 = vsel %vm1549, %v1387, %v1677
      %v1806 = vsel %vm1550, %v1390, %v1678
      %v1807 = vsel %vm1551, %v1395, %v1679
      %v1808 = vsel %vm1552, %v1398, %v1680
      %v1809 = vsel %vm1553, %v1403, %v1681
      %v1810 = vsel %vm1554, %v1406, %v1682
      %v1811 = vsel %vm1555, %v1411, %v1683
      %v1812 = vsel %vm1556, %v1414, %v1684
      %v1813 = vsel %vm1557, %v1419, %v1685
      %v1814 = vsel %vm1558, %v1422, %v1686
      %v1815 = vsel %vm1559, %v1427, %v1687
      %v1816 = vsel %vm1560, %v1430, %v1688
      %v1817 = vpack.c.bf16 %v1690, %v1689
      %v1818 = vpack.c.bf16 %v1692, %v1691
      %v1819 = vpack.c.bf16 %v1694, %v1693
      %v1820 = vpack.c.bf16 %v1696, %v1695
      %v1821 = vpack.c.bf16 %v1698, %v1697
      %v1822 = vpack.c.bf16 %v1700, %v1699
      %v1823 = vpack.c.bf16 %v1702, %v1701
      %v1824 = vpack.c.bf16 %v1704, %v1703
      %v1825 = vpack.c.bf16 %v1706, %v1705
      %v1826 = vpack.c.bf16 %v1708, %v1707
      %v1827 = vpack.c.bf16 %v1710, %v1709
      %v1828 = vpack.c.bf16 %v1712, %v1711
      %v1829 = vpack.c.bf16 %v1714, %v1713
      %v1830 = vpack.c.bf16 %v1716, %v1715
      %v1831 = vpack.c.bf16 %v1718, %v1717
      %v1832 = vpack.c.bf16 %v1720, %v1719
      %v1833 = vpack.c.bf16 %v1722, %v1721
      %v1834 = vpack.c.bf16 %v1724, %v1723
      %v1835 = vpack.c.bf16 %v1726, %v1725
      %v1836 = vpack.c.bf16 %v1728, %v1727
      %v1837 = vpack.c.bf16 %v1730, %v1729
      %v1838 = vpack.c.bf16 %v1732, %v1731
      %v1839 = vpack.c.bf16 %v1734, %v1733
      %v1840 = vpack.c.bf16 %v1736, %v1735
      %v1841 = vpack.c.bf16 %v1738, %v1737
      %v1842 = vpack.c.bf16 %v1740, %v1739
      %v1843 = vpack.c.bf16 %v1742, %v1741
      %v1844 = vpack.c.bf16 %v1744, %v1743
      %v1845 = vpack.c.bf16 %v1746, %v1745
      %v1846 = vpack.c.bf16 %v1748, %v1747
      %v1847 = vpack.c.bf16 %v1750, %v1749
      %v1848 = vpack.c.bf16 %v1752, %v1751
      %v1849 = vpack.c.bf16 %v1754, %v1753
      %v1850 = vpack.c.bf16 %v1756, %v1755
      %v1851 = vpack.c.bf16 %v1758, %v1757
      %v1852 = vpack.c.bf16 %v1760, %v1759
      %v1853 = vpack.c.bf16 %v1762, %v1761
      %v1854 = vpack.c.bf16 %v1764, %v1763
      %v1855 = vpack.c.bf16 %v1766, %v1765
      %v1856 = vpack.c.bf16 %v1768, %v1767
      %v1857 = vpack.c.bf16 %v1770, %v1769
      %v1858 = vpack.c.bf16 %v1772, %v1771
      %v1859 = vpack.c.bf16 %v1774, %v1773
      %v1860 = vpack.c.bf16 %v1776, %v1775
      %v1861 = vpack.c.bf16 %v1778, %v1777
      %v1862 = vpack.c.bf16 %v1780, %v1779
      %v1863 = vpack.c.bf16 %v1782, %v1781
      %v1864 = vpack.c.bf16 %v1784, %v1783
      %v1865 = vpack.c.bf16 %v1786, %v1785
      %v1866 = vpack.c.bf16 %v1788, %v1787
      %v1867 = vpack.c.bf16 %v1790, %v1789
      %v1868 = vpack.c.bf16 %v1792, %v1791
      %v1869 = vpack.c.bf16 %v1794, %v1793
      %v1870 = vpack.c.bf16 %v1796, %v1795
      %v1871 = vpack.c.bf16 %v1798, %v1797
      %v1872 = vpack.c.bf16 %v1800, %v1799
      %v1873 = vpack.c.bf16 %v1802, %v1801
      %v1874 = vpack.c.bf16 %v1804, %v1803
      %v1875 = vpack.c.bf16 %v1806, %v1805
      %v1876 = vpack.c.bf16 %v1808, %v1807
      %v1877 = vpack.c.bf16 %v1810, %v1809
      %v1878 = vpack.c.bf16 %v1812, %v1811
      %v1879 = vpack.c.bf16 %v1814, %v1813
      %v1880 = vpack.c.bf16 %v1816, %v1815
      %v1881 = vld [vmem:[%s3] sm:$0xf]
      %v1882 = vld [vmem:[%s3 + $0x4] sm:$0xf]
      %v1883 = vld [vmem:[%s3 + $0x8] sm:$0xf]
      %v1884 = vld [vmem:[%s3 + $0xc] sm:$0xf]
      %v1885 = vld [vmem:[%s3 + $0x10] sm:$0xf]
      %v1886 = vld [vmem:[%s3 + $0x14] sm:$0xf]
      %v1887 = vld [vmem:[%s3 + $0x18] sm:$0xf]
      %v1888 = vld [vmem:[%s3 + $0x1c] sm:$0xf]
      %v1889 = vld [vmem:[%s4] sm:$0x1]
      %v1891 = vlaneseq
      %v1892 = vshrl.u32 %v1891, 7
      %v1893 = vsub.s32 0, %v1892
      %v1894 = vrot.slane %v1889, %v1893
      %v1904 = vunpack.c.l.b16 %v1881
      %v1905 = vunpack.c.l.b16 %v1882
      %v1906 = vunpack.c.l.b16 %v1883
      %v1907 = vunpack.c.l.b16 %v1884
      %v1908 = vunpack.c.l.b16 %v1885
      %v1909 = vunpack.c.l.b16 %v1886
      %v1910 = vunpack.c.l.b16 %v1887
      %v1911 = vunpack.c.l.b16 %v1888
      %v1912 = vpack.c.b16 %v1905, %v1904
      %v1913 = vpack.c.b16 %v1907, %v1906
      %v1914 = vpack.c.b16 %v1909, %v1908
      %v1915 = vpack.c.b16 %v1911, %v1910
      %vm1920 = vcmask 523264
      %v1922 = vsel %vm1920, %v1817, 0
      %v1925 = vsel %vm1920, %v1818, 0
      %v1928 = vsel %vm1920, %v1819, 0
      %v1931 = vsel %vm1920, %v1820, 0
      %v1934 = vsel %vm1920, %v1821, 0
      %v1937 = vsel %vm1920, %v1822, 0
      %v1940 = vsel %vm1920, %v1823, 0
      %v1943 = vsel %vm1920, %v1824, 0
      %v1946 = vsel %vm1920, %v1825, 0
      %v1949 = vsel %vm1920, %v1826, 0
      %v1952 = vsel %vm1920, %v1827, 0
      %v1955 = vsel %vm1920, %v1828, 0
      %v1958 = vsel %vm1920, %v1829, 0
      %v1961 = vsel %vm1920, %v1830, 0
      %v1964 = vsel %vm1920, %v1831, 0
      %v1967 = vsel %vm1920, %v1832, 0
      %v1970 = vsel %vm1920, %v1833, 0
      %v1973 = vsel %vm1920, %v1834, 0
      %v1976 = vsel %vm1920, %v1835, 0
      %v1979 = vsel %vm1920, %v1836, 0
      %v1982 = vsel %vm1920, %v1837, 0
      %v1985 = vsel %vm1920, %v1838, 0
      %v1988 = vsel %vm1920, %v1839, 0
      %v1991 = vsel %vm1920, %v1840, 0
      %v1994 = vsel %vm1920, %v1841, 0
      %v1997 = vsel %vm1920, %v1842, 0
      %v2000 = vsel %vm1920, %v1843, 0
      %v2003 = vsel %vm1920, %v1844, 0
      %v2006 = vsel %vm1920, %v1845, 0
      %v2009 = vsel %vm1920, %v1846, 0
      %v2012 = vsel %vm1920, %v1847, 0
      %v2015 = vsel %vm1920, %v1848, 0
      %v2018 = vsel %vm1920, %v1849, 0
      %v2021 = vsel %vm1920, %v1850, 0
      %v2024 = vsel %vm1920, %v1851, 0
      %v2027 = vsel %vm1920, %v1852, 0
      %v2030 = vsel %vm1920, %v1853, 0
      %v2033 = vsel %vm1920, %v1854, 0
      %v2036 = vsel %vm1920, %v1855, 0
      %v2039 = vsel %vm1920, %v1856, 0
      %v2042 = vsel %vm1920, %v1857, 0
      %v2045 = vsel %vm1920, %v1858, 0
      %v2048 = vsel %vm1920, %v1859, 0
      %v2051 = vsel %vm1920, %v1860, 0
      %v2054 = vsel %vm1920, %v1861, 0
      %v2057 = vsel %vm1920, %v1862, 0
      %v2060 = vsel %vm1920, %v1863, 0
      %v2063 = vsel %vm1920, %v1864, 0
      %v2066 = vsel %vm1920, %v1865, 0
      %v2069 = vsel %vm1920, %v1866, 0
      %v2072 = vsel %vm1920, %v1867, 0
      %v2075 = vsel %vm1920, %v1868, 0
      %v2078 = vsel %vm1920, %v1869, 0
      %v2081 = vsel %vm1920, %v1870, 0
      %v2084 = vsel %vm1920, %v1871, 0
      %v2087 = vsel %vm1920, %v1872, 0
      %v2090 = vsel %vm1920, %v1873, 0
      %v2093 = vsel %vm1920, %v1874, 0
      %v2096 = vsel %vm1920, %v1875, 0
      %v2099 = vsel %vm1920, %v1876, 0
      %v2102 = vsel %vm1920, %v1877, 0
      %v2105 = vsel %vm1920, %v1878, 0
      %v2108 = vsel %vm1920, %v1879, 0
      %v2111 = vsel %vm1920, %v1880, 0
      %2113 = vmatprep.subr.bf16.mxu0 0
      %2114 = vmatpush1.bf16.msra.mxu0 %v1912
      %2115 = vmatprep.subr.bf16.mxu0 0
      %2116 = vmatpush1.bf16.msra.mxu0 %v1913
      %2117 = vmatprep.subr.bf16.mxu0 0
      %2118 = vmatpush1.bf16.msra.mxu0 %v1914
      %2119 = vmatprep.subr.bf16.mxu0 0
      %2120 = vmatpush1.bf16.msra.mxu0 %v1915
      %2121 = vmatprep.subr.bf16.mxu0 0
      %2122 = vmatpush1.bf16.msra.mxu0 0
      %2123 = vmatprep.subr.bf16.mxu0 0
      %2124 = vmatpush1.bf16.msra.mxu0 0
      %2125 = vmatprep.subr.bf16.mxu0 0
      %2126 = vmatpush1.bf16.msra.mxu0 0
      %2127 = vmatprep.subr.bf16.mxu0 0
      %2128 = vmatpush1.bf16.msra.mxu0 0
      %2129 = vmatprep.subr.bf16.mxu0 0
      %2130 = vmatpush1.bf16.msra.mxu0 0
      %2131 = vmatprep.subr.bf16.mxu0 0
      %2132 = vmatpush1.bf16.msra.mxu0 0
      %2133 = vmatprep.subr.bf16.mxu0 0
      %2134 = vmatpush1.bf16.msra.mxu0 0
      %2135 = vmatprep.subr.bf16.mxu0 0
      %2136 = vmatpush1.bf16.msra.mxu0 0
      %2137 = vmatprep.subr.bf16.mxu0 0
      %2138 = vmatpush1.bf16.msra.mxu0 0
      %2139 = vmatprep.subr.bf16.mxu0 0
      %2140 = vmatpush1.bf16.msra.mxu0 0
      %2141 = vmatprep.subr.bf16.mxu0 0
      %2142 = vmatpush1.bf16.msra.mxu0 0
      %2143 = vmatprep.subr.bf16.mxu0 0
      %2144 = vmatpush1.bf16.msra.mxu0 0
      %2145 = vmatprep.mubr.bf16.mxu0 0
      %2146 = vmatmul.mubr.bf16.gmra.mrb[0].mxu0 %v1922
      %v2147 = vpop.f32.mrb[0].mxu0
      %v2148 = vadd.f32 %v1894, %v2147
      %v2149 = vpop.f32.mrb[0].mxu0
      %v2150 = vpop.f32.mrb[0].mxu0
      %v2151 = vadd.f32 %v1894, %v2150
      %v2152 = vpop.f32.mrb[0].mxu0
      %2153 = vmatprep.mubr.bf16.mxu0 0
      %2154 = vmatmul.mubr.bf16.gmra.mrb[0].mxu0 %v1925
      %v2155 = vpop.f32.mrb[0].mxu0
      %v2156 = vadd.f32 %v1894, %v2155
      %v2157 = vpop.f32.mrb[0].mxu0
      %v2158 = vpop.f32.mrb[0].mxu0
      %v2159 = vadd.f32 %v1894, %v2158
      %v2160 = vpop.f32.mrb[0].mxu0
      %2161 = vmatprep.mubr.bf16.mxu0 0
      %2162 = vmatmul.mubr.bf16.gmra.mrb[0].mxu0 %v1928
      %v2163 = vpop.f32.mrb[0].mxu0
      %v2164 = vadd.f32 %v1894, %v2163
      %v2165 = vpop.f32.mrb[0].mxu0
      %v2166 = vpop.f32.mrb[0].mxu0
      %v2167 = vadd.f32 %v1894, %v2166
      %v2168 = vpop.f32.mrb[0].mxu0
      %2169 = vmatprep.mubr.bf16.mxu0 0
      %2170 = vmatmul.mubr.bf16.gmra.mrb[0].mxu0 %v1931
      %v2171 = vpop.f32.mrb[0].mxu0
      %v2172 = vadd.f32 %v1894, %v2171
      %v2173 = vpop.f32.mrb[0].mxu0
      %v2174 = vpop.f32.mrb[0].mxu0
      %v2175 = vadd.f32 %v1894, %v2174
      %v2176 = vpop.f32.mrb[0].mxu0
      %2177 = vmatprep.mubr.bf16.mxu0 0
      %2178 = vmatmul.mubr.bf16.gmra.mrb[0].mxu0 %v1934
      %v2179 = vpop.f32.mrb[0].mxu0
      %v2180 = vadd.f32 %v1894, %v2179
      %v2181 = vpop.f32.mrb[0].mxu0
      %v2182 = vpop.f32.mrb[0].mxu0
      %v2183 = vadd.f32 %v1894, %v2182
      %v2184 = vpop.f32.mrb[0].mxu0
      %2185 = vmatprep.mubr.bf16.mxu0 0
      %2186 = vmatmul.mubr.bf16.gmra.mrb[0].mxu0 %v1937
      %v2187 = vpop.f32.mrb[0].mxu0
      %v2188 = vadd.f32 %v1894, %v2187
      %v2189 = vpop.f32.mrb[0].mxu0
      %v2190 = vpop.f32.mrb[0].mxu0
      %v2191 = vadd.f32 %v1894, %v2190
      %v2192 = vpop.f32.mrb[0].mxu0
      %2193 = vmatprep.mubr.bf16.mxu0 0
      %2194 = vmatmul.mubr.bf16.gmra.mrb[0].mxu0 %v1940
      %v2195 = vpop.f32.mrb[0].mxu0
      %v2196 = vadd.f32 %v1894, %v2195
      %v2197 = vpop.f32.mrb[0].mxu0
      %v2198 = vpop.f32.mrb[0].mxu0
      %v2199 = vadd.f32 %v1894, %v2198
      %v2200 = vpop.f32.mrb[0].mxu0
      %2201 = vmatprep.mubr.bf16.mxu0 0
      %2202 = vmatmul.mubr.bf16.gmra.mrb[0].mxu0 %v1943
      %v2203 = vpop.f32.mrb[0].mxu0
      %v2204 = vadd.f32 %v1894, %v2203
      %v2205 = vpop.f32.mrb[0].mxu0
      %v2206 = vpop.f32.mrb[0].mxu0
      %v2207 = vadd.f32 %v1894, %v2206
      %v2208 = vpop.f32.mrb[0].mxu0
      %2209 = vmatprep.mubr.bf16.mxu0 0
      %2210 = vmatmul.mubr.bf16.gmra.mrb[0].mxu0 %v1946
      %v2211 = vpop.f32.mrb[0].mxu0
      %v2212 = vadd.f32 %v1894, %v2211
      %v2213 = vpop.f32.mrb[0].mxu0
      %v2214 = vpop.f32.mrb[0].mxu0
      %v2215 = vadd.f32 %v1894, %v2214
      %v2216 = vpop.f32.mrb[0].mxu0
      %2217 = vmatprep.mubr.bf16.mxu0 0
      %2218 = vmatmul.mubr.bf16.gmra.mrb[0].mxu0 %v1949
      %v2219 = vpop.f32.mrb[0].mxu0
      %v2220 = vadd.f32 %v1894, %v2219
      %v2221 = vpop.f32.mrb[0].mxu0
      %v2222 = vpop.f32.mrb[0].mxu0
      %v2223 = vadd.f32 %v1894, %v2222
      %v2224 = vpop.f32.mrb[0].mxu0
      %2225 = vmatprep.mubr.bf16.mxu0 0
      %2226 = vmatmul.mubr.bf16.gmra.mrb[0].mxu0 %v1952
      %v2227 = vpop.f32.mrb[0].mxu0
      %v2228 = vadd.f32 %v1894, %v2227
      %v2229 = vpop.f32.mrb[0].mxu0
      %v2230 = vpop.f32.mrb[0].mxu0
      %v2231 = vadd.f32 %v1894, %v2230
      %v2232 = vpop.f32.mrb[0].mxu0
      %2233 = vmatprep.mubr.bf16.mxu0 0
      %2234 = vmatmul.mubr.bf16.gmra.mrb[0].mxu0 %v1955
      %v2235 = vpop.f32.mrb[0].mxu0
      %v2236 = vadd.f32 %v1894, %v2235
      %v2237 = vpop.f32.mrb[0].mxu0
      %v2238 = vpop.f32.mrb[0].mxu0
      %v2239 = vadd.f32 %v1894, %v2238
      %v2240 = vpop.f32.mrb[0].mxu0
      %2241 = vmatprep.mubr.bf16.mxu0 0
      %2242 = vmatmul.mubr.bf16.gmra.mrb[0].mxu0 %v1958
      %v2243 = vpop.f32.mrb[0].mxu0
      %v2244 = vadd.f32 %v1894, %v2243
      %v2245 = vpop.f32.mrb[0].mxu0
      %v2246 = vpop.f32.mrb[0].mxu0
      %v2247 = vadd.f32 %v1894, %v2246
      %v2248 = vpop.f32.mrb[0].mxu0
      %2249 = vmatprep.mubr.bf16.mxu0 0
      %2250 = vmatmul.mubr.bf16.gmra.mrb[0].mxu0 %v1961
      %v2251 = vpop.f32.mrb[0].mxu0
      %v2252 = vadd.f32 %v1894, %v2251
      %v2253 = vpop.f32.mrb[0].mxu0
      %v2254 = vpop.f32.mrb[0].mxu0
      %v2255 = vadd.f32 %v1894, %v2254
      %v2256 = vpop.f32.mrb[0].mxu0
      %2257 = vmatprep.mubr.bf16.mxu0 0
      %2258 = vmatmul.mubr.bf16.gmra.mrb[0].mxu0 %v1964
      %v2259 = vpop.f32.mrb[0].mxu0
      %v2260 = vadd.f32 %v1894, %v2259
      %v2261 = vpop.f32.mrb[0].mxu0
      %v2262 = vpop.f32.mrb[0].mxu0
      %v2263 = vadd.f32 %v1894, %v2262
      %v2264 = vpop.f32.mrb[0].mxu0
      %2265 = vmatprep.mubr.bf16.mxu0 0
      %2266 = vmatmul.mubr.bf16.gmra.mrb[0].mxu0 %v1967
      %v2267 = vpop.f32.mrb[0].mxu0
      %v2268 = vadd.f32 %v1894, %v2267
      %v2269 = vpop.f32.mrb[0].mxu0
      %v2270 = vpop.f32.mrb[0].mxu0
      %v2271 = vadd.f32 %v1894, %v2270
      %v2272 = vpop.f32.mrb[0].mxu0
      %2273 = vmatprep.mubr.bf16.mxu0 0
      %2274 = vmatmul.mubr.bf16.gmra.mrb[0].mxu0 %v1970
      %v2275 = vpop.f32.mrb[0].mxu0
      %v2276 = vadd.f32 %v1894, %v2275
      %v2277 = vpop.f32.mrb[0].mxu0
      %v2278 = vpop.f32.mrb[0].mxu0
      %v2279 = vadd.f32 %v1894, %v2278
      %v2280 = vpop.f32.mrb[0].mxu0
      %2281 = vmatprep.mubr.bf16.mxu0 0
      %2282 = vmatmul.mubr.bf16.gmra.mrb[0].mxu0 %v1973
      %v2283 = vpop.f32.mrb[0].mxu0
      %v2284 = vadd.f32 %v1894, %v2283
      %v2285 = vpop.f32.mrb[0].mxu0
      %v2286 = vpop.f32.mrb[0].mxu0
      %v2287 = vadd.f32 %v1894, %v2286
      %v2288 = vpop.f32.mrb[0].mxu0
      %2289 = vmatprep.mubr.bf16.mxu0 0
      %2290 = vmatmul.mubr.bf16.gmra.mrb[0].mxu0 %v1976
      %v2291 = vpop.f32.mrb[0].mxu0
      %v2292 = vadd.f32 %v1894, %v2291
      %v2293 = vpop.f32.mrb[0].mxu0
      %v2294 = vpop.f32.mrb[0].mxu0
      %v2295 = vadd.f32 %v1894, %v2294
      %v2296 = vpop.f32.mrb[0].mxu0
      %2297 = vmatprep.mubr.bf16.mxu0 0
      %2298 = vmatmul.mubr.bf16.gmra.mrb[0].mxu0 %v1979
      %v2299 = vpop.f32.mrb[0].mxu0
      %v2300 = vadd.f32 %v1894, %v2299
      %v2301 = vpop.f32.mrb[0].mxu0
      %v2302 = vpop.f32.mrb[0].mxu0
      %v2303 = vadd.f32 %v1894, %v2302
      %v2304 = vpop.f32.mrb[0].mxu0
      %2305 = vmatprep.mubr.bf16.mxu0 0
      %2306 = vmatmul.mubr.bf16.gmra.mrb[0].mxu0 %v1982
      %v2307 = vpop.f32.mrb[0].mxu0
      %v2308 = vadd.f32 %v1894, %v2307
      %v2309 = vpop.f32.mrb[0].mxu0
      %v2310 = vpop.f32.mrb[0].mxu0
      %v2311 = vadd.f32 %v1894, %v2310
      %v2312 = vpop.f32.mrb[0].mxu0
      %2313 = vmatprep.mubr.bf16.mxu0 0
      %2314 = vmatmul.mubr.bf16.gmra.mrb[0].mxu0 %v1985
      %v2315 = vpop.f32.mrb[0].mxu0
      %v2316 = vadd.f32 %v1894, %v2315
      %v2317 = vpop.f32.mrb[0].mxu0
      %v2318 = vpop.f32.mrb[0].mxu0
      %v2319 = vadd.f32 %v1894, %v2318
      %v2320 = vpop.f32.mrb[0].mxu0
      %2321 = vmatprep.mubr.bf16.mxu0 0
      %2322 = vmatmul.mubr.bf16.gmra.mrb[0].mxu0 %v1988
      %v2323 = vpop.f32.mrb[0].mxu0
      %v2324 = vadd.f32 %v1894, %v2323
      %v2325 = vpop.f32.mrb[0].mxu0
      %v2326 = vpop.f32.mrb[0].mxu0
      %v2327 = vadd.f32 %v1894, %v2326
      %v2328 = vpop.f32.mrb[0].mxu0
      %2329 = vmatprep.mubr.bf16.mxu0 0
      %2330 = vmatmul.mubr.bf16.gmra.mrb[0].mxu0 %v1991
      %v2331 = vpop.f32.mrb[0].mxu0
      %v2332 = vadd.f32 %v1894, %v2331
      %v2333 = vpop.f32.mrb[0].mxu0
      %v2334 = vpop.f32.mrb[0].mxu0
      %v2335 = vadd.f32 %v1894, %v2334
      %v2336 = vpop.f32.mrb[0].mxu0
      %2337 = vmatprep.mubr.bf16.mxu0 0
      %2338 = vmatmul.mubr.bf16.gmra.mrb[0].mxu0 %v1994
      %v2339 = vpop.f32.mrb[0].mxu0
      %v2340 = vadd.f32 %v1894, %v2339
      %v2341 = vpop.f32.mrb[0].mxu0
      %v2342 = vpop.f32.mrb[0].mxu0
      %v2343 = vadd.f32 %v1894, %v2342
      %v2344 = vpop.f32.mrb[0].mxu0
      %2345 = vmatprep.mubr.bf16.mxu0 0
      %2346 = vmatmul.mubr.bf16.gmra.mrb[0].mxu0 %v1997
      %v2347 = vpop.f32.mrb[0].mxu0
      %v2348 = vadd.f32 %v1894, %v2347
      %v2349 = vpop.f32.mrb[0].mxu0
      %v2350 = vpop.f32.mrb[0].mxu0
      %v2351 = vadd.f32 %v1894, %v2350
      %v2352 = vpop.f32.mrb[0].mxu0
      %2353 = vmatprep.mubr.bf16.mxu0 0
      %2354 = vmatmul.mubr.bf16.gmra.mrb[0].mxu0 %v2000
      %v2355 = vpop.f32.mrb[0].mxu0
      %v2356 = vadd.f32 %v1894, %v2355
      %v2357 = vpop.f32.mrb[0].mxu0
      %v2358 = vpop.f32.mrb[0].mxu0
      %v2359 = vadd.f32 %v1894, %v2358
      %v2360 = vpop.f32.mrb[0].mxu0
      %2361 = vmatprep.mubr.bf16.mxu0 0
      %2362 = vmatmul.mubr.bf16.gmra.mrb[0].mxu0 %v2003
      %v2363 = vpop.f32.mrb[0].mxu0
      %v2364 = vadd.f32 %v1894, %v2363
      %v2365 = vpop.f32.mrb[0].mxu0
      %v2366 = vpop.f32.mrb[0].mxu0
      %v2367 = vadd.f32 %v1894, %v2366
      %v2368 = vpop.f32.mrb[0].mxu0
      %2369 = vmatprep.mubr.bf16.mxu0 0
      %2370 = vmatmul.mubr.bf16.gmra.mrb[0].mxu0 %v2006
      %v2371 = vpop.f32.mrb[0].mxu0
      %v2372 = vadd.f32 %v1894, %v2371
      %v2373 = vpop.f32.mrb[0].mxu0
      %v2374 = vpop.f32.mrb[0].mxu0
      %v2375 = vadd.f32 %v1894, %v2374
      %v2376 = vpop.f32.mrb[0].mxu0
      %2377 = vmatprep.mubr.bf16.mxu0 0
      %2378 = vmatmul.mubr.bf16.gmra.mrb[0].mxu0 %v2009
      %v2379 = vpop.f32.mrb[0].mxu0
      %v2380 = vadd.f32 %v1894, %v2379
      %v2381 = vpop.f32.mrb[0].mxu0
      %v2382 = vpop.f32.mrb[0].mxu0
      %v2383 = vadd.f32 %v1894, %v2382
      %v2384 = vpop.f32.mrb[0].mxu0
      %2385 = vmatprep.mubr.bf16.mxu0 0
      %2386 = vmatmul.mubr.bf16.gmra.mrb[0].mxu0 %v2012
      %v2387 = vpop.f32.mrb[0].mxu0
      %v2388 = vadd.f32 %v1894, %v2387
      %v2389 = vpop.f32.mrb[0].mxu0
      %v2390 = vpop.f32.mrb[0].mxu0
      %v2391 = vadd.f32 %v1894, %v2390
      %v2392 = vpop.f32.mrb[0].mxu0
      %2393 = vmatprep.mubr.bf16.mxu0 0
      %2394 = vmatmul.mubr.bf16.gmra.mrb[0].mxu0 %v2015
      %v2395 = vpop.f32.mrb[0].mxu0
      %v2396 = vadd.f32 %v1894, %v2395
      %v2397 = vpop.f32.mrb[0].mxu0
      %v2398 = vpop.f32.mrb[0].mxu0
      %v2399 = vadd.f32 %v1894, %v2398
      %v2400 = vpop.f32.mrb[0].mxu0
      %2401 = vmatprep.mubr.bf16.mxu0 0
      %2402 = vmatmul.mubr.bf16.gmra.mrb[0].mxu0 %v2018
      %v2403 = vpop.f32.mrb[0].mxu0
      %v2404 = vadd.f32 %v1894, %v2403
      %v2405 = vpop.f32.mrb[0].mxu0
      %v2406 = vpop.f32.mrb[0].mxu0
      %v2407 = vadd.f32 %v1894, %v2406
      %v2408 = vpop.f32.mrb[0].mxu0
      %2409 = vmatprep.mubr.bf16.mxu0 0
      %2410 = vmatmul.mubr.bf16.gmra.mrb[0].mxu0 %v2021
      %v2411 = vpop.f32.mrb[0].mxu0
      %v2412 = vadd.f32 %v1894, %v2411
      %v2413 = vpop.f32.mrb[0].mxu0
      %v2414 = vpop.f32.mrb[0].mxu0
      %v2415 = vadd.f32 %v1894, %v2414
      %v2416 = vpop.f32.mrb[0].mxu0
      %2417 = vmatprep.mubr.bf16.mxu0 0
      %2418 = vmatmul.mubr.bf16.gmra.mrb[0].mxu0 %v2024
      %v2419 = vpop.f32.mrb[0].mxu0
      %v2420 = vadd.f32 %v1894, %v2419
      %v2421 = vpop.f32.mrb[0].mxu0
      %v2422 = vpop.f32.mrb[0].mxu0
      %v2423 = vadd.f32 %v1894, %v2422
      %v2424 = vpop.f32.mrb[0].mxu0
      %2425 = vmatprep.mubr.bf16.mxu0 0
      %2426 = vmatmul.mubr.bf16.gmra.mrb[0].mxu0 %v2027
      %v2427 = vpop.f32.mrb[0].mxu0
      %v2428 = vadd.f32 %v1894, %v2427
      %v2429 = vpop.f32.mrb[0].mxu0
      %v2430 = vpop.f32.mrb[0].mxu0
      %v2431 = vadd.f32 %v1894, %v2430
      %v2432 = vpop.f32.mrb[0].mxu0
      %2433 = vmatprep.mubr.bf16.mxu0 0
      %2434 = vmatmul.mubr.bf16.gmra.mrb[0].mxu0 %v2030
      %v2435 = vpop.f32.mrb[0].mxu0
      %v2436 = vadd.f32 %v1894, %v2435
      %v2437 = vpop.f32.mrb[0].mxu0
      %v2438 = vpop.f32.mrb[0].mxu0
      %v2439 = vadd.f32 %v1894, %v2438
      %v2440 = vpop.f32.mrb[0].mxu0
      %2441 = vmatprep.mubr.bf16.mxu0 0
      %2442 = vmatmul.mubr.bf16.gmra.mrb[0].mxu0 %v2033
      %v2443 = vpop.f32.mrb[0].mxu0
      %v2444 = vadd.f32 %v1894, %v2443
      %v2445 = vpop.f32.mrb[0].mxu0
      %v2446 = vpop.f32.mrb[0].mxu0
      %v2447 = vadd.f32 %v1894, %v2446
      %v2448 = vpop.f32.mrb[0].mxu0
      %2449 = vmatprep.mubr.bf16.mxu0 0
      %2450 = vmatmul.mubr.bf16.gmra.mrb[0].mxu0 %v2036
      %v2451 = vpop.f32.mrb[0].mxu0
      %v2452 = vadd.f32 %v1894, %v2451
      %v2453 = vpop.f32.mrb[0].mxu0
      %v2454 = vpop.f32.mrb[0].mxu0
      %v2455 = vadd.f32 %v1894, %v2454
      %v2456 = vpop.f32.mrb[0].mxu0
      %2457 = vmatprep.mubr.bf16.mxu0 0
      %2458 = vmatmul.mubr.bf16.gmra.mrb[0].mxu0 %v2039
      %v2459 = vpop.f32.mrb[0].mxu0
      %v2460 = vadd.f32 %v1894, %v2459
      %v2461 = vpop.f32.mrb[0].mxu0
      %v2462 = vpop.f32.mrb[0].mxu0
      %v2463 = vadd.f32 %v1894, %v2462
      %v2464 = vpop.f32.mrb[0].mxu0
      %2465 = vmatprep.mubr.bf16.mxu0 0
      %2466 = vmatmul.mubr.bf16.gmra.mrb[0].mxu0 %v2042
      %v2467 = vpop.f32.mrb[0].mxu0
      %v2468 = vadd.f32 %v1894, %v2467
      %v2469 = vpop.f32.mrb[0].mxu0
      %v2470 = vpop.f32.mrb[0].mxu0
      %v2471 = vadd.f32 %v1894, %v2470
      %v2472 = vpop.f32.mrb[0].mxu0
      %2473 = vmatprep.mubr.bf16.mxu0 0
      %2474 = vmatmul.mubr.bf16.gmra.mrb[0].mxu0 %v2045
      %v2475 = vpop.f32.mrb[0].mxu0
      %v2476 = vadd.f32 %v1894, %v2475
      %v2477 = vpop.f32.mrb[0].mxu0
      %v2478 = vpop.f32.mrb[0].mxu0
      %v2479 = vadd.f32 %v1894, %v2478
      %v2480 = vpop.f32.mrb[0].mxu0
      %2481 = vmatprep.mubr.bf16.mxu0 0
      %2482 = vmatmul.mubr.bf16.gmra.mrb[0].mxu0 %v2048
      %v2483 = vpop.f32.mrb[0].mxu0
      %v2484 = vadd.f32 %v1894, %v2483
      %v2485 = vpop.f32.mrb[0].mxu0
      %v2486 = vpop.f32.mrb[0].mxu0
      %v2487 = vadd.f32 %v1894, %v2486
      %v2488 = vpop.f32.mrb[0].mxu0
      %2489 = vmatprep.mubr.bf16.mxu0 0
      %2490 = vmatmul.mubr.bf16.gmra.mrb[0].mxu0 %v2051
      %v2491 = vpop.f32.mrb[0].mxu0
      %v2492 = vadd.f32 %v1894, %v2491
      %v2493 = vpop.f32.mrb[0].mxu0
      %v2494 = vpop.f32.mrb[0].mxu0
      %v2495 = vadd.f32 %v1894, %v2494
      %v2496 = vpop.f32.mrb[0].mxu0
      %2497 = vmatprep.mubr.bf16.mxu0 0
      %2498 = vmatmul.mubr.bf16.gmra.mrb[0].mxu0 %v2054
      %v2499 = vpop.f32.mrb[0].mxu0
      %v2500 = vadd.f32 %v1894, %v2499
      %v2501 = vpop.f32.mrb[0].mxu0
      %v2502 = vpop.f32.mrb[0].mxu0
      %v2503 = vadd.f32 %v1894, %v2502
      %v2504 = vpop.f32.mrb[0].mxu0
      %2505 = vmatprep.mubr.bf16.mxu0 0
      %2506 = vmatmul.mubr.bf16.gmra.mrb[0].mxu0 %v2057
      %v2507 = vpop.f32.mrb[0].mxu0
      %v2508 = vadd.f32 %v1894, %v2507
      %v2509 = vpop.f32.mrb[0].mxu0
      %v2510 = vpop.f32.mrb[0].mxu0
      %v2511 = vadd.f32 %v1894, %v2510
      %v2512 = vpop.f32.mrb[0].mxu0
      %2513 = vmatprep.mubr.bf16.mxu0 0
      %2514 = vmatmul.mubr.bf16.gmra.mrb[0].mxu0 %v2060
      %v2515 = vpop.f32.mrb[0].mxu0
      %v2516 = vadd.f32 %v1894, %v2515
      %v2517 = vpop.f32.mrb[0].mxu0
      %v2518 = vpop.f32.mrb[0].mxu0
      %v2519 = vadd.f32 %v1894, %v2518
      %v2520 = vpop.f32.mrb[0].mxu0
      %2521 = vmatprep.mubr.bf16.mxu0 0
      %2522 = vmatmul.mubr.bf16.gmra.mrb[0].mxu0 %v2063
      %v2523 = vpop.f32.mrb[0].mxu0
      %v2524 = vadd.f32 %v1894, %v2523
      %v2525 = vpop.f32.mrb[0].mxu0
      %v2526 = vpop.f32.mrb[0].mxu0
      %v2527 = vadd.f32 %v1894, %v2526
      %v2528 = vpop.f32.mrb[0].mxu0
      %2529 = vmatprep.mubr.bf16.mxu0 0
      %2530 = vmatmul.mubr.bf16.gmra.mrb[0].mxu0 %v2066
      %v2531 = vpop.f32.mrb[0].mxu0
      %v2532 = vadd.f32 %v1894, %v2531
      %v2533 = vpop.f32.mrb[0].mxu0
      %v2534 = vpop.f32.mrb[0].mxu0
      %v2535 = vadd.f32 %v1894, %v2534
      %v2536 = vpop.f32.mrb[0].mxu0
      %2537 = vmatprep.mubr.bf16.mxu0 0
      %2538 = vmatmul.mubr.bf16.gmra.mrb[0].mxu0 %v2069
      %v2539 = vpop.f32.mrb[0].mxu0
      %v2540 = vadd.f32 %v1894, %v2539
      %v2541 = vpop.f32.mrb[0].mxu0
      %v2542 = vpop.f32.mrb[0].mxu0
      %v2543 = vadd.f32 %v1894, %v2542
      %v2544 = vpop.f32.mrb[0].mxu0
      %2545 = vmatprep.mubr.bf16.mxu0 0
      %2546 = vmatmul.mubr.bf16.gmra.mrb[0].mxu0 %v2072
      %v2547 = vpop.f32.mrb[0].mxu0
      %v2548 = vadd.f32 %v1894, %v2547
      %v2549 = vpop.f32.mrb[0].mxu0
      %v2550 = vpop.f32.mrb[0].mxu0
      %v2551 = vadd.f32 %v1894, %v2550
      %v2552 = vpop.f32.mrb[0].mxu0
      %2553 = vmatprep.mubr.bf16.mxu0 0
      %2554 = vmatmul.mubr.bf16.gmra.mrb[0].mxu0 %v2075
      %v2555 = vpop.f32.mrb[0].mxu0
      %v2556 = vadd.f32 %v1894, %v2555
      %v2557 = vpop.f32.mrb[0].mxu0
      %v2558 = vpop.f32.mrb[0].mxu0
      %v2559 = vadd.f32 %v1894, %v2558
      %v2560 = vpop.f32.mrb[0].mxu0
      %2561 = vmatprep.mubr.bf16.mxu0 0
      %2562 = vmatmul.mubr.bf16.gmra.mrb[0].mxu0 %v2078
      %v2563 = vpop.f32.mrb[0].mxu0
      %v2564 = vadd.f32 %v1894, %v2563
      %v2565 = vpop.f32.mrb[0].mxu0
      %v2566 = vpop.f32.mrb[0].mxu0
      %v2567 = vadd.f32 %v1894, %v2566
      %v2568 = vpop.f32.mrb[0].mxu0
      %2569 = vmatprep.mubr.bf16.mxu0 0
      %2570 = vmatmul.mubr.bf16.gmra.mrb[0].mxu0 %v2081
      %v2571 = vpop.f32.mrb[0].mxu0
      %v2572 = vadd.f32 %v1894, %v2571
      %v2573 = vpop.f32.mrb[0].mxu0
      %v2574 = vpop.f32.mrb[0].mxu0
      %v2575 = vadd.f32 %v1894, %v2574
      %v2576 = vpop.f32.mrb[0].mxu0
      %2577 = vmatprep.mubr.bf16.mxu0 0
      %2578 = vmatmul.mubr.bf16.gmra.mrb[0].mxu0 %v2084
      %v2579 = vpop.f32.mrb[0].mxu0
      %v2580 = vadd.f32 %v1894, %v2579
      %v2581 = vpop.f32.mrb[0].mxu0
      %v2582 = vpop.f32.mrb[0].mxu0
      %v2583 = vadd.f32 %v1894, %v2582
      %v2584 = vpop.f32.mrb[0].mxu0
      %2585 = vmatprep.mubr.bf16.mxu0 0
      %2586 = vmatmul.mubr.bf16.gmra.mrb[0].mxu0 %v2087
      %v2587 = vpop.f32.mrb[0].mxu0
      %v2588 = vadd.f32 %v1894, %v2587
      %v2589 = vpop.f32.mrb[0].mxu0
      %v2590 = vpop.f32.mrb[0].mxu0
      %v2591 = vadd.f32 %v1894, %v2590
      %v2592 = vpop.f32.mrb[0].mxu0
      %2593 = vmatprep.mubr.bf16.mxu0 0
      %2594 = vmatmul.mubr.bf16.gmra.mrb[0].mxu0 %v2090
      %v2595 = vpop.f32.mrb[0].mxu0
      %v2596 = vadd.f32 %v1894, %v2595
      %v2597 = vpop.f32.mrb[0].mxu0
      %v2598 = vpop.f32.mrb[0].mxu0
      %v2599 = vadd.f32 %v1894, %v2598
      %v2600 = vpop.f32.mrb[0].mxu0
      %2601 = vmatprep.mubr.bf16.mxu0 0
      %2602 = vmatmul.mubr.bf16.gmra.mrb[0].mxu0 %v2093
      %v2603 = vpop.f32.mrb[0].mxu0
      %v2604 = vadd.f32 %v1894, %v2603
      %v2605 = vpop.f32.mrb[0].mxu0
      %v2606 = vpop.f32.mrb[0].mxu0
      %v2607 = vadd.f32 %v1894, %v2606
      %v2608 = vpop.f32.mrb[0].mxu0
      %2609 = vmatprep.mubr.bf16.mxu0 0
      %2610 = vmatmul.mubr.bf16.gmra.mrb[0].mxu0 %v2096
      %v2611 = vpop.f32.mrb[0].mxu0
      %v2612 = vadd.f32 %v1894, %v2611
      %v2613 = vpop.f32.mrb[0].mxu0
      %v2614 = vpop.f32.mrb[0].mxu0
      %v2615 = vadd.f32 %v1894, %v2614
      %v2616 = vpop.f32.mrb[0].mxu0
      %2617 = vmatprep.mubr.bf16.mxu0 0
      %2618 = vmatmul.mubr.bf16.gmra.mrb[0].mxu0 %v2099
      %v2619 = vpop.f32.mrb[0].mxu0
      %v2620 = vadd.f32 %v1894, %v2619
      %v2621 = vpop.f32.mrb[0].mxu0
      %v2622 = vpop.f32.mrb[0].mxu0
      %v2623 = vadd.f32 %v1894, %v2622
      %v2624 = vpop.f32.mrb[0].mxu0
      %2625 = vmatprep.mubr.bf16.mxu0 0
      %2626 = vmatmul.mubr.bf16.gmra.mrb[0].mxu0 %v2102
      %v2627 = vpop.f32.mrb[0].mxu0
      %v2628 = vadd.f32 %v1894, %v2627
      %v2629 = vpop.f32.mrb[0].mxu0
      %v2630 = vpop.f32.mrb[0].mxu0
      %v2631 = vadd.f32 %v1894, %v2630
      %v2632 = vpop.f32.mrb[0].mxu0
      %2633 = vmatprep.mubr.bf16.mxu0 0
      %2634 = vmatmul.mubr.bf16.gmra.mrb[0].mxu0 %v2105
      %v2635 = vpop.f32.mrb[0].mxu0
      %v2636 = vadd.f32 %v1894, %v2635
      %v2637 = vpop.f32.mrb[0].mxu0
      %v2638 = vpop.f32.mrb[0].mxu0
      %v2639 = vadd.f32 %v1894, %v2638
      %v2640 = vpop.f32.mrb[0].mxu0
      %2641 = vmatprep.mubr.bf16.mxu0 0
      %2642 = vmatmul.mubr.bf16.gmra.mrb[0].mxu0 %v2108
      %v2643 = vpop.f32.mrb[0].mxu0
      %v2644 = vadd.f32 %v1894, %v2643
      %v2645 = vpop.f32.mrb[0].mxu0
      %v2646 = vpop.f32.mrb[0].mxu0
      %v2647 = vadd.f32 %v1894, %v2646
      %v2648 = vpop.f32.mrb[0].mxu0
      %2649 = vmatprep.mubr.bf16.mxu0 0
      %2650 = vmatmul.mubr.bf16.gmra.mrb[0].mxu0 %v2111
      %v2651 = vpop.f32.mrb[0].mxu0
      %v2652 = vadd.f32 %v1894, %v2651
      %v2653 = vpop.f32.mrb[0].mxu0
      %v2654 = vpop.f32.mrb[0].mxu0
      %v2655 = vadd.f32 %v1894, %v2654
      %v2656 = vpop.f32.mrb[0].mxu0
      %2657 = vdwg.mxu0
      %vm2658 = vcmp.ge.f32.partialorder %v2148, 0.0
      %vm2659 = vcmp.ge.f32.partialorder %v2151, 0.0
      %vm2660 = vcmp.ge.f32.partialorder %v2156, 0.0
      %vm2661 = vcmp.ge.f32.partialorder %v2159, 0.0
      %vm2662 = vcmp.ge.f32.partialorder %v2164, 0.0
      %vm2663 = vcmp.ge.f32.partialorder %v2167, 0.0
      %vm2664 = vcmp.ge.f32.partialorder %v2172, 0.0
      %vm2665 = vcmp.ge.f32.partialorder %v2175, 0.0
      %vm2666 = vcmp.ge.f32.partialorder %v2180, 0.0
      %vm2667 = vcmp.ge.f32.partialorder %v2183, 0.0
      %vm2668 = vcmp.ge.f32.partialorder %v2188, 0.0
      %vm2669 = vcmp.ge.f32.partialorder %v2191, 0.0
      %vm2670 = vcmp.ge.f32.partialorder %v2196, 0.0
      %vm2671 = vcmp.ge.f32.partialorder %v2199, 0.0
      %vm2672 = vcmp.ge.f32.partialorder %v2204, 0.0
      %vm2673 = vcmp.ge.f32.partialorder %v2207, 0.0
      %vm2674 = vcmp.ge.f32.partialorder %v2212, 0.0
      %vm2675 = vcmp.ge.f32.partialorder %v2215, 0.0
      %vm2676 = vcmp.ge.f32.partialorder %v2220, 0.0
      %vm2677 = vcmp.ge.f32.partialorder %v2223, 0.0
      %vm2678 = vcmp.ge.f32.partialorder %v2228, 0.0
      %vm2679 = vcmp.ge.f32.partialorder %v2231, 0.0
      %vm2680 = vcmp.ge.f32.partialorder %v2236, 0.0
      %vm2681 = vcmp.ge.f32.partialorder %v2239, 0.0
      %vm2682 = vcmp.ge.f32.partialorder %v2244, 0.0
      %vm2683 = vcmp.ge.f32.partialorder %v2247, 0.0
      %vm2684 = vcmp.ge.f32.partialorder %v2252, 0.0
      %vm2685 = vcmp.ge.f32.partialorder %v2255, 0.0
      %vm2686 = vcmp.ge.f32.partialorder %v2260, 0.0
      %vm2687 = vcmp.ge.f32.partialorder %v2263, 0.0
      %vm2688 = vcmp.ge.f32.partialorder %v2268, 0.0
      %vm2689 = vcmp.ge.f32.partialorder %v2271, 0.0
      %vm2690 = vcmp.ge.f32.partialorder %v2276, 0.0
      %vm2691 = vcmp.ge.f32.partialorder %v2279, 0.0
      %vm2692 = vcmp.ge.f32.partialorder %v2284, 0.0
      %vm2693 = vcmp.ge.f32.partialorder %v2287, 0.0
      %vm2694 = vcmp.ge.f32.partialorder %v2292, 0.0
      %vm2695 = vcmp.ge.f32.partialorder %v2295, 0.0
      %vm2696 = vcmp.ge.f32.partialorder %v2300, 0.0
      %vm2697 = vcmp.ge.f32.partialorder %v2303, 0.0
      %vm2698 = vcmp.ge.f32.partialorder %v2308, 0.0
      %vm2699 = vcmp.ge.f32.partialorder %v2311, 0.0
      %vm2700 = vcmp.ge.f32.partialorder %v2316, 0.0
      %vm2701 = vcmp.ge.f32.partialorder %v2319, 0.0
      %vm2702 = vcmp.ge.f32.partialorder %v2324, 0.0
      %vm2703 = vcmp.ge.f32.partialorder %v2327, 0.0
      %vm2704 = vcmp.ge.f32.partialorder %v2332, 0.0
      %vm2705 = vcmp.ge.f32.partialorder %v2335, 0.0
      %vm2706 = vcmp.ge.f32.partialorder %v2340, 0.0
      %vm2707 = vcmp.ge.f32.partialorder %v2343, 0.0
      %vm2708 = vcmp.ge.f32.partialorder %v2348, 0.0
      %vm2709 = vcmp.ge.f32.partialorder %v2351, 0.0
      %vm2710 = vcmp.ge.f32.partialorder %v2356, 0.0
      %vm2711 = vcmp.ge.f32.partialorder %v2359, 0.0
      %vm2712 = vcmp.ge.f32.partialorder %v2364, 0.0
      %vm2713 = vcmp.ge.f32.partialorder %v2367, 0.0
      %vm2714 = vcmp.ge.f32.partialorder %v2372, 0.0
      %vm2715 = vcmp.ge.f32.partialorder %v2375, 0.0
      %vm2716 = vcmp.ge.f32.partialorder %v2380, 0.0
      %vm2717 = vcmp.ge.f32.partialorder %v2383, 0.0
      %vm2718 = vcmp.ge.f32.partialorder %v2388, 0.0
      %vm2719 = vcmp.ge.f32.partialorder %v2391, 0.0
      %vm2720 = vcmp.ge.f32.partialorder %v2396, 0.0
      %vm2721 = vcmp.ge.f32.partialorder %v2399, 0.0
      %vm2722 = vcmp.ge.f32.partialorder %v2404, 0.0
      %vm2723 = vcmp.ge.f32.partialorder %v2407, 0.0
      %vm2724 = vcmp.ge.f32.partialorder %v2412, 0.0
      %vm2725 = vcmp.ge.f32.partialorder %v2415, 0.0
      %vm2726 = vcmp.ge.f32.partialorder %v2420, 0.0
      %vm2727 = vcmp.ge.f32.partialorder %v2423, 0.0
      %vm2728 = vcmp.ge.f32.partialorder %v2428, 0.0
      %vm2729 = vcmp.ge.f32.partialorder %v2431, 0.0
      %vm2730 = vcmp.ge.f32.partialorder %v2436, 0.0
      %vm2731 = vcmp.ge.f32.partialorder %v2439, 0.0
      %vm2732 = vcmp.ge.f32.partialorder %v2444, 0.0
      %vm2733 = vcmp.ge.f32.partialorder %v2447, 0.0
      %vm2734 = vcmp.ge.f32.partialorder %v2452, 0.0
      %vm2735 = vcmp.ge.f32.partialorder %v2455, 0.0
      %vm2736 = vcmp.ge.f32.partialorder %v2460, 0.0
      %vm2737 = vcmp.ge.f32.partialorder %v2463, 0.0
      %vm2738 = vcmp.ge.f32.partialorder %v2468, 0.0
      %vm2739 = vcmp.ge.f32.partialorder %v2471, 0.0
      %vm2740 = vcmp.ge.f32.partialorder %v2476, 0.0
      %vm2741 = vcmp.ge.f32.partialorder %v2479, 0.0
      %vm2742 = vcmp.ge.f32.partialorder %v2484, 0.0
      %vm2743 = vcmp.ge.f32.partialorder %v2487, 0.0
      %vm2744 = vcmp.ge.f32.partialorder %v2492, 0.0
      %vm2745 = vcmp.ge.f32.partialorder %v2495, 0.0
      %vm2746 = vcmp.ge.f32.partialorder %v2500, 0.0
      %vm2747 = vcmp.ge.f32.partialorder %v2503, 0.0
      %vm2748 = vcmp.ge.f32.partialorder %v2508, 0.0
      %vm2749 = vcmp.ge.f32.partialorder %v2511, 0.0
      %vm2750 = vcmp.ge.f32.partialorder %v2516, 0.0
      %vm2751 = vcmp.ge.f32.partialorder %v2519, 0.0
      %vm2752 = vcmp.ge.f32.partialorder %v2524, 0.0
      %vm2753 = vcmp.ge.f32.partialorder %v2527, 0.0
      %vm2754 = vcmp.ge.f32.partialorder %v2532, 0.0
      %vm2755 = vcmp.ge.f32.partialorder %v2535, 0.0
      %vm2756 = vcmp.ge.f32.partialorder %v2540, 0.0
      %vm2757 = vcmp.ge.f32.partialorder %v2543, 0.0
      %vm2758 = vcmp.ge.f32.partialorder %v2548, 0.0
      %vm2759 = vcmp.ge.f32.partialorder %v2551, 0.0
      %vm2760 = vcmp.ge.f32.partialorder %v2556, 0.0
      %vm2761 = vcmp.ge.f32.partialorder %v2559, 0.0
      %vm2762 = vcmp.ge.f32.partialorder %v2564, 0.0
      %vm2763 = vcmp.ge.f32.partialorder %v2567, 0.0
      %vm2764 = vcmp.ge.f32.partialorder %v2572, 0.0
      %vm2765 = vcmp.ge.f32.partialorder %v2575, 0.0
      %vm2766 = vcmp.ge.f32.partialorder %v2580, 0.0
      %vm2767 = vcmp.ge.f32.partialorder %v2583, 0.0
      %vm2768 = vcmp.ge.f32.partialorder %v2588, 0.0
      %vm2769 = vcmp.ge.f32.partialorder %v2591, 0.0
      %vm2770 = vcmp.ge.f32.partialorder %v2596, 0.0
      %vm2771 = vcmp.ge.f32.partialorder %v2599, 0.0
      %vm2772 = vcmp.ge.f32.partialorder %v2604, 0.0
      %vm2773 = vcmp.ge.f32.partialorder %v2607, 0.0
      %vm2774 = vcmp.ge.f32.partialorder %v2612, 0.0
      %vm2775 = vcmp.ge.f32.partialorder %v2615, 0.0
      %vm2776 = vcmp.ge.f32.partialorder %v2620, 0.0
      %vm2777 = vcmp.ge.f32.partialorder %v2623, 0.0
      %vm2778 = vcmp.ge.f32.partialorder %v2628, 0.0
      %vm2779 = vcmp.ge.f32.partialorder %v2631, 0.0
      %vm2780 = vcmp.ge.f32.partialorder %v2636, 0.0
      %vm2781 = vcmp.ge.f32.partialorder %v2639, 0.0
      %vm2782 = vcmp.ge.f32.partialorder %v2644, 0.0
      %vm2783 = vcmp.ge.f32.partialorder %v2647, 0.0
      %vm2784 = vcmp.ge.f32.partialorder %v2652, 0.0
      %vm2785 = vcmp.ge.f32.partialorder %v2655, 0.0
      %v2786 = vmul.f32 %v2148, 0.01
      %v2787 = vmul.f32 %v2151, 0.01
      %v2788 = vmul.f32 %v2156, 0.01
      %v2789 = vmul.f32 %v2159, 0.01
      %v2790 = vmul.f32 %v2164, 0.01
      %v2791 = vmul.f32 %v2167, 0.01
      %v2792 = vmul.f32 %v2172, 0.01
      %v2793 = vmul.f32 %v2175, 0.01
      %v2794 = vmul.f32 %v2180, 0.01
      %v2795 = vmul.f32 %v2183, 0.01
      %v2796 = vmul.f32 %v2188, 0.01
      %v2797 = vmul.f32 %v2191, 0.01
      %v2798 = vmul.f32 %v2196, 0.01
      %v2799 = vmul.f32 %v2199, 0.01
      %v2800 = vmul.f32 %v2204, 0.01
      %v2801 = vmul.f32 %v2207, 0.01
      %v2802 = vmul.f32 %v2212, 0.01
      %v2803 = vmul.f32 %v2215, 0.01
      %v2804 = vmul.f32 %v2220, 0.01
      %v2805 = vmul.f32 %v2223, 0.01
      %v2806 = vmul.f32 %v2228, 0.01
      %v2807 = vmul.f32 %v2231, 0.01
      %v2808 = vmul.f32 %v2236, 0.01
      %v2809 = vmul.f32 %v2239, 0.01
      %v2810 = vmul.f32 %v2244, 0.01
      %v2811 = vmul.f32 %v2247, 0.01
      %v2812 = vmul.f32 %v2252, 0.01
      %v2813 = vmul.f32 %v2255, 0.01
      %v2814 = vmul.f32 %v2260, 0.01
      %v2815 = vmul.f32 %v2263, 0.01
      %v2816 = vmul.f32 %v2268, 0.01
      %v2817 = vmul.f32 %v2271, 0.01
      %v2818 = vmul.f32 %v2276, 0.01
      %v2819 = vmul.f32 %v2279, 0.01
      %v2820 = vmul.f32 %v2284, 0.01
      %v2821 = vmul.f32 %v2287, 0.01
      %v2822 = vmul.f32 %v2292, 0.01
      %v2823 = vmul.f32 %v2295, 0.01
      %v2824 = vmul.f32 %v2300, 0.01
      %v2825 = vmul.f32 %v2303, 0.01
      %v2826 = vmul.f32 %v2308, 0.01
      %v2827 = vmul.f32 %v2311, 0.01
      %v2828 = vmul.f32 %v2316, 0.01
      %v2829 = vmul.f32 %v2319, 0.01
      %v2830 = vmul.f32 %v2324, 0.01
      %v2831 = vmul.f32 %v2327, 0.01
      %v2832 = vmul.f32 %v2332, 0.01
      %v2833 = vmul.f32 %v2335, 0.01
      %v2834 = vmul.f32 %v2340, 0.01
      %v2835 = vmul.f32 %v2343, 0.01
      %v2836 = vmul.f32 %v2348, 0.01
      %v2837 = vmul.f32 %v2351, 0.01
      %v2838 = vmul.f32 %v2356, 0.01
      %v2839 = vmul.f32 %v2359, 0.01
      %v2840 = vmul.f32 %v2364, 0.01
      %v2841 = vmul.f32 %v2367, 0.01
      %v2842 = vmul.f32 %v2372, 0.01
      %v2843 = vmul.f32 %v2375, 0.01
      %v2844 = vmul.f32 %v2380, 0.01
      %v2845 = vmul.f32 %v2383, 0.01
      %v2846 = vmul.f32 %v2388, 0.01
      %v2847 = vmul.f32 %v2391, 0.01
      %v2848 = vmul.f32 %v2396, 0.01
      %v2849 = vmul.f32 %v2399, 0.01
      %v2850 = vmul.f32 %v2404, 0.01
      %v2851 = vmul.f32 %v2407, 0.01
      %v2852 = vmul.f32 %v2412, 0.01
      %v2853 = vmul.f32 %v2415, 0.01
      %v2854 = vmul.f32 %v2420, 0.01
      %v2855 = vmul.f32 %v2423, 0.01
      %v2856 = vmul.f32 %v2428, 0.01
      %v2857 = vmul.f32 %v2431, 0.01
      %v2858 = vmul.f32 %v2436, 0.01
      %v2859 = vmul.f32 %v2439, 0.01
      %v2860 = vmul.f32 %v2444, 0.01
      %v2861 = vmul.f32 %v2447, 0.01
      %v2862 = vmul.f32 %v2452, 0.01
      %v2863 = vmul.f32 %v2455, 0.01
      %v2864 = vmul.f32 %v2460, 0.01
      %v2865 = vmul.f32 %v2463, 0.01
      %v2866 = vmul.f32 %v2468, 0.01
      %v2867 = vmul.f32 %v2471, 0.01
      %v2868 = vmul.f32 %v2476, 0.01
      %v2869 = vmul.f32 %v2479, 0.01
      %v2870 = vmul.f32 %v2484, 0.01
      %v2871 = vmul.f32 %v2487, 0.01
      %v2872 = vmul.f32 %v2492, 0.01
      %v2873 = vmul.f32 %v2495, 0.01
      %v2874 = vmul.f32 %v2500, 0.01
      %v2875 = vmul.f32 %v2503, 0.01
      %v2876 = vmul.f32 %v2508, 0.01
      %v2877 = vmul.f32 %v2511, 0.01
      %v2878 = vmul.f32 %v2516, 0.01
      %v2879 = vmul.f32 %v2519, 0.01
      %v2880 = vmul.f32 %v2524, 0.01
      %v2881 = vmul.f32 %v2527, 0.01
      %v2882 = vmul.f32 %v2532, 0.01
      %v2883 = vmul.f32 %v2535, 0.01
      %v2884 = vmul.f32 %v2540, 0.01
      %v2885 = vmul.f32 %v2543, 0.01
      %v2886 = vmul.f32 %v2548, 0.01
      %v2887 = vmul.f32 %v2551, 0.01
      %v2888 = vmul.f32 %v2556, 0.01
      %v2889 = vmul.f32 %v2559, 0.01
      %v2890 = vmul.f32 %v2564, 0.01
      %v2891 = vmul.f32 %v2567, 0.01
      %v2892 = vmul.f32 %v2572, 0.01
      %v2893 = vmul.f32 %v2575, 0.01
      %v2894 = vmul.f32 %v2580, 0.01
      %v2895 = vmul.f32 %v2583, 0.01
      %v2896 = vmul.f32 %v2588, 0.01
      %v2897 = vmul.f32 %v2591, 0.01
      %v2898 = vmul.f32 %v2596, 0.01
      %v2899 = vmul.f32 %v2599, 0.01
      %v2900 = vmul.f32 %v2604, 0.01
      %v2901 = vmul.f32 %v2607, 0.01
      %v2902 = vmul.f32 %v2612, 0.01
      %v2903 = vmul.f32 %v2615, 0.01
      %v2904 = vmul.f32 %v2620, 0.01
      %v2905 = vmul.f32 %v2623, 0.01
      %v2906 = vmul.f32 %v2628, 0.01
      %v2907 = vmul.f32 %v2631, 0.01
      %v2908 = vmul.f32 %v2636, 0.01
      %v2909 = vmul.f32 %v2639, 0.01
      %v2910 = vmul.f32 %v2644, 0.01
      %v2911 = vmul.f32 %v2647, 0.01
      %v2912 = vmul.f32 %v2652, 0.01
      %v2913 = vmul.f32 %v2655, 0.01
      %v2914 = vsel %vm2658, %v2148, %v2786
      %v2915 = vsel %vm2659, %v2151, %v2787
      %v2916 = vsel %vm2660, %v2156, %v2788
      %v2917 = vsel %vm2661, %v2159, %v2789
      %v2918 = vsel %vm2662, %v2164, %v2790
      %v2919 = vsel %vm2663, %v2167, %v2791
      %v2920 = vsel %vm2664, %v2172, %v2792
      %v2921 = vsel %vm2665, %v2175, %v2793
      %v2922 = vsel %vm2666, %v2180, %v2794
      %v2923 = vsel %vm2667, %v2183, %v2795
      %v2924 = vsel %vm2668, %v2188, %v2796
      %v2925 = vsel %vm2669, %v2191, %v2797
      %v2926 = vsel %vm2670, %v2196, %v2798
      %v2927 = vsel %vm2671, %v2199, %v2799
      %v2928 = vsel %vm2672, %v2204, %v2800
      %v2929 = vsel %vm2673, %v2207, %v2801
      %v2930 = vsel %vm2674, %v2212, %v2802
      %v2931 = vsel %vm2675, %v2215, %v2803
      %v2932 = vsel %vm2676, %v2220, %v2804
      %v2933 = vsel %vm2677, %v2223, %v2805
      %v2934 = vsel %vm2678, %v2228, %v2806
      %v2935 = vsel %vm2679, %v2231, %v2807
      %v2936 = vsel %vm2680, %v2236, %v2808
      %v2937 = vsel %vm2681, %v2239, %v2809
      %v2938 = vsel %vm2682, %v2244, %v2810
      %v2939 = vsel %vm2683, %v2247, %v2811
      %v2940 = vsel %vm2684, %v2252, %v2812
      %v2941 = vsel %vm2685, %v2255, %v2813
      %v2942 = vsel %vm2686, %v2260, %v2814
      %v2943 = vsel %vm2687, %v2263, %v2815
      %v2944 = vsel %vm2688, %v2268, %v2816
      %v2945 = vsel %vm2689, %v2271, %v2817
      %v2946 = vsel %vm2690, %v2276, %v2818
      %v2947 = vsel %vm2691, %v2279, %v2819
      %v2948 = vsel %vm2692, %v2284, %v2820
      %v2949 = vsel %vm2693, %v2287, %v2821
      %v2950 = vsel %vm2694, %v2292, %v2822
      %v2951 = vsel %vm2695, %v2295, %v2823
      %v2952 = vsel %vm2696, %v2300, %v2824
      %v2953 = vsel %vm2697, %v2303, %v2825
      %v2954 = vsel %vm2698, %v2308, %v2826
      %v2955 = vsel %vm2699, %v2311, %v2827
      %v2956 = vsel %vm2700, %v2316, %v2828
      %v2957 = vsel %vm2701, %v2319, %v2829
      %v2958 = vsel %vm2702, %v2324, %v2830
      %v2959 = vsel %vm2703, %v2327, %v2831
      %v2960 = vsel %vm2704, %v2332, %v2832
      %v2961 = vsel %vm2705, %v2335, %v2833
      %v2962 = vsel %vm2706, %v2340, %v2834
      %v2963 = vsel %vm2707, %v2343, %v2835
      %v2964 = vsel %vm2708, %v2348, %v2836
      %v2965 = vsel %vm2709, %v2351, %v2837
      %v2966 = vsel %vm2710, %v2356, %v2838
      %v2967 = vsel %vm2711, %v2359, %v2839
      %v2968 = vsel %vm2712, %v2364, %v2840
      %v2969 = vsel %vm2713, %v2367, %v2841
      %v2970 = vsel %vm2714, %v2372, %v2842
      %v2971 = vsel %vm2715, %v2375, %v2843
      %v2972 = vsel %vm2716, %v2380, %v2844
      %v2973 = vsel %vm2717, %v2383, %v2845
      %v2974 = vsel %vm2718, %v2388, %v2846
      %v2975 = vsel %vm2719, %v2391, %v2847
      %v2976 = vsel %vm2720, %v2396, %v2848
      %v2977 = vsel %vm2721, %v2399, %v2849
      %v2978 = vsel %vm2722, %v2404, %v2850
      %v2979 = vsel %vm2723, %v2407, %v2851
      %v2980 = vsel %vm2724, %v2412, %v2852
      %v2981 = vsel %vm2725, %v2415, %v2853
      %v2982 = vsel %vm2726, %v2420, %v2854
      %v2983 = vsel %vm2727, %v2423, %v2855
      %v2984 = vsel %vm2728, %v2428, %v2856
      %v2985 = vsel %vm2729, %v2431, %v2857
      %v2986 = vsel %vm2730, %v2436, %v2858
      %v2987 = vsel %vm2731, %v2439, %v2859
      %v2988 = vsel %vm2732, %v2444, %v2860
      %v2989 = vsel %vm2733, %v2447, %v2861
      %v2990 = vsel %vm2734, %v2452, %v2862
      %v2991 = vsel %vm2735, %v2455, %v2863
      %v2992 = vsel %vm2736, %v2460, %v2864
      %v2993 = vsel %vm2737, %v2463, %v2865
      %v2994 = vsel %vm2738, %v2468, %v2866
      %v2995 = vsel %vm2739, %v2471, %v2867
      %v2996 = vsel %vm2740, %v2476, %v2868
      %v2997 = vsel %vm2741, %v2479, %v2869
      %v2998 = vsel %vm2742, %v2484, %v2870
      %v2999 = vsel %vm2743, %v2487, %v2871
      %v3000 = vsel %vm2744, %v2492, %v2872
      %v3001 = vsel %vm2745, %v2495, %v2873
      %v3002 = vsel %vm2746, %v2500, %v2874
      %v3003 = vsel %vm2747, %v2503, %v2875
      %v3004 = vsel %vm2748, %v2508, %v2876
      %v3005 = vsel %vm2749, %v2511, %v2877
      %v3006 = vsel %vm2750, %v2516, %v2878
      %v3007 = vsel %vm2751, %v2519, %v2879
      %v3008 = vsel %vm2752, %v2524, %v2880
      %v3009 = vsel %vm2753, %v2527, %v2881
      %v3010 = vsel %vm2754, %v2532, %v2882
      %v3011 = vsel %vm2755, %v2535, %v2883
      %v3012 = vsel %vm2756, %v2540, %v2884
      %v3013 = vsel %vm2757, %v2543, %v2885
      %v3014 = vsel %vm2758, %v2548, %v2886
      %v3015 = vsel %vm2759, %v2551, %v2887
      %v3016 = vsel %vm2760, %v2556, %v2888
      %v3017 = vsel %vm2761, %v2559, %v2889
      %v3018 = vsel %vm2762, %v2564, %v2890
      %v3019 = vsel %vm2763, %v2567, %v2891
      %v3020 = vsel %vm2764, %v2572, %v2892
      %v3021 = vsel %vm2765, %v2575, %v2893
      %v3022 = vsel %vm2766, %v2580, %v2894
      %v3023 = vsel %vm2767, %v2583, %v2895
      %v3024 = vsel %vm2768, %v2588, %v2896
      %v3025 = vsel %vm2769, %v2591, %v2897
      %v3026 = vsel %vm2770, %v2596, %v2898
      %v3027 = vsel %vm2771, %v2599, %v2899
      %v3028 = vsel %vm2772, %v2604, %v2900
      %v3029 = vsel %vm2773, %v2607, %v2901
      %v3030 = vsel %vm2774, %v2612, %v2902
      %v3031 = vsel %vm2775, %v2615, %v2903
      %v3032 = vsel %vm2776, %v2620, %v2904
      %v3033 = vsel %vm2777, %v2623, %v2905
      %v3034 = vsel %vm2778, %v2628, %v2906
      %v3035 = vsel %vm2779, %v2631, %v2907
      %v3036 = vsel %vm2780, %v2636, %v2908
      %v3037 = vsel %vm2781, %v2639, %v2909
      %v3038 = vsel %vm2782, %v2644, %v2910
      %v3039 = vsel %vm2783, %v2647, %v2911
      %v3040 = vsel %vm2784, %v2652, %v2912
      %v3041 = vsel %vm2785, %v2655, %v2913
      %v3042 = vpack.c.bf16 %v2915, %v2914
      %v3043 = vpack.c.bf16 %v2917, %v2916
      %v3044 = vpack.c.bf16 %v2919, %v2918
      %v3045 = vpack.c.bf16 %v2921, %v2920
      %v3046 = vpack.c.bf16 %v2923, %v2922
      %v3047 = vpack.c.bf16 %v2925, %v2924
      %v3048 = vpack.c.bf16 %v2927, %v2926
      %v3049 = vpack.c.bf16 %v2929, %v2928
      %v3050 = vpack.c.bf16 %v2931, %v2930
      %v3051 = vpack.c.bf16 %v2933, %v2932
      %v3052 = vpack.c.bf16 %v2935, %v2934
      %v3053 = vpack.c.bf16 %v2937, %v2936
      %v3054 = vpack.c.bf16 %v2939, %v2938
      %v3055 = vpack.c.bf16 %v2941, %v2940
      %v3056 = vpack.c.bf16 %v2943, %v2942
      %v3057 = vpack.c.bf16 %v2945, %v2944
      %v3058 = vpack.c.bf16 %v2947, %v2946
      %v3059 = vpack.c.bf16 %v2949, %v2948
      %v3060 = vpack.c.bf16 %v2951, %v2950
      %v3061 = vpack.c.bf16 %v2953, %v2952
      %v3062 = vpack.c.bf16 %v2955, %v2954
      %v3063 = vpack.c.bf16 %v2957, %v2956
      %v3064 = vpack.c.bf16 %v2959, %v2958
      %v3065 = vpack.c.bf16 %v2961, %v2960
      %v3066 = vpack.c.bf16 %v2963, %v2962
      %v3067 = vpack.c.bf16 %v2965, %v2964
      %v3068 = vpack.c.bf16 %v2967, %v2966
      %v3069 = vpack.c.bf16 %v2969, %v2968
      %v3070 = vpack.c.bf16 %v2971, %v2970
      %v3071 = vpack.c.bf16 %v2973, %v2972
      %v3072 = vpack.c.bf16 %v2975, %v2974
      %v3073 = vpack.c.bf16 %v2977, %v2976
      %v3074 = vpack.c.bf16 %v2979, %v2978
      %v3075 = vpack.c.bf16 %v2981, %v2980
      %v3076 = vpack.c.bf16 %v2983, %v2982
      %v3077 = vpack.c.bf16 %v2985, %v2984
      %v3078 = vpack.c.bf16 %v2987, %v2986
      %v3079 = vpack.c.bf16 %v2989, %v2988
      %v3080 = vpack.c.bf16 %v2991, %v2990
      %v3081 = vpack.c.bf16 %v2993, %v2992
      %v3082 = vpack.c.bf16 %v2995, %v2994
      %v3083 = vpack.c.bf16 %v2997, %v2996
      %v3084 = vpack.c.bf16 %v2999, %v2998
      %v3085 = vpack.c.bf16 %v3001, %v3000
      %v3086 = vpack.c.bf16 %v3003, %v3002
      %v3087 = vpack.c.bf16 %v3005, %v3004
      %v3088 = vpack.c.bf16 %v3007, %v3006
      %v3089 = vpack.c.bf16 %v3009, %v3008
      %v3090 = vpack.c.bf16 %v3011, %v3010
      %v3091 = vpack.c.bf16 %v3013, %v3012
      %v3092 = vpack.c.bf16 %v3015, %v3014
      %v3093 = vpack.c.bf16 %v3017, %v3016
      %v3094 = vpack.c.bf16 %v3019, %v3018
      %v3095 = vpack.c.bf16 %v3021, %v3020
      %v3096 = vpack.c.bf16 %v3023, %v3022
      %v3097 = vpack.c.bf16 %v3025, %v3024
      %v3098 = vpack.c.bf16 %v3027, %v3026
      %v3099 = vpack.c.bf16 %v3029, %v3028
      %v3100 = vpack.c.bf16 %v3031, %v3030
      %v3101 = vpack.c.bf16 %v3033, %v3032
      %v3102 = vpack.c.bf16 %v3035, %v3034
      %v3103 = vpack.c.bf16 %v3037, %v3036
      %v3104 = vpack.c.bf16 %v3039, %v3038
      %v3105 = vpack.c.bf16 %v3041, %v3040
      %v3170 = vunpack.c.l.b16 %v3042
      %v3171 = vunpack.c.h.b16 %v3042
      %v3172 = vunpack.c.l.b16 %v3043
      %v3173 = vunpack.c.h.b16 %v3043
      %v3174 = vunpack.c.l.b16 %v3044
      %v3175 = vunpack.c.h.b16 %v3044
      %v3176 = vunpack.c.l.b16 %v3045
      %v3177 = vunpack.c.h.b16 %v3045
      %v3178 = vunpack.c.l.b16 %v3046
      %v3179 = vunpack.c.h.b16 %v3046
      %v3180 = vunpack.c.l.b16 %v3047
      %v3181 = vunpack.c.h.b16 %v3047
      %v3182 = vunpack.c.l.b16 %v3048
      %v3183 = vunpack.c.h.b16 %v3048
      %v3184 = vunpack.c.l.b16 %v3049
      %v3185 = vunpack.c.h.b16 %v3049
      %v3186 = vunpack.c.l.b16 %v3050
      %v3187 = vunpack.c.h.b16 %v3050
      %v3188 = vunpack.c.l.b16 %v3051
      %v3189 = vunpack.c.h.b16 %v3051
      %v3190 = vunpack.c.l.b16 %v3052
      %v3191 = vunpack.c.h.b16 %v3052
      %v3192 = vunpack.c.l.b16 %v3053
      %v3193 = vunpack.c.h.b16 %v3053
      %v3194 = vunpack.c.l.b16 %v3054
      %v3195 = vunpack.c.h.b16 %v3054
      %v3196 = vunpack.c.l.b16 %v3055
      %v3197 = vunpack.c.h.b16 %v3055
      %v3198 = vunpack.c.l.b16 %v3056
      %v3199 = vunpack.c.h.b16 %v3056
      %v3200 = vunpack.c.l.b16 %v3057
      %v3201 = vunpack.c.h.b16 %v3057
      %v3202 = vunpack.c.l.b16 %v3058
      %v3203 = vunpack.c.h.b16 %v3058
      %v3204 = vunpack.c.l.b16 %v3059
      %v3205 = vunpack.c.h.b16 %v3059
      %v3206 = vunpack.c.l.b16 %v3060
      %v3207 = vunpack.c.h.b16 %v3060
      %v3208 = vunpack.c.l.b16 %v3061
      %v3209 = vunpack.c.h.b16 %v3061
      %v3210 = vunpack.c.l.b16 %v3062
      %v3211 = vunpack.c.h.b16 %v3062
      %v3212 = vunpack.c.l.b16 %v3063
      %v3213 = vunpack.c.h.b16 %v3063
      %v3214 = vunpack.c.l.b16 %v3064
      %v3215 = vunpack.c.h.b16 %v3064
      %v3216 = vunpack.c.l.b16 %v3065
      %v3217 = vunpack.c.h.b16 %v3065
      %v3218 = vunpack.c.l.b16 %v3066
      %v3219 = vunpack.c.h.b16 %v3066
      %v3220 = vunpack.c.l.b16 %v3067
      %v3221 = vunpack.c.h.b16 %v3067
      %v3222 = vunpack.c.l.b16 %v3068
      %v3223 = vunpack.c.h.b16 %v3068
      %v3224 = vunpack.c.l.b16 %v3069
      %v3225 = vunpack.c.h.b16 %v3069
      %v3226 = vunpack.c.l.b16 %v3070
      %v3227 = vunpack.c.h.b16 %v3070
      %v3228 = vunpack.c.l.b16 %v3071
      %v3229 = vunpack.c.h.b16 %v3071
      %v3230 = vunpack.c.l.b16 %v3072
      %v3231 = vunpack.c.h.b16 %v3072
      %v3232 = vunpack.c.l.b16 %v3073
      %v3233 = vunpack.c.h.b16 %v3073
      %v3234 = vunpack.c.l.b16 %v3074
      %v3235 = vunpack.c.h.b16 %v3074
      %v3236 = vunpack.c.l.b16 %v3075
      %v3237 = vunpack.c.h.b16 %v3075
      %v3238 = vunpack.c.l.b16 %v3076
      %v3239 = vunpack.c.h.b16 %v3076
      %v3240 = vunpack.c.l.b16 %v3077
      %v3241 = vunpack.c.h.b16 %v3077
      %v3242 = vunpack.c.l.b16 %v3078
      %v3243 = vunpack.c.h.b16 %v3078
      %v3244 = vunpack.c.l.b16 %v3079
      %v3245 = vunpack.c.h.b16 %v3079
      %v3246 = vunpack.c.l.b16 %v3080
      %v3247 = vunpack.c.h.b16 %v3080
      %v3248 = vunpack.c.l.b16 %v3081
      %v3249 = vunpack.c.h.b16 %v3081
      %v3250 = vunpack.c.l.b16 %v3082
      %v3251 = vunpack.c.h.b16 %v3082
      %v3252 = vunpack.c.l.b16 %v3083
      %v3253 = vunpack.c.h.b16 %v3083
      %v3254 = vunpack.c.l.b16 %v3084
      %v3255 = vunpack.c.h.b16 %v3084
      %v3256 = vunpack.c.l.b16 %v3085
      %v3257 = vunpack.c.h.b16 %v3085
      %v3258 = vunpack.c.l.b16 %v3086
      %v3259 = vunpack.c.h.b16 %v3086
      %v3260 = vunpack.c.l.b16 %v3087
      %v3261 = vunpack.c.h.b16 %v3087
      %v3262 = vunpack.c.l.b16 %v3088
      %v3263 = vunpack.c.h.b16 %v3088
      %v3264 = vunpack.c.l.b16 %v3089
      %v3265 = vunpack.c.h.b16 %v3089
      %v3266 = vunpack.c.l.b16 %v3090
      %v3267 = vunpack.c.h.b16 %v3090
      %v3268 = vunpack.c.l.b16 %v3091
      %v3269 = vunpack.c.h.b16 %v3091
      %v3270 = vunpack.c.l.b16 %v3092
      %v3271 = vunpack.c.h.b16 %v3092
      %v3272 = vunpack.c.l.b16 %v3093
      %v3273 = vunpack.c.h.b16 %v3093
      %v3274 = vunpack.c.l.b16 %v3094
      %v3275 = vunpack.c.h.b16 %v3094
      %v3276 = vunpack.c.l.b16 %v3095
      %v3277 = vunpack.c.h.b16 %v3095
      %v3278 = vunpack.c.l.b16 %v3096
      %v3279 = vunpack.c.h.b16 %v3096
      %v3280 = vunpack.c.l.b16 %v3097
      %v3281 = vunpack.c.h.b16 %v3097
      %v3282 = vunpack.c.l.b16 %v3098
      %v3283 = vunpack.c.h.b16 %v3098
      %v3284 = vunpack.c.l.b16 %v3099
      %v3285 = vunpack.c.h.b16 %v3099
      %v3286 = vunpack.c.l.b16 %v3100
      %v3287 = vunpack.c.h.b16 %v3100
      %v3288 = vunpack.c.l.b16 %v3101
      %v3289 = vunpack.c.h.b16 %v3101
      %v3290 = vunpack.c.l.b16 %v3102
      %v3291 = vunpack.c.h.b16 %v3102
      %v3292 = vunpack.c.l.b16 %v3103
      %v3293 = vunpack.c.h.b16 %v3103
      %v3294 = vunpack.c.l.b16 %v3104
      %v3295 = vunpack.c.h.b16 %v3104
      %v3296 = vunpack.c.l.b16 %v3105
      %v3297 = vunpack.c.h.b16 %v3105
      %v3298 = vpack.c.b16 %v3170, %v3170
      %v3299 = vpack.c.b16 %v3171, %v3171
      %v3300 = vpack.c.b16 %v3172, %v3172
      %v3301 = vpack.c.b16 %v3173, %v3173
      %v3302 = vpack.c.b16 %v3174, %v3174
      %v3303 = vpack.c.b16 %v3175, %v3175
      %v3304 = vpack.c.b16 %v3176, %v3176
      %v3305 = vpack.c.b16 %v3177, %v3177
      %v3306 = vpack.c.b16 %v3178, %v3178
      %v3307 = vpack.c.b16 %v3179, %v3179
      %v3308 = vpack.c.b16 %v3180, %v3180
      %v3309 = vpack.c.b16 %v3181, %v3181
      %v3310 = vpack.c.b16 %v3182, %v3182
      %v3311 = vpack.c.b16 %v3183, %v3183
      %v3312 = vpack.c.b16 %v3184, %v3184
      %v3313 = vpack.c.b16 %v3185, %v3185
      %v3314 = vpack.c.b16 %v3186, %v3186
      %v3315 = vpack.c.b16 %v3187, %v3187
      %v3316 = vpack.c.b16 %v3188, %v3188
      %v3317 = vpack.c.b16 %v3189, %v3189
      %v3318 = vpack.c.b16 %v3190, %v3190
      %v3319 = vpack.c.b16 %v3191, %v3191
      %v3320 = vpack.c.b16 %v3192, %v3192
      %v3321 = vpack.c.b16 %v3193, %v3193
      %v3322 = vpack.c.b16 %v3194, %v3194
      %v3323 = vpack.c.b16 %v3195, %v3195
      %v3324 = vpack.c.b16 %v3196, %v3196
      %v3325 = vpack.c.b16 %v3197, %v3197
      %v3326 = vpack.c.b16 %v3198, %v3198
      %v3327 = vpack.c.b16 %v3199, %v3199
      %v3328 = vpack.c.b16 %v3200, %v3200
      %v3329 = vpack.c.b16 %v3201, %v3201
      %v3330 = vpack.c.b16 %v3202, %v3202
      %v3331 = vpack.c.b16 %v3203, %v3203
      %v3332 = vpack.c.b16 %v3204, %v3204
      %v3333 = vpack.c.b16 %v3205, %v3205
      %v3334 = vpack.c.b16 %v3206, %v3206
      %v3335 = vpack.c.b16 %v3207, %v3207
      %v3336 = vpack.c.b16 %v3208, %v3208
      %v3337 = vpack.c.b16 %v3209, %v3209
      %v3338 = vpack.c.b16 %v3210, %v3210
      %v3339 = vpack.c.b16 %v3211, %v3211
      %v3340 = vpack.c.b16 %v3212, %v3212
      %v3341 = vpack.c.b16 %v3213, %v3213
      %v3342 = vpack.c.b16 %v3214, %v3214
      %v3343 = vpack.c.b16 %v3215, %v3215
      %v3344 = vpack.c.b16 %v3216, %v3216
      %v3345 = vpack.c.b16 %v3217, %v3217
      %v3346 = vpack.c.b16 %v3218, %v3218
      %v3347 = vpack.c.b16 %v3219, %v3219
      %v3348 = vpack.c.b16 %v3220, %v3220
      %v3349 = vpack.c.b16 %v3221, %v3221
      %v3350 = vpack.c.b16 %v3222, %v3222
      %v3351 = vpack.c.b16 %v3223, %v3223
      %v3352 = vpack.c.b16 %v3224, %v3224
      %v3353 = vpack.c.b16 %v3225, %v3225
      %v3354 = vpack.c.b16 %v3226, %v3226
      %v3355 = vpack.c.b16 %v3227, %v3227
      %v3356 = vpack.c.b16 %v3228, %v3228
      %v3357 = vpack.c.b16 %v3229, %v3229
      %v3358 = vpack.c.b16 %v3230, %v3230
      %v3359 = vpack.c.b16 %v3231, %v3231
      %v3360 = vpack.c.b16 %v3232, %v3232
      %v3361 = vpack.c.b16 %v3233, %v3233
      %v3362 = vpack.c.b16 %v3234, %v3234
      %v3363 = vpack.c.b16 %v3235, %v3235
      %v3364 = vpack.c.b16 %v3236, %v3236
      %v3365 = vpack.c.b16 %v3237, %v3237
      %v3366 = vpack.c.b16 %v3238, %v3238
      %v3367 = vpack.c.b16 %v3239, %v3239
      %v3368 = vpack.c.b16 %v3240, %v3240
      %v3369 = vpack.c.b16 %v3241, %v3241
      %v3370 = vpack.c.b16 %v3242, %v3242
      %v3371 = vpack.c.b16 %v3243, %v3243
      %v3372 = vpack.c.b16 %v3244, %v3244
      %v3373 = vpack.c.b16 %v3245, %v3245
      %v3374 = vpack.c.b16 %v3246, %v3246
      %v3375 = vpack.c.b16 %v3247, %v3247
      %v3376 = vpack.c.b16 %v3248, %v3248
      %v3377 = vpack.c.b16 %v3249, %v3249
      %v3378 = vpack.c.b16 %v3250, %v3250
      %v3379 = vpack.c.b16 %v3251, %v3251
      %v3380 = vpack.c.b16 %v3252, %v3252
      %v3381 = vpack.c.b16 %v3253, %v3253
      %v3382 = vpack.c.b16 %v3254, %v3254
      %v3383 = vpack.c.b16 %v3255, %v3255
      %v3384 = vpack.c.b16 %v3256, %v3256
      %v3385 = vpack.c.b16 %v3257, %v3257
      %v3386 = vpack.c.b16 %v3258, %v3258
      %v3387 = vpack.c.b16 %v3259, %v3259
      %v3388 = vpack.c.b16 %v3260, %v3260
      %v3389 = vpack.c.b16 %v3261, %v3261
      %v3390 = vpack.c.b16 %v3262, %v3262
      %v3391 = vpack.c.b16 %v3263, %v3263
      %v3392 = vpack.c.b16 %v3264, %v3264
      %v3393 = vpack.c.b16 %v3265, %v3265
      %v3394 = vpack.c.b16 %v3266, %v3266
      %v3395 = vpack.c.b16 %v3267, %v3267
      %v3396 = vpack.c.b16 %v3268, %v3268
      %v3397 = vpack.c.b16 %v3269, %v3269
      %v3398 = vpack.c.b16 %v3270, %v3270
      %v3399 = vpack.c.b16 %v3271, %v3271
      %v3400 = vpack.c.b16 %v3272, %v3272
      %v3401 = vpack.c.b16 %v3273, %v3273
      %v3402 = vpack.c.b16 %v3274, %v3274
      %v3403 = vpack.c.b16 %v3275, %v3275
      %v3404 = vpack.c.b16 %v3276, %v3276
      %v3405 = vpack.c.b16 %v3277, %v3277
      %v3406 = vpack.c.b16 %v3278, %v3278
      %v3407 = vpack.c.b16 %v3279, %v3279
      %v3408 = vpack.c.b16 %v3280, %v3280
      %v3409 = vpack.c.b16 %v3281, %v3281
      %v3410 = vpack.c.b16 %v3282, %v3282
      %v3411 = vpack.c.b16 %v3283, %v3283
      %v3412 = vpack.c.b16 %v3284, %v3284
      %v3413 = vpack.c.b16 %v3285, %v3285
      %v3414 = vpack.c.b16 %v3286, %v3286
      %v3415 = vpack.c.b16 %v3287, %v3287
      %v3416 = vpack.c.b16 %v3288, %v3288
      %v3417 = vpack.c.b16 %v3289, %v3289
      %v3418 = vpack.c.b16 %v3290, %v3290
      %v3419 = vpack.c.b16 %v3291, %v3291
      %v3420 = vpack.c.b16 %v3292, %v3292
      %v3421 = vpack.c.b16 %v3293, %v3293
      %v3422 = vpack.c.b16 %v3294, %v3294
      %v3423 = vpack.c.b16 %v3295, %v3295
      %v3424 = vpack.c.b16 %v3296, %v3296
      %v3425 = vpack.c.b16 %v3297, %v3297
      %vm3554 = vcmask 519168
      %3555 = vst.msk [vmem:[%s226] sm:$0xf] %vm3554, %v3298
      %3556 = vst.msk [vmem:[%s226 + $0x4] sm:$0xf] %vm3554, %v3299
      %3557 = vst.msk [vmem:[%s226 + $0x8] sm:$0xf] %vm3554, %v3300
      %3558 = vst.msk [vmem:[%s226 + $0xc] sm:$0xf] %vm3554, %v3301
      %3559 = vst.msk [vmem:[%s226 + $0x10] sm:$0xf] %vm3554, %v3302
      %3560 = vst.msk [vmem:[%s226 + $0x14] sm:$0xf] %vm3554, %v3303
      %3561 = vst.msk [vmem:[%s226 + $0x18] sm:$0xf] %vm3554, %v3304
      %3562 = vst.msk [vmem:[%s226 + $0x1c] sm:$0xf] %vm3554, %v3305
      %3563 = vst.msk [vmem:[%s226 + $0x20] sm:$0xf] %vm3554, %v3306
      %3564 = vst.msk [vmem:[%s226 + $0x24] sm:$0xf] %vm3554, %v3307
      %3565 = vst.msk [vmem:[%s226 + $0x28] sm:$0xf] %vm3554, %v3308
      %3566 = vst.msk [vmem:[%s226 + $0x2c] sm:$0xf] %vm3554, %v3309
      %3567 = vst.msk [vmem:[%s226 + $0x30] sm:$0xf] %vm3554, %v3310
      %3568 = vst.msk [vmem:[%s226 + $0x34] sm:$0xf] %vm3554, %v3311
      %3569 = vst.msk [vmem:[%s226 + $0x38] sm:$0xf] %vm3554, %v3312
      %3570 = vst.msk [vmem:[%s226 + $0x3c] sm:$0xf] %vm3554, %v3313
      %3571 = vst.msk [vmem:[%s226 + $0x40] sm:$0xf] %vm3554, %v3314
      %3572 = vst.msk [vmem:[%s226 + $0x44] sm:$0xf] %vm3554, %v3315
      %3573 = vst.msk [vmem:[%s226 + $0x48] sm:$0xf] %vm3554, %v3316
      %3574 = vst.msk [vmem:[%s226 + $0x4c] sm:$0xf] %vm3554, %v3317
      %3575 = vst.msk [vmem:[%s226 + $0x50] sm:$0xf] %vm3554, %v3318
      %3576 = vst.msk [vmem:[%s226 + $0x54] sm:$0xf] %vm3554, %v3319
      %3577 = vst.msk [vmem:[%s226 + $0x58] sm:$0xf] %vm3554, %v3320
      %3578 = vst.msk [vmem:[%s226 + $0x5c] sm:$0xf] %vm3554, %v3321
      %3579 = vst.msk [vmem:[%s226 + $0x60] sm:$0xf] %vm3554, %v3322
      %3580 = vst.msk [vmem:[%s226 + $0x64] sm:$0xf] %vm3554, %v3323
      %3581 = vst.msk [vmem:[%s226 + $0x68] sm:$0xf] %vm3554, %v3324
      %3582 = vst.msk [vmem:[%s226 + $0x6c] sm:$0xf] %vm3554, %v3325
      %3583 = vst.msk [vmem:[%s226 + $0x70] sm:$0xf] %vm3554, %v3326
      %3584 = vst.msk [vmem:[%s226 + $0x74] sm:$0xf] %vm3554, %v3327
      %3585 = vst.msk [vmem:[%s226 + $0x78] sm:$0xf] %vm3554, %v3328
      %3586 = vst.msk [vmem:[%s226 + $0x7c] sm:$0xf] %vm3554, %v3329
      %3587 = vst.msk [vmem:[%s226 + $0x80] sm:$0xf] %vm3554, %v3330
      %3588 = vst.msk [vmem:[%s226 + $0x84] sm:$0xf] %vm3554, %v3331
      %3589 = vst.msk [vmem:[%s226 + $0x88] sm:$0xf] %vm3554, %v3332
      %3590 = vst.msk [vmem:[%s226 + $0x8c] sm:$0xf] %vm3554, %v3333
      %3591 = vst.msk [vmem:[%s226 + $0x90] sm:$0xf] %vm3554, %v3334
      %3592 = vst.msk [vmem:[%s226 + $0x94] sm:$0xf] %vm3554, %v3335
      %3593 = vst.msk [vmem:[%s226 + $0x98] sm:$0xf] %vm3554, %v3336
      %3594 = vst.msk [vmem:[%s226 + $0x9c] sm:$0xf] %vm3554, %v3337
      %3595 = vst.msk [vmem:[%s226 + $0xa0] sm:$0xf] %vm3554, %v3338
      %3596 = vst.msk [vmem:[%s226 + $0xa4] sm:$0xf] %vm3554, %v3339
      %3597 = vst.msk [vmem:[%s226 + $0xa8] sm:$0xf] %vm3554, %v3340
      %3598 = vst.msk [vmem:[%s226 + $0xac] sm:$0xf] %vm3554, %v3341
      %3599 = vst.msk [vmem:[%s226 + $0xb0] sm:$0xf] %vm3554, %v3342
      %3600 = vst.msk [vmem:[%s226 + $0xb4] sm:$0xf] %vm3554, %v3343
      %3601 = vst.msk [vmem:[%s226 + $0xb8] sm:$0xf] %vm3554, %v3344
      %3602 = vst.msk [vmem:[%s226 + $0xbc] sm:$0xf] %vm3554, %v3345
      %3603 = vst.msk [vmem:[%s226 + $0xc0] sm:$0xf] %vm3554, %v3346
      %3604 = vst.msk [vmem:[%s226 + $0xc4] sm:$0xf] %vm3554, %v3347
      %3605 = vst.msk [vmem:[%s226 + $0xc8] sm:$0xf] %vm3554, %v3348
      %3606 = vst.msk [vmem:[%s226 + $0xcc] sm:$0xf] %vm3554, %v3349
      %3607 = vst.msk [vmem:[%s226 + $0xd0] sm:$0xf] %vm3554, %v3350
      %3608 = vst.msk [vmem:[%s226 + $0xd4] sm:$0xf] %vm3554, %v3351
      %3609 = vst.msk [vmem:[%s226 + $0xd8] sm:$0xf] %vm3554, %v3352
      %3610 = vst.msk [vmem:[%s226 + $0xdc] sm:$0xf] %vm3554, %v3353
      %3611 = vst.msk [vmem:[%s226 + $0xe0] sm:$0xf] %vm3554, %v3354
      %3612 = vst.msk [vmem:[%s226 + $0xe4] sm:$0xf] %vm3554, %v3355
      %3613 = vst.msk [vmem:[%s226 + $0xe8] sm:$0xf] %vm3554, %v3356
      %3614 = vst.msk [vmem:[%s226 + $0xec] sm:$0xf] %vm3554, %v3357
      %3615 = vst.msk [vmem:[%s226 + $0xf0] sm:$0xf] %vm3554, %v3358
      %3616 = vst.msk [vmem:[%s226 + $0xf4] sm:$0xf] %vm3554, %v3359
      %3617 = vst.msk [vmem:[%s226 + $0xf8] sm:$0xf] %vm3554, %v3360
      %3618 = vst.msk [vmem:[%s226 + $0xfc] sm:$0xf] %vm3554, %v3361
      %3619 = vst.msk [vmem:[%s226 + $0x100] sm:$0xf] %vm3554, %v3362
      %3620 = vst.msk [vmem:[%s226 + $0x104] sm:$0xf] %vm3554, %v3363
      %3621 = vst.msk [vmem:[%s226 + $0x108] sm:$0xf] %vm3554, %v3364
      %3622 = vst.msk [vmem:[%s226 + $0x10c] sm:$0xf] %vm3554, %v3365
      %3623 = vst.msk [vmem:[%s226 + $0x110] sm:$0xf] %vm3554, %v3366
      %3624 = vst.msk [vmem:[%s226 + $0x114] sm:$0xf] %vm3554, %v3367
      %3625 = vst.msk [vmem:[%s226 + $0x118] sm:$0xf] %vm3554, %v3368
      %3626 = vst.msk [vmem:[%s226 + $0x11c] sm:$0xf] %vm3554, %v3369
      %3627 = vst.msk [vmem:[%s226 + $0x120] sm:$0xf] %vm3554, %v3370
      %3628 = vst.msk [vmem:[%s226 + $0x124] sm:$0xf] %vm3554, %v3371
      %3629 = vst.msk [vmem:[%s226 + $0x128] sm:$0xf] %vm3554, %v3372
      %3630 = vst.msk [vmem:[%s226 + $0x12c] sm:$0xf] %vm3554, %v3373
      %3631 = vst.msk [vmem:[%s226 + $0x130] sm:$0xf] %vm3554, %v3374
      %3632 = vst.msk [vmem:[%s226 + $0x134] sm:$0xf] %vm3554, %v3375
      %3633 = vst.msk [vmem:[%s226 + $0x138] sm:$0xf] %vm3554, %v3376
      %3634 = vst.msk [vmem:[%s226 + $0x13c] sm:$0xf] %vm3554, %v3377
      %3635 = vst.msk [vmem:[%s226 + $0x140] sm:$0xf] %vm3554, %v3378
      %3636 = vst.msk [vmem:[%s226 + $0x144] sm:$0xf] %vm3554, %v3379
      %3637 = vst.msk [vmem:[%s226 + $0x148] sm:$0xf] %vm3554, %v3380
      %3638 = vst.msk [vmem:[%s226 + $0x14c] sm:$0xf] %vm3554, %v3381
      %3639 = vst.msk [vmem:[%s226 + $0x150] sm:$0xf] %vm3554, %v3382
      %3640 = vst.msk [vmem:[%s226 + $0x154] sm:$0xf] %vm3554, %v3383
      %3641 = vst.msk [vmem:[%s226 + $0x158] sm:$0xf] %vm3554, %v3384
      %3642 = vst.msk [vmem:[%s226 + $0x15c] sm:$0xf] %vm3554, %v3385
      %3643 = vst.msk [vmem:[%s226 + $0x160] sm:$0xf] %vm3554, %v3386
      %3644 = vst.msk [vmem:[%s226 + $0x164] sm:$0xf] %vm3554, %v3387
      %3645 = vst.msk [vmem:[%s226 + $0x168] sm:$0xf] %vm3554, %v3388
      %3646 = vst.msk [vmem:[%s226 + $0x16c] sm:$0xf] %vm3554, %v3389
      %3647 = vst.msk [vmem:[%s226 + $0x170] sm:$0xf] %vm3554, %v3390
      %3648 = vst.msk [vmem:[%s226 + $0x174] sm:$0xf] %vm3554, %v3391
      %3649 = vst.msk [vmem:[%s226 + $0x178] sm:$0xf] %vm3554, %v3392
      %3650 = vst.msk [vmem:[%s226 + $0x17c] sm:$0xf] %vm3554, %v3393
      %3651 = vst.msk [vmem:[%s226 + $0x180] sm:$0xf] %vm3554, %v3394
      %3652 = vst.msk [vmem:[%s226 + $0x184] sm:$0xf] %vm3554, %v3395
      %3653 = vst.msk [vmem:[%s226 + $0x188] sm:$0xf] %vm3554, %v3396
      %3654 = vst.msk [vmem:[%s226 + $0x18c] sm:$0xf] %vm3554, %v3397
      %3655 = vst.msk [vmem:[%s226 + $0x190] sm:$0xf] %vm3554, %v3398
      %3656 = vst.msk [vmem:[%s226 + $0x194] sm:$0xf] %vm3554, %v3399
      %3657 = vst.msk [vmem:[%s226 + $0x198] sm:$0xf] %vm3554, %v3400
      %3658 = vst.msk [vmem:[%s226 + $0x19c] sm:$0xf] %vm3554, %v3401
      %3659 = vst.msk [vmem:[%s226 + $0x1a0] sm:$0xf] %vm3554, %v3402
      %3660 = vst.msk [vmem:[%s226 + $0x1a4] sm:$0xf] %vm3554, %v3403
      %3661 = vst.msk [vmem:[%s226 + $0x1a8] sm:$0xf] %vm3554, %v3404
      %3662 = vst.msk [vmem:[%s226 + $0x1ac] sm:$0xf] %vm3554, %v3405
      %3663 = vst.msk [vmem:[%s226 + $0x1b0] sm:$0xf] %vm3554, %v3406
      %3664 = vst.msk [vmem:[%s226 + $0x1b4] sm:$0xf] %vm3554, %v3407
      %3665 = vst.msk [vmem:[%s226 + $0x1b8] sm:$0xf] %vm3554, %v3408
      %3666 = vst.msk [vmem:[%s226 + $0x1bc] sm:$0xf] %vm3554, %v3409
      %3667 = vst.msk [vmem:[%s226 + $0x1c0] sm:$0xf] %vm3554, %v3410
      %3668 = vst.msk [vmem:[%s226 + $0x1c4] sm:$0xf] %vm3554, %v3411
      %3669 = vst.msk [vmem:[%s226 + $0x1c8] sm:$0xf] %vm3554, %v3412
      %3670 = vst.msk [vmem:[%s226 + $0x1cc] sm:$0xf] %vm3554, %v3413
      %3671 = vst.msk [vmem:[%s226 + $0x1d0] sm:$0xf] %vm3554, %v3414
      %3672 = vst.msk [vmem:[%s226 + $0x1d4] sm:$0xf] %vm3554, %v3415
      %3673 = vst.msk [vmem:[%s226 + $0x1d8] sm:$0xf] %vm3554, %v3416
      %3674 = vst.msk [vmem:[%s226 + $0x1dc] sm:$0xf] %vm3554, %v3417
      %3675 = vst.msk [vmem:[%s226 + $0x1e0] sm:$0xf] %vm3554, %v3418
      %3676 = vst.msk [vmem:[%s226 + $0x1e4] sm:$0xf] %vm3554, %v3419
      %3677 = vst.msk [vmem:[%s226 + $0x1e8] sm:$0xf] %vm3554, %v3420
      %3678 = vst.msk [vmem:[%s226 + $0x1ec] sm:$0xf] %vm3554, %v3421
      %3679 = vst.msk [vmem:[%s226 + $0x1f0] sm:$0xf] %vm3554, %v3422
      %3680 = vst.msk [vmem:[%s226 + $0x1f4] sm:$0xf] %vm3554, %v3423
      %3681 = vst.msk [vmem:[%s226 + $0x1f8] sm:$0xf] %vm3554, %v3424
      %3682 = vst.msk [vmem:[%s226 + $0x1fc] sm:$0xf] %vm3554, %v3425
      %s3683 = smul.u32 128, %s16
      %p3684 = scmp.lt.s32.totalorder %s3683, 255
      %s3685 = scalar_select %p3684, %s3683, 255
      %s3686 = smul.addr %s3685, 4
      %s3687 = scalar_lea.vmem %s5, %s3686
      // Predicated region
      $region41: #{discriminator_forward.5} parent=39 // pred_check
        %p3688 = pneg %p144
      $region42: #{discriminator_forward.5} parent=39 // pred_check_branch
        %3690 = sbr.rel (%p3688) target = $region44
      $region43: #{discriminator_forward.5} parent=39 // pred_region
        %s3691 = smul.u32 128, %s16
      $region44: #{discriminator_forward.5} parent=39 // pred_fallthru
        _
    $region40: #{discriminator_forward.5} parent=5 // pred_fallthru
      _
    %p3692 = scmp.le.s32.totalorder 2, %s11
    // Predicated region
    $region45: #{discriminator_forward.5} parent=5 // pred_check
      %p3693 = pneg %p3692
    $region46: #{discriminator_forward.5} parent=5 // pred_check_branch
      %3695 = sbr.rel (%p3693) target = $region48
    $region47: #{discriminator_forward.5} parent=5 // pred_region
      %s3696 = ssub.s32 %s11, 2
      // Predicated region
      $region49: #{discriminator_forward.5} parent=47 // pred_check
        %p3697 = pneg %p150
      $region50: #{discriminator_forward.5} parent=47 // pred_check_branch
        %3699 = sbr.rel (%p3697) target = $region52
      $region51: #{discriminator_forward.5} parent=47 // pred_region
        %s3700 = smul.u32 128, %s17
        %p3701 = scmp.lt.s32.totalorder %s3700, 255
        %s3702 = scalar_select %p3701, %s3700, 255
        %s3703 = smul.addr %s3702, 4
        %s3704 = scalar_lea.vmem %s5, %s3703
      $region52: #{discriminator_forward.5} parent=47 // pred_fallthru
        _
    $region48: #{discriminator_forward.5} parent=5 // pred_fallthru
      _
  $region6: #{discriminator_forward.5} parent=0 // loop_footer
    %s15 = sadd.s32 1, %s11
  $region7: #{discriminator_forward.5} parent=0 // loop_footer_branch
    %10 = sbr.rel target = $region3
  $region8: #{discriminator_forward.5} parent=0 // loop_exit
    _

// kernel: discriminator_forward.6
$region0: #{discriminator_forward.6}
  #allocation0 [shape = 'u32[]', space=smem, size = 0x4, offset = 0x4, fixed_abs, tag = 'smem constant byte address 0x4 - core index']
  #allocation1 [shape = 'u32[144,128]{1,0:T(1,128)}', space=vmem, size = 0x12000, scoped, tag = 'internal scratch']
  %s0 = inlined_call_operand.vmem [shape: bf16[512,256], index: 0, kind: input, shape index: {}]
  %s1 = inlined_call_operand.vmem [shape: bf16[256,128], index: 1, kind: input, shape index: {}]
  %s2 = inlined_call_operand.vmem [shape: f32[1,128], index: 2, kind: input, shape index: {}]
  %s3 = inlined_call_operand.vmem [shape: bf16[128,128], index: 3, kind: input, shape index: {}]
  %s4 = inlined_call_operand.vmem [shape: f32[1,128], index: 4, kind: input, shape index: {}]
  %s5 = inlined_call_operand.vmem [shape: bf16[512,128], index: 5, kind: output, shape index: {}]
  %s6 = sld [smem:[#allocation0]]
  $region53: #{discriminator_forward.6} parent=0
    _
  %s8 = ssub.s32 1, %s6
  %s9 = scalar_select 0, %s8, %s6
  loop: start=0, step=1, limit=4
  $region2: #{discriminator_forward.6} parent=0 // loop_pre_header
    _
  $region3: #{discriminator_forward.6} parent=0 // loop_header
    %s11 = sphi 0, %s15
    %p12 = scmp.ge.s32.totalorder %s11, 4
    %s21 = sphi 0, %s23
    %s24 = sphi 0, %s21
    %s25 = sphi 0, %s24
    %s41 = sphi 0, %s25
    %s45 = sphi 0, %s45
    %s47 = sphi 0, %s45
    %s48 = sphi 0, %s47
    %s62 = sphi 0, %s48
    %s66 = sphi 0, %s66
    %s68 = sphi 0, %s66
    %s69 = sphi 0, %s68
    %s83 = sphi 0, %s69
    %s87 = sphi 0, %s87
    %s89 = sphi 0, %s87
    %s90 = sphi 0, %s89
    %s104 = sphi 0, %s90
    %s108 = sphi 0, %s108
    %s110 = sphi 0, %s108
    %s111 = sphi 0, %s110
    %s125 = sphi 0, %s111
    %s131 = sphi 0, %s133
    %s134 = sphi 0, %s131
    %s135 = sphi 0, %s134
    %s151 = sphi 0, %s135
  $region4: #{discriminator_forward.6} parent=0 // loop_header_branch
    %14 = sbr.rel (%p12) target = $region8
  $region5: #{discriminator_forward.6} parent=0 // loop_body
    %s16 = ssub.s32 %s11, 1
    %s17 = ssub.s32 %s11, 2
    %s18 = sadd.s32 %s11, 1
    %s19 = ssub.s32 %s11, %s18
    %p20 = scmp.eq.s32.totalorder %s19, 0
    %s22 = sadd.s32 %s21, 1
    %s23 = scalar_select %p20, %s21, %s22
    %p26 = pneg %p20
    %p27 = scmp.eq.s32.totalorder %s11, 1
    %p28 = por %p26, %p27
    %p29 = scmp.ne.s32.totalorder %s21, %s24
    %p30 = scmp.eq.s32.totalorder %s11, 0
    %p31 = por %p29, %p30
    %p32 = scmp.ne.s32.totalorder %s21, %s24
    %p33 = scmp.eq.s32.totalorder %s16, 1
    %p34 = por %p32, %p33
    %p35 = scmp.ne.s32.totalorder %s24, %s25
    %p36 = scmp.eq.s32.totalorder %s16, 0
    %p37 = por %p35, %p36
    %p38 = scmp.ne.s32.totalorder %s24, %s25
    %p39 = scmp.eq.s32.totalorder %s17, 1
    %p40 = por %p38, %p39
    %p42 = scmp.ne.s32.totalorder %s25, %s41
    %p43 = scmp.eq.s32.totalorder %s17, 0
    %p44 = por %p42, %p43
    %s46 = sadd.s32 %s45, 1
    %p49 = scmp.eq.s32.totalorder %s11, 1
    %p50 = scmp.ne.s32.totalorder %s45, %s47
    %p51 = scmp.eq.s32.totalorder %s11, 0
    %p52 = por %p50, %p51
    %p53 = scmp.ne.s32.totalorder %s45, %s47
    %p54 = scmp.eq.s32.totalorder %s16, 1
    %p55 = por %p53, %p54
    %p56 = scmp.ne.s32.totalorder %s47, %s48
    %p57 = scmp.eq.s32.totalorder %s16, 0
    %p58 = por %p56, %p57
    %p59 = scmp.ne.s32.totalorder %s47, %s48
    %p60 = scmp.eq.s32.totalorder %s17, 1
    %p61 = por %p59, %p60
    %p63 = scmp.ne.s32.totalorder %s48, %s62
    %p64 = scmp.eq.s32.totalorder %s17, 0
    %p65 = por %p63, %p64
    %s67 = sadd.s32 %s66, 1
    %p70 = scmp.eq.s32.totalorder %s11, 1
    %p71 = scmp.ne.s32.totalorder %s66, %s68
    %p72 = scmp.eq.s32.totalorder %s11, 0
    %p73 = por %p71, %p72
    %p74 = scmp.ne.s32.totalorder %s66, %s68
    %p75 = scmp.eq.s32.totalorder %s16, 1
    %p76 = por %p74, %p75
    %p77 = scmp.ne.s32.totalorder %s68, %s69
    %p78 = scmp.eq.s32.totalorder %s16, 0
    %p79 = por %p77, %p78
    %p80 = scmp.ne.s32.totalorder %s68, %s69
    %p81 = scmp.eq.s32.totalorder %s17, 1
    %p82 = por %p80, %p81
    %p84 = scmp.ne.s32.totalorder %s69, %s83
    %p85 = scmp.eq.s32.totalorder %s17, 0
    %p86 = por %p84, %p85
    %s88 = sadd.s32 %s87, 1
    %p91 = scmp.eq.s32.totalorder %s11, 1
    %p92 = scmp.ne.s32.totalorder %s87, %s89
    %p93 = scmp.eq.s32.totalorder %s11, 0
    %p94 = por %p92, %p93
    %p95 = scmp.ne.s32.totalorder %s87, %s89
    %p96 = scmp.eq.s32.totalorder %s16, 1
    %p97 = por %p95, %p96
    %p98 = scmp.ne.s32.totalorder %s89, %s90
    %p99 = scmp.eq.s32.totalorder %s16, 0
    %p100 = por %p98, %p99
    %p101 = scmp.ne.s32.totalorder %s89, %s90
    %p102 = scmp.eq.s32.totalorder %s17, 1
    %p103 = por %p101, %p102
    %p105 = scmp.ne.s32.totalorder %s90, %s104
    %p106 = scmp.eq.s32.totalorder %s17, 0
    %p107 = por %p105, %p106
    %s109 = sadd.s32 %s108, 1
    %p112 = scmp.eq.s32.totalorder %s11, 1
    %p113 = scmp.ne.s32.totalorder %s108, %s110
    %p114 = scmp.eq.s32.totalorder %s11, 0
    %p115 = por %p113, %p114
    %p116 = scmp.ne.s32.totalorder %s108, %s110
    %p117 = scmp.eq.s32.totalorder %s16, 1
    %p118 = por %p116, %p117
    %p119 = scmp.ne.s32.totalorder %s110, %s111
    %p120 = scmp.eq.s32.totalorder %s16, 0
    %p121 = por %p119, %p120
    %p122 = scmp.ne.s32.totalorder %s110, %s111
    %p123 = scmp.eq.s32.totalorder %s17, 1
    %p124 = por %p122, %p123
    %p126 = scmp.ne.s32.totalorder %s111, %s125
    %p127 = scmp.eq.s32.totalorder %s17, 0
    %p128 = por %p126, %p127
    %s129 = ssub.s32 %s11, %s18
    %p130 = scmp.eq.s32.totalorder %s129, 0
    %s132 = sadd.s32 %s131, 1
    %s133 = scalar_select %p130, %s131, %s132
    %p136 = pneg %p130
    %p137 = scmp.eq.s32.totalorder %s11, 1
    %p138 = por %p136, %p137
    %p139 = scmp.ne.s32.totalorder %s131, %s134
    %p140 = scmp.eq.s32.totalorder %s11, 0
    %p141 = por %p139, %p140
    %p142 = scmp.ne.s32.totalorder %s131, %s134
    %p143 = scmp.eq.s32.totalorder %s16, 1
    %p144 = por %p142, %p143
    %p145 = scmp.ne.s32.totalorder %s134, %s135
    %p146 = scmp.eq.s32.totalorder %s16, 0
    %p147 = por %p145, %p146
    %p148 = scmp.ne.s32.totalorder %s134, %s135
    %p149 = scmp.eq.s32.totalorder %s17, 1
    %p150 = por %p148, %p149
    %p152 = scmp.ne.s32.totalorder %s135, %s151
    %p153 = scmp.eq.s32.totalorder %s17, 0
    %p154 = por %p152, %p153
    %p155 = scmp.le.s32.totalorder 1, %s11
    %p156 = scmp.lt.s32.totalorder %s11, 3
    %p157 = pnand %p155, %p156
    %p158 = pneg %p157
    // Predicated region
    $region9: #{discriminator_forward.6} parent=5 // pred_check
      _
    $region10: #{discriminator_forward.6} parent=5 // pred_check_branch
      %160 = sbr.rel (%p157) target = $region12
    $region11: #{discriminator_forward.6} parent=5 // pred_region
      %s161 = ssub.s32 %s11, 1
      // Predicated region
      $region13: #{discriminator_forward.6} parent=11 // pred_check
        %p162 = pneg %p58
      $region14: #{discriminator_forward.6} parent=11 // pred_check_branch
        %164 = sbr.rel (%p162) target = $region16
      $region15: #{discriminator_forward.6} parent=11 // pred_region
        _
      $region16: #{discriminator_forward.6} parent=11 // pred_fallthru
        _
      // Predicated region
      $region17: #{discriminator_forward.6} parent=11 // pred_check
        %p165 = pneg %p79
      $region18: #{discriminator_forward.6} parent=11 // pred_check_branch
        %167 = sbr.rel (%p165) target = $region20
      $region19: #{discriminator_forward.6} parent=11 // pred_region
        _
      $region20: #{discriminator_forward.6} parent=11 // pred_fallthru
        _
      // Predicated region
      $region21: #{discriminator_forward.6} parent=11 // pred_check
        %p168 = pneg %p100
      $region22: #{discriminator_forward.6} parent=11 // pred_check_branch
        %170 = sbr.rel (%p168) target = $region24
      $region23: #{discriminator_forward.6} parent=11 // pred_region
        _
      $region24: #{discriminator_forward.6} parent=11 // pred_fallthru
        _
      // Predicated region
      $region25: #{discriminator_forward.6} parent=11 // pred_check
        %p171 = pneg %p121
      $region26: #{discriminator_forward.6} parent=11 // pred_check_branch
        %173 = sbr.rel (%p171) target = $region28
      $region27: #{discriminator_forward.6} parent=11 // pred_region
        _
      $region28: #{discriminator_forward.6} parent=11 // pred_fallthru
        _
    $region12: #{discriminator_forward.6} parent=5 // pred_fallthru
      _
    %p174 = scmp.lt.s32.totalorder %s11, 2
    // Predicated region
    $region29: #{discriminator_forward.6} parent=5 // pred_check
      %p175 = pneg %p174
    $region30: #{discriminator_forward.6} parent=5 // pred_check_branch
      %177 = sbr.rel (%p175) target = $region32
    $region31: #{discriminator_forward.6} parent=5 // pred_region
      // Predicated region
      $region33: #{discriminator_forward.6} parent=31 // pred_check
        %p178 = pneg %p31
      $region34: #{discriminator_forward.6} parent=31 // pred_check_branch
        %180 = sbr.rel (%p178) target = $region36
      $region35: #{discriminator_forward.6} parent=31 // pred_region
        %s181 = smul.u32 32, %s11
        %p182 = scmp.lt.s32.totalorder %s181, 63
        %s183 = scalar_select %p182, %s181, 63
        %s184 = smul.addr %s183, 2
        %s185 = smul.addr %s184, 4
        %s186 = scalar_lea.vmem %s0, %s185
        %s187 = smul.u32 32, %s11
      $region36: #{discriminator_forward.6} parent=31 // pred_fallthru
        _
    $region32: #{discriminator_forward.6} parent=5 // pred_fallthru
      _
    %p188 = scmp.le.s32.totalorder 1, %s11
    %p189 = scmp.lt.s32.totalorder %s11, 3
    %p190 = pnand %p188, %p189
    %p191 = pneg %p190
    // Predicated region
    $region37: #{discriminator_forward.6} parent=5 // pred_check
      _
    $region38: #{discriminator_forward.6} parent=5 // pred_check_branch
      %193 = sbr.rel (%p190) target = $region40
    $region39: #{discriminator_forward.6} parent=5 // pred_region
      %s194 = ssub.s32 %s11, 1
      %s195 = smul.u32 32, %s16
      %p196 = scmp.lt.s32.totalorder %s195, 63
      %s197 = scalar_select %p196, %s195, 63
      %s198 = smul.addr %s197, 2
      %s199 = smul.addr %s198, 4
      %s200 = scalar_lea.vmem %s0, %s199
      %p201 = pneg %p37
      %p202 = pneg %p34
      %p203 = pneg %p58
      %p204 = pneg %p55
      %p205 = pneg %p79
      %p206 = pneg %p76
      %p207 = pneg %p100
      %p208 = pneg %p97
      %p209 = pneg %p121
      %p210 = pneg %p118
      %p211 = pneg %p147
      %p212 = pneg %p144
      %s213 = smul.u32 32, %s16
      %p214 = scmp.lt.s32.totalorder %s213, 63
      %s215 = scalar_select %p214, %s213, 63
      %s216 = smul.addr %s215, 4
      %s217 = scalar_lea.vmem %s5, %s216
      %s218 = smul.u32 32, %s16
      %p219 = scmp.lt.s32.totalorder %s218, 63
      %s220 = scalar_select %p219, %s218, 63
      %s221 = smul.addr %s220, 2
      %s222 = smul.addr %s221, 4
      %s223 = scalar_lea.vmem %s0, %s222
      %s224 = smul.u32 32, %s16
      %s225 = smul.u32 32, %s16
      %p226 = scmp.lt.s32.totalorder %s225, 63
      %s227 = scalar_select %p226, %s225, 63
      %s228 = smul.addr %s227, 4
      %s229 = scalar_lea.vmem %s5, %s228
      %s230 = smul.u32 32, %s16
      %v232 = vld [vmem:[%s223] sm:$0xff]
      %v233 = vld [vmem:[%s223 + $0x8] sm:$0xff]
      %v234 = vld [vmem:[%s223 + $0x10] sm:$0xff]
      %v235 = vld [vmem:[%s223 + $0x18] sm:$0xff]
      %v236 = vld [vmem:[%s223 + $0x20] sm:$0xff]
      %v237 = vld [vmem:[%s223 + $0x28] sm:$0xff]
      %v238 = vld [vmem:[%s223 + $0x30] sm:$0xff]
      %v239 = vld [vmem:[%s223 + $0x38] sm:$0xff]
      %v240 = vld [vmem:[%s223 + $0x40] sm:$0xff]
      %v241 = vld [vmem:[%s223 + $0x48] sm:$0xff]
      %v242 = vld [vmem:[%s223 + $0x50] sm:$0xff]
      %v243 = vld [vmem:[%s223 + $0x58] sm:$0xff]
      %v244 = vld [vmem:[%s223 + $0x60] sm:$0xff]
      %v245 = vld [vmem:[%s223 + $0x68] sm:$0xff]
      %v246 = vld [vmem:[%s223 + $0x70] sm:$0xff]
      %v247 = vld [vmem:[%s223 + $0x78] sm:$0xff]
      %v248 = vld [vmem:[%s223 + $0x80] sm:$0xff]
      %v249 = vld [vmem:[%s223 + $0x88] sm:$0xff]
      %v250 = vld [vmem:[%s223 + $0x90] sm:$0xff]
      %v251 = vld [vmem:[%s223 + $0x98] sm:$0xff]
      %v252 = vld [vmem:[%s223 + $0xa0] sm:$0xff]
      %v253 = vld [vmem:[%s223 + $0xa8] sm:$0xff]
      %v254 = vld [vmem:[%s223 + $0xb0] sm:$0xff]
      %v255 = vld [vmem:[%s223 + $0xb8] sm:$0xff]
      %v256 = vld [vmem:[%s223 + $0xc0] sm:$0xff]
      %v257 = vld [vmem:[%s223 + $0xc8] sm:$0xff]
      %v258 = vld [vmem:[%s223 + $0xd0] sm:$0xff]
      %v259 = vld [vmem:[%s223 + $0xd8] sm:$0xff]
      %v260 = vld [vmem:[%s223 + $0xe0] sm:$0xff]
      %v261 = vld [vmem:[%s223 + $0xe8] sm:$0xff]
      %v262 = vld [vmem:[%s223 + $0xf0] sm:$0xff]
      %v263 = vld [vmem:[%s223 + $0xf8] sm:$0xff]
      %v264 = vld [vmem:[%s1] sm:$0xf]
      %v265 = vld [vmem:[%s1 + $0x4] sm:$0xf]
      %v266 = vld [vmem:[%s1 + $0x8] sm:$0xf]
      %v267 = vld [vmem:[%s1 + $0xc] sm:$0xf]
      %v268 = vld [vmem:[%s1 + $0x10] sm:$0xf]
      %v269 = vld [vmem:[%s1 + $0x14] sm:$0xf]
      %v270 = vld [vmem:[%s1 + $0x18] sm:$0xf]
      %v271 = vld [vmem:[%s1 + $0x1c] sm:$0xf]
      %v272 = vld [vmem:[%s1 + $0x20] sm:$0xf]
      %v273 = vld [vmem:[%s1 + $0x24] sm:$0xf]
      %v274 = vld [vmem:[%s1 + $0x28] sm:$0xf]
      %v275 = vld [vmem:[%s1 + $0x2c] sm:$0xf]
      %v276 = vld [vmem:[%s1 + $0x30] sm:$0xf]
      %v277 = vld [vmem:[%s1 + $0x34] sm:$0xf]
      %v278 = vld [vmem:[%s1 + $0x38] sm:$0xf]
      %v279 = vld [vmem:[%s1 + $0x3c] sm:$0xf]
      %v280 = vld [vmem:[%s1 + $0x40] sm:$0xf]
      %v281 = vld [vmem:[%s1 + $0x44] sm:$0xf]
      %v282 = vld [vmem:[%s1 + $0x48] sm:$0xf]
      %v283 = vld [vmem:[%s1 + $0x4c] sm:$0xf]
      %v284 = vld [vmem:[%s1 + $0x50] sm:$0xf]
      %v285 = vld [vmem:[%s1 + $0x54] sm:$0xf]
      %v286 = vld [vmem:[%s1 + $0x58] sm:$0xf]
      %v287 = vld [vmem:[%s1 + $0x5c] sm:$0xf]
      %v288 = vld [vmem:[%s1 + $0x60] sm:$0xf]
      %v289 = vld [vmem:[%s1 + $0x64] sm:$0xf]
      %v290 = vld [vmem:[%s1 + $0x68] sm:$0xf]
      %v291 = vld [vmem:[%s1 + $0x6c] sm:$0xf]
      %v292 = vld [vmem:[%s1 + $0x70] sm:$0xf]
      %v293 = vld [vmem:[%s1 + $0x74] sm:$0xf]
      %v294 = vld [vmem:[%s1 + $0x78] sm:$0xf]
      %v295 = vld [vmem:[%s1 + $0x7c] sm:$0xf]
      %v296 = vld [vmem:[%s2] sm:$0x1]
      %v298 = vlaneseq
      %v299 = vshrl.u32 %v298, 7
      %v300 = vsub.s32 0, %v299
      %v301 = vrot.slane %v296, %v300
      %v335 = vunpack.c.l.b16 %v232
      %v336 = vunpack.c.h.b16 %v232
      %v337 = vunpack.c.l.b16 %v233
      %v338 = vunpack.c.h.b16 %v233
      %v339 = vunpack.c.l.b16 %v234
      %v340 = vunpack.c.h.b16 %v234
      %v341 = vunpack.c.l.b16 %v235
      %v342 = vunpack.c.h.b16 %v235
      %v343 = vunpack.c.l.b16 %v236
      %v344 = vunpack.c.h.b16 %v236
      %v345 = vunpack.c.l.b16 %v237
      %v346 = vunpack.c.h.b16 %v237
      %v347 = vunpack.c.l.b16 %v238
      %v348 = vunpack.c.h.b16 %v238
      %v349 = vunpack.c.l.b16 %v239
      %v350 = vunpack.c.h.b16 %v239
      %v351 = vunpack.c.l.b16 %v240
      %v352 = vunpack.c.h.b16 %v240
      %v353 = vunpack.c.l.b16 %v241
      %v354 = vunpack.c.h.b16 %v241
      %v355 = vunpack.c.l.b16 %v242
      %v356 = vunpack.c.h.b16 %v242
      %v357 = vunpack.c.l.b16 %v243
      %v358 = vunpack.c.h.b16 %v243
      %v359 = vunpack.c.l.b16 %v244
      %v360 = vunpack.c.h.b16 %v244
      %v361 = vunpack.c.l.b16 %v245
      %v362 = vunpack.c.h.b16 %v245
      %v363 = vunpack.c.l.b16 %v246
      %v364 = vunpack.c.h.b16 %v246
      %v365 = vunpack.c.l.b16 %v247
      %v366 = vunpack.c.h.b16 %v247
      %v367 = vunpack.c.l.b16 %v248
      %v368 = vunpack.c.h.b16 %v248
      %v369 = vunpack.c.l.b16 %v249
      %v370 = vunpack.c.h.b16 %v249
      %v371 = vunpack.c.l.b16 %v250
      %v372 = vunpack.c.h.b16 %v250
      %v373 = vunpack.c.l.b16 %v251
      %v374 = vunpack.c.h.b16 %v251
      %v375 = vunpack.c.l.b16 %v252
      %v376 = vunpack.c.h.b16 %v252
      %v377 = vunpack.c.l.b16 %v253
      %v378 = vunpack.c.h.b16 %v253
      %v379 = vunpack.c.l.b16 %v254
      %v380 = vunpack.c.h.b16 %v254
      %v381 = vunpack.c.l.b16 %v255
      %v382 = vunpack.c.h.b16 %v255
      %v383 = vunpack.c.l.b16 %v256
      %v384 = vunpack.c.h.b16 %v256
      %v385 = vunpack.c.l.b16 %v257
      %v386 = vunpack.c.h.b16 %v257
      %v387 = vunpack.c.l.b16 %v258
      %v388 = vunpack.c.h.b16 %v258
      %v389 = vunpack.c.l.b16 %v259
      %v390 = vunpack.c.h.b16 %v259
      %v391 = vunpack.c.l.b16 %v260
      %v392 = vunpack.c.h.b16 %v260
      %v393 = vunpack.c.l.b16 %v261
      %v394 = vunpack.c.h.b16 %v261
      %v395 = vunpack.c.l.b16 %v262
      %v396 = vunpack.c.h.b16 %v262
      %v397 = vunpack.c.l.b16 %v263
      %v398 = vunpack.c.h.b16 %v263
      %v399 = vpack.c.b16 %v337, %v335
      %v400 = vpack.c.b16 %v338, %v336
      %v401 = vpack.c.b16 %v341, %v339
      %v402 = vpack.c.b16 %v342, %v340
      %v403 = vpack.c.b16 %v345, %v343
      %v404 = vpack.c.b16 %v346, %v344
      %v405 = vpack.c.b16 %v349, %v347
      %v406 = vpack.c.b16 %v350, %v348
      %v407 = vpack.c.b16 %v353, %v351
      %v408 = vpack.c.b16 %v354, %v352
      %v409 = vpack.c.b16 %v357, %v355
      %v410 = vpack.c.b16 %v358, %v356
      %v411 = vpack.c.b16 %v361, %v359
      %v412 = vpack.c.b16 %v362, %v360
      %v413 = vpack.c.b16 %v365, %v363
      %v414 = vpack.c.b16 %v366, %v364
      %v415 = vpack.c.b16 %v369, %v367
      %v416 = vpack.c.b16 %v370, %v368
      %v417 = vpack.c.b16 %v373, %v371
      %v418 = vpack.c.b16 %v374, %v372
      %v419 = vpack.c.b16 %v377, %v375
      %v420 = vpack.c.b16 %v378, %v376
      %v421 = vpack.c.b16 %v381, %v379
      %v422 = vpack.c.b16 %v382, %v380
      %v423 = vpack.c.b16 %v385, %v383
      %v424 = vpack.c.b16 %v386, %v384
      %v425 = vpack.c.b16 %v389, %v387
      %v426 = vpack.c.b16 %v390, %v388
      %v427 = vpack.c.b16 %v393, %v391
      %v428 = vpack.c.b16 %v394, %v392
      %v429 = vpack.c.b16 %v397, %v395
      %v430 = vpack.c.b16 %v398, %v396
      %v495 = vunpack.c.l.b16 %v264
      %v496 = vunpack.c.l.b16 %v265
      %v497 = vunpack.c.l.b16 %v266
      %v498 = vunpack.c.l.b16 %v267
      %v499 = vunpack.c.l.b16 %v268
      %v500 = vunpack.c.l.b16 %v269
      %v501 = vunpack.c.l.b16 %v270
      %v502 = vunpack.c.l.b16 %v271
      %v503 = vunpack.c.l.b16 %v272
      %v504 = vunpack.c.l.b16 %v273
      %v505 = vunpack.c.l.b16 %v274
      %v506 = vunpack.c.l.b16 %v275
      %v507 = vunpack.c.l.b16 %v276
      %v508 = vunpack.c.l.b16 %v277
      %v509 = vunpack.c.l.b16 %v278
      %v510 = vunpack.c.l.b16 %v279
      %v511 = vunpack.c.l.b16 %v280
      %v512 = vunpack.c.l.b16 %v281
      %v513 = vunpack.c.l.b16 %v282
      %v514 = vunpack.c.l.b16 %v283
      %v515 = vunpack.c.l.b16 %v284
      %v516 = vunpack.c.l.b16 %v285
      %v517 = vunpack.c.l.b16 %v286
      %v518 = vunpack.c.l.b16 %v287
      %v519 = vunpack.c.l.b16 %v288
      %v520 = vunpack.c.l.b16 %v289
      %v521 = vunpack.c.l.b16 %v290
      %v522 = vunpack.c.l.b16 %v291
      %v523 = vunpack.c.l.b16 %v292
      %v524 = vunpack.c.l.b16 %v293
      %v525 = vunpack.c.l.b16 %v294
      %v526 = vunpack.c.l.b16 %v295
      %v527 = vpack.c.b16 %v496, %v495
      %v528 = vpack.c.b16 %v498, %v497
      %v529 = vpack.c.b16 %v500, %v499
      %v530 = vpack.c.b16 %v502, %v501
      %v531 = vpack.c.b16 %v504, %v503
      %v532 = vpack.c.b16 %v506, %v505
      %v533 = vpack.c.b16 %v508, %v507
      %v534 = vpack.c.b16 %v510, %v509
      %v535 = vpack.c.b16 %v512, %v511
      %v536 = vpack.c.b16 %v514, %v513
      %v537 = vpack.c.b16 %v516, %v515
      %v538 = vpack.c.b16 %v518, %v517
      %v539 = vpack.c.b16 %v520, %v519
      %v540 = vpack.c.b16 %v522, %v521
      %v541 = vpack.c.b16 %v524, %v523
      %v542 = vpack.c.b16 %v526, %v525
      %559 = vmatprep.subr.bf16.mxu0 0
      %560 = vmatpush1.bf16.msra.mxu0 %v527
      %561 = vmatprep.subr.bf16.mxu0 0
      %562 = vmatpush1.bf16.msra.mxu0 %v528
      %563 = vmatprep.subr.bf16.mxu0 0
      %564 = vmatpush1.bf16.msra.mxu0 %v529
      %565 = vmatprep.subr.bf16.mxu0 0
      %566 = vmatpush1.bf16.msra.mxu0 %v530
      %567 = vmatprep.subr.bf16.mxu0 0
      %568 = vmatpush1.bf16.msra.mxu0 %v531
      %569 = vmatprep.subr.bf16.mxu0 0
      %570 = vmatpush1.bf16.msra.mxu0 %v532
      %571 = vmatprep.subr.bf16.mxu0 0
      %572 = vmatpush1.bf16.msra.mxu0 %v533
      %573 = vmatprep.subr.bf16.mxu0 0
      %574 = vmatpush1.bf16.msra.mxu0 %v534
      %575 = vmatprep.subr.bf16.mxu0 0
      %576 = vmatpush1.bf16.msra.mxu0 %v535
      %577 = vmatprep.subr.bf16.mxu0 0
      %578 = vmatpush1.bf16.msra.mxu0 %v536
      %579 = vmatprep.subr.bf16.mxu0 0
      %580 = vmatpush1.bf16.msra.mxu0 %v537
      %581 = vmatprep.subr.bf16.mxu0 0
      %582 = vmatpush1.bf16.msra.mxu0 %v538
      %583 = vmatprep.subr.bf16.mxu0 0
      %584 = vmatpush1.bf16.msra.mxu0 %v539
      %585 = vmatprep.subr.bf16.mxu0 0
      %586 = vmatpush1.bf16.msra.mxu0 %v540
      %587 = vmatprep.subr.bf16.mxu0 0
      %588 = vmatpush1.bf16.msra.mxu0 %v541
      %589 = vmatprep.subr.bf16.mxu0 0
      %590 = vmatpush1.bf16.msra.mxu0 %v542
      %591 = vmatprep.mubr.bf16.mxu0 %v400
      %592 = vmatmul.mubr.bf16.gmra.mrb[0].mxu0 %v399
      %v593 = vpop.f32.mrb[0].mxu0
      %v594 = vadd.f32 %v301, %v593
      %v595 = vpop.f32.mrb[0].mxu0
      %v596 = vpop.f32.mrb[0].mxu0
      %v597 = vadd.f32 %v301, %v596
      %v598 = vpop.f32.mrb[0].mxu0
      %599 = vmatprep.mubr.bf16.mxu0 %v402
      %600 = vmatmul.mubr.bf16.gmra.mrb[0].mxu0 %v401
      %v601 = vpop.f32.mrb[0].mxu0
      %v602 = vadd.f32 %v301, %v601
      %v603 = vpop.f32.mrb[0].mxu0
      %v604 = vpop.f32.mrb[0].mxu0
      %v605 = vadd.f32 %v301, %v604
      %v606 = vpop.f32.mrb[0].mxu0
      %607 = vmatprep.mubr.bf16.mxu0 %v404
      %608 = vmatmul.mubr.bf16.gmra.mrb[0].mxu0 %v403
      %v609 = vpop.f32.mrb[0].mxu0
      %v610 = vadd.f32 %v301, %v609
      %v611 = vpop.f32.mrb[0].mxu0
      %v612 = vpop.f32.mrb[0].mxu0
      %v613 = vadd.f32 %v301, %v612
      %v614 = vpop.f32.mrb[0].mxu0
      %615 = vmatprep.mubr.bf16.mxu0 %v406
      %616 = vmatmul.mubr.bf16.gmra.mrb[0].mxu0 %v405
      %v617 = vpop.f32.mrb[0].mxu0
      %v618 = vadd.f32 %v301, %v617
      %v619 = vpop.f32.mrb[0].mxu0
      %v620 = vpop.f32.mrb[0].mxu0
      %v621 = vadd.f32 %v301, %v620
      %v622 = vpop.f32.mrb[0].mxu0
      %623 = vmatprep.mubr.bf16.mxu0 %v408
      %624 = vmatmul.mubr.bf16.gmra.mrb[0].mxu0 %v407
      %v625 = vpop.f32.mrb[0].mxu0
      %v626 = vadd.f32 %v301, %v625
      %v627 = vpop.f32.mrb[0].mxu0
      %v628 = vpop.f32.mrb[0].mxu0
      %v629 = vadd.f32 %v301, %v628
      %v630 = vpop.f32.mrb[0].mxu0
      %631 = vmatprep.mubr.bf16.mxu0 %v410
      %632 = vmatmul.mubr.bf16.gmra.mrb[0].mxu0 %v409
      %v633 = vpop.f32.mrb[0].mxu0
      %v634 = vadd.f32 %v301, %v633
      %v635 = vpop.f32.mrb[0].mxu0
      %v636 = vpop.f32.mrb[0].mxu0
      %v637 = vadd.f32 %v301, %v636
      %v638 = vpop.f32.mrb[0].mxu0
      %639 = vmatprep.mubr.bf16.mxu0 %v412
      %640 = vmatmul.mubr.bf16.gmra.mrb[0].mxu0 %v411
      %v641 = vpop.f32.mrb[0].mxu0
      %v642 = vadd.f32 %v301, %v641
      %v643 = vpop.f32.mrb[0].mxu0
      %v644 = vpop.f32.mrb[0].mxu0
      %v645 = vadd.f32 %v301, %v644
      %v646 = vpop.f32.mrb[0].mxu0
      %647 = vmatprep.mubr.bf16.mxu0 %v414
      %648 = vmatmul.mubr.bf16.gmra.mrb[0].mxu0 %v413
      %v649 = vpop.f32.mrb[0].mxu0
      %v650 = vadd.f32 %v301, %v649
      %v651 = vpop.f32.mrb[0].mxu0
      %v652 = vpop.f32.mrb[0].mxu0
      %v653 = vadd.f32 %v301, %v652
      %v654 = vpop.f32.mrb[0].mxu0
      %655 = vmatprep.mubr.bf16.mxu0 %v416
      %656 = vmatmul.mubr.bf16.gmra.mrb[0].mxu0 %v415
      %v657 = vpop.f32.mrb[0].mxu0
      %v658 = vadd.f32 %v301, %v657
      %v659 = vpop.f32.mrb[0].mxu0
      %v660 = vpop.f32.mrb[0].mxu0
      %v661 = vadd.f32 %v301, %v660
      %v662 = vpop.f32.mrb[0].mxu0
      %663 = vmatprep.mubr.bf16.mxu0 %v418
      %664 = vmatmul.mubr.bf16.gmra.mrb[0].mxu0 %v417
      %v665 = vpop.f32.mrb[0].mxu0
      %v666 = vadd.f32 %v301, %v665
      %v667 = vpop.f32.mrb[0].mxu0
      %v668 = vpop.f32.mrb[0].mxu0
      %v669 = vadd.f32 %v301, %v668
      %v670 = vpop.f32.mrb[0].mxu0
      %671 = vmatprep.mubr.bf16.mxu0 %v420
      %672 = vmatmul.mubr.bf16.gmra.mrb[0].mxu0 %v419
      %v673 = vpop.f32.mrb[0].mxu0
      %v674 = vadd.f32 %v301, %v673
      %v675 = vpop.f32.mrb[0].mxu0
      %v676 = vpop.f32.mrb[0].mxu0
      %v677 = vadd.f32 %v301, %v676
      %v678 = vpop.f32.mrb[0].mxu0
      %679 = vmatprep.mubr.bf16.mxu0 %v422
      %680 = vmatmul.mubr.bf16.gmra.mrb[0].mxu0 %v421
      %v681 = vpop.f32.mrb[0].mxu0
      %v682 = vadd.f32 %v301, %v681
      %v683 = vpop.f32.mrb[0].mxu0
      %v684 = vpop.f32.mrb[0].mxu0
      %v685 = vadd.f32 %v301, %v684
      %v686 = vpop.f32.mrb[0].mxu0
      %687 = vmatprep.mubr.bf16.mxu0 %v424
      %688 = vmatmul.mubr.bf16.gmra.mrb[0].mxu0 %v423
      %v689 = vpop.f32.mrb[0].mxu0
      %v690 = vadd.f32 %v301, %v689
      %v691 = vpop.f32.mrb[0].mxu0
      %v692 = vpop.f32.mrb[0].mxu0
      %v693 = vadd.f32 %v301, %v692
      %v694 = vpop.f32.mrb[0].mxu0
      %695 = vmatprep.mubr.bf16.mxu0 %v426
      %696 = vmatmul.mubr.bf16.gmra.mrb[0].mxu0 %v425
      %v697 = vpop.f32.mrb[0].mxu0
      %v698 = vadd.f32 %v301, %v697
      %v699 = vpop.f32.mrb[0].mxu0
      %v700 = vpop.f32.mrb[0].mxu0
      %v701 = vadd.f32 %v301, %v700
      %v702 = vpop.f32.mrb[0].mxu0
      %703 = vmatprep.mubr.bf16.mxu0 %v428
      %704 = vmatmul.mubr.bf16.gmra.mrb[0].mxu0 %v427
      %v705 = vpop.f32.mrb[0].mxu0
      %v706 = vadd.f32 %v301, %v705
      %v707 = vpop.f32.mrb[0].mxu0
      %v708 = vpop.f32.mrb[0].mxu0
      %v709 = vadd.f32 %v301, %v708
      %v710 = vpop.f32.mrb[0].mxu0
      %711 = vmatprep.mubr.bf16.mxu0 %v430
      %712 = vmatmul.mubr.bf16.gmra.mrb[0].mxu0 %v429
      %v713 = vpop.f32.mrb[0].mxu0
      %v714 = vadd.f32 %v301, %v713
      %v715 = vpop.f32.mrb[0].mxu0
      %v716 = vpop.f32.mrb[0].mxu0
      %v717 = vadd.f32 %v301, %v716
      %v718 = vpop.f32.mrb[0].mxu0
      %719 = vdwg.mxu0
      %vm720 = vcmp.ge.f32.partialorder %v594, 0.0
      %vm721 = vcmp.ge.f32.partialorder %v597, 0.0
      %vm722 = vcmp.ge.f32.partialorder %v602, 0.0
      %vm723 = vcmp.ge.f32.partialorder %v605, 0.0
      %vm724 = vcmp.ge.f32.partialorder %v610, 0.0
      %vm725 = vcmp.ge.f32.partialorder %v613, 0.0
      %vm726 = vcmp.ge.f32.partialorder %v618, 0.0
      %vm727 = vcmp.ge.f32.partialorder %v621, 0.0
      %vm728 = vcmp.ge.f32.partialorder %v626, 0.0
      %vm729 = vcmp.ge.f32.partialorder %v629, 0.0
      %vm730 = vcmp.ge.f32.partialorder %v634, 0.0
      %vm731 = vcmp.ge.f32.partialorder %v637, 0.0
      %vm732 = vcmp.ge.f32.partialorder %v642, 0.0
      %vm733 = vcmp.ge.f32.partialorder %v645, 0.0
      %vm734 = vcmp.ge.f32.partialorder %v650, 0.0
      %vm735 = vcmp.ge.f32.partialorder %v653, 0.0
      %vm736 = vcmp.ge.f32.partialorder %v658, 0.0
      %vm737 = vcmp.ge.f32.partialorder %v661, 0.0
      %vm738 = vcmp.ge.f32.partialorder %v666, 0.0
      %vm739 = vcmp.ge.f32.partialorder %v669, 0.0
      %vm740 = vcmp.ge.f32.partialorder %v674, 0.0
      %vm741 = vcmp.ge.f32.partialorder %v677, 0.0
      %vm742 = vcmp.ge.f32.partialorder %v682, 0.0
      %vm743 = vcmp.ge.f32.partialorder %v685, 0.0
      %vm744 = vcmp.ge.f32.partialorder %v690, 0.0
      %vm745 = vcmp.ge.f32.partialorder %v693, 0.0
      %vm746 = vcmp.ge.f32.partialorder %v698, 0.0
      %vm747 = vcmp.ge.f32.partialorder %v701, 0.0
      %vm748 = vcmp.ge.f32.partialorder %v706, 0.0
      %vm749 = vcmp.ge.f32.partialorder %v709, 0.0
      %vm750 = vcmp.ge.f32.partialorder %v714, 0.0
      %vm751 = vcmp.ge.f32.partialorder %v717, 0.0
      %v752 = vmul.f32 %v594, 0.01
      %v753 = vmul.f32 %v597, 0.01
      %v754 = vmul.f32 %v602, 0.01
      %v755 = vmul.f32 %v605, 0.01
      %v756 = vmul.f32 %v610, 0.01
      %v757 = vmul.f32 %v613, 0.01
      %v758 = vmul.f32 %v618, 0.01
      %v759 = vmul.f32 %v621, 0.01
      %v760 = vmul.f32 %v626, 0.01
      %v761 = vmul.f32 %v629, 0.01
      %v762 = vmul.f32 %v634, 0.01
      %v763 = vmul.f32 %v637, 0.01
      %v764 = vmul.f32 %v642, 0.01
      %v765 = vmul.f32 %v645, 0.01
      %v766 = vmul.f32 %v650, 0.01
      %v767 = vmul.f32 %v653, 0.01
      %v768 = vmul.f32 %v658, 0.01
      %v769 = vmul.f32 %v661, 0.01
      %v770 = vmul.f32 %v666, 0.01
      %v771 = vmul.f32 %v669, 0.01
      %v772 = vmul.f32 %v674, 0.01
      %v773 = vmul.f32 %v677, 0.01
      %v774 = vmul.f32 %v682, 0.01
      %v775 = vmul.f32 %v685, 0.01
      %v776 = vmul.f32 %v690, 0.01
      %v777 = vmul.f32 %v693, 0.01
      %v778 = vmul.f32 %v698, 0.01
      %v779 = vmul.f32 %v701, 0.01
      %v780 = vmul.f32 %v706, 0.01
      %v781 = vmul.f32 %v709, 0.01
      %v782 = vmul.f32 %v714, 0.01
      %v783 = vmul.f32 %v717, 0.01
      %v784 = vsel %vm720, %v594, %v752
      %v785 = vsel %vm721, %v597, %v753
      %v786 = vsel %vm722, %v602, %v754
      %v787 = vsel %vm723, %v605, %v755
      %v788 = vsel %vm724, %v610, %v756
      %v789 = vsel %vm725, %v613, %v757
      %v790 = vsel %vm726, %v618, %v758
      %v791 = vsel %vm727, %v621, %v759
      %v792 = vsel %vm728, %v626, %v760
      %v793 = vsel %vm729, %v629, %v761
      %v794 = vsel %vm730, %v634, %v762
      %v795 = vsel %vm731, %v637, %v763
      %v796 = vsel %vm732, %v642, %v764
      %v797 = vsel %vm733, %v645, %v765
      %v798 = vsel %vm734, %v650, %v766
      %v799 = vsel %vm735, %v653, %v767
      %v800 = vsel %vm736, %v658, %v768
      %v801 = vsel %vm737, %v661, %v769
      %v802 = vsel %vm738, %v666, %v770
      %v803 = vsel %vm739, %v669, %v771
      %v804 = vsel %vm740, %v674, %v772
      %v805 = vsel %vm741, %v677, %v773
      %v806 = vsel %vm742, %v682, %v774
      %v807 = vsel %vm743, %v685, %v775
      %v808 = vsel %vm744, %v690, %v776
      %v809 = vsel %vm745, %v693, %v777
      %v810 = vsel %vm746, %v698, %v778
      %v811 = vsel %vm747, %v701, %v779
      %v812 = vsel %vm748, %v706, %v780
      %v813 = vsel %vm749, %v709, %v781
      %v814 = vsel %vm750, %v714, %v782
      %v815 = vsel %vm751, %v717, %v783
      %v816 = vpack.c.bf16 %v785, %v784
      %v817 = vpack.c.bf16 %v787, %v786
      %v818 = vpack.c.bf16 %v789, %v788
      %v819 = vpack.c.bf16 %v791, %v790
      %v820 = vpack.c.bf16 %v793, %v792
      %v821 = vpack.c.bf16 %v795, %v794
      %v822 = vpack.c.bf16 %v797, %v796
      %v823 = vpack.c.bf16 %v799, %v798
      %v824 = vpack.c.bf16 %v801, %v800
      %v825 = vpack.c.bf16 %v803, %v802
      %v826 = vpack.c.bf16 %v805, %v804
      %v827 = vpack.c.bf16 %v807, %v806
      %v828 = vpack.c.bf16 %v809, %v808
      %v829 = vpack.c.bf16 %v811, %v810
      %v830 = vpack.c.bf16 %v813, %v812
      %v831 = vpack.c.bf16 %v815, %v814
      %v832 = vld [vmem:[%s3] sm:$0xf]
      %v833 = vld [vmem:[%s3 + $0x4] sm:$0xf]
      %v834 = vld [vmem:[%s3 + $0x8] sm:$0xf]
      %v835 = vld [vmem:[%s3 + $0xc] sm:$0xf]
      %v836 = vld [vmem:[%s3 + $0x10] sm:$0xf]
      %v837 = vld [vmem:[%s3 + $0x14] sm:$0xf]
      %v838 = vld [vmem:[%s3 + $0x18] sm:$0xf]
      %v839 = vld [vmem:[%s3 + $0x1c] sm:$0xf]
      %v840 = vld [vmem:[%s3 + $0x20] sm:$0xf]
      %v841 = vld [vmem:[%s3 + $0x24] sm:$0xf]
      %v842 = vld [vmem:[%s3 + $0x28] sm:$0xf]
      %v843 = vld [vmem:[%s3 + $0x2c] sm:$0xf]
      %v844 = vld [vmem:[%s3 + $0x30] sm:$0xf]
      %v845 = vld [vmem:[%s3 + $0x34] sm:$0xf]
      %v846 = vld [vmem:[%s3 + $0x38] sm:$0xf]
      %v847 = vld [vmem:[%s3 + $0x3c] sm:$0xf]
      %v848 = vld [vmem:[%s4] sm:$0x1]
      %v850 = vlaneseq
      %v851 = vshrl.u32 %v850, 7
      %v852 = vsub.s32 0, %v851
      %v853 = vrot.slane %v848, %v852
      %v871 = vunpack.c.l.b16 %v832
      %v872 = vunpack.c.l.b16 %v833
      %v873 = vunpack.c.l.b16 %v834
      %v874 = vunpack.c.l.b16 %v835
      %v875 = vunpack.c.l.b16 %v836
      %v876 = vunpack.c.l.b16 %v837
      %v877 = vunpack.c.l.b16 %v838
      %v878 = vunpack.c.l.b16 %v839
      %v879 = vunpack.c.l.b16 %v840
      %v880 = vunpack.c.l.b16 %v841
      %v881 = vunpack.c.l.b16 %v842
      %v882 = vunpack.c.l.b16 %v843
      %v883 = vunpack.c.l.b16 %v844
      %v884 = vunpack.c.l.b16 %v845
      %v885 = vunpack.c.l.b16 %v846
      %v886 = vunpack.c.l.b16 %v847
      %v887 = vpack.c.b16 %v872, %v871
      %v888 = vpack.c.b16 %v874, %v873
      %v889 = vpack.c.b16 %v876, %v875
      %v890 = vpack.c.b16 %v878, %v877
      %v891 = vpack.c.b16 %v880, %v879
      %v892 = vpack.c.b16 %v882, %v881
      %v893 = vpack.c.b16 %v884, %v883
      %v894 = vpack.c.b16 %v886, %v885
      %903 = vmatprep.subr.bf16.mxu0 0
      %904 = vmatpush1.bf16.msra.mxu0 %v887
      %905 = vmatprep.subr.bf16.mxu0 0
      %906 = vmatpush1.bf16.msra.mxu0 %v888
      %907 = vmatprep.subr.bf16.mxu0 0
      %908 = vmatpush1.bf16.msra.mxu0 %v889
      %909 = vmatprep.subr.bf16.mxu0 0
      %910 = vmatpush1.bf16.msra.mxu0 %v890
      %911 = vmatprep.subr.bf16.mxu0 0
      %912 = vmatpush1.bf16.msra.mxu0 %v891
      %913 = vmatprep.subr.bf16.mxu0 0
      %914 = vmatpush1.bf16.msra.mxu0 %v892
      %915 = vmatprep.subr.bf16.mxu0 0
      %916 = vmatpush1.bf16.msra.mxu0 %v893
      %917 = vmatprep.subr.bf16.mxu0 0
      %918 = vmatpush1.bf16.msra.mxu0 %v894
      %919 = vmatprep.subr.bf16.mxu0 0
      %920 = vmatpush1.bf16.msra.mxu0 0
      %921 = vmatprep.subr.bf16.mxu0 0
      %922 = vmatpush1.bf16.msra.mxu0 0
      %923 = vmatprep.subr.bf16.mxu0 0
      %924 = vmatpush1.bf16.msra.mxu0 0
      %925 = vmatprep.subr.bf16.mxu0 0
      %926 = vmatpush1.bf16.msra.mxu0 0
      %927 = vmatprep.subr.bf16.mxu0 0
      %928 = vmatpush1.bf16.msra.mxu0 0
      %929 = vmatprep.subr.bf16.mxu0 0
      %930 = vmatpush1.bf16.msra.mxu0 0
      %931 = vmatprep.subr.bf16.mxu0 0
      %932 = vmatpush1.bf16.msra.mxu0 0
      %933 = vmatprep.subr.bf16.mxu0 0
      %934 = vmatpush1.bf16.msra.mxu0 0
      %935 = vmatprep.mubr.bf16.mxu0 0
      %936 = vmatmul.mubr.bf16.gmra.mrb[0].mxu0 %v816
      %v937 = vpop.f32.mrb[0].mxu0
      %v938 = vadd.f32 %v853, %v937
      %v939 = vpop.f32.mrb[0].mxu0
      %v940 = vpop.f32.mrb[0].mxu0
      %v941 = vadd.f32 %v853, %v940
      %v942 = vpop.f32.mrb[0].mxu0
      %943 = vmatprep.mubr.bf16.mxu0 0
      %944 = vmatmul.mubr.bf16.gmra.mrb[0].mxu0 %v817
      %v945 = vpop.f32.mrb[0].mxu0
      %v946 = vadd.f32 %v853, %v945
      %v947 = vpop.f32.mrb[0].mxu0
      %v948 = vpop.f32.mrb[0].mxu0
      %v949 = vadd.f32 %v853, %v948
      %v950 = vpop.f32.mrb[0].mxu0
      %951 = vmatprep.mubr.bf16.mxu0 0
      %952 = vmatmul.mubr.bf16.gmra.mrb[0].mxu0 %v818
      %v953 = vpop.f32.mrb[0].mxu0
      %v954 = vadd.f32 %v853, %v953
      %v955 = vpop.f32.mrb[0].mxu0
      %v956 = vpop.f32.mrb[0].mxu0
      %v957 = vadd.f32 %v853, %v956
      %v958 = vpop.f32.mrb[0].mxu0
      %959 = vmatprep.mubr.bf16.mxu0 0
      %960 = vmatmul.mubr.bf16.gmra.mrb[0].mxu0 %v819
      %v961 = vpop.f32.mrb[0].mxu0
      %v962 = vadd.f32 %v853, %v961
      %v963 = vpop.f32.mrb[0].mxu0
      %v964 = vpop.f32.mrb[0].mxu0
      %v965 = vadd.f32 %v853, %v964
      %v966 = vpop.f32.mrb[0].mxu0
      %967 = vmatprep.mubr.bf16.mxu0 0
      %968 = vmatmul.mubr.bf16.gmra.mrb[0].mxu0 %v820
      %v969 = vpop.f32.mrb[0].mxu0
      %v970 = vadd.f32 %v853, %v969
      %v971 = vpop.f32.mrb[0].mxu0
      %v972 = vpop.f32.mrb[0].mxu0
      %v973 = vadd.f32 %v853, %v972
      %v974 = vpop.f32.mrb[0].mxu0
      %975 = vmatprep.mubr.bf16.mxu0 0
      %976 = vmatmul.mubr.bf16.gmra.mrb[0].mxu0 %v821
      %v977 = vpop.f32.mrb[0].mxu0
      %v978 = vadd.f32 %v853, %v977
      %v979 = vpop.f32.mrb[0].mxu0
      %v980 = vpop.f32.mrb[0].mxu0
      %v981 = vadd.f32 %v853, %v980
      %v982 = vpop.f32.mrb[0].mxu0
      %983 = vmatprep.mubr.bf16.mxu0 0
      %984 = vmatmul.mubr.bf16.gmra.mrb[0].mxu0 %v822
      %v985 = vpop.f32.mrb[0].mxu0
      %v986 = vadd.f32 %v853, %v985
      %v987 = vpop.f32.mrb[0].mxu0
      %v988 = vpop.f32.mrb[0].mxu0
      %v989 = vadd.f32 %v853, %v988
      %v990 = vpop.f32.mrb[0].mxu0
      %991 = vmatprep.mubr.bf16.mxu0 0
      %992 = vmatmul.mubr.bf16.gmra.mrb[0].mxu0 %v823
      %v993 = vpop.f32.mrb[0].mxu0
      %v994 = vadd.f32 %v853, %v993
      %v995 = vpop.f32.mrb[0].mxu0
      %v996 = vpop.f32.mrb[0].mxu0
      %v997 = vadd.f32 %v853, %v996
      %v998 = vpop.f32.mrb[0].mxu0
      %999 = vmatprep.mubr.bf16.mxu0 0
      %1000 = vmatmul.mubr.bf16.gmra.mrb[0].mxu0 %v824
      %v1001 = vpop.f32.mrb[0].mxu0
      %v1002 = vadd.f32 %v853, %v1001
      %v1003 = vpop.f32.mrb[0].mxu0
      %v1004 = vpop.f32.mrb[0].mxu0
      %v1005 = vadd.f32 %v853, %v1004
      %v1006 = vpop.f32.mrb[0].mxu0
      %1007 = vmatprep.mubr.bf16.mxu0 0
      %1008 = vmatmul.mubr.bf16.gmra.mrb[0].mxu0 %v825
      %v1009 = vpop.f32.mrb[0].mxu0
      %v1010 = vadd.f32 %v853, %v1009
      %v1011 = vpop.f32.mrb[0].mxu0
      %v1012 = vpop.f32.mrb[0].mxu0
      %v1013 = vadd.f32 %v853, %v1012
      %v1014 = vpop.f32.mrb[0].mxu0
      %1015 = vmatprep.mubr.bf16.mxu0 0
      %1016 = vmatmul.mubr.bf16.gmra.mrb[0].mxu0 %v826
      %v1017 = vpop.f32.mrb[0].mxu0
      %v1018 = vadd.f32 %v853, %v1017
      %v1019 = vpop.f32.mrb[0].mxu0
      %v1020 = vpop.f32.mrb[0].mxu0
      %v1021 = vadd.f32 %v853, %v1020
      %v1022 = vpop.f32.mrb[0].mxu0
      %1023 = vmatprep.mubr.bf16.mxu0 0
      %1024 = vmatmul.mubr.bf16.gmra.mrb[0].mxu0 %v827
      %v1025 = vpop.f32.mrb[0].mxu0
      %v1026 = vadd.f32 %v853, %v1025
      %v1027 = vpop.f32.mrb[0].mxu0
      %v1028 = vpop.f32.mrb[0].mxu0
      %v1029 = vadd.f32 %v853, %v1028
      %v1030 = vpop.f32.mrb[0].mxu0
      %1031 = vmatprep.mubr.bf16.mxu0 0
      %1032 = vmatmul.mubr.bf16.gmra.mrb[0].mxu0 %v828
      %v1033 = vpop.f32.mrb[0].mxu0
      %v1034 = vadd.f32 %v853, %v1033
      %v1035 = vpop.f32.mrb[0].mxu0
      %v1036 = vpop.f32.mrb[0].mxu0
      %v1037 = vadd.f32 %v853, %v1036
      %v1038 = vpop.f32.mrb[0].mxu0
      %1039 = vmatprep.mubr.bf16.mxu0 0
      %1040 = vmatmul.mubr.bf16.gmra.mrb[0].mxu0 %v829
      %v1041 = vpop.f32.mrb[0].mxu0
      %v1042 = vadd.f32 %v853, %v1041
      %v1043 = vpop.f32.mrb[0].mxu0
      %v1044 = vpop.f32.mrb[0].mxu0
      %v1045 = vadd.f32 %v853, %v1044
      %v1046 = vpop.f32.mrb[0].mxu0
      %1047 = vmatprep.mubr.bf16.mxu0 0
      %1048 = vmatmul.mubr.bf16.gmra.mrb[0].mxu0 %v830
      %v1049 = vpop.f32.mrb[0].mxu0
      %v1050 = vadd.f32 %v853, %v1049
      %v1051 = vpop.f32.mrb[0].mxu0
      %v1052 = vpop.f32.mrb[0].mxu0
      %v1053 = vadd.f32 %v853, %v1052
      %v1054 = vpop.f32.mrb[0].mxu0
      %1055 = vmatprep.mubr.bf16.mxu0 0
      %1056 = vmatmul.mubr.bf16.gmra.mrb[0].mxu0 %v831
      %v1057 = vpop.f32.mrb[0].mxu0
      %v1058 = vadd.f32 %v853, %v1057
      %v1059 = vpop.f32.mrb[0].mxu0
      %v1060 = vpop.f32.mrb[0].mxu0
      %v1061 = vadd.f32 %v853, %v1060
      %v1062 = vpop.f32.mrb[0].mxu0
      %1063 = vdwg.mxu0
      %vm1064 = vcmp.ge.f32.partialorder %v938, 0.0
      %vm1065 = vcmp.ge.f32.partialorder %v941, 0.0
      %vm1066 = vcmp.ge.f32.partialorder %v946, 0.0
      %vm1067 = vcmp.ge.f32.partialorder %v949, 0.0
      %vm1068 = vcmp.ge.f32.partialorder %v954, 0.0
      %vm1069 = vcmp.ge.f32.partialorder %v957, 0.0
      %vm1070 = vcmp.ge.f32.partialorder %v962, 0.0
      %vm1071 = vcmp.ge.f32.partialorder %v965, 0.0
      %vm1072 = vcmp.ge.f32.partialorder %v970, 0.0
      %vm1073 = vcmp.ge.f32.partialorder %v973, 0.0
      %vm1074 = vcmp.ge.f32.partialorder %v978, 0.0
      %vm1075 = vcmp.ge.f32.partialorder %v981, 0.0
      %vm1076 = vcmp.ge.f32.partialorder %v986, 0.0
      %vm1077 = vcmp.ge.f32.partialorder %v989, 0.0
      %vm1078 = vcmp.ge.f32.partialorder %v994, 0.0
      %vm1079 = vcmp.ge.f32.partialorder %v997, 0.0
      %vm1080 = vcmp.ge.f32.partialorder %v1002, 0.0
      %vm1081 = vcmp.ge.f32.partialorder %v1005, 0.0
      %vm1082 = vcmp.ge.f32.partialorder %v1010, 0.0
      %vm1083 = vcmp.ge.f32.partialorder %v1013, 0.0
      %vm1084 = vcmp.ge.f32.partialorder %v1018, 0.0
      %vm1085 = vcmp.ge.f32.partialorder %v1021, 0.0
      %vm1086 = vcmp.ge.f32.partialorder %v1026, 0.0
      %vm1087 = vcmp.ge.f32.partialorder %v1029, 0.0
      %vm1088 = vcmp.ge.f32.partialorder %v1034, 0.0
      %vm1089 = vcmp.ge.f32.partialorder %v1037, 0.0
      %vm1090 = vcmp.ge.f32.partialorder %v1042, 0.0
      %vm1091 = vcmp.ge.f32.partialorder %v1045, 0.0
      %vm1092 = vcmp.ge.f32.partialorder %v1050, 0.0
      %vm1093 = vcmp.ge.f32.partialorder %v1053, 0.0
      %vm1094 = vcmp.ge.f32.partialorder %v1058, 0.0
      %vm1095 = vcmp.ge.f32.partialorder %v1061, 0.0
      %v1096 = vmul.f32 %v938, 0.01
      %v1097 = vmul.f32 %v941, 0.01
      %v1098 = vmul.f32 %v946, 0.01
      %v1099 = vmul.f32 %v949, 0.01
      %v1100 = vmul.f32 %v954, 0.01
      %v1101 = vmul.f32 %v957, 0.01
      %v1102 = vmul.f32 %v962, 0.01
      %v1103 = vmul.f32 %v965, 0.01
      %v1104 = vmul.f32 %v970, 0.01
      %v1105 = vmul.f32 %v973, 0.01
      %v1106 = vmul.f32 %v978, 0.01
      %v1107 = vmul.f32 %v981, 0.01
      %v1108 = vmul.f32 %v986, 0.01
      %v1109 = vmul.f32 %v989, 0.01
      %v1110 = vmul.f32 %v994, 0.01
      %v1111 = vmul.f32 %v997, 0.01
      %v1112 = vmul.f32 %v1002, 0.01
      %v1113 = vmul.f32 %v1005, 0.01
      %v1114 = vmul.f32 %v1010, 0.01
      %v1115 = vmul.f32 %v1013, 0.01
      %v1116 = vmul.f32 %v1018, 0.01
      %v1117 = vmul.f32 %v1021, 0.01
      %v1118 = vmul.f32 %v1026, 0.01
      %v1119 = vmul.f32 %v1029, 0.01
      %v1120 = vmul.f32 %v1034, 0.01
      %v1121 = vmul.f32 %v1037, 0.01
      %v1122 = vmul.f32 %v1042, 0.01
      %v1123 = vmul.f32 %v1045, 0.01
      %v1124 = vmul.f32 %v1050, 0.01
      %v1125 = vmul.f32 %v1053, 0.01
      %v1126 = vmul.f32 %v1058, 0.01
      %v1127 = vmul.f32 %v1061, 0.01
      %v1128 = vsel %vm1064, %v938, %v1096
      %v1129 = vsel %vm1065, %v941, %v1097
      %v1130 = vsel %vm1066, %v946, %v1098
      %v1131 = vsel %vm1067, %v949, %v1099
      %v1132 = vsel %vm1068, %v954, %v1100
      %v1133 = vsel %vm1069, %v957, %v1101
      %v1134 = vsel %vm1070, %v962, %v1102
      %v1135 = vsel %vm1071, %v965, %v1103
      %v1136 = vsel %vm1072, %v970, %v1104
      %v1137 = vsel %vm1073, %v973, %v1105
      %v1138 = vsel %vm1074, %v978, %v1106
      %v1139 = vsel %vm1075, %v981, %v1107
      %v1140 = vsel %vm1076, %v986, %v1108
      %v1141 = vsel %vm1077, %v989, %v1109
      %v1142 = vsel %vm1078, %v994, %v1110
      %v1143 = vsel %vm1079, %v997, %v1111
      %v1144 = vsel %vm1080, %v1002, %v1112
      %v1145 = vsel %vm1081, %v1005, %v1113
      %v1146 = vsel %vm1082, %v1010, %v1114
      %v1147 = vsel %vm1083, %v1013, %v1115
      %v1148 = vsel %vm1084, %v1018, %v1116
      %v1149 = vsel %vm1085, %v1021, %v1117
      %v1150 = vsel %vm1086, %v1026, %v1118
      %v1151 = vsel %vm1087, %v1029, %v1119
      %v1152 = vsel %vm1088, %v1034, %v1120
      %v1153 = vsel %vm1089, %v1037, %v1121
      %v1154 = vsel %vm1090, %v1042, %v1122
      %v1155 = vsel %vm1091, %v1045, %v1123
      %v1156 = vsel %vm1092, %v1050, %v1124
      %v1157 = vsel %vm1093, %v1053, %v1125
      %v1158 = vsel %vm1094, %v1058, %v1126
      %v1159 = vsel %vm1095, %v1061, %v1127
      %v1160 = vpack.c.bf16 %v1129, %v1128
      %v1161 = vpack.c.bf16 %v1131, %v1130
      %v1162 = vpack.c.bf16 %v1133, %v1132
      %v1163 = vpack.c.bf16 %v1135, %v1134
      %v1164 = vpack.c.bf16 %v1137, %v1136
      %v1165 = vpack.c.bf16 %v1139, %v1138
      %v1166 = vpack.c.bf16 %v1141, %v1140
      %v1167 = vpack.c.bf16 %v1143, %v1142
      %v1168 = vpack.c.bf16 %v1145, %v1144
      %v1169 = vpack.c.bf16 %v1147, %v1146
      %v1170 = vpack.c.bf16 %v1149, %v1148
      %v1171 = vpack.c.bf16 %v1151, %v1150
      %v1172 = vpack.c.bf16 %v1153, %v1152
      %v1173 = vpack.c.bf16 %v1155, %v1154
      %v1174 = vpack.c.bf16 %v1157, %v1156
      %v1175 = vpack.c.bf16 %v1159, %v1158
      %v1192 = vunpack.c.l.b16 %v1160
      %v1193 = vunpack.c.h.b16 %v1160
      %v1194 = vunpack.c.l.b16 %v1161
      %v1195 = vunpack.c.h.b16 %v1161
      %v1196 = vunpack.c.l.b16 %v1162
      %v1197 = vunpack.c.h.b16 %v1162
      %v1198 = vunpack.c.l.b16 %v1163
      %v1199 = vunpack.c.h.b16 %v1163
      %v1200 = vunpack.c.l.b16 %v1164
      %v1201 = vunpack.c.h.b16 %v1164
      %v1202 = vunpack.c.l.b16 %v1165
      %v1203 = vunpack.c.h.b16 %v1165
      %v1204 = vunpack.c.l.b16 %v1166
      %v1205 = vunpack.c.h.b16 %v1166
      %v1206 = vunpack.c.l.b16 %v1167
      %v1207 = vunpack.c.h.b16 %v1167
      %v1208 = vunpack.c.l.b16 %v1168
      %v1209 = vunpack.c.h.b16 %v1168
      %v1210 = vunpack.c.l.b16 %v1169
      %v1211 = vunpack.c.h.b16 %v1169
      %v1212 = vunpack.c.l.b16 %v1170
      %v1213 = vunpack.c.h.b16 %v1170
      %v1214 = vunpack.c.l.b16 %v1171
      %v1215 = vunpack.c.h.b16 %v1171
      %v1216 = vunpack.c.l.b16 %v1172
      %v1217 = vunpack.c.h.b16 %v1172
      %v1218 = vunpack.c.l.b16 %v1173
      %v1219 = vunpack.c.h.b16 %v1173
      %v1220 = vunpack.c.l.b16 %v1174
      %v1221 = vunpack.c.h.b16 %v1174
      %v1222 = vunpack.c.l.b16 %v1175
      %v1223 = vunpack.c.h.b16 %v1175
      %v1224 = vpack.c.b16 %v1192, %v1192
      %v1225 = vpack.c.b16 %v1193, %v1193
      %v1226 = vpack.c.b16 %v1194, %v1194
      %v1227 = vpack.c.b16 %v1195, %v1195
      %v1228 = vpack.c.b16 %v1196, %v1196
      %v1229 = vpack.c.b16 %v1197, %v1197
      %v1230 = vpack.c.b16 %v1198, %v1198
      %v1231 = vpack.c.b16 %v1199, %v1199
      %v1232 = vpack.c.b16 %v1200, %v1200
      %v1233 = vpack.c.b16 %v1201, %v1201
      %v1234 = vpack.c.b16 %v1202, %v1202
      %v1235 = vpack.c.b16 %v1203, %v1203
      %v1236 = vpack.c.b16 %v1204, %v1204
      %v1237 = vpack.c.b16 %v1205, %v1205
      %v1238 = vpack.c.b16 %v1206, %v1206
      %v1239 = vpack.c.b16 %v1207, %v1207
      %v1240 = vpack.c.b16 %v1208, %v1208
      %v1241 = vpack.c.b16 %v1209, %v1209
      %v1242 = vpack.c.b16 %v1210, %v1210
      %v1243 = vpack.c.b16 %v1211, %v1211
      %v1244 = vpack.c.b16 %v1212, %v1212
      %v1245 = vpack.c.b16 %v1213, %v1213
      %v1246 = vpack.c.b16 %v1214, %v1214
      %v1247 = vpack.c.b16 %v1215, %v1215
      %v1248 = vpack.c.b16 %v1216, %v1216
      %v1249 = vpack.c.b16 %v1217, %v1217
      %v1250 = vpack.c.b16 %v1218, %v1218
      %v1251 = vpack.c.b16 %v1219, %v1219
      %v1252 = vpack.c.b16 %v1220, %v1220
      %v1253 = vpack.c.b16 %v1221, %v1221
      %v1254 = vpack.c.b16 %v1222, %v1222
      %v1255 = vpack.c.b16 %v1223, %v1223
      %1288 = vst [vmem:[%s229] sm:$0xf] %v1224
      %1289 = vst [vmem:[%s229 + $0x4] sm:$0xf] %v1225
      %1290 = vst [vmem:[%s229 + $0x8] sm:$0xf] %v1226
      %1291 = vst [vmem:[%s229 + $0xc] sm:$0xf] %v1227
      %1292 = vst [vmem:[%s229 + $0x10] sm:$0xf] %v1228
      %1293 = vst [vmem:[%s229 + $0x14] sm:$0xf] %v1229
      %1294 = vst [vmem:[%s229 + $0x18] sm:$0xf] %v1230
      %1295 = vst [vmem:[%s229 + $0x1c] sm:$0xf] %v1231
      %1296 = vst [vmem:[%s229 + $0x20] sm:$0xf] %v1232
      %1297 = vst [vmem:[%s229 + $0x24] sm:$0xf] %v1233
      %1298 = vst [vmem:[%s229 + $0x28] sm:$0xf] %v1234
      %1299 = vst [vmem:[%s229 + $0x2c] sm:$0xf] %v1235
      %1300 = vst [vmem:[%s229 + $0x30] sm:$0xf] %v1236
      %1301 = vst [vmem:[%s229 + $0x34] sm:$0xf] %v1237
      %1302 = vst [vmem:[%s229 + $0x38] sm:$0xf] %v1238
      %1303 = vst [vmem:[%s229 + $0x3c] sm:$0xf] %v1239
      %1304 = vst [vmem:[%s229 + $0x40] sm:$0xf] %v1240
      %1305 = vst [vmem:[%s229 + $0x44] sm:$0xf] %v1241
      %1306 = vst [vmem:[%s229 + $0x48] sm:$0xf] %v1242
      %1307 = vst [vmem:[%s229 + $0x4c] sm:$0xf] %v1243
      %1308 = vst [vmem:[%s229 + $0x50] sm:$0xf] %v1244
      %1309 = vst [vmem:[%s229 + $0x54] sm:$0xf] %v1245
      %1310 = vst [vmem:[%s229 + $0x58] sm:$0xf] %v1246
      %1311 = vst [vmem:[%s229 + $0x5c] sm:$0xf] %v1247
      %1312 = vst [vmem:[%s229 + $0x60] sm:$0xf] %v1248
      %1313 = vst [vmem:[%s229 + $0x64] sm:$0xf] %v1249
      %1314 = vst [vmem:[%s229 + $0x68] sm:$0xf] %v1250
      %1315 = vst [vmem:[%s229 + $0x6c] sm:$0xf] %v1251
      %1316 = vst [vmem:[%s229 + $0x70] sm:$0xf] %v1252
      %1317 = vst [vmem:[%s229 + $0x74] sm:$0xf] %v1253
      %1318 = vst [vmem:[%s229 + $0x78] sm:$0xf] %v1254
      %1319 = vst [vmem:[%s229 + $0x7c] sm:$0xf] %v1255
      %s1320 = smul.u32 32, %s16
      %p1321 = scmp.lt.s32.totalorder %s1320, 63
      %s1322 = scalar_select %p1321, %s1320, 63
      %s1323 = smul.addr %s1322, 4
      %s1324 = scalar_lea.vmem %s5, %s1323
      // Predicated region
      $region41: #{discriminator_forward.6} parent=39 // pred_check
        %p1325 = pneg %p144
      $region42: #{discriminator_forward.6} parent=39 // pred_check_branch
        %1327 = sbr.rel (%p1325) target = $region44
      $region43: #{discriminator_forward.6} parent=39 // pred_region
        %s1328 = smul.u32 32, %s16
      $region44: #{discriminator_forward.6} parent=39 // pred_fallthru
        _
    $region40: #{discriminator_forward.6} parent=5 // pred_fallthru
      _
    %p1329 = scmp.le.s32.totalorder 2, %s11
    // Predicated region
    $region45: #{discriminator_forward.6} parent=5 // pred_check
      %p1330 = pneg %p1329
    $region46: #{discriminator_forward.6} parent=5 // pred_check_branch
      %1332 = sbr.rel (%p1330) target = $region48
    $region47: #{discriminator_forward.6} parent=5 // pred_region
      %s1333 = ssub.s32 %s11, 2
      // Predicated region
      $region49: #{discriminator_forward.6} parent=47 // pred_check
        %p1334 = pneg %p150
      $region50: #{discriminator_forward.6} parent=47 // pred_check_branch
        %1336 = sbr.rel (%p1334) target = $region52
      $region51: #{discriminator_forward.6} parent=47 // pred_region
        %s1337 = smul.u32 32, %s17
        %p1338 = scmp.lt.s32.totalorder %s1337, 63
        %s1339 = scalar_select %p1338, %s1337, 63
        %s1340 = smul.addr %s1339, 4
        %s1341 = scalar_lea.vmem %s5, %s1340
      $region52: #{discriminator_forward.6} parent=47 // pred_fallthru
        _
    $region48: #{discriminator_forward.6} parent=5 // pred_fallthru
      _
  $region6: #{discriminator_forward.6} parent=0 // loop_footer
    %s15 = sadd.s32 1, %s11
  $region7: #{discriminator_forward.6} parent=0 // loop_footer_branch
    %10 = sbr.rel target = $region3
  $region8: #{discriminator_forward.6} parent=0 // loop_exit
    _

// kernel: discriminator_forward.7
$region0: #{discriminator_forward.7}
  #allocation0 [shape = 'u32[]', space=smem, size = 0x4, offset = 0x4, fixed_abs, tag = 'smem constant byte address 0x4 - core index']
  #allocation1 [shape = 'u32[144,128]{1,0:T(1,128)}', space=vmem, size = 0x12000, scoped, tag = 'internal scratch']
  %s0 = inlined_call_operand.vmem [shape: bf16[128,512], index: 0, kind: input, shape index: {}]
  %s1 = inlined_call_operand.vmem [shape: bf16[512,256], index: 1, kind: input, shape index: {}]
  %s2 = inlined_call_operand.vmem [shape: f32[1,256], index: 2, kind: input, shape index: {}]
  %s3 = inlined_call_operand.vmem [shape: bf16[256,256], index: 3, kind: input, shape index: {}]
  %s4 = inlined_call_operand.vmem [shape: f32[1,256], index: 4, kind: input, shape index: {}]
  %s5 = inlined_call_operand.vmem [shape: bf16[128,256], index: 5, kind: output, shape index: {}]
  %s6 = sld [smem:[#allocation0]]
  $region53: #{discriminator_forward.7} parent=0
    _
  %s8 = ssub.s32 1, %s6
  %s9 = scalar_select 0, %s8, %s6
  loop: start=0, step=1, limit=4
  $region2: #{discriminator_forward.7} parent=0 // loop_pre_header
    _
  $region3: #{discriminator_forward.7} parent=0 // loop_header
    %s11 = sphi 0, %s15
    %p12 = scmp.ge.s32.totalorder %s11, 4
    %s21 = sphi 0, %s23
    %s24 = sphi 0, %s21
    %s25 = sphi 0, %s24
    %s41 = sphi 0, %s25
    %s45 = sphi 0, %s45
    %s47 = sphi 0, %s45
    %s48 = sphi 0, %s47
    %s62 = sphi 0, %s48
    %s66 = sphi 0, %s66
    %s68 = sphi 0, %s66
    %s69 = sphi 0, %s68
    %s83 = sphi 0, %s69
    %s87 = sphi 0, %s87
    %s89 = sphi 0, %s87
    %s90 = sphi 0, %s89
    %s104 = sphi 0, %s90
    %s108 = sphi 0, %s108
    %s110 = sphi 0, %s108
    %s111 = sphi 0, %s110
    %s125 = sphi 0, %s111
    %s131 = sphi 0, %s133
    %s134 = sphi 0, %s131
    %s135 = sphi 0, %s134
    %s151 = sphi 0, %s135
  $region4: #{discriminator_forward.7} parent=0 // loop_header_branch
    %14 = sbr.rel (%p12) target = $region8
  $region5: #{discriminator_forward.7} parent=0 // loop_body
    %s16 = ssub.s32 %s11, 1
    %s17 = ssub.s32 %s11, 2
    %s18 = sadd.s32 %s11, 1
    %s19 = ssub.s32 %s11, %s18
    %p20 = scmp.eq.s32.totalorder %s19, 0
    %s22 = sadd.s32 %s21, 1
    %s23 = scalar_select %p20, %s21, %s22
    %p26 = pneg %p20
    %p27 = scmp.eq.s32.totalorder %s11, 1
    %p28 = por %p26, %p27
    %p29 = scmp.ne.s32.totalorder %s21, %s24
    %p30 = scmp.eq.s32.totalorder %s11, 0
    %p31 = por %p29, %p30
    %p32 = scmp.ne.s32.totalorder %s21, %s24
    %p33 = scmp.eq.s32.totalorder %s16, 1
    %p34 = por %p32, %p33
    %p35 = scmp.ne.s32.totalorder %s24, %s25
    %p36 = scmp.eq.s32.totalorder %s16, 0
    %p37 = por %p35, %p36
    %p38 = scmp.ne.s32.totalorder %s24, %s25
    %p39 = scmp.eq.s32.totalorder %s17, 1
    %p40 = por %p38, %p39
    %p42 = scmp.ne.s32.totalorder %s25, %s41
    %p43 = scmp.eq.s32.totalorder %s17, 0
    %p44 = por %p42, %p43
    %s46 = sadd.s32 %s45, 1
    %p49 = scmp.eq.s32.totalorder %s11, 1
    %p50 = scmp.ne.s32.totalorder %s45, %s47
    %p51 = scmp.eq.s32.totalorder %s11, 0
    %p52 = por %p50, %p51
    %p53 = scmp.ne.s32.totalorder %s45, %s47
    %p54 = scmp.eq.s32.totalorder %s16, 1
    %p55 = por %p53, %p54
    %p56 = scmp.ne.s32.totalorder %s47, %s48
    %p57 = scmp.eq.s32.totalorder %s16, 0
    %p58 = por %p56, %p57
    %p59 = scmp.ne.s32.totalorder %s47, %s48
    %p60 = scmp.eq.s32.totalorder %s17, 1
    %p61 = por %p59, %p60
    %p63 = scmp.ne.s32.totalorder %s48, %s62
    %p64 = scmp.eq.s32.totalorder %s17, 0
    %p65 = por %p63, %p64
    %s67 = sadd.s32 %s66, 1
    %p70 = scmp.eq.s32.totalorder %s11, 1
    %p71 = scmp.ne.s32.totalorder %s66, %s68
    %p72 = scmp.eq.s32.totalorder %s11, 0
    %p73 = por %p71, %p72
    %p74 = scmp.ne.s32.totalorder %s66, %s68
    %p75 = scmp.eq.s32.totalorder %s16, 1
    %p76 = por %p74, %p75
    %p77 = scmp.ne.s32.totalorder %s68, %s69
    %p78 = scmp.eq.s32.totalorder %s16, 0
    %p79 = por %p77, %p78
    %p80 = scmp.ne.s32.totalorder %s68, %s69
    %p81 = scmp.eq.s32.totalorder %s17, 1
    %p82 = por %p80, %p81
    %p84 = scmp.ne.s32.totalorder %s69, %s83
    %p85 = scmp.eq.s32.totalorder %s17, 0
    %p86 = por %p84, %p85
    %s88 = sadd.s32 %s87, 1
    %p91 = scmp.eq.s32.totalorder %s11, 1
    %p92 = scmp.ne.s32.totalorder %s87, %s89
    %p93 = scmp.eq.s32.totalorder %s11, 0
    %p94 = por %p92, %p93
    %p95 = scmp.ne.s32.totalorder %s87, %s89
    %p96 = scmp.eq.s32.totalorder %s16, 1
    %p97 = por %p95, %p96
    %p98 = scmp.ne.s32.totalorder %s89, %s90
    %p99 = scmp.eq.s32.totalorder %s16, 0
    %p100 = por %p98, %p99
    %p101 = scmp.ne.s32.totalorder %s89, %s90
    %p102 = scmp.eq.s32.totalorder %s17, 1
    %p103 = por %p101, %p102
    %p105 = scmp.ne.s32.totalorder %s90, %s104
    %p106 = scmp.eq.s32.totalorder %s17, 0
    %p107 = por %p105, %p106
    %s109 = sadd.s32 %s108, 1
    %p112 = scmp.eq.s32.totalorder %s11, 1
    %p113 = scmp.ne.s32.totalorder %s108, %s110
    %p114 = scmp.eq.s32.totalorder %s11, 0
    %p115 = por %p113, %p114
    %p116 = scmp.ne.s32.totalorder %s108, %s110
    %p117 = scmp.eq.s32.totalorder %s16, 1
    %p118 = por %p116, %p117
    %p119 = scmp.ne.s32.totalorder %s110, %s111
    %p120 = scmp.eq.s32.totalorder %s16, 0
    %p121 = por %p119, %p120
    %p122 = scmp.ne.s32.totalorder %s110, %s111
    %p123 = scmp.eq.s32.totalorder %s17, 1
    %p124 = por %p122, %p123
    %p126 = scmp.ne.s32.totalorder %s111, %s125
    %p127 = scmp.eq.s32.totalorder %s17, 0
    %p128 = por %p126, %p127
    %s129 = ssub.s32 %s11, %s18
    %p130 = scmp.eq.s32.totalorder %s129, 0
    %s132 = sadd.s32 %s131, 1
    %s133 = scalar_select %p130, %s131, %s132
    %p136 = pneg %p130
    %p137 = scmp.eq.s32.totalorder %s11, 1
    %p138 = por %p136, %p137
    %p139 = scmp.ne.s32.totalorder %s131, %s134
    %p140 = scmp.eq.s32.totalorder %s11, 0
    %p141 = por %p139, %p140
    %p142 = scmp.ne.s32.totalorder %s131, %s134
    %p143 = scmp.eq.s32.totalorder %s16, 1
    %p144 = por %p142, %p143
    %p145 = scmp.ne.s32.totalorder %s134, %s135
    %p146 = scmp.eq.s32.totalorder %s16, 0
    %p147 = por %p145, %p146
    %p148 = scmp.ne.s32.totalorder %s134, %s135
    %p149 = scmp.eq.s32.totalorder %s17, 1
    %p150 = por %p148, %p149
    %p152 = scmp.ne.s32.totalorder %s135, %s151
    %p153 = scmp.eq.s32.totalorder %s17, 0
    %p154 = por %p152, %p153
    %p155 = scmp.le.s32.totalorder 1, %s11
    %p156 = scmp.lt.s32.totalorder %s11, 3
    %p157 = pnand %p155, %p156
    %p158 = pneg %p157
    // Predicated region
    $region9: #{discriminator_forward.7} parent=5 // pred_check
      _
    $region10: #{discriminator_forward.7} parent=5 // pred_check_branch
      %160 = sbr.rel (%p157) target = $region12
    $region11: #{discriminator_forward.7} parent=5 // pred_region
      %s161 = ssub.s32 %s11, 1
      // Predicated region
      $region13: #{discriminator_forward.7} parent=11 // pred_check
        %p162 = pneg %p58
      $region14: #{discriminator_forward.7} parent=11 // pred_check_branch
        %164 = sbr.rel (%p162) target = $region16
      $region15: #{discriminator_forward.7} parent=11 // pred_region
        _
      $region16: #{discriminator_forward.7} parent=11 // pred_fallthru
        _
      // Predicated region
      $region17: #{discriminator_forward.7} parent=11 // pred_check
        %p165 = pneg %p79
      $region18: #{discriminator_forward.7} parent=11 // pred_check_branch
        %167 = sbr.rel (%p165) target = $region20
      $region19: #{discriminator_forward.7} parent=11 // pred_region
        _
      $region20: #{discriminator_forward.7} parent=11 // pred_fallthru
        _
      // Predicated region
      $region21: #{discriminator_forward.7} parent=11 // pred_check
        %p168 = pneg %p100
      $region22: #{discriminator_forward.7} parent=11 // pred_check_branch
        %170 = sbr.rel (%p168) target = $region24
      $region23: #{discriminator_forward.7} parent=11 // pred_region
        _
      $region24: #{discriminator_forward.7} parent=11 // pred_fallthru
        _
      // Predicated region
      $region25: #{discriminator_forward.7} parent=11 // pred_check
        %p171 = pneg %p121
      $region26: #{discriminator_forward.7} parent=11 // pred_check_branch
        %173 = sbr.rel (%p171) target = $region28
      $region27: #{discriminator_forward.7} parent=11 // pred_region
        _
      $region28: #{discriminator_forward.7} parent=11 // pred_fallthru
        _
    $region12: #{discriminator_forward.7} parent=5 // pred_fallthru
      _
    %p174 = scmp.lt.s32.totalorder %s11, 2
    // Predicated region
    $region29: #{discriminator_forward.7} parent=5 // pred_check
      %p175 = pneg %p174
    $region30: #{discriminator_forward.7} parent=5 // pred_check_branch
      %177 = sbr.rel (%p175) target = $region32
    $region31: #{discriminator_forward.7} parent=5 // pred_region
      // Predicated region
      $region33: #{discriminator_forward.7} parent=31 // pred_check
        %p178 = pneg %p31
      $region34: #{discriminator_forward.7} parent=31 // pred_check_branch
        %180 = sbr.rel (%p178) target = $region36
      $region35: #{discriminator_forward.7} parent=31 // pred_region
        %s181 = smul.u32 8, %s11
        %p182 = scmp.lt.s32.totalorder %s181, 15
        %s183 = scalar_select %p182, %s181, 15
        %s184 = smul.addr %s183, 4
        %s185 = smul.addr %s184, 4
        %s186 = scalar_lea.vmem %s0, %s185
        %s187 = smul.u32 8, %s11
      $region36: #{discriminator_forward.7} parent=31 // pred_fallthru
        _
    $region32: #{discriminator_forward.7} parent=5 // pred_fallthru
      _
    %p188 = scmp.le.s32.totalorder 1, %s11
    %p189 = scmp.lt.s32.totalorder %s11, 3
    %p190 = pnand %p188, %p189
    %p191 = pneg %p190
    // Predicated region
    $region37: #{discriminator_forward.7} parent=5 // pred_check
      _
    $region38: #{discriminator_forward.7} parent=5 // pred_check_branch
      %193 = sbr.rel (%p190) target = $region40
    $region39: #{discriminator_forward.7} parent=5 // pred_region
      %s194 = ssub.s32 %s11, 1
      %s195 = smul.u32 8, %s16
      %p196 = scmp.lt.s32.totalorder %s195, 15
      %s197 = scalar_select %p196, %s195, 15
      %s198 = smul.addr %s197, 4
      %s199 = smul.addr %s198, 4
      %s200 = scalar_lea.vmem %s0, %s199
      %p201 = pneg %p37
      %p202 = pneg %p34
      %p203 = pneg %p58
      %p204 = pneg %p55
      %p205 = pneg %p79
      %p206 = pneg %p76
      %p207 = pneg %p100
      %p208 = pneg %p97
      %p209 = pneg %p121
      %p210 = pneg %p118
      %p211 = pneg %p147
      %p212 = pneg %p144
      %s213 = smul.u32 8, %s16
      %p214 = scmp.lt.s32.totalorder %s213, 15
      %s215 = scalar_select %p214, %s213, 15
      %s216 = smul.addr %s215, 2
      %s217 = smul.addr %s216, 4
      %s218 = scalar_lea.vmem %s5, %s217
      %s219 = smul.u32 8, %s16
      %p220 = scmp.lt.s32.totalorder %s219, 15
      %s221 = scalar_select %p220, %s219, 15
      %s222 = smul.addr %s221, 4
      %s223 = smul.addr %s222, 4
      %s224 = scalar_lea.vmem %s0, %s223
      %s225 = smul.u32 8, %s16
      %s226 = smul.u32 8, %s16
      %p227 = scmp.lt.s32.totalorder %s226, 15
      %s228 = scalar_select %p227, %s226, 15
      %s229 = smul.addr %s228, 2
      %s230 = smul.addr %s229, 4
      %s231 = scalar_lea.vmem %s5, %s230
      %s232 = smul.u32 8, %s16
      %v233 = vld [vmem:[%s224] sm:$0xff]
      %v234 = vld [vmem:[%s224 + $0x8] sm:$0xff]
      %v235 = vld [vmem:[%s224 + $0x10] sm:$0xff]
      %v236 = vld [vmem:[%s224 + $0x18] sm:$0xff]
      %v237 = vld [vmem:[%s224 + $0x20] sm:$0xff]
      %v238 = vld [vmem:[%s224 + $0x28] sm:$0xff]
      %v239 = vld [vmem:[%s224 + $0x30] sm:$0xff]
      %v240 = vld [vmem:[%s224 + $0x38] sm:$0xff]
      %v241 = vld [vmem:[%s224 + $0x40] sm:$0xff]
      %v242 = vld [vmem:[%s224 + $0x48] sm:$0xff]
      %v243 = vld [vmem:[%s224 + $0x50] sm:$0xff]
      %v244 = vld [vmem:[%s224 + $0x58] sm:$0xff]
      %v245 = vld [vmem:[%s224 + $0x60] sm:$0xff]
      %v246 = vld [vmem:[%s224 + $0x68] sm:$0xff]
      %v247 = vld [vmem:[%s224 + $0x70] sm:$0xff]
      %v248 = vld [vmem:[%s224 + $0x78] sm:$0xff]
      %v249 = vld [vmem:[%s1] sm:$0xff]
      %v250 = vld [vmem:[%s1 + $0x8] sm:$0xff]
      %v251 = vld [vmem:[%s1 + $0x10] sm:$0xff]
      %v252 = vld [vmem:[%s1 + $0x18] sm:$0xff]
      %v253 = vld [vmem:[%s1 + $0x20] sm:$0xff]
      %v254 = vld [vmem:[%s1 + $0x28] sm:$0xff]
      %v255 = vld [vmem:[%s1 + $0x30] sm:$0xff]
      %v256 = vld [vmem:[%s1 + $0x38] sm:$0xff]
      %v257 = vld [vmem:[%s1 + $0x40] sm:$0xff]
      %v258 = vld [vmem:[%s1 + $0x48] sm:$0xff]
      %v259 = vld [vmem:[%s1 + $0x50] sm:$0xff]
      %v260 = vld [vmem:[%s1 + $0x58] sm:$0xff]
      %v261 = vld [vmem:[%s1 + $0x60] sm:$0xff]
      %v262 = vld [vmem:[%s1 + $0x68] sm:$0xff]
      %v263 = vld [vmem:[%s1 + $0x70] sm:$0xff]
      %v264 = vld [vmem:[%s1 + $0x78] sm:$0xff]
      %v265 = vld [vmem:[%s1 + $0x80] sm:$0xff]
      %v266 = vld [vmem:[%s1 + $0x88] sm:$0xff]
      %v267 = vld [vmem:[%s1 + $0x90] sm:$0xff]
      %v268 = vld [vmem:[%s1 + $0x98] sm:$0xff]
      %v269 = vld [vmem:[%s1 + $0xa0] sm:$0xff]
      %v270 = vld [vmem:[%s1 + $0xa8] sm:$0xff]
      %v271 = vld [vmem:[%s1 + $0xb0] sm:$0xff]
      %v272 = vld [vmem:[%s1 + $0xb8] sm:$0xff]
      %v273 = vld [vmem:[%s1 + $0xc0] sm:$0xff]
      %v274 = vld [vmem:[%s1 + $0xc8] sm:$0xff]
      %v275 = vld [vmem:[%s1 + $0xd0] sm:$0xff]
      %v276 = vld [vmem:[%s1 + $0xd8] sm:$0xff]
      %v277 = vld [vmem:[%s1 + $0xe0] sm:$0xff]
      %v278 = vld [vmem:[%s1 + $0xe8] sm:$0xff]
      %v279 = vld [vmem:[%s1 + $0xf0] sm:$0xff]
      %v280 = vld [vmem:[%s1 + $0xf8] sm:$0xff]
      %v281 = vld [vmem:[%s1 + $0x100] sm:$0xff]
      %v282 = vld [vmem:[%s1 + $0x108] sm:$0xff]
      %v283 = vld [vmem:[%s1 + $0x110] sm:$0xff]
      %v284 = vld [vmem:[%s1 + $0x118] sm:$0xff]
      %v285 = vld [vmem:[%s1 + $0x120] sm:$0xff]
      %v286 = vld [vmem:[%s1 + $0x128] sm:$0xff]
      %v287 = vld [vmem:[%s1 + $0x130] sm:$0xff]
      %v288 = vld [vmem:[%s1 + $0x138] sm:$0xff]
      %v289 = vld [vmem:[%s1 + $0x140] sm:$0xff]
      %v290 = vld [vmem:[%s1 + $0x148] sm:$0xff]
      %v291 = vld [vmem:[%s1 + $0x150] sm:$0xff]
      %v292 = vld [vmem:[%s1 + $0x158] sm:$0xff]
      %v293 = vld [vmem:[%s1 + $0x160] sm:$0xff]
      %v294 = vld [vmem:[%s1 + $0x168] sm:$0xff]
      %v295 = vld [vmem:[%s1 + $0x170] sm:$0xff]
      %v296 = vld [vmem:[%s1 + $0x178] sm:$0xff]
      %v297 = vld [vmem:[%s1 + $0x180] sm:$0xff]
      %v298 = vld [vmem:[%s1 + $0x188] sm:$0xff]
      %v299 = vld [vmem:[%s1 + $0x190] sm:$0xff]
      %v300 = vld [vmem:[%s1 + $0x198] sm:$0xff]
      %v301 = vld [vmem:[%s1 + $0x1a0] sm:$0xff]
      %v302 = vld [vmem:[%s1 + $0x1a8] sm:$0xff]
      %v303 = vld [vmem:[%s1 + $0x1b0] sm:$0xff]
      %v304 = vld [vmem:[%s1 + $0x1b8] sm:$0xff]
      %v305 = vld [vmem:[%s1 + $0x1c0] sm:$0xff]
      %v306 = vld [vmem:[%s1 + $0x1c8] sm:$0xff]
      %v307 = vld [vmem:[%s1 + $0x1d0] sm:$0xff]
      %v308 = vld [vmem:[%s1 + $0x1d8] sm:$0xff]
      %v309 = vld [vmem:[%s1 + $0x1e0] sm:$0xff]
      %v310 = vld [vmem:[%s1 + $0x1e8] sm:$0xff]
      %v311 = vld [vmem:[%s1 + $0x1f0] sm:$0xff]
      %v312 = vld [vmem:[%s1 + $0x1f8] sm:$0xff]
      %v313 = vld [vmem:[%s2] sm:$0x3]
      %v315 = vlaneseq
      %v316 = vshrl.u32 %v315, 7
      %v317 = vsub.s32 0, %v316
      %v318 = vrot.slane %v313, %v317
      %v319 = vlaneseq
      %v320 = vshrl.u32 %v319, 7
      %v321 = vsub.s32 1, %v320
      %v322 = vrot.slane %v313, %v321
      %v341 = vunpack.c.l.b16 %v233
      %v342 = vunpack.c.h.b16 %v233
      %v343 = vunpack.c.l.b16 %v234
      %v344 = vunpack.c.h.b16 %v234
      %v345 = vunpack.c.l.b16 %v235
      %v346 = vunpack.c.h.b16 %v235
      %v347 = vunpack.c.l.b16 %v236
      %v348 = vunpack.c.h.b16 %v236
      %v349 = vunpack.c.l.b16 %v237
      %v350 = vunpack.c.h.b16 %v237
      %v351 = vunpack.c.l.b16 %v238
      %v352 = vunpack.c.h.b16 %v238
      %v353 = vunpack.c.l.b16 %v239
      %v354 = vunpack.c.h.b16 %v239
      %v355 = vunpack.c.l.b16 %v240
      %v356 = vunpack.c.h.b16 %v240
      %v357 = vunpack.c.l.b16 %v241
      %v358 = vunpack.c.h.b16 %v241
      %v359 = vunpack.c.l.b16 %v242
      %v360 = vunpack.c.h.b16 %v242
      %v361 = vunpack.c.l.b16 %v243
      %v362 = vunpack.c.h.b16 %v243
      %v363 = vunpack.c.l.b16 %v244
      %v364 = vunpack.c.h.b16 %v244
      %v365 = vunpack.c.l.b16 %v245
      %v366 = vunpack.c.h.b16 %v245
      %v367 = vunpack.c.l.b16 %v246
      %v368 = vunpack.c.h.b16 %v246
      %v369 = vunpack.c.l.b16 %v247
      %v370 = vunpack.c.h.b16 %v247
      %v371 = vunpack.c.l.b16 %v248
      %v372 = vunpack.c.h.b16 %v248
      %v373 = vpack.c.b16 %v345, %v341
      %v374 = vpack.c.b16 %v346, %v342
      %v375 = vpack.c.b16 %v347, %v343
      %v376 = vpack.c.b16 %v348, %v344
      %v377 = vpack.c.b16 %v353, %v349
      %v378 = vpack.c.b16 %v354, %v350
      %v379 = vpack.c.b16 %v355, %v351
      %v380 = vpack.c.b16 %v356, %v352
      %v381 = vpack.c.b16 %v361, %v357
      %v382 = vpack.c.b16 %v362, %v358
      %v383 = vpack.c.b16 %v363, %v359
      %v384 = vpack.c.b16 %v364, %v360
      %v385 = vpack.c.b16 %v369, %v365
      %v386 = vpack.c.b16 %v370, %v366
      %v387 = vpack.c.b16 %v371, %v367
      %v388 = vpack.c.b16 %v372, %v368
      %v469 = vunpack.c.l.b16 %v249
      %v470 = vunpack.c.h.b16 %v249
      %v471 = vunpack.c.l.b16 %v250
      %v472 = vunpack.c.h.b16 %v250
      %v473 = vunpack.c.l.b16 %v251
      %v474 = vunpack.c.h.b16 %v251
      %v475 = vunpack.c.l.b16 %v252
      %v476 = vunpack.c.h.b16 %v252
      %v477 = vunpack.c.l.b16 %v253
      %v478 = vunpack.c.h.b16 %v253
      %v479 = vunpack.c.l.b16 %v254
      %v480 = vunpack.c.h.b16 %v254
      %v481 = vunpack.c.l.b16 %v255
      %v482 = vunpack.c.h.b16 %v255
      %v483 = vunpack.c.l.b16 %v256
      %v484 = vunpack.c.h.b16 %v256
      %v485 = vunpack.c.l.b16 %v257
      %v486 = vunpack.c.h.b16 %v257
      %v487 = vunpack.c.l.b16 %v258
      %v488 = vunpack.c.h.b16 %v258
      %v489 = vunpack.c.l.b16 %v259
      %v490 = vunpack.c.h.b16 %v259
      %v491 = vunpack.c.l.b16 %v260
      %v492 = vunpack.c.h.b16 %v260
      %v493 = vunpack.c.l.b16 %v261
      %v494 = vunpack.c.h.b16 %v261
      %v495 = vunpack.c.l.b16 %v262
      %v496 = vunpack.c.h.b16 %v262
      %v497 = vunpack.c.l.b16 %v263
      %v498 = vunpack.c.h.b16 %v263
      %v499 = vunpack.c.l.b16 %v264
      %v500 = vunpack.c.h.b16 %v264
      %v501 = vunpack.c.l.b16 %v265
      %v502 = vunpack.c.h.b16 %v265
      %v503 = vunpack.c.l.b16 %v266
      %v504 = vunpack.c.h.b16 %v266
      %v505 = vunpack.c.l.b16 %v267
      %v506 = vunpack.c.h.b16 %v267
      %v507 = vunpack.c.l.b16 %v268
      %v508 = vunpack.c.h.b16 %v268
      %v509 = vunpack.c.l.b16 %v269
      %v510 = vunpack.c.h.b16 %v269
      %v511 = vunpack.c.l.b16 %v270
      %v512 = vunpack.c.h.b16 %v270
      %v513 = vunpack.c.l.b16 %v271
      %v514 = vunpack.c.h.b16 %v271
      %v515 = vunpack.c.l.b16 %v272
      %v516 = vunpack.c.h.b16 %v272
      %v517 = vunpack.c.l.b16 %v273
      %v518 = vunpack.c.h.b16 %v273
      %v519 = vunpack.c.l.b16 %v274
      %v520 = vunpack.c.h.b16 %v274
      %v521 = vunpack.c.l.b16 %v275
      %v522 = vunpack.c.h.b16 %v275
      %v523 = vunpack.c.l.b16 %v276
      %v524 = vunpack.c.h.b16 %v276
      %v525 = vunpack.c.l.b16 %v277
      %v526 = vunpack.c.h.b16 %v277
      %v527 = vunpack.c.l.b16 %v278
      %v528 = vunpack.c.h.b16 %v278
      %v529 = vunpack.c.l.b16 %v279
      %v530 = vunpack.c.h.b16 %v279
      %v531 = vunpack.c.l.b16 %v280
      %v532 = vunpack.c.h.b16 %v280
      %v533 = vunpack.c.l.b16 %v281
      %v534 = vunpack.c.h.b16 %v281
      %v535 = vunpack.c.l.b16 %v282
      %v536 = vunpack.c.h.b16 %v282
      %v537 = vunpack.c.l.b16 %v283
      %v538 = vunpack.c.h.b16 %v283
      %v539 = vunpack.c.l.b16 %v284
      %v540 = vunpack.c.h.b16 %v284
      %v541 = vunpack.c.l.b16 %v285
      %v542 = vunpack.c.h.b16 %v285
      %v543 = vunpack.c.l.b16 %v286
      %v544 = vunpack.c.h.b16 %v286
      %v545 = vunpack.c.l.b16 %v287
      %v546 = vunpack.c.h.b16 %v287
      %v547 = vunpack.c.l.b16 %v288
      %v548 = vunpack.c.h.b16 %v288
      %v549 = vunpack.c.l.b16 %v289
      %v550 = vunpack.c.h.b16 %v289
      %v551 = vunpack.c.l.b16 %v290
      %v552 = vunpack.c.h.b16 %v290
      %v553 = vunpack.c.l.b16 %v291
      %v554 = vunpack.c.h.b16 %v291
      %v555 = vunpack.c.l.b16 %v292
      %v556 = vunpack.c.h.b16 %v292
      %v557 = vunpack.c.l.b16 %v293
      %v558 = vunpack.c.h.b16 %v293
      %v559 = vunpack.c.l.b16 %v294
      %v560 = vunpack.c.h.b16 %v294
      %v561 = vunpack.c.l.b16 %v295
      %v562 = vunpack.c.h.b16 %v295
      %v563 = vunpack.c.l.b16 %v296
      %v564 = vunpack.c.h.b16 %v296
      %v565 = vunpack.c.l.b16 %v297
      %v566 = vunpack.c.h.b16 %v297
      %v567 = vunpack.c.l.b16 %v298
      %v568 = vunpack.c.h.b16 %v298
      %v569 = vunpack.c.l.b16 %v299
      %v570 = vunpack.c.h.b16 %v299
      %v571 = vunpack.c.l.b16 %v300
      %v572 = vunpack.c.h.b16 %v300
      %v573 = vunpack.c.l.b16 %v301
      %v574 = vunpack.c.h.b16 %v301
      %v575 = vunpack.c.l.b16 %v302
      %v576 = vunpack.c.h.b16 %v302
      %v577 = vunpack.c.l.b16 %v303
      %v578 = vunpack.c.h.b16 %v303
      %v579 = vunpack.c.l.b16 %v304
      %v580 = vunpack.c.h.b16 %v304
      %v581 = vunpack.c.l.b16 %v305
      %v582 = vunpack.c.h.b16 %v305
      %v583 = vunpack.c.l.b16 %v306
      %v584 = vunpack.c.h.b16 %v306
      %v585 = vunpack.c.l.b16 %v307
      %v586 = vunpack.c.h.b16 %v307
      %v587 = vunpack.c.l.b16 %v308
      %v588 = vunpack.c.h.b16 %v308
      %v589 = vunpack.c.l.b16 %v309
      %v590 = vunpack.c.h.b16 %v309
      %v591 = vunpack.c.l.b16 %v310
      %v592 = vunpack.c.h.b16 %v310
      %v593 = vunpack.c.l.b16 %v311
      %v594 = vunpack.c.h.b16 %v311
      %v595 = vunpack.c.l.b16 %v312
      %v596 = vunpack.c.h.b16 %v312
      %v597 = vpack.c.b16 %v471, %v469
      %v598 = vpack.c.b16 %v472, %v470
      %v599 = vpack.c.b16 %v475, %v473
      %v600 = vpack.c.b16 %v476, %v474
      %v601 = vpack.c.b16 %v479, %v477
      %v602 = vpack.c.b16 %v480, %v478
      %v603 = vpack.c.b16 %v483, %v481
      %v604 = vpack.c.b16 %v484, %v482
      %v605 = vpack.c.b16 %v487, %v485
      %v606 = vpack.c.b16 %v488, %v486
      %v607 = vpack.c.b16 %v491, %v489
      %v608 = vpack.c.b16 %v492, %v490
      %v609 = vpack.c.b16 %v495, %v493
      %v610 = vpack.c.b16 %v496, %v494
      %v611 = vpack.c.b16 %v499, %v497
      %v612 = vpack.c.b16 %v500, %v498
      %v613 = vpack.c.b16 %v503, %v501
      %v614 = vpack.c.b16 %v504, %v502
      %v615 = vpack.c.b16 %v507, %v505
      %v616 = vpack.c.b16 %v508, %v506
      %v617 = vpack.c.b16 %v511, %v509
      %v618 = vpack.c.b16 %v512, %v510
      %v619 = vpack.c.b16 %v515, %v513
      %v620 = vpack.c.b16 %v516, %v514
      %v621 = vpack.c.b16 %v519, %v517
      %v622 = vpack.c.b16 %v520, %v518
      %v623 = vpack.c.b16 %v523, %v521
      %v624 = vpack.c.b16 %v524, %v522
      %v625 = vpack.c.b16 %v527, %v525
      %v626 = vpack.c.b16 %v528, %v526
      %v627 = vpack.c.b16 %v531, %v529
      %v628 = vpack.c.b16 %v532, %v530
      %v629 = vpack.c.b16 %v535, %v533
      %v630 = vpack.c.b16 %v536, %v534
      %v631 = vpack.c.b16 %v539, %v537
      %v632 = vpack.c.b16 %v540, %v538
      %v633 = vpack.c.b16 %v543, %v541
      %v634 = vpack.c.b16 %v544, %v542
      %v635 = vpack.c.b16 %v547, %v545
      %v636 = vpack.c.b16 %v548, %v546
      %v637 = vpack.c.b16 %v551, %v549
      %v638 = vpack.c.b16 %v552, %v550
      %v639 = vpack.c.b16 %v555, %v553
      %v640 = vpack.c.b16 %v556, %v554
      %v641 = vpack.c.b16 %v559, %v557
      %v642 = vpack.c.b16 %v560, %v558
      %v643 = vpack.c.b16 %v563, %v561
      %v644 = vpack.c.b16 %v564, %v562
      %v645 = vpack.c.b16 %v567, %v565
      %v646 = vpack.c.b16 %v568, %v566
      %v647 = vpack.c.b16 %v571, %v569
      %v648 = vpack.c.b16 %v572, %v570
      %v649 = vpack.c.b16 %v575, %v573
      %v650 = vpack.c.b16 %v576, %v574
      %v651 = vpack.c.b16 %v579, %v577
      %v652 = vpack.c.b16 %v580, %v578
      %v653 = vpack.c.b16 %v583, %v581
      %v654 = vpack.c.b16 %v584, %v582
      %v655 = vpack.c.b16 %v587, %v585
      %v656 = vpack.c.b16 %v588, %v586
      %v657 = vpack.c.b16 %v591, %v589
      %v658 = vpack.c.b16 %v592, %v590
      %v659 = vpack.c.b16 %v595, %v593
      %v660 = vpack.c.b16 %v596, %v594
      %725 = vmatprep.subr.bf16.mxu0 %v598
      %726 = vmatpush1.bf16.msra.mxu0 %v597
      %727 = vmatprep.subr.bf16.mxu0 %v600
      %728 = vmatpush1.bf16.msra.mxu0 %v599
      %729 = vmatprep.subr.bf16.mxu0 %v602
      %730 = vmatpush1.bf16.msra.mxu0 %v601
      %731 = vmatprep.subr.bf16.mxu0 %v604
      %732 = vmatpush1.bf16.msra.mxu0 %v603
      %733 = vmatprep.subr.bf16.mxu0 %v606
      %734 = vmatpush1.bf16.msra.mxu0 %v605
      %735 = vmatprep.subr.bf16.mxu0 %v608
      %736 = vmatpush1.bf16.msra.mxu0 %v607
      %737 = vmatprep.subr.bf16.mxu0 %v610
      %738 = vmatpush1.bf16.msra.mxu0 %v609
      %739 = vmatprep.subr.bf16.mxu0 %v612
      %740 = vmatpush1.bf16.msra.mxu0 %v611
      %741 = vmatprep.subr.bf16.mxu0 %v614
      %742 = vmatpush1.bf16.msra.mxu0 %v613
      %743 = vmatprep.subr.bf16.mxu0 %v616
      %744 = vmatpush1.bf16.msra.mxu0 %v615
      %745 = vmatprep.subr.bf16.mxu0 %v618
      %746 = vmatpush1.bf16.msra.mxu0 %v617
      %747 = vmatprep.subr.bf16.mxu0 %v620
      %748 = vmatpush1.bf16.msra.mxu0 %v619
      %749 = vmatprep.subr.bf16.mxu0 %v622
      %750 = vmatpush1.bf16.msra.mxu0 %v621
      %751 = vmatprep.subr.bf16.mxu0 %v624
      %752 = vmatpush1.bf16.msra.mxu0 %v623
      %753 = vmatprep.subr.bf16.mxu0 %v626
      %754 = vmatpush1.bf16.msra.mxu0 %v625
      %755 = vmatprep.subr.bf16.mxu0 %v628
      %756 = vmatpush1.bf16.msra.mxu0 %v627
      %757 = vmatprep.mubr.bf16.mxu0 %v374
      %758 = vmatmul.mubr.bf16.gmra.mrb[0].mxu0 %v373
      %v759 = vpop.f32.mrb[0].mxu0
      %v760 = vadd.f32 %v318, %v759
      %v761 = vpop.f32.mrb[0].mxu0
      %v762 = vadd.f32 %v322, %v761
      %v763 = vpop.f32.mrb[0].mxu0
      %v764 = vadd.f32 %v318, %v763
      %v765 = vpop.f32.mrb[0].mxu0
      %v766 = vadd.f32 %v322, %v765
      %767 = vmatprep.mubr.bf16.mxu0 %v378
      %768 = vmatmul.mubr.bf16.gmra.mrb[0].mxu0 %v377
      %v769 = vpop.f32.mrb[0].mxu0
      %v770 = vadd.f32 %v318, %v769
      %v771 = vpop.f32.mrb[0].mxu0
      %v772 = vadd.f32 %v322, %v771
      %v773 = vpop.f32.mrb[0].mxu0
      %v774 = vadd.f32 %v318, %v773
      %v775 = vpop.f32.mrb[0].mxu0
      %v776 = vadd.f32 %v322, %v775
      %777 = vmatprep.mubr.bf16.mxu0 %v382
      %778 = vmatmul.mubr.bf16.gmra.mrb[0].mxu0 %v381
      %v779 = vpop.f32.mrb[0].mxu0
      %v780 = vadd.f32 %v318, %v779
      %v781 = vpop.f32.mrb[0].mxu0
      %v782 = vadd.f32 %v322, %v781
      %v783 = vpop.f32.mrb[0].mxu0
      %v784 = vadd.f32 %v318, %v783
      %v785 = vpop.f32.mrb[0].mxu0
      %v786 = vadd.f32 %v322, %v785
      %787 = vmatprep.mubr.bf16.mxu0 %v386
      %788 = vmatmul.mubr.bf16.gmra.mrb[0].mxu0 %v385
      %v789 = vpop.f32.mrb[0].mxu0
      %v790 = vadd.f32 %v318, %v789
      %v791 = vpop.f32.mrb[0].mxu0
      %v792 = vadd.f32 %v322, %v791
      %v793 = vpop.f32.mrb[0].mxu0
      %v794 = vadd.f32 %v318, %v793
      %v795 = vpop.f32.mrb[0].mxu0
      %v796 = vadd.f32 %v322, %v795
      %797 = vdwg.mxu0
      %798 = vmatprep.subr.bf16.mxu0 %v630
      %799 = vmatpush1.bf16.msra.mxu0 %v629
      %800 = vmatprep.subr.bf16.mxu0 %v632
      %801 = vmatpush1.bf16.msra.mxu0 %v631
      %802 = vmatprep.subr.bf16.mxu0 %v634
      %803 = vmatpush1.bf16.msra.mxu0 %v633
      %804 = vmatprep.subr.bf16.mxu0 %v636
      %805 = vmatpush1.bf16.msra.mxu0 %v635
      %806 = vmatprep.subr.bf16.mxu0 %v638
      %807 = vmatpush1.bf16.msra.mxu0 %v637
      %808 = vmatprep.subr.bf16.mxu0 %v640
      %809 = vmatpush1.bf16.msra.mxu0 %v639
      %810 = vmatprep.subr.bf16.mxu0 %v642
      %811 = vmatpush1.bf16.msra.mxu0 %v641
      %812 = vmatprep.subr.bf16.mxu0 %v644
      %813 = vmatpush1.bf16.msra.mxu0 %v643
      %814 = vmatprep.subr.bf16.mxu0 %v646
      %815 = vmatpush1.bf16.msra.mxu0 %v645
      %816 = vmatprep.subr.bf16.mxu0 %v648
      %817 = vmatpush1.bf16.msra.mxu0 %v647
      %818 = vmatprep.subr.bf16.mxu0 %v650
      %819 = vmatpush1.bf16.msra.mxu0 %v649
      %820 = vmatprep.subr.bf16.mxu0 %v652
      %821 = vmatpush1.bf16.msra.mxu0 %v651
      %822 = vmatprep.subr.bf16.mxu0 %v654
      %823 = vmatpush1.bf16.msra.mxu0 %v653
      %824 = vmatprep.subr.bf16.mxu0 %v656
      %825 = vmatpush1.bf16.msra.mxu0 %v655
      %826 = vmatprep.subr.bf16.mxu0 %v658
      %827 = vmatpush1.bf16.msra.mxu0 %v657
      %828 = vmatprep.subr.bf16.mxu0 %v660
      %829 = vmatpush1.bf16.msra.mxu0 %v659
      %830 = vmatprep.mubr.bf16.mxu0 %v376
      %831 = vmatmul.mubr.bf16.gmra.mrb[0].mxu0 %v375
      %v832 = vpop.f32.mrb[0].mxu0
      %v833 = vadd.f32 %v760, %v832
      %v834 = vpop.f32.mrb[0].mxu0
      %v835 = vadd.f32 %v762, %v834
      %v836 = vpop.f32.mrb[0].mxu0
      %v837 = vadd.f32 %v764, %v836
      %v838 = vpop.f32.mrb[0].mxu0
      %v839 = vadd.f32 %v766, %v838
      %840 = vmatprep.mubr.bf16.mxu0 %v380
      %841 = vmatmul.mubr.bf16.gmra.mrb[0].mxu0 %v379
      %v842 = vpop.f32.mrb[0].mxu0
      %v843 = vadd.f32 %v770, %v842
      %v844 = vpop.f32.mrb[0].mxu0
      %v845 = vadd.f32 %v772, %v844
      %v846 = vpop.f32.mrb[0].mxu0
      %v847 = vadd.f32 %v774, %v846
      %v848 = vpop.f32.mrb[0].mxu0
      %v849 = vadd.f32 %v776, %v848
      %850 = vmatprep.mubr.bf16.mxu0 %v384
      %851 = vmatmul.mubr.bf16.gmra.mrb[0].mxu0 %v383
      %v852 = vpop.f32.mrb[0].mxu0
      %v853 = vadd.f32 %v780, %v852
      %v854 = vpop.f32.mrb[0].mxu0
      %v855 = vadd.f32 %v782, %v854
      %v856 = vpop.f32.mrb[0].mxu0
      %v857 = vadd.f32 %v784, %v856
      %v858 = vpop.f32.mrb[0].mxu0
      %v859 = vadd.f32 %v786, %v858
      %860 = vmatprep.mubr.bf16.mxu0 %v388
      %861 = vmatmul.mubr.bf16.gmra.mrb[0].mxu0 %v387
      %v862 = vpop.f32.mrb[0].mxu0
      %v863 = vadd.f32 %v790, %v862
      %v864 = vpop.f32.mrb[0].mxu0
      %v865 = vadd.f32 %v792, %v864
      %v866 = vpop.f32.mrb[0].mxu0
      %v867 = vadd.f32 %v794, %v866
      %v868 = vpop.f32.mrb[0].mxu0
      %v869 = vadd.f32 %v796, %v868
      %870 = vdwg.mxu0
      %vm871 = vcmp.ge.f32.partialorder %v833, 0.0
      %vm872 = vcmp.ge.f32.partialorder %v835, 0.0
      %vm873 = vcmp.ge.f32.partialorder %v837, 0.0
      %vm874 = vcmp.ge.f32.partialorder %v839, 0.0
      %vm875 = vcmp.ge.f32.partialorder %v843, 0.0
      %vm876 = vcmp.ge.f32.partialorder %v845, 0.0
      %vm877 = vcmp.ge.f32.partialorder %v847, 0.0
      %vm878 = vcmp.ge.f32.partialorder %v849, 0.0
      %vm879 = vcmp.ge.f32.partialorder %v853, 0.0
      %vm880 = vcmp.ge.f32.partialorder %v855, 0.0
      %vm881 = vcmp.ge.f32.partialorder %v857, 0.0
      %vm882 = vcmp.ge.f32.partialorder %v859, 0.0
      %vm883 = vcmp.ge.f32.partialorder %v863, 0.0
      %vm884 = vcmp.ge.f32.partialorder %v865, 0.0
      %vm885 = vcmp.ge.f32.partialorder %v867, 0.0
      %vm886 = vcmp.ge.f32.partialorder %v869, 0.0
      %v887 = vmul.f32 %v833, 0.01
      %v888 = vmul.f32 %v835, 0.01
      %v889 = vmul.f32 %v837, 0.01
      %v890 = vmul.f32 %v839, 0.01
      %v891 = vmul.f32 %v843, 0.01
      %v892 = vmul.f32 %v845, 0.01
      %v893 = vmul.f32 %v847, 0.01
      %v894 = vmul.f32 %v849, 0.01
      %v895 = vmul.f32 %v853, 0.01
      %v896 = vmul.f32 %v855, 0.01
      %v897 = vmul.f32 %v857, 0.01
      %v898 = vmul.f32 %v859, 0.01
      %v899 = vmul.f32 %v863, 0.01
      %v900 = vmul.f32 %v865, 0.01
      %v901 = vmul.f32 %v867, 0.01
      %v902 = vmul.f32 %v869, 0.01
      %v903 = vsel %vm871, %v833, %v887
      %v904 = vsel %vm872, %v835, %v888
      %v905 = vsel %vm873, %v837, %v889
      %v906 = vsel %vm874, %v839, %v890
      %v907 = vsel %vm875, %v843, %v891
      %v908 = vsel %vm876, %v845, %v892
      %v909 = vsel %vm877, %v847, %v893
      %v910 = vsel %vm878, %v849, %v894
      %v911 = vsel %vm879, %v853, %v895
      %v912 = vsel %vm880, %v855, %v896
      %v913 = vsel %vm881, %v857, %v897
      %v914 = vsel %vm882, %v859, %v898
      %v915 = vsel %vm883, %v863, %v899
      %v916 = vsel %vm884, %v865, %v900
      %v917 = vsel %vm885, %v867, %v901
      %v918 = vsel %vm886, %v869, %v902
      %v919 = vpack.c.bf16 %v905, %v903
      %v920 = vpack.c.bf16 %v906, %v904
      %v921 = vpack.c.bf16 %v909, %v907
      %v922 = vpack.c.bf16 %v910, %v908
      %v923 = vpack.c.bf16 %v913, %v911
      %v924 = vpack.c.bf16 %v914, %v912
      %v925 = vpack.c.bf16 %v917, %v915
      %v926 = vpack.c.bf16 %v918, %v916
      %v927 = vld [vmem:[%s3] sm:$0xff]
      %v928 = vld [vmem:[%s3 + $0x8] sm:$0xff]
      %v929 = vld [vmem:[%s3 + $0x10] sm:$0xff]
      %v930 = vld [vmem:[%s3 + $0x18] sm:$0xff]
      %v931 = vld [vmem:[%s3 + $0x20] sm:$0xff]
      %v932 = vld [vmem:[%s3 + $0x28] sm:$0xff]
      %v933 = vld [vmem:[%s3 + $0x30] sm:$0xff]
      %v934 = vld [vmem:[%s3 + $0x38] sm:$0xff]
      %v935 = vld [vmem:[%s3 + $0x40] sm:$0xff]
      %v936 = vld [vmem:[%s3 + $0x48] sm:$0xff]
      %v937 = vld [vmem:[%s3 + $0x50] sm:$0xff]
      %v938 = vld [vmem:[%s3 + $0x58] sm:$0xff]
      %v939 = vld [vmem:[%s3 + $0x60] sm:$0xff]
      %v940 = vld [vmem:[%s3 + $0x68] sm:$0xff]
      %v941 = vld [vmem:[%s3 + $0x70] sm:$0xff]
      %v942 = vld [vmem:[%s3 + $0x78] sm:$0xff]
      %v943 = vld [vmem:[%s3 + $0x80] sm:$0xff]
      %v944 = vld [vmem:[%s3 + $0x88] sm:$0xff]
      %v945 = vld [vmem:[%s3 + $0x90] sm:$0xff]
      %v946 = vld [vmem:[%s3 + $0x98] sm:$0xff]
      %v947 = vld [vmem:[%s3 + $0xa0] sm:$0xff]
      %v948 = vld [vmem:[%s3 + $0xa8] sm:$0xff]
      %v949 = vld [vmem:[%s3 + $0xb0] sm:$0xff]
      %v950 = vld [vmem:[%s3 + $0xb8] sm:$0xff]
      %v951 = vld [vmem:[%s3 + $0xc0] sm:$0xff]
      %v952 = vld [vmem:[%s3 + $0xc8] sm:$0xff]
      %v953 = vld [vmem:[%s3 + $0xd0] sm:$0xff]
      %v954 = vld [vmem:[%s3 + $0xd8] sm:$0xff]
      %v955 = vld [vmem:[%s3 + $0xe0] sm:$0xff]
      %v956 = vld [vmem:[%s3 + $0xe8] sm:$0xff]
      %v957 = vld [vmem:[%s3 + $0xf0] sm:$0xff]
      %v958 = vld [vmem:[%s3 + $0xf8] sm:$0xff]
      %v959 = vld [vmem:[%s4] sm:$0x3]
      %v961 = vlaneseq
      %v962 = vshrl.u32 %v961, 7
      %v963 = vsub.s32 0, %v962
      %v964 = vrot.slane %v959, %v963
      %v965 = vlaneseq
      %v966 = vshrl.u32 %v965, 7
      %v967 = vsub.s32 1, %v966
      %v968 = vrot.slane %v959, %v967
      %v1003 = vunpack.c.l.b16 %v927
      %v1004 = vunpack.c.h.b16 %v927
      %v1005 = vunpack.c.l.b16 %v928
      %v1006 = vunpack.c.h.b16 %v928
      %v1007 = vunpack.c.l.b16 %v929
      %v1008 = vunpack.c.h.b16 %v929
      %v1009 = vunpack.c.l.b16 %v930
      %v1010 = vunpack.c.h.b16 %v930
      %v1011 = vunpack.c.l.b16 %v931
      %v1012 = vunpack.c.h.b16 %v931
      %v1013 = vunpack.c.l.b16 %v932
      %v1014 = vunpack.c.h.b16 %v932
      %v1015 = vunpack.c.l.b16 %v933
      %v1016 = vunpack.c.h.b16 %v933
      %v1017 = vunpack.c.l.b16 %v934
      %v1018 = vunpack.c.h.b16 %v934
      %v1019 = vunpack.c.l.b16 %v935
      %v1020 = vunpack.c.h.b16 %v935
      %v1021 = vunpack.c.l.b16 %v936
      %v1022 = vunpack.c.h.b16 %v936
      %v1023 = vunpack.c.l.b16 %v937
      %v1024 = vunpack.c.h.b16 %v937
      %v1025 = vunpack.c.l.b16 %v938
      %v1026 = vunpack.c.h.b16 %v938
      %v1027 = vunpack.c.l.b16 %v939
      %v1028 = vunpack.c.h.b16 %v939
      %v1029 = vunpack.c.l.b16 %v940
      %v1030 = vunpack.c.h.b16 %v940
      %v1031 = vunpack.c.l.b16 %v941
      %v1032 = vunpack.c.h.b16 %v941
      %v1033 = vunpack.c.l.b16 %v942
      %v1034 = vunpack.c.h.b16 %v942
      %v1035 = vunpack.c.l.b16 %v943
      %v1036 = vunpack.c.h.b16 %v943
      %v1037 = vunpack.c.l.b16 %v944
      %v1038 = vunpack.c.h.b16 %v944
      %v1039 = vunpack.c.l.b16 %v945
      %v1040 = vunpack.c.h.b16 %v945
      %v1041 = vunpack.c.l.b16 %v946
      %v1042 = vunpack.c.h.b16 %v946
      %v1043 = vunpack.c.l.b16 %v947
      %v1044 = vunpack.c.h.b16 %v947
      %v1045 = vunpack.c.l.b16 %v948
      %v1046 = vunpack.c.h.b16 %v948
      %v1047 = vunpack.c.l.b16 %v949
      %v1048 = vunpack.c.h.b16 %v949
      %v1049 = vunpack.c.l.b16 %v950
      %v1050 = vunpack.c.h.b16 %v950
      %v1051 = vunpack.c.l.b16 %v951
      %v1052 = vunpack.c.h.b16 %v951
      %v1053 = vunpack.c.l.b16 %v952
      %v1054 = vunpack.c.h.b16 %v952
      %v1055 = vunpack.c.l.b16 %v953
      %v1056 = vunpack.c.h.b16 %v953
      %v1057 = vunpack.c.l.b16 %v954
      %v1058 = vunpack.c.h.b16 %v954
      %v1059 = vunpack.c.l.b16 %v955
      %v1060 = vunpack.c.h.b16 %v955
      %v1061 = vunpack.c.l.b16 %v956
      %v1062 = vunpack.c.h.b16 %v956
      %v1063 = vunpack.c.l.b16 %v957
      %v1064 = vunpack.c.h.b16 %v957
      %v1065 = vunpack.c.l.b16 %v958
      %v1066 = vunpack.c.h.b16 %v958
      %v1067 = vpack.c.b16 %v1005, %v1003
      %v1068 = vpack.c.b16 %v1006, %v1004
      %v1069 = vpack.c.b16 %v1009, %v1007
      %v1070 = vpack.c.b16 %v1010, %v1008
      %v1071 = vpack.c.b16 %v1013, %v1011
      %v1072 = vpack.c.b16 %v1014, %v1012
      %v1073 = vpack.c.b16 %v1017, %v1015
      %v1074 = vpack.c.b16 %v1018, %v1016
      %v1075 = vpack.c.b16 %v1021, %v1019
      %v1076 = vpack.c.b16 %v1022, %v1020
      %v1077 = vpack.c.b16 %v1025, %v1023
      %v1078 = vpack.c.b16 %v1026, %v1024
      %v1079 = vpack.c.b16 %v1029, %v1027
      %v1080 = vpack.c.b16 %v1030, %v1028
      %v1081 = vpack.c.b16 %v1033, %v1031
      %v1082 = vpack.c.b16 %v1034, %v1032
      %v1083 = vpack.c.b16 %v1037, %v1035
      %v1084 = vpack.c.b16 %v1038, %v1036
      %v1085 = vpack.c.b16 %v1041, %v1039
      %v1086 = vpack.c.b16 %v1042, %v1040
      %v1087 = vpack.c.b16 %v1045, %v1043
      %v1088 = vpack.c.b16 %v1046, %v1044
      %v1089 = vpack.c.b16 %v1049, %v1047
      %v1090 = vpack.c.b16 %v1050, %v1048
      %v1091 = vpack.c.b16 %v1053, %v1051
      %v1092 = vpack.c.b16 %v1054, %v1052
      %v1093 = vpack.c.b16 %v1057, %v1055
      %v1094 = vpack.c.b16 %v1058, %v1056
      %v1095 = vpack.c.b16 %v1061, %v1059
      %v1096 = vpack.c.b16 %v1062, %v1060
      %v1097 = vpack.c.b16 %v1065, %v1063
      %v1098 = vpack.c.b16 %v1066, %v1064
      %1131 = vmatprep.subr.bf16.mxu0 %v1068
      %1132 = vmatpush1.bf16.msra.mxu0 %v1067
      %1133 = vmatprep.subr.bf16.mxu0 %v1070
      %1134 = vmatpush1.bf16.msra.mxu0 %v1069
      %1135 = vmatprep.subr.bf16.mxu0 %v1072
      %1136 = vmatpush1.bf16.msra.mxu0 %v1071
      %1137 = vmatprep.subr.bf16.mxu0 %v1074
      %1138 = vmatpush1.bf16.msra.mxu0 %v1073
      %1139 = vmatprep.subr.bf16.mxu0 %v1076
      %1140 = vmatpush1.bf16.msra.mxu0 %v1075
      %1141 = vmatprep.subr.bf16.mxu0 %v1078
      %1142 = vmatpush1.bf16.msra.mxu0 %v1077
      %1143 = vmatprep.subr.bf16.mxu0 %v1080
      %1144 = vmatpush1.bf16.msra.mxu0 %v1079
      %1145 = vmatprep.subr.bf16.mxu0 %v1082
      %1146 = vmatpush1.bf16.msra.mxu0 %v1081
      %1147 = vmatprep.subr.bf16.mxu0 %v1084
      %1148 = vmatpush1.bf16.msra.mxu0 %v1083
      %1149 = vmatprep.subr.bf16.mxu0 %v1086
      %1150 = vmatpush1.bf16.msra.mxu0 %v1085
      %1151 = vmatprep.subr.bf16.mxu0 %v1088
      %1152 = vmatpush1.bf16.msra.mxu0 %v1087
      %1153 = vmatprep.subr.bf16.mxu0 %v1090
      %1154 = vmatpush1.bf16.msra.mxu0 %v1089
      %1155 = vmatprep.subr.bf16.mxu0 %v1092
      %1156 = vmatpush1.bf16.msra.mxu0 %v1091
      %1157 = vmatprep.subr.bf16.mxu0 %v1094
      %1158 = vmatpush1.bf16.msra.mxu0 %v1093
      %1159 = vmatprep.subr.bf16.mxu0 %v1096
      %1160 = vmatpush1.bf16.msra.mxu0 %v1095
      %1161 = vmatprep.subr.bf16.mxu0 %v1098
      %1162 = vmatpush1.bf16.msra.mxu0 %v1097
      %1163 = vmatprep.mubr.bf16.mxu0 %v920
      %1164 = vmatmul.mubr.bf16.gmra.mrb[0].mxu0 %v919
      %v1165 = vpop.f32.mrb[0].mxu0
      %v1166 = vadd.f32 %v964, %v1165
      %v1167 = vpop.f32.mrb[0].mxu0
      %v1168 = vadd.f32 %v968, %v1167
      %v1169 = vpop.f32.mrb[0].mxu0
      %v1170 = vadd.f32 %v964, %v1169
      %v1171 = vpop.f32.mrb[0].mxu0
      %v1172 = vadd.f32 %v968, %v1171
      %1173 = vmatprep.mubr.bf16.mxu0 %v922
      %1174 = vmatmul.mubr.bf16.gmra.mrb[0].mxu0 %v921
      %v1175 = vpop.f32.mrb[0].mxu0
      %v1176 = vadd.f32 %v964, %v1175
      %v1177 = vpop.f32.mrb[0].mxu0
      %v1178 = vadd.f32 %v968, %v1177
      %v1179 = vpop.f32.mrb[0].mxu0
      %v1180 = vadd.f32 %v964, %v1179
      %v1181 = vpop.f32.mrb[0].mxu0
      %v1182 = vadd.f32 %v968, %v1181
      %1183 = vmatprep.mubr.bf16.mxu0 %v924
      %1184 = vmatmul.mubr.bf16.gmra.mrb[0].mxu0 %v923
      %v1185 = vpop.f32.mrb[0].mxu0
      %v1186 = vadd.f32 %v964, %v1185
      %v1187 = vpop.f32.mrb[0].mxu0
      %v1188 = vadd.f32 %v968, %v1187
      %v1189 = vpop.f32.mrb[0].mxu0
      %v1190 = vadd.f32 %v964, %v1189
      %v1191 = vpop.f32.mrb[0].mxu0
      %v1192 = vadd.f32 %v968, %v1191
      %1193 = vmatprep.mubr.bf16.mxu0 %v926
      %1194 = vmatmul.mubr.bf16.gmra.mrb[0].mxu0 %v925
      %v1195 = vpop.f32.mrb[0].mxu0
      %v1196 = vadd.f32 %v964, %v1195
      %v1197 = vpop.f32.mrb[0].mxu0
      %v1198 = vadd.f32 %v968, %v1197
      %v1199 = vpop.f32.mrb[0].mxu0
      %v1200 = vadd.f32 %v964, %v1199
      %v1201 = vpop.f32.mrb[0].mxu0
      %v1202 = vadd.f32 %v968, %v1201
      %1203 = vdwg.mxu0
      %vm1204 = vcmp.ge.f32.partialorder %v1166, 0.0
      %vm1205 = vcmp.ge.f32.partialorder %v1168, 0.0
      %vm1206 = vcmp.ge.f32.partialorder %v1170, 0.0
      %vm1207 = vcmp.ge.f32.partialorder %v1172, 0.0
      %vm1208 = vcmp.ge.f32.partialorder %v1176, 0.0
      %vm1209 = vcmp.ge.f32.partialorder %v1178, 0.0
      %vm1210 = vcmp.ge.f32.partialorder %v1180, 0.0
      %vm1211 = vcmp.ge.f32.partialorder %v1182, 0.0
      %vm1212 = vcmp.ge.f32.partialorder %v1186, 0.0
      %vm1213 = vcmp.ge.f32.partialorder %v1188, 0.0
      %vm1214 = vcmp.ge.f32.partialorder %v1190, 0.0
      %vm1215 = vcmp.ge.f32.partialorder %v1192, 0.0
      %vm1216 = vcmp.ge.f32.partialorder %v1196, 0.0
      %vm1217 = vcmp.ge.f32.partialorder %v1198, 0.0
      %vm1218 = vcmp.ge.f32.partialorder %v1200, 0.0
      %vm1219 = vcmp.ge.f32.partialorder %v1202, 0.0
      %v1220 = vmul.f32 %v1166, 0.01
      %v1221 = vmul.f32 %v1168, 0.01
      %v1222 = vmul.f32 %v1170, 0.01
      %v1223 = vmul.f32 %v1172, 0.01
      %v1224 = vmul.f32 %v1176, 0.01
      %v1225 = vmul.f32 %v1178, 0.01
      %v1226 = vmul.f32 %v1180, 0.01
      %v1227 = vmul.f32 %v1182, 0.01
      %v1228 = vmul.f32 %v1186, 0.01
      %v1229 = vmul.f32 %v1188, 0.01
      %v1230 = vmul.f32 %v1190, 0.01
      %v1231 = vmul.f32 %v1192, 0.01
      %v1232 = vmul.f32 %v1196, 0.01
      %v1233 = vmul.f32 %v1198, 0.01
      %v1234 = vmul.f32 %v1200, 0.01
      %v1235 = vmul.f32 %v1202, 0.01
      %v1236 = vsel %vm1204, %v1166, %v1220
      %v1237 = vsel %vm1205, %v1168, %v1221
      %v1238 = vsel %vm1206, %v1170, %v1222
      %v1239 = vsel %vm1207, %v1172, %v1223
      %v1240 = vsel %vm1208, %v1176, %v1224
      %v1241 = vsel %vm1209, %v1178, %v1225
      %v1242 = vsel %vm1210, %v1180, %v1226
      %v1243 = vsel %vm1211, %v1182, %v1227
      %v1244 = vsel %vm1212, %v1186, %v1228
      %v1245 = vsel %vm1213, %v1188, %v1229
      %v1246 = vsel %vm1214, %v1190, %v1230
      %v1247 = vsel %vm1215, %v1192, %v1231
      %v1248 = vsel %vm1216, %v1196, %v1232
      %v1249 = vsel %vm1217, %v1198, %v1233
      %v1250 = vsel %vm1218, %v1200, %v1234
      %v1251 = vsel %vm1219, %v1202, %v1235
      %v1252 = vpack.c.bf16 %v1238, %v1236
      %v1253 = vpack.c.bf16 %v1239, %v1237
      %v1254 = vpack.c.bf16 %v1242, %v1240
      %v1255 = vpack.c.bf16 %v1243, %v1241
      %v1256 = vpack.c.bf16 %v1246, %v1244
      %v1257 = vpack.c.bf16 %v1247, %v1245
      %v1258 = vpack.c.bf16 %v1250, %v1248
      %v1259 = vpack.c.bf16 %v1251, %v1249
      %v1268 = vunpack.c.l.b16 %v1252
      %v1269 = vunpack.c.l.b16 %v1253
      %v1270 = vunpack.c.h.b16 %v1252
      %v1271 = vunpack.c.h.b16 %v1253
      %v1272 = vunpack.c.l.b16 %v1254
      %v1273 = vunpack.c.l.b16 %v1255
      %v1274 = vunpack.c.h.b16 %v1254
      %v1275 = vunpack.c.h.b16 %v1255
      %v1276 = vunpack.c.l.b16 %v1256
      %v1277 = vunpack.c.l.b16 %v1257
      %v1278 = vunpack.c.h.b16 %v1256
      %v1279 = vunpack.c.h.b16 %v1257
      %v1280 = vunpack.c.l.b16 %v1258
      %v1281 = vunpack.c.l.b16 %v1259
      %v1282 = vunpack.c.h.b16 %v1258
      %v1283 = vunpack.c.h.b16 %v1259
      %v1284 = vpack.c.b16 %v1269, %v1268
      %v1285 = vpack.c.b16 %v1271, %v1270
      %v1286 = vpack.c.b16 %v1273, %v1272
      %v1287 = vpack.c.b16 %v1275, %v1274
      %v1288 = vpack.c.b16 %v1277, %v1276
      %v1289 = vpack.c.b16 %v1279, %v1278
      %v1290 = vpack.c.b16 %v1281, %v1280
      %v1291 = vpack.c.b16 %v1283, %v1282
      %1300 = vst [vmem:[%s231] sm:$0xff] %v1284
      %1301 = vst [vmem:[%s231 + $0x8] sm:$0xff] %v1285
      %1302 = vst [vmem:[%s231 + $0x10] sm:$0xff] %v1286
      %1303 = vst [vmem:[%s231 + $0x18] sm:$0xff] %v1287
      %1304 = vst [vmem:[%s231 + $0x20] sm:$0xff] %v1288
      %1305 = vst [vmem:[%s231 + $0x28] sm:$0xff] %v1289
      %1306 = vst [vmem:[%s231 + $0x30] sm:$0xff] %v1290
      %1307 = vst [vmem:[%s231 + $0x38] sm:$0xff] %v1291
      %s1308 = smul.u32 8, %s16
      %p1309 = scmp.lt.s32.totalorder %s1308, 15
      %s1310 = scalar_select %p1309, %s1308, 15
      %s1311 = smul.addr %s1310, 2
      %s1312 = smul.addr %s1311, 4
      %s1313 = scalar_lea.vmem %s5, %s1312
      // Predicated region
      $region41: #{discriminator_forward.7} parent=39 // pred_check
        %p1314 = pneg %p144
      $region42: #{discriminator_forward.7} parent=39 // pred_check_branch
        %1316 = sbr.rel (%p1314) target = $region44
      $region43: #{discriminator_forward.7} parent=39 // pred_region
        %s1317 = smul.u32 8, %s16
      $region44: #{discriminator_forward.7} parent=39 // pred_fallthru
        _
    $region40: #{discriminator_forward.7} parent=5 // pred_fallthru
      _
    %p1318 = scmp.le.s32.totalorder 2, %s11
    // Predicated region
    $region45: #{discriminator_forward.7} parent=5 // pred_check
      %p1319 = pneg %p1318
    $region46: #{discriminator_forward.7} parent=5 // pred_check_branch
      %1321 = sbr.rel (%p1319) target = $region48
    $region47: #{discriminator_forward.7} parent=5 // pred_region
      %s1322 = ssub.s32 %s11, 2
      // Predicated region
      $region49: #{discriminator_forward.7} parent=47 // pred_check
        %p1323 = pneg %p150
      $region50: #{discriminator_forward.7} parent=47 // pred_check_branch
        %1325 = sbr.rel (%p1323) target = $region52
      $region51: #{discriminator_forward.7} parent=47 // pred_region
        %s1326 = smul.u32 8, %s17
        %p1327 = scmp.lt.s32.totalorder %s1326, 15
        %s1328 = scalar_select %p1327, %s1326, 15
        %s1329 = smul.addr %s1328, 2
        %s1330 = smul.addr %s1329, 4
        %s1331 = scalar_lea.vmem %s5, %s1330
      $region52: #{discriminator_forward.7} parent=47 // pred_fallthru
        _
    $region48: #{discriminator_forward.7} parent=5 // pred_fallthru
      _
  $region6: #{discriminator_forward.7} parent=0 // loop_footer
    %s15 = sadd.s32 1, %s11
  $region7: #{discriminator_forward.7} parent=0 // loop_footer_branch
    %10 = sbr.rel target = $region3
  $region8: #{discriminator_forward.7} parent=0 // loop_exit
    _

// kernel: discriminator_forward.8
$region0: #{discriminator_forward.8}
  #allocation0 [shape = 'u32[]', space=smem, size = 0x4, offset = 0x4, fixed_abs, tag = 'smem constant byte address 0x4 - core index']
  #allocation1 [shape = 'u32[144,128]{1,0:T(1,128)}', space=vmem, size = 0x12000, scoped, tag = 'internal scratch']
  %s0 = inlined_call_operand.vmem [shape: bf16[32,1024], index: 0, kind: input, shape index: {}]
  %s1 = inlined_call_operand.vmem [shape: bf16[1024,512], index: 1, kind: input, shape index: {}]
  %s2 = inlined_call_operand.vmem [shape: f32[1,512], index: 2, kind: input, shape index: {}]
  %s3 = inlined_call_operand.vmem [shape: bf16[512,512], index: 3, kind: input, shape index: {}]
  %s4 = inlined_call_operand.vmem [shape: f32[1,512], index: 4, kind: input, shape index: {}]
  %s5 = inlined_call_operand.vmem [shape: bf16[32,512], index: 5, kind: output, shape index: {}]
  %s6 = sld [smem:[#allocation0]]
  $region53: #{discriminator_forward.8} parent=0
    _
  %s8 = ssub.s32 1, %s6
  %s9 = scalar_select 0, %s8, %s6
  loop: start=0, step=1, limit=4
  $region2: #{discriminator_forward.8} parent=0 // loop_pre_header
    _
  $region3: #{discriminator_forward.8} parent=0 // loop_header
    %s11 = sphi 0, %s15
    %p12 = scmp.ge.s32.totalorder %s11, 4
    %s21 = sphi 0, %s23
    %s24 = sphi 0, %s21
    %s25 = sphi 0, %s24
    %s41 = sphi 0, %s25
    %s45 = sphi 0, %s45
    %s47 = sphi 0, %s45
    %s48 = sphi 0, %s47
    %s62 = sphi 0, %s48
    %s66 = sphi 0, %s66
    %s68 = sphi 0, %s66
    %s69 = sphi 0, %s68
    %s83 = sphi 0, %s69
    %s87 = sphi 0, %s87
    %s89 = sphi 0, %s87
    %s90 = sphi 0, %s89
    %s104 = sphi 0, %s90
    %s108 = sphi 0, %s108
    %s110 = sphi 0, %s108
    %s111 = sphi 0, %s110
    %s125 = sphi 0, %s111
    %s131 = sphi 0, %s133
    %s134 = sphi 0, %s131
    %s135 = sphi 0, %s134
    %s151 = sphi 0, %s135
  $region4: #{discriminator_forward.8} parent=0 // loop_header_branch
    %14 = sbr.rel (%p12) target = $region8
  $region5: #{discriminator_forward.8} parent=0 // loop_body
    %s16 = ssub.s32 %s11, 1
    %s17 = ssub.s32 %s11, 2
    %s18 = sadd.s32 %s11, 1
    %s19 = ssub.s32 %s11, %s18
    %p20 = scmp.eq.s32.totalorder %s19, 0
    %s22 = sadd.s32 %s21, 1
    %s23 = scalar_select %p20, %s21, %s22
    %p26 = pneg %p20
    %p27 = scmp.eq.s32.totalorder %s11, 1
    %p28 = por %p26, %p27
    %p29 = scmp.ne.s32.totalorder %s21, %s24
    %p30 = scmp.eq.s32.totalorder %s11, 0
    %p31 = por %p29, %p30
    %p32 = scmp.ne.s32.totalorder %s21, %s24
    %p33 = scmp.eq.s32.totalorder %s16, 1
    %p34 = por %p32, %p33
    %p35 = scmp.ne.s32.totalorder %s24, %s25
    %p36 = scmp.eq.s32.totalorder %s16, 0
    %p37 = por %p35, %p36
    %p38 = scmp.ne.s32.totalorder %s24, %s25
    %p39 = scmp.eq.s32.totalorder %s17, 1
    %p40 = por %p38, %p39
    %p42 = scmp.ne.s32.totalorder %s25, %s41
    %p43 = scmp.eq.s32.totalorder %s17, 0
    %p44 = por %p42, %p43
    %s46 = sadd.s32 %s45, 1
    %p49 = scmp.eq.s32.totalorder %s11, 1
    %p50 = scmp.ne.s32.totalorder %s45, %s47
    %p51 = scmp.eq.s32.totalorder %s11, 0
    %p52 = por %p50, %p51
    %p53 = scmp.ne.s32.totalorder %s45, %s47
    %p54 = scmp.eq.s32.totalorder %s16, 1
    %p55 = por %p53, %p54
    %p56 = scmp.ne.s32.totalorder %s47, %s48
    %p57 = scmp.eq.s32.totalorder %s16, 0
    %p58 = por %p56, %p57
    %p59 = scmp.ne.s32.totalorder %s47, %s48
    %p60 = scmp.eq.s32.totalorder %s17, 1
    %p61 = por %p59, %p60
    %p63 = scmp.ne.s32.totalorder %s48, %s62
    %p64 = scmp.eq.s32.totalorder %s17, 0
    %p65 = por %p63, %p64
    %s67 = sadd.s32 %s66, 1
    %p70 = scmp.eq.s32.totalorder %s11, 1
    %p71 = scmp.ne.s32.totalorder %s66, %s68
    %p72 = scmp.eq.s32.totalorder %s11, 0
    %p73 = por %p71, %p72
    %p74 = scmp.ne.s32.totalorder %s66, %s68
    %p75 = scmp.eq.s32.totalorder %s16, 1
    %p76 = por %p74, %p75
    %p77 = scmp.ne.s32.totalorder %s68, %s69
    %p78 = scmp.eq.s32.totalorder %s16, 0
    %p79 = por %p77, %p78
    %p80 = scmp.ne.s32.totalorder %s68, %s69
    %p81 = scmp.eq.s32.totalorder %s17, 1
    %p82 = por %p80, %p81
    %p84 = scmp.ne.s32.totalorder %s69, %s83
    %p85 = scmp.eq.s32.totalorder %s17, 0
    %p86 = por %p84, %p85
    %s88 = sadd.s32 %s87, 1
    %p91 = scmp.eq.s32.totalorder %s11, 1
    %p92 = scmp.ne.s32.totalorder %s87, %s89
    %p93 = scmp.eq.s32.totalorder %s11, 0
    %p94 = por %p92, %p93
    %p95 = scmp.ne.s32.totalorder %s87, %s89
    %p96 = scmp.eq.s32.totalorder %s16, 1
    %p97 = por %p95, %p96
    %p98 = scmp.ne.s32.totalorder %s89, %s90
    %p99 = scmp.eq.s32.totalorder %s16, 0
    %p100 = por %p98, %p99
    %p101 = scmp.ne.s32.totalorder %s89, %s90
    %p102 = scmp.eq.s32.totalorder %s17, 1
    %p103 = por %p101, %p102
    %p105 = scmp.ne.s32.totalorder %s90, %s104
    %p106 = scmp.eq.s32.totalorder %s17, 0
    %p107 = por %p105, %p106
    %s109 = sadd.s32 %s108, 1
    %p112 = scmp.eq.s32.totalorder %s11, 1
    %p113 = scmp.ne.s32.totalorder %s108, %s110
    %p114 = scmp.eq.s32.totalorder %s11, 0
    %p115 = por %p113, %p114
    %p116 = scmp.ne.s32.totalorder %s108, %s110
    %p117 = scmp.eq.s32.totalorder %s16, 1
    %p118 = por %p116, %p117
    %p119 = scmp.ne.s32.totalorder %s110, %s111
    %p120 = scmp.eq.s32.totalorder %s16, 0
    %p121 = por %p119, %p120
    %p122 = scmp.ne.s32.totalorder %s110, %s111
    %p123 = scmp.eq.s32.totalorder %s17, 1
    %p124 = por %p122, %p123
    %p126 = scmp.ne.s32.totalorder %s111, %s125
    %p127 = scmp.eq.s32.totalorder %s17, 0
    %p128 = por %p126, %p127
    %s129 = ssub.s32 %s11, %s18
    %p130 = scmp.eq.s32.totalorder %s129, 0
    %s132 = sadd.s32 %s131, 1
    %s133 = scalar_select %p130, %s131, %s132
    %p136 = pneg %p130
    %p137 = scmp.eq.s32.totalorder %s11, 1
    %p138 = por %p136, %p137
    %p139 = scmp.ne.s32.totalorder %s131, %s134
    %p140 = scmp.eq.s32.totalorder %s11, 0
    %p141 = por %p139, %p140
    %p142 = scmp.ne.s32.totalorder %s131, %s134
    %p143 = scmp.eq.s32.totalorder %s16, 1
    %p144 = por %p142, %p143
    %p145 = scmp.ne.s32.totalorder %s134, %s135
    %p146 = scmp.eq.s32.totalorder %s16, 0
    %p147 = por %p145, %p146
    %p148 = scmp.ne.s32.totalorder %s134, %s135
    %p149 = scmp.eq.s32.totalorder %s17, 1
    %p150 = por %p148, %p149
    %p152 = scmp.ne.s32.totalorder %s135, %s151
    %p153 = scmp.eq.s32.totalorder %s17, 0
    %p154 = por %p152, %p153
    %p155 = scmp.le.s32.totalorder 1, %s11
    %p156 = scmp.lt.s32.totalorder %s11, 3
    %p157 = pnand %p155, %p156
    %p158 = pneg %p157
    // Predicated region
    $region9: #{discriminator_forward.8} parent=5 // pred_check
      _
    $region10: #{discriminator_forward.8} parent=5 // pred_check_branch
      %160 = sbr.rel (%p157) target = $region12
    $region11: #{discriminator_forward.8} parent=5 // pred_region
      %s161 = ssub.s32 %s11, 1
      // Predicated region
      $region13: #{discriminator_forward.8} parent=11 // pred_check
        %p162 = pneg %p58
      $region14: #{discriminator_forward.8} parent=11 // pred_check_branch
        %164 = sbr.rel (%p162) target = $region16
      $region15: #{discriminator_forward.8} parent=11 // pred_region
        _
      $region16: #{discriminator_forward.8} parent=11 // pred_fallthru
        _
      // Predicated region
      $region17: #{discriminator_forward.8} parent=11 // pred_check
        %p165 = pneg %p79
      $region18: #{discriminator_forward.8} parent=11 // pred_check_branch
        %167 = sbr.rel (%p165) target = $region20
      $region19: #{discriminator_forward.8} parent=11 // pred_region
        _
      $region20: #{discriminator_forward.8} parent=11 // pred_fallthru
        _
      // Predicated region
      $region21: #{discriminator_forward.8} parent=11 // pred_check
        %p168 = pneg %p100
      $region22: #{discriminator_forward.8} parent=11 // pred_check_branch
        %170 = sbr.rel (%p168) target = $region24
      $region23: #{discriminator_forward.8} parent=11 // pred_region
        _
      $region24: #{discriminator_forward.8} parent=11 // pred_fallthru
        _
      // Predicated region
      $region25: #{discriminator_forward.8} parent=11 // pred_check
        %p171 = pneg %p121
      $region26: #{discriminator_forward.8} parent=11 // pred_check_branch
        %173 = sbr.rel (%p171) target = $region28
      $region27: #{discriminator_forward.8} parent=11 // pred_region
        _
      $region28: #{discriminator_forward.8} parent=11 // pred_fallthru
        _
    $region12: #{discriminator_forward.8} parent=5 // pred_fallthru
      _
    %p174 = scmp.lt.s32.totalorder %s11, 2
    // Predicated region
    $region29: #{discriminator_forward.8} parent=5 // pred_check
      %p175 = pneg %p174
    $region30: #{discriminator_forward.8} parent=5 // pred_check_branch
      %177 = sbr.rel (%p175) target = $region32
    $region31: #{discriminator_forward.8} parent=5 // pred_region
      // Predicated region
      $region33: #{discriminator_forward.8} parent=31 // pred_check
        %p178 = pneg %p31
      $region34: #{discriminator_forward.8} parent=31 // pred_check_branch
        %180 = sbr.rel (%p178) target = $region36
      $region35: #{discriminator_forward.8} parent=31 // pred_region
        %s181 = smul.u32 2, %s11
        %p182 = scmp.lt.s32.totalorder %s181, 3
        %s183 = scalar_select %p182, %s181, 3
        %s184 = smul.addr %s183, 8
        %s185 = smul.addr %s184, 4
        %s186 = scalar_lea.vmem %s0, %s185
        %s187 = smul.u32 2, %s11
      $region36: #{discriminator_forward.8} parent=31 // pred_fallthru
        _
    $region32: #{discriminator_forward.8} parent=5 // pred_fallthru
      _
    %p188 = scmp.le.s32.totalorder 1, %s11
    %p189 = scmp.lt.s32.totalorder %s11, 3
    %p190 = pnand %p188, %p189
    %p191 = pneg %p190
    // Predicated region
    $region37: #{discriminator_forward.8} parent=5 // pred_check
      _
    $region38: #{discriminator_forward.8} parent=5 // pred_check_branch
      %193 = sbr.rel (%p190) target = $region40
    $region39: #{discriminator_forward.8} parent=5 // pred_region
      %s194 = ssub.s32 %s11, 1
      %s195 = smul.u32 2, %s16
      %p196 = scmp.lt.s32.totalorder %s195, 3
      %s197 = scalar_select %p196, %s195, 3
      %s198 = smul.addr %s197, 8
      %s199 = smul.addr %s198, 4
      %s200 = scalar_lea.vmem %s0, %s199
      %p201 = pneg %p37
      %p202 = pneg %p34
      %p203 = pneg %p58
      %p204 = pneg %p55
      %p205 = pneg %p79
      %p206 = pneg %p76
      %p207 = pneg %p100
      %p208 = pneg %p97
      %p209 = pneg %p121
      %p210 = pneg %p118
      %p211 = pneg %p147
      %p212 = pneg %p144
      %s213 = smul.u32 2, %s16
      %p214 = scmp.lt.s32.totalorder %s213, 3
      %s215 = scalar_select %p214, %s213, 3
      %s216 = smul.addr %s215, 4
      %s217 = smul.addr %s216, 4
      %s218 = scalar_lea.vmem %s5, %s217
      %s219 = smul.u32 2, %s16
      %p220 = scmp.lt.s32.totalorder %s219, 3
      %s221 = scalar_select %p220, %s219, 3
      %s222 = smul.addr %s221, 8
      %s223 = smul.addr %s222, 4
      %s224 = scalar_lea.vmem %s0, %s223
      %s225 = smul.u32 2, %s16
      %s226 = smul.u32 2, %s16
      %p227 = scmp.lt.s32.totalorder %s226, 3
      %s228 = scalar_select %p227, %s226, 3
      %s229 = smul.addr %s228, 4
      %s230 = smul.addr %s229, 4
      %s231 = scalar_lea.vmem %s5, %s230
      %s232 = smul.u32 2, %s16
      %v233 = vld [vmem:[%s224] sm:$0xff]
      %v234 = vld [vmem:[%s224 + $0x8] sm:$0xff]
      %v235 = vld [vmem:[%s224 + $0x10] sm:$0xff]
      %v236 = vld [vmem:[%s224 + $0x18] sm:$0xff]
      %v237 = vld [vmem:[%s224 + $0x20] sm:$0xff]
      %v238 = vld [vmem:[%s224 + $0x28] sm:$0xff]
      %v239 = vld [vmem:[%s224 + $0x30] sm:$0xff]
      %v240 = vld [vmem:[%s224 + $0x38] sm:$0xff]
      %v241 = vld [vmem:[%s1] sm:$0xff]
      %v242 = vld [vmem:[%s1 + $0x8] sm:$0xff]
      %v243 = vld [vmem:[%s1 + $0x10] sm:$0xff]
      %v244 = vld [vmem:[%s1 + $0x18] sm:$0xff]
      %v245 = vld [vmem:[%s1 + $0x20] sm:$0xff]
      %v246 = vld [vmem:[%s1 + $0x28] sm:$0xff]
      %v247 = vld [vmem:[%s1 + $0x30] sm:$0xff]
      %v248 = vld [vmem:[%s1 + $0x38] sm:$0xff]
      %v249 = vld [vmem:[%s1 + $0x40] sm:$0xff]
      %v250 = vld [vmem:[%s1 + $0x48] sm:$0xff]
      %v251 = vld [vmem:[%s1 + $0x50] sm:$0xff]
      %v252 = vld [vmem:[%s1 + $0x58] sm:$0xff]
      %v253 = vld [vmem:[%s1 + $0x60] sm:$0xff]
      %v254 = vld [vmem:[%s1 + $0x68] sm:$0xff]
      %v255 = vld [vmem:[%s1 + $0x70] sm:$0xff]
      %v256 = vld [vmem:[%s1 + $0x78] sm:$0xff]
      %v257 = vld [vmem:[%s1 + $0x80] sm:$0xff]
      %v258 = vld [vmem:[%s1 + $0x88] sm:$0xff]
      %v259 = vld [vmem:[%s1 + $0x90] sm:$0xff]
      %v260 = vld [vmem:[%s1 + $0x98] sm:$0xff]
      %v261 = vld [vmem:[%s1 + $0xa0] sm:$0xff]
      %v262 = vld [vmem:[%s1 + $0xa8] sm:$0xff]
      %v263 = vld [vmem:[%s1 + $0xb0] sm:$0xff]
      %v264 = vld [vmem:[%s1 + $0xb8] sm:$0xff]
      %v265 = vld [vmem:[%s1 + $0xc0] sm:$0xff]
      %v266 = vld [vmem:[%s1 + $0xc8] sm:$0xff]
      %v267 = vld [vmem:[%s1 + $0xd0] sm:$0xff]
      %v268 = vld [vmem:[%s1 + $0xd8] sm:$0xff]
      %v269 = vld [vmem:[%s1 + $0xe0] sm:$0xff]
      %v270 = vld [vmem:[%s1 + $0xe8] sm:$0xff]
      %v271 = vld [vmem:[%s1 + $0xf0] sm:$0xff]
      %v272 = vld [vmem:[%s1 + $0xf8] sm:$0xff]
      %v273 = vld [vmem:[%s1 + $0x100] sm:$0xff]
      %v274 = vld [vmem:[%s1 + $0x108] sm:$0xff]
      %v275 = vld [vmem:[%s1 + $0x110] sm:$0xff]
      %v276 = vld [vmem:[%s1 + $0x118] sm:$0xff]
      %v277 = vld [vmem:[%s1 + $0x120] sm:$0xff]
      %v278 = vld [vmem:[%s1 + $0x128] sm:$0xff]
      %v279 = vld [vmem:[%s1 + $0x130] sm:$0xff]
      %v280 = vld [vmem:[%s1 + $0x138] sm:$0xff]
      %v281 = vld [vmem:[%s1 + $0x140] sm:$0xff]
      %v282 = vld [vmem:[%s1 + $0x148] sm:$0xff]
      %v283 = vld [vmem:[%s1 + $0x150] sm:$0xff]
      %v284 = vld [vmem:[%s1 + $0x158] sm:$0xff]
      %v285 = vld [vmem:[%s1 + $0x160] sm:$0xff]
      %v286 = vld [vmem:[%s1 + $0x168] sm:$0xff]
      %v287 = vld [vmem:[%s1 + $0x170] sm:$0xff]
      %v288 = vld [vmem:[%s1 + $0x178] sm:$0xff]
      %v289 = vld [vmem:[%s1 + $0x180] sm:$0xff]
      %v290 = vld [vmem:[%s1 + $0x188] sm:$0xff]
      %v291 = vld [vmem:[%s1 + $0x190] sm:$0xff]
      %v292 = vld [vmem:[%s1 + $0x198] sm:$0xff]
      %v293 = vld [vmem:[%s1 + $0x1a0] sm:$0xff]
      %v294 = vld [vmem:[%s1 + $0x1a8] sm:$0xff]
      %v295 = vld [vmem:[%s1 + $0x1b0] sm:$0xff]
      %v296 = vld [vmem:[%s1 + $0x1b8] sm:$0xff]
      %v297 = vld [vmem:[%s1 + $0x1c0] sm:$0xff]
      %v298 = vld [vmem:[%s1 + $0x1c8] sm:$0xff]
      %v299 = vld [vmem:[%s1 + $0x1d0] sm:$0xff]
      %v300 = vld [vmem:[%s1 + $0x1d8] sm:$0xff]
      %v301 = vld [vmem:[%s1 + $0x1e0] sm:$0xff]
      %v302 = vld [vmem:[%s1 + $0x1e8] sm:$0xff]
      %v303 = vld [vmem:[%s1 + $0x1f0] sm:$0xff]
      %v304 = vld [vmem:[%s1 + $0x1f8] sm:$0xff]
      %v305 = vld [vmem:[%s1 + $0x200] sm:$0xff]
      %v306 = vld [vmem:[%s1 + $0x208] sm:$0xff]
      %v307 = vld [vmem:[%s1 + $0x210] sm:$0xff]
      %v308 = vld [vmem:[%s1 + $0x218] sm:$0xff]
      %v309 = vld [vmem:[%s1 + $0x220] sm:$0xff]
      %v310 = vld [vmem:[%s1 + $0x228] sm:$0xff]
      %v311 = vld [vmem:[%s1 + $0x230] sm:$0xff]
      %v312 = vld [vmem:[%s1 + $0x238] sm:$0xff]
      %v313 = vld [vmem:[%s1 + $0x240] sm:$0xff]
      %v314 = vld [vmem:[%s1 + $0x248] sm:$0xff]
      %v315 = vld [vmem:[%s1 + $0x250] sm:$0xff]
      %v316 = vld [vmem:[%s1 + $0x258] sm:$0xff]
      %v317 = vld [vmem:[%s1 + $0x260] sm:$0xff]
      %v318 = vld [vmem:[%s1 + $0x268] sm:$0xff]
      %v319 = vld [vmem:[%s1 + $0x270] sm:$0xff]
      %v320 = vld [vmem:[%s1 + $0x278] sm:$0xff]
      %v321 = vld [vmem:[%s1 + $0x280] sm:$0xff]
      %v322 = vld [vmem:[%s1 + $0x288] sm:$0xff]
      %v323 = vld [vmem:[%s1 + $0x290] sm:$0xff]
      %v324 = vld [vmem:[%s1 + $0x298] sm:$0xff]
      %v325 = vld [vmem:[%s1 + $0x2a0] sm:$0xff]
      %v326 = vld [vmem:[%s1 + $0x2a8] sm:$0xff]
      %v327 = vld [vmem:[%s1 + $0x2b0] sm:$0xff]
      %v328 = vld [vmem:[%s1 + $0x2b8] sm:$0xff]
      %v329 = vld [vmem:[%s1 + $0x2c0] sm:$0xff]
      %v330 = vld [vmem:[%s1 + $0x2c8] sm:$0xff]
      %v331 = vld [vmem:[%s1 + $0x2d0] sm:$0xff]
      %v332 = vld [vmem:[%s1 + $0x2d8] sm:$0xff]
      %v333 = vld [vmem:[%s1 + $0x2e0] sm:$0xff]
      %v334 = vld [vmem:[%s1 + $0x2e8] sm:$0xff]
      %v335 = vld [vmem:[%s1 + $0x2f0] sm:$0xff]
      %v336 = vld [vmem:[%s1 + $0x2f8] sm:$0xff]
      %v337 = vld [vmem:[%s1 + $0x300] sm:$0xff]
      %v338 = vld [vmem:[%s1 + $0x308] sm:$0xff]
      %v339 = vld [vmem:[%s1 + $0x310] sm:$0xff]
      %v340 = vld [vmem:[%s1 + $0x318] sm:$0xff]
      %v341 = vld [vmem:[%s1 + $0x320] sm:$0xff]
      %v342 = vld [vmem:[%s1 + $0x328] sm:$0xff]
      %v343 = vld [vmem:[%s1 + $0x330] sm:$0xff]
      %v344 = vld [vmem:[%s1 + $0x338] sm:$0xff]
      %v345 = vld [vmem:[%s1 + $0x340] sm:$0xff]
      %v346 = vld [vmem:[%s1 + $0x348] sm:$0xff]
      %v347 = vld [vmem:[%s1 + $0x350] sm:$0xff]
      %v348 = vld [vmem:[%s1 + $0x358] sm:$0xff]
      %v349 = vld [vmem:[%s1 + $0x360] sm:$0xff]
      %v350 = vld [vmem:[%s1 + $0x368] sm:$0xff]
      %v351 = vld [vmem:[%s1 + $0x370] sm:$0xff]
      %v352 = vld [vmem:[%s1 + $0x378] sm:$0xff]
      %v353 = vld [vmem:[%s1 + $0x380] sm:$0xff]
      %v354 = vld [vmem:[%s1 + $0x388] sm:$0xff]
      %v355 = vld [vmem:[%s1 + $0x390] sm:$0xff]
      %v356 = vld [vmem:[%s1 + $0x398] sm:$0xff]
      %v357 = vld [vmem:[%s1 + $0x3a0] sm:$0xff]
      %v358 = vld [vmem:[%s1 + $0x3a8] sm:$0xff]
      %v359 = vld [vmem:[%s1 + $0x3b0] sm:$0xff]
      %v360 = vld [vmem:[%s1 + $0x3b8] sm:$0xff]
      %v361 = vld [vmem:[%s1 + $0x3c0] sm:$0xff]
      %v362 = vld [vmem:[%s1 + $0x3c8] sm:$0xff]
      %v363 = vld [vmem:[%s1 + $0x3d0] sm:$0xff]
      %v364 = vld [vmem:[%s1 + $0x3d8] sm:$0xff]
      %v365 = vld [vmem:[%s1 + $0x3e0] sm:$0xff]
      %v366 = vld [vmem:[%s1 + $0x3e8] sm:$0xff]
      %v367 = vld [vmem:[%s1 + $0x3f0] sm:$0xff]
      %v368 = vld [vmem:[%s1 + $0x3f8] sm:$0xff]
      %v369 = vld [vmem:[%s1 + $0x400] sm:$0xff]
      %v370 = vld [vmem:[%s1 + $0x408] sm:$0xff]
      %v371 = vld [vmem:[%s1 + $0x410] sm:$0xff]
      %v372 = vld [vmem:[%s1 + $0x418] sm:$0xff]
      %v373 = vld [vmem:[%s1 + $0x420] sm:$0xff]
      %v374 = vld [vmem:[%s1 + $0x428] sm:$0xff]
      %v375 = vld [vmem:[%s1 + $0x430] sm:$0xff]
      %v376 = vld [vmem:[%s1 + $0x438] sm:$0xff]
      %v377 = vld [vmem:[%s1 + $0x440] sm:$0xff]
      %v378 = vld [vmem:[%s1 + $0x448] sm:$0xff]
      %v379 = vld [vmem:[%s1 + $0x450] sm:$0xff]
      %v380 = vld [vmem:[%s1 + $0x458] sm:$0xff]
      %v381 = vld [vmem:[%s1 + $0x460] sm:$0xff]
      %v382 = vld [vmem:[%s1 + $0x468] sm:$0xff]
      %v383 = vld [vmem:[%s1 + $0x470] sm:$0xff]
      %v384 = vld [vmem:[%s1 + $0x478] sm:$0xff]
      %v385 = vld [vmem:[%s1 + $0x480] sm:$0xff]
      %v386 = vld [vmem:[%s1 + $0x488] sm:$0xff]
      %v387 = vld [vmem:[%s1 + $0x490] sm:$0xff]
      %v388 = vld [vmem:[%s1 + $0x498] sm:$0xff]
      %v389 = vld [vmem:[%s1 + $0x4a0] sm:$0xff]
      %v390 = vld [vmem:[%s1 + $0x4a8] sm:$0xff]
      %v391 = vld [vmem:[%s1 + $0x4b0] sm:$0xff]
      %v392 = vld [vmem:[%s1 + $0x4b8] sm:$0xff]
      %v393 = vld [vmem:[%s1 + $0x4c0] sm:$0xff]
      %v394 = vld [vmem:[%s1 + $0x4c8] sm:$0xff]
      %v395 = vld [vmem:[%s1 + $0x4d0] sm:$0xff]
      %v396 = vld [vmem:[%s1 + $0x4d8] sm:$0xff]
      %v397 = vld [vmem:[%s1 + $0x4e0] sm:$0xff]
      %v398 = vld [vmem:[%s1 + $0x4e8] sm:$0xff]
      %v399 = vld [vmem:[%s1 + $0x4f0] sm:$0xff]
      %v400 = vld [vmem:[%s1 + $0x4f8] sm:$0xff]
      %v401 = vld [vmem:[%s1 + $0x500] sm:$0xff]
      %v402 = vld [vmem:[%s1 + $0x508] sm:$0xff]
      %v403 = vld [vmem:[%s1 + $0x510] sm:$0xff]
      %v404 = vld [vmem:[%s1 + $0x518] sm:$0xff]
      %v405 = vld [vmem:[%s1 + $0x520] sm:$0xff]
      %v406 = vld [vmem:[%s1 + $0x528] sm:$0xff]
      %v407 = vld [vmem:[%s1 + $0x530] sm:$0xff]
      %v408 = vld [vmem:[%s1 + $0x538] sm:$0xff]
      %v409 = vld [vmem:[%s1 + $0x540] sm:$0xff]
      %v410 = vld [vmem:[%s1 + $0x548] sm:$0xff]
      %v411 = vld [vmem:[%s1 + $0x550] sm:$0xff]
      %v412 = vld [vmem:[%s1 + $0x558] sm:$0xff]
      %v413 = vld [vmem:[%s1 + $0x560] sm:$0xff]
      %v414 = vld [vmem:[%s1 + $0x568] sm:$0xff]
      %v415 = vld [vmem:[%s1 + $0x570] sm:$0xff]
      %v416 = vld [vmem:[%s1 + $0x578] sm:$0xff]
      %v417 = vld [vmem:[%s1 + $0x580] sm:$0xff]
      %v418 = vld [vmem:[%s1 + $0x588] sm:$0xff]
      %v419 = vld [vmem:[%s1 + $0x590] sm:$0xff]
      %v420 = vld [vmem:[%s1 + $0x598] sm:$0xff]
      %v421 = vld [vmem:[%s1 + $0x5a0] sm:$0xff]
      %v422 = vld [vmem:[%s1 + $0x5a8] sm:$0xff]
      %v423 = vld [vmem:[%s1 + $0x5b0] sm:$0xff]
      %v424 = vld [vmem:[%s1 + $0x5b8] sm:$0xff]
      %v425 = vld [vmem:[%s1 + $0x5c0] sm:$0xff]
      %v426 = vld [vmem:[%s1 + $0x5c8] sm:$0xff]
      %v427 = vld [vmem:[%s1 + $0x5d0] sm:$0xff]
      %v428 = vld [vmem:[%s1 + $0x5d8] sm:$0xff]
      %v429 = vld [vmem:[%s1 + $0x5e0] sm:$0xff]
      %v430 = vld [vmem:[%s1 + $0x5e8] sm:$0xff]
      %v431 = vld [vmem:[%s1 + $0x5f0] sm:$0xff]
      %v432 = vld [vmem:[%s1 + $0x5f8] sm:$0xff]
      %v433 = vld [vmem:[%s1 + $0x600] sm:$0xff]
      %v434 = vld [vmem:[%s1 + $0x608] sm:$0xff]
      %v435 = vld [vmem:[%s1 + $0x610] sm:$0xff]
      %v436 = vld [vmem:[%s1 + $0x618] sm:$0xff]
      %v437 = vld [vmem:[%s1 + $0x620] sm:$0xff]
      %v438 = vld [vmem:[%s1 + $0x628] sm:$0xff]
      %v439 = vld [vmem:[%s1 + $0x630] sm:$0xff]
      %v440 = vld [vmem:[%s1 + $0x638] sm:$0xff]
      %v441 = vld [vmem:[%s1 + $0x640] sm:$0xff]
      %v442 = vld [vmem:[%s1 + $0x648] sm:$0xff]
      %v443 = vld [vmem:[%s1 + $0x650] sm:$0xff]
      %v444 = vld [vmem:[%s1 + $0x658] sm:$0xff]
      %v445 = vld [vmem:[%s1 + $0x660] sm:$0xff]
      %v446 = vld [vmem:[%s1 + $0x668] sm:$0xff]
      %v447 = vld [vmem:[%s1 + $0x670] sm:$0xff]
      %v448 = vld [vmem:[%s1 + $0x678] sm:$0xff]
      %v449 = vld [vmem:[%s1 + $0x680] sm:$0xff]
      %v450 = vld [vmem:[%s1 + $0x688] sm:$0xff]
      %v451 = vld [vmem:[%s1 + $0x690] sm:$0xff]
      %v452 = vld [vmem:[%s1 + $0x698] sm:$0xff]
      %v453 = vld [vmem:[%s1 + $0x6a0] sm:$0xff]
      %v454 = vld [vmem:[%s1 + $0x6a8] sm:$0xff]
      %v455 = vld [vmem:[%s1 + $0x6b0] sm:$0xff]
      %v456 = vld [vmem:[%s1 + $0x6b8] sm:$0xff]
      %v457 = vld [vmem:[%s1 + $0x6c0] sm:$0xff]
      %v458 = vld [vmem:[%s1 + $0x6c8] sm:$0xff]
      %v459 = vld [vmem:[%s1 + $0x6d0] sm:$0xff]
      %v460 = vld [vmem:[%s1 + $0x6d8] sm:$0xff]
      %v461 = vld [vmem:[%s1 + $0x6e0] sm:$0xff]
      %v462 = vld [vmem:[%s1 + $0x6e8] sm:$0xff]
      %v463 = vld [vmem:[%s1 + $0x6f0] sm:$0xff]
      %v464 = vld [vmem:[%s1 + $0x6f8] sm:$0xff]
      %v465 = vld [vmem:[%s1 + $0x700] sm:$0xff]
      %v466 = vld [vmem:[%s1 + $0x708] sm:$0xff]
      %v467 = vld [vmem:[%s1 + $0x710] sm:$0xff]
      %v468 = vld [vmem:[%s1 + $0x718] sm:$0xff]
      %v469 = vld [vmem:[%s1 + $0x720] sm:$0xff]
      %v470 = vld [vmem:[%s1 + $0x728] sm:$0xff]
      %v471 = vld [vmem:[%s1 + $0x730] sm:$0xff]
      %v472 = vld [vmem:[%s1 + $0x738] sm:$0xff]
      %v473 = vld [vmem:[%s1 + $0x740] sm:$0xff]
      %v474 = vld [vmem:[%s1 + $0x748] sm:$0xff]
      %v475 = vld [vmem:[%s1 + $0x750] sm:$0xff]
      %v476 = vld [vmem:[%s1 + $0x758] sm:$0xff]
      %v477 = vld [vmem:[%s1 + $0x760] sm:$0xff]
      %v478 = vld [vmem:[%s1 + $0x768] sm:$0xff]
      %v479 = vld [vmem:[%s1 + $0x770] sm:$0xff]
      %v480 = vld [vmem:[%s1 + $0x778] sm:$0xff]
      %v481 = vld [vmem:[%s1 + $0x780] sm:$0xff]
      %v482 = vld [vmem:[%s1 + $0x788] sm:$0xff]
      %v483 = vld [vmem:[%s1 + $0x790] sm:$0xff]
      %v484 = vld [vmem:[%s1 + $0x798] sm:$0xff]
      %v485 = vld [vmem:[%s1 + $0x7a0] sm:$0xff]
      %v486 = vld [vmem:[%s1 + $0x7a8] sm:$0xff]
      %v487 = vld [vmem:[%s1 + $0x7b0] sm:$0xff]
      %v488 = vld [vmem:[%s1 + $0x7b8] sm:$0xff]
      %v489 = vld [vmem:[%s1 + $0x7c0] sm:$0xff]
      %v490 = vld [vmem:[%s1 + $0x7c8] sm:$0xff]
      %v491 = vld [vmem:[%s1 + $0x7d0] sm:$0xff]
      %v492 = vld [vmem:[%s1 + $0x7d8] sm:$0xff]
      %v493 = vld [vmem:[%s1 + $0x7e0] sm:$0xff]
      %v494 = vld [vmem:[%s1 + $0x7e8] sm:$0xff]
      %v495 = vld [vmem:[%s1 + $0x7f0] sm:$0xff]
      %v496 = vld [vmem:[%s1 + $0x7f8] sm:$0xff]
      %v497 = vld [vmem:[%s2] sm:$0xf]
      %v499 = vlaneseq
      %v500 = vshrl.u32 %v499, 7
      %v501 = vsub.s32 0, %v500
      %v502 = vrot.slane %v497, %v501
      %v503 = vlaneseq
      %v504 = vshrl.u32 %v503, 7
      %v505 = vsub.s32 1, %v504
      %v506 = vrot.slane %v497, %v505
      %v507 = vlaneseq
      %v508 = vshrl.u32 %v507, 7
      %v509 = vsub.s32 2, %v508
      %v510 = vrot.slane %v497, %v509
      %v511 = vlaneseq
      %v512 = vshrl.u32 %v511, 7
      %v513 = vsub.s32 3, %v512
      %v514 = vrot.slane %v497, %v513
      %v527 = vunpack.c.l.b16 %v233
      %v528 = vunpack.c.h.b16 %v233
      %v529 = vunpack.c.l.b16 %v234
      %v530 = vunpack.c.h.b16 %v234
      %v531 = vunpack.c.l.b16 %v235
      %v532 = vunpack.c.h.b16 %v235
      %v533 = vunpack.c.l.b16 %v236
      %v534 = vunpack.c.h.b16 %v236
      %v535 = vunpack.c.l.b16 %v237
      %v536 = vunpack.c.h.b16 %v237
      %v537 = vunpack.c.l.b16 %v238
      %v538 = vunpack.c.h.b16 %v238
      %v539 = vunpack.c.l.b16 %v239
      %v540 = vunpack.c.h.b16 %v239
      %v541 = vunpack.c.l.b16 %v240
      %v542 = vunpack.c.h.b16 %v240
      %v543 = vpack.c.b16 %v535, %v527
      %v544 = vpack.c.b16 %v536, %v528
      %v545 = vpack.c.b16 %v537, %v529
      %v546 = vpack.c.b16 %v538, %v530
      %v547 = vpack.c.b16 %v539, %v531
      %v548 = vpack.c.b16 %v540, %v532
      %v549 = vpack.c.b16 %v541, %v533
      %v550 = vpack.c.b16 %v542, %v534
      %v815 = vunpack.c.l.b16 %v241
      %v816 = vunpack.c.h.b16 %v241
      %v817 = vunpack.c.l.b16 %v242
      %v818 = vunpack.c.h.b16 %v242
      %v819 = vunpack.c.l.b16 %v243
      %v820 = vunpack.c.h.b16 %v243
      %v821 = vunpack.c.l.b16 %v244
      %v822 = vunpack.c.h.b16 %v244
      %v823 = vunpack.c.l.b16 %v245
      %v824 = vunpack.c.h.b16 %v245
      %v825 = vunpack.c.l.b16 %v246
      %v826 = vunpack.c.h.b16 %v246
      %v827 = vunpack.c.l.b16 %v247
      %v828 = vunpack.c.h.b16 %v247
      %v829 = vunpack.c.l.b16 %v248
      %v830 = vunpack.c.h.b16 %v248
      %v831 = vunpack.c.l.b16 %v249
      %v832 = vunpack.c.h.b16 %v249
      %v833 = vunpack.c.l.b16 %v250
      %v834 = vunpack.c.h.b16 %v250
      %v835 = vunpack.c.l.b16 %v251
      %v836 = vunpack.c.h.b16 %v251
      %v837 = vunpack.c.l.b16 %v252
      %v838 = vunpack.c.h.b16 %v252
      %v839 = vunpack.c.l.b16 %v253
      %v840 = vunpack.c.h.b16 %v253
      %v841 = vunpack.c.l.b16 %v254
      %v842 = vunpack.c.h.b16 %v254
      %v843 = vunpack.c.l.b16 %v255
      %v844 = vunpack.c.h.b16 %v255
      %v845 = vunpack.c.l.b16 %v256
      %v846 = vunpack.c.h.b16 %v256
      %v847 = vunpack.c.l.b16 %v257
      %v848 = vunpack.c.h.b16 %v257
      %v849 = vunpack.c.l.b16 %v258
      %v850 = vunpack.c.h.b16 %v258
      %v851 = vunpack.c.l.b16 %v259
      %v852 = vunpack.c.h.b16 %v259
      %v853 = vunpack.c.l.b16 %v260
      %v854 = vunpack.c.h.b16 %v260
      %v855 = vunpack.c.l.b16 %v261
      %v856 = vunpack.c.h.b16 %v261
      %v857 = vunpack.c.l.b16 %v262
      %v858 = vunpack.c.h.b16 %v262
      %v859 = vunpack.c.l.b16 %v263
      %v860 = vunpack.c.h.b16 %v263
      %v861 = vunpack.c.l.b16 %v264
      %v862 = vunpack.c.h.b16 %v264
      %v863 = vunpack.c.l.b16 %v265
      %v864 = vunpack.c.h.b16 %v265
      %v865 = vunpack.c.l.b16 %v266
      %v866 = vunpack.c.h.b16 %v266
      %v867 = vunpack.c.l.b16 %v267
      %v868 = vunpack.c.h.b16 %v267
      %v869 = vunpack.c.l.b16 %v268
      %v870 = vunpack.c.h.b16 %v268
      %v871 = vunpack.c.l.b16 %v269
      %v872 = vunpack.c.h.b16 %v269
      %v873 = vunpack.c.l.b16 %v270
      %v874 = vunpack.c.h.b16 %v270
      %v875 = vunpack.c.l.b16 %v271
      %v876 = vunpack.c.h.b16 %v271
      %v877 = vunpack.c.l.b16 %v272
      %v878 = vunpack.c.h.b16 %v272
      %v879 = vunpack.c.l.b16 %v273
      %v880 = vunpack.c.h.b16 %v273
      %v881 = vunpack.c.l.b16 %v274
      %v882 = vunpack.c.h.b16 %v274
      %v883 = vunpack.c.l.b16 %v275
      %v884 = vunpack.c.h.b16 %v275
      %v885 = vunpack.c.l.b16 %v276
      %v886 = vunpack.c.h.b16 %v276
      %v887 = vunpack.c.l.b16 %v277
      %v888 = vunpack.c.h.b16 %v277
      %v889 = vunpack.c.l.b16 %v278
      %v890 = vunpack.c.h.b16 %v278
      %v891 = vunpack.c.l.b16 %v279
      %v892 = vunpack.c.h.b16 %v279
      %v893 = vunpack.c.l.b16 %v280
      %v894 = vunpack.c.h.b16 %v280
      %v895 = vunpack.c.l.b16 %v281
      %v896 = vunpack.c.h.b16 %v281
      %v897 = vunpack.c.l.b16 %v282
      %v898 = vunpack.c.h.b16 %v282
      %v899 = vunpack.c.l.b16 %v283
      %v900 = vunpack.c.h.b16 %v283
      %v901 = vunpack.c.l.b16 %v284
      %v902 = vunpack.c.h.b16 %v284
      %v903 = vunpack.c.l.b16 %v285
      %v904 = vunpack.c.h.b16 %v285
      %v905 = vunpack.c.l.b16 %v286
      %v906 = vunpack.c.h.b16 %v286
      %v907 = vunpack.c.l.b16 %v287
      %v908 = vunpack.c.h.b16 %v287
      %v909 = vunpack.c.l.b16 %v288
      %v910 = vunpack.c.h.b16 %v288
      %v911 = vunpack.c.l.b16 %v289
      %v912 = vunpack.c.h.b16 %v289
      %v913 = vunpack.c.l.b16 %v290
      %v914 = vunpack.c.h.b16 %v290
      %v915 = vunpack.c.l.b16 %v291
      %v916 = vunpack.c.h.b16 %v291
      %v917 = vunpack.c.l.b16 %v292
      %v918 = vunpack.c.h.b16 %v292
      %v919 = vunpack.c.l.b16 %v293
      %v920 = vunpack.c.h.b16 %v293
      %v921 = vunpack.c.l.b16 %v294
      %v922 = vunpack.c.h.b16 %v294
      %v923 = vunpack.c.l.b16 %v295
      %v924 = vunpack.c.h.b16 %v295
      %v925 = vunpack.c.l.b16 %v296
      %v926 = vunpack.c.h.b16 %v296
      %v927 = vunpack.c.l.b16 %v297
      %v928 = vunpack.c.h.b16 %v297
      %v929 = vunpack.c.l.b16 %v298
      %v930 = vunpack.c.h.b16 %v298
      %v931 = vunpack.c.l.b16 %v299
      %v932 = vunpack.c.h.b16 %v299
      %v933 = vunpack.c.l.b16 %v300
      %v934 = vunpack.c.h.b16 %v300
      %v935 = vunpack.c.l.b16 %v301
      %v936 = vunpack.c.h.b16 %v301
      %v937 = vunpack.c.l.b16 %v302
      %v938 = vunpack.c.h.b16 %v302
      %v939 = vunpack.c.l.b16 %v303
      %v940 = vunpack.c.h.b16 %v303
      %v941 = vunpack.c.l.b16 %v304
      %v942 = vunpack.c.h.b16 %v304
      %v943 = vunpack.c.l.b16 %v305
      %v944 = vunpack.c.h.b16 %v305
      %v945 = vunpack.c.l.b16 %v306
      %v946 = vunpack.c.h.b16 %v306
      %v947 = vunpack.c.l.b16 %v307
      %v948 = vunpack.c.h.b16 %v307
      %v949 = vunpack.c.l.b16 %v308
      %v950 = vunpack.c.h.b16 %v308
      %v951 = vunpack.c.l.b16 %v309
      %v952 = vunpack.c.h.b16 %v309
      %v953 = vunpack.c.l.b16 %v310
      %v954 = vunpack.c.h.b16 %v310
      %v955 = vunpack.c.l.b16 %v311
      %v956 = vunpack.c.h.b16 %v311
      %v957 = vunpack.c.l.b16 %v312
      %v958 = vunpack.c.h.b16 %v312
      %v959 = vunpack.c.l.b16 %v313
      %v960 = vunpack.c.h.b16 %v313
      %v961 = vunpack.c.l.b16 %v314
      %v962 = vunpack.c.h.b16 %v314
      %v963 = vunpack.c.l.b16 %v315
      %v964 = vunpack.c.h.b16 %v315
      %v965 = vunpack.c.l.b16 %v316
      %v966 = vunpack.c.h.b16 %v316
      %v967 = vunpack.c.l.b16 %v317
      %v968 = vunpack.c.h.b16 %v317
      %v969 = vunpack.c.l.b16 %v318
      %v970 = vunpack.c.h.b16 %v318
      %v971 = vunpack.c.l.b16 %v319
      %v972 = vunpack.c.h.b16 %v319
      %v973 = vunpack.c.l.b16 %v320
      %v974 = vunpack.c.h.b16 %v320
      %v975 = vunpack.c.l.b16 %v321
      %v976 = vunpack.c.h.b16 %v321
      %v977 = vunpack.c.l.b16 %v322
      %v978 = vunpack.c.h.b16 %v322
      %v979 = vunpack.c.l.b16 %v323
      %v980 = vunpack.c.h.b16 %v323
      %v981 = vunpack.c.l.b16 %v324
      %v982 = vunpack.c.h.b16 %v324
      %v983 = vunpack.c.l.b16 %v325
      %v984 = vunpack.c.h.b16 %v325
      %v985 = vunpack.c.l.b16 %v326
      %v986 = vunpack.c.h.b16 %v326
      %v987 = vunpack.c.l.b16 %v327
      %v988 = vunpack.c.h.b16 %v327
      %v989 = vunpack.c.l.b16 %v328
      %v990 = vunpack.c.h.b16 %v328
      %v991 = vunpack.c.l.b16 %v329
      %v992 = vunpack.c.h.b16 %v329
      %v993 = vunpack.c.l.b16 %v330
      %v994 = vunpack.c.h.b16 %v330
      %v995 = vunpack.c.l.b16 %v331
      %v996 = vunpack.c.h.b16 %v331
      %v997 = vunpack.c.l.b16 %v332
      %v998 = vunpack.c.h.b16 %v332
      %v999 = vunpack.c.l.b16 %v333
      %v1000 = vunpack.c.h.b16 %v333
      %v1001 = vunpack.c.l.b16 %v334
      %v1002 = vunpack.c.h.b16 %v334
      %v1003 = vunpack.c.l.b16 %v335
      %v1004 = vunpack.c.h.b16 %v335
      %v1005 = vunpack.c.l.b16 %v336
      %v1006 = vunpack.c.h.b16 %v336
      %v1007 = vunpack.c.l.b16 %v337
      %v1008 = vunpack.c.h.b16 %v337
      %v1009 = vunpack.c.l.b16 %v338
      %v1010 = vunpack.c.h.b16 %v338
      %v1011 = vunpack.c.l.b16 %v339
      %v1012 = vunpack.c.h.b16 %v339
      %v1013 = vunpack.c.l.b16 %v340
      %v1014 = vunpack.c.h.b16 %v340
      %v1015 = vunpack.c.l.b16 %v341
      %v1016 = vunpack.c.h.b16 %v341
      %v1017 = vunpack.c.l.b16 %v342
      %v1018 = vunpack.c.h.b16 %v342
      %v1019 = vunpack.c.l.b16 %v343
      %v1020 = vunpack.c.h.b16 %v343
      %v1021 = vunpack.c.l.b16 %v344
      %v1022 = vunpack.c.h.b16 %v344
      %v1023 = vunpack.c.l.b16 %v345
      %v1024 = vunpack.c.h.b16 %v345
      %v1025 = vunpack.c.l.b16 %v346
      %v1026 = vunpack.c.h.b16 %v346
      %v1027 = vunpack.c.l.b16 %v347
      %v1028 = vunpack.c.h.b16 %v347
      %v1029 = vunpack.c.l.b16 %v348
      %v1030 = vunpack.c.h.b16 %v348
      %v1031 = vunpack.c.l.b16 %v349
      %v1032 = vunpack.c.h.b16 %v349
      %v1033 = vunpack.c.l.b16 %v350
      %v1034 = vunpack.c.h.b16 %v350
      %v1035 = vunpack.c.l.b16 %v351
      %v1036 = vunpack.c.h.b16 %v351
      %v1037 = vunpack.c.l.b16 %v352
      %v1038 = vunpack.c.h.b16 %v352
      %v1039 = vunpack.c.l.b16 %v353
      %v1040 = vunpack.c.h.b16 %v353
      %v1041 = vunpack.c.l.b16 %v354
      %v1042 = vunpack.c.h.b16 %v354
      %v1043 = vunpack.c.l.b16 %v355
      %v1044 = vunpack.c.h.b16 %v355
      %v1045 = vunpack.c.l.b16 %v356
      %v1046 = vunpack.c.h.b16 %v356
      %v1047 = vunpack.c.l.b16 %v357
      %v1048 = vunpack.c.h.b16 %v357
      %v1049 = vunpack.c.l.b16 %v358
      %v1050 = vunpack.c.h.b16 %v358
      %v1051 = vunpack.c.l.b16 %v359
      %v1052 = vunpack.c.h.b16 %v359
      %v1053 = vunpack.c.l.b16 %v360
      %v1054 = vunpack.c.h.b16 %v360
      %v1055 = vunpack.c.l.b16 %v361
      %v1056 = vunpack.c.h.b16 %v361
      %v1057 = vunpack.c.l.b16 %v362
      %v1058 = vunpack.c.h.b16 %v362
      %v1059 = vunpack.c.l.b16 %v363
      %v1060 = vunpack.c.h.b16 %v363
      %v1061 = vunpack.c.l.b16 %v364
      %v1062 = vunpack.c.h.b16 %v364
      %v1063 = vunpack.c.l.b16 %v365
      %v1064 = vunpack.c.h.b16 %v365
      %v1065 = vunpack.c.l.b16 %v366
      %v1066 = vunpack.c.h.b16 %v366
      %v1067 = vunpack.c.l.b16 %v367
      %v1068 = vunpack.c.h.b16 %v367
      %v1069 = vunpack.c.l.b16 %v368
      %v1070 = vunpack.c.h.b16 %v368
      %v1071 = vunpack.c.l.b16 %v369
      %v1072 = vunpack.c.h.b16 %v369
      %v1073 = vunpack.c.l.b16 %v370
      %v1074 = vunpack.c.h.b16 %v370
      %v1075 = vunpack.c.l.b16 %v371
      %v1076 = vunpack.c.h.b16 %v371
      %v1077 = vunpack.c.l.b16 %v372
      %v1078 = vunpack.c.h.b16 %v372
      %v1079 = vunpack.c.l.b16 %v373
      %v1080 = vunpack.c.h.b16 %v373
      %v1081 = vunpack.c.l.b16 %v374
      %v1082 = vunpack.c.h.b16 %v374
      %v1083 = vunpack.c.l.b16 %v375
      %v1084 = vunpack.c.h.b16 %v375
      %v1085 = vunpack.c.l.b16 %v376
      %v1086 = vunpack.c.h.b16 %v376
      %v1087 = vunpack.c.l.b16 %v377
      %v1088 = vunpack.c.h.b16 %v377
      %v1089 = vunpack.c.l.b16 %v378
      %v1090 = vunpack.c.h.b16 %v378
      %v1091 = vunpack.c.l.b16 %v379
      %v1092 = vunpack.c.h.b16 %v379
      %v1093 = vunpack.c.l.b16 %v380
      %v1094 = vunpack.c.h.b16 %v380
      %v1095 = vunpack.c.l.b16 %v381
      %v1096 = vunpack.c.h.b16 %v381
      %v1097 = vunpack.c.l.b16 %v382
      %v1098 = vunpack.c.h.b16 %v382
      %v1099 = vunpack.c.l.b16 %v383
      %v1100 = vunpack.c.h.b16 %v383
      %v1101 = vunpack.c.l.b16 %v384
      %v1102 = vunpack.c.h.b16 %v384
      %v1103 = vunpack.c.l.b16 %v385
      %v1104 = vunpack.c.h.b16 %v385
      %v1105 = vunpack.c.l.b16 %v386
      %v1106 = vunpack.c.h.b16 %v386
      %v1107 = vunpack.c.l.b16 %v387
      %v1108 = vunpack.c.h.b16 %v387
      %v1109 = vunpack.c.l.b16 %v388
      %v1110 = vunpack.c.h.b16 %v388
      %v1111 = vunpack.c.l.b16 %v389
      %v1112 = vunpack.c.h.b16 %v389
      %v1113 = vunpack.c.l.b16 %v390
      %v1114 = vunpack.c.h.b16 %v390
      %v1115 = vunpack.c.l.b16 %v391
      %v1116 = vunpack.c.h.b16 %v391
      %v1117 = vunpack.c.l.b16 %v392
      %v1118 = vunpack.c.h.b16 %v392
      %v1119 = vunpack.c.l.b16 %v393
      %v1120 = vunpack.c.h.b16 %v393
      %v1121 = vunpack.c.l.b16 %v394
      %v1122 = vunpack.c.h.b16 %v394
      %v1123 = vunpack.c.l.b16 %v395
      %v1124 = vunpack.c.h.b16 %v395
      %v1125 = vunpack.c.l.b16 %v396
      %v1126 = vunpack.c.h.b16 %v396
      %v1127 = vunpack.c.l.b16 %v397
      %v1128 = vunpack.c.h.b16 %v397
      %v1129 = vunpack.c.l.b16 %v398
      %v1130 = vunpack.c.h.b16 %v398
      %v1131 = vunpack.c.l.b16 %v399
      %v1132 = vunpack.c.h.b16 %v399
      %v1133 = vunpack.c.l.b16 %v400
      %v1134 = vunpack.c.h.b16 %v400
      %v1135 = vunpack.c.l.b16 %v401
      %v1136 = vunpack.c.h.b16 %v401
      %v1137 = vunpack.c.l.b16 %v402
      %v1138 = vunpack.c.h.b16 %v402
      %v1139 = vunpack.c.l.b16 %v403
      %v1140 = vunpack.c.h.b16 %v403
      %v1141 = vunpack.c.l.b16 %v404
      %v1142 = vunpack.c.h.b16 %v404
      %v1143 = vunpack.c.l.b16 %v405
      %v1144 = vunpack.c.h.b16 %v405
      %v1145 = vunpack.c.l.b16 %v406
      %v1146 = vunpack.c.h.b16 %v406
      %v1147 = vunpack.c.l.b16 %v407
      %v1148 = vunpack.c.h.b16 %v407
      %v1149 = vunpack.c.l.b16 %v408
      %v1150 = vunpack.c.h.b16 %v408
      %v1151 = vunpack.c.l.b16 %v409
      %v1152 = vunpack.c.h.b16 %v409
      %v1153 = vunpack.c.l.b16 %v410
      %v1154 = vunpack.c.h.b16 %v410
      %v1155 = vunpack.c.l.b16 %v411
      %v1156 = vunpack.c.h.b16 %v411
      %v1157 = vunpack.c.l.b16 %v412
      %v1158 = vunpack.c.h.b16 %v412
      %v1159 = vunpack.c.l.b16 %v413
      %v1160 = vunpack.c.h.b16 %v413
      %v1161 = vunpack.c.l.b16 %v414
      %v1162 = vunpack.c.h.b16 %v414
      %v1163 = vunpack.c.l.b16 %v415
      %v1164 = vunpack.c.h.b16 %v415
      %v1165 = vunpack.c.l.b16 %v416
      %v1166 = vunpack.c.h.b16 %v416
      %v1167 = vunpack.c.l.b16 %v417
      %v1168 = vunpack.c.h.b16 %v417
      %v1169 = vunpack.c.l.b16 %v418
      %v1170 = vunpack.c.h.b16 %v418
      %v1171 = vunpack.c.l.b16 %v419
      %v1172 = vunpack.c.h.b16 %v419
      %v1173 = vunpack.c.l.b16 %v420
      %v1174 = vunpack.c.h.b16 %v420
      %v1175 = vunpack.c.l.b16 %v421
      %v1176 = vunpack.c.h.b16 %v421
      %v1177 = vunpack.c.l.b16 %v422
      %v1178 = vunpack.c.h.b16 %v422
      %v1179 = vunpack.c.l.b16 %v423
      %v1180 = vunpack.c.h.b16 %v423
      %v1181 = vunpack.c.l.b16 %v424
      %v1182 = vunpack.c.h.b16 %v424
      %v1183 = vunpack.c.l.b16 %v425
      %v1184 = vunpack.c.h.b16 %v425
      %v1185 = vunpack.c.l.b16 %v426
      %v1186 = vunpack.c.h.b16 %v426
      %v1187 = vunpack.c.l.b16 %v427
      %v1188 = vunpack.c.h.b16 %v427
      %v1189 = vunpack.c.l.b16 %v428
      %v1190 = vunpack.c.h.b16 %v428
      %v1191 = vunpack.c.l.b16 %v429
      %v1192 = vunpack.c.h.b16 %v429
      %v1193 = vunpack.c.l.b16 %v430
      %v1194 = vunpack.c.h.b16 %v430
      %v1195 = vunpack.c.l.b16 %v431
      %v1196 = vunpack.c.h.b16 %v431
      %v1197 = vunpack.c.l.b16 %v432
      %v1198 = vunpack.c.h.b16 %v432
      %v1199 = vunpack.c.l.b16 %v433
      %v1200 = vunpack.c.h.b16 %v433
      %v1201 = vunpack.c.l.b16 %v434
      %v1202 = vunpack.c.h.b16 %v434
      %v1203 = vunpack.c.l.b16 %v435
      %v1204 = vunpack.c.h.b16 %v435
      %v1205 = vunpack.c.l.b16 %v436
      %v1206 = vunpack.c.h.b16 %v436
      %v1207 = vunpack.c.l.b16 %v437
      %v1208 = vunpack.c.h.b16 %v437
      %v1209 = vunpack.c.l.b16 %v438
      %v1210 = vunpack.c.h.b16 %v438
      %v1211 = vunpack.c.l.b16 %v439
      %v1212 = vunpack.c.h.b16 %v439
      %v1213 = vunpack.c.l.b16 %v440
      %v1214 = vunpack.c.h.b16 %v440
      %v1215 = vunpack.c.l.b16 %v441
      %v1216 = vunpack.c.h.b16 %v441
      %v1217 = vunpack.c.l.b16 %v442
      %v1218 = vunpack.c.h.b16 %v442
      %v1219 = vunpack.c.l.b16 %v443
      %v1220 = vunpack.c.h.b16 %v443
      %v1221 = vunpack.c.l.b16 %v444
      %v1222 = vunpack.c.h.b16 %v444
      %v1223 = vunpack.c.l.b16 %v445
      %v1224 = vunpack.c.h.b16 %v445
      %v1225 = vunpack.c.l.b16 %v446
      %v1226 = vunpack.c.h.b16 %v446
      %v1227 = vunpack.c.l.b16 %v447
      %v1228 = vunpack.c.h.b16 %v447
      %v1229 = vunpack.c.l.b16 %v448
      %v1230 = vunpack.c.h.b16 %v448
      %v1231 = vunpack.c.l.b16 %v449
      %v1232 = vunpack.c.h.b16 %v449
      %v1233 = vunpack.c.l.b16 %v450
      %v1234 = vunpack.c.h.b16 %v450
      %v1235 = vunpack.c.l.b16 %v451
      %v1236 = vunpack.c.h.b16 %v451
      %v1237 = vunpack.c.l.b16 %v452
      %v1238 = vunpack.c.h.b16 %v452
      %v1239 = vunpack.c.l.b16 %v453
      %v1240 = vunpack.c.h.b16 %v453
      %v1241 = vunpack.c.l.b16 %v454
      %v1242 = vunpack.c.h.b16 %v454
      %v1243 = vunpack.c.l.b16 %v455
      %v1244 = vunpack.c.h.b16 %v455
      %v1245 = vunpack.c.l.b16 %v456
      %v1246 = vunpack.c.h.b16 %v456
      %v1247 = vunpack.c.l.b16 %v457
      %v1248 = vunpack.c.h.b16 %v457
      %v1249 = vunpack.c.l.b16 %v458
      %v1250 = vunpack.c.h.b16 %v458
      %v1251 = vunpack.c.l.b16 %v459
      %v1252 = vunpack.c.h.b16 %v459
      %v1253 = vunpack.c.l.b16 %v460
      %v1254 = vunpack.c.h.b16 %v460
      %v1255 = vunpack.c.l.b16 %v461
      %v1256 = vunpack.c.h.b16 %v461
      %v1257 = vunpack.c.l.b16 %v462
      %v1258 = vunpack.c.h.b16 %v462
      %v1259 = vunpack.c.l.b16 %v463
      %v1260 = vunpack.c.h.b16 %v463
      %v1261 = vunpack.c.l.b16 %v464
      %v1262 = vunpack.c.h.b16 %v464
      %v1263 = vunpack.c.l.b16 %v465
      %v1264 = vunpack.c.h.b16 %v465
      %v1265 = vunpack.c.l.b16 %v466
      %v1266 = vunpack.c.h.b16 %v466
      %v1267 = vunpack.c.l.b16 %v467
      %v1268 = vunpack.c.h.b16 %v467
      %v1269 = vunpack.c.l.b16 %v468
      %v1270 = vunpack.c.h.b16 %v468
      %v1271 = vunpack.c.l.b16 %v469
      %v1272 = vunpack.c.h.b16 %v469
      %v1273 = vunpack.c.l.b16 %v470
      %v1274 = vunpack.c.h.b16 %v470
      %v1275 = vunpack.c.l.b16 %v471
      %v1276 = vunpack.c.h.b16 %v471
      %v1277 = vunpack.c.l.b16 %v472
      %v1278 = vunpack.c.h.b16 %v472
      %v1279 = vunpack.c.l.b16 %v473
      %v1280 = vunpack.c.h.b16 %v473
      %v1281 = vunpack.c.l.b16 %v474
      %v1282 = vunpack.c.h.b16 %v474
      %v1283 = vunpack.c.l.b16 %v475
      %v1284 = vunpack.c.h.b16 %v475
      %v1285 = vunpack.c.l.b16 %v476
      %v1286 = vunpack.c.h.b16 %v476
      %v1287 = vunpack.c.l.b16 %v477
      %v1288 = vunpack.c.h.b16 %v477
      %v1289 = vunpack.c.l.b16 %v478
      %v1290 = vunpack.c.h.b16 %v478
      %v1291 = vunpack.c.l.b16 %v479
      %v1292 = vunpack.c.h.b16 %v479
      %v1293 = vunpack.c.l.b16 %v480
      %v1294 = vunpack.c.h.b16 %v480
      %v1295 = vunpack.c.l.b16 %v481
      %v1296 = vunpack.c.h.b16 %v481
      %v1297 = vunpack.c.l.b16 %v482
      %v1298 = vunpack.c.h.b16 %v482
      %v1299 = vunpack.c.l.b16 %v483
      %v1300 = vunpack.c.h.b16 %v483
      %v1301 = vunpack.c.l.b16 %v484
      %v1302 = vunpack.c.h.b16 %v484
      %v1303 = vunpack.c.l.b16 %v485
      %v1304 = vunpack.c.h.b16 %v485
      %v1305 = vunpack.c.l.b16 %v486
      %v1306 = vunpack.c.h.b16 %v486
      %v1307 = vunpack.c.l.b16 %v487
      %v1308 = vunpack.c.h.b16 %v487
      %v1309 = vunpack.c.l.b16 %v488
      %v1310 = vunpack.c.h.b16 %v488
      %v1311 = vunpack.c.l.b16 %v489
      %v1312 = vunpack.c.h.b16 %v489
      %v1313 = vunpack.c.l.b16 %v490
      %v1314 = vunpack.c.h.b16 %v490
      %v1315 = vunpack.c.l.b16 %v491
      %v1316 = vunpack.c.h.b16 %v491
      %v1317 = vunpack.c.l.b16 %v492
      %v1318 = vunpack.c.h.b16 %v492
      %v1319 = vunpack.c.l.b16 %v493
      %v1320 = vunpack.c.h.b16 %v493
      %v1321 = vunpack.c.l.b16 %v494
      %v1322 = vunpack.c.h.b16 %v494
      %v1323 = vunpack.c.l.b16 %v495
      %v1324 = vunpack.c.h.b16 %v495
      %v1325 = vunpack.c.l.b16 %v496
      %v1326 = vunpack.c.h.b16 %v496
      %v1327 = vpack.c.b16 %v819, %v815
      %v1328 = vpack.c.b16 %v820, %v816
      %v1329 = vpack.c.b16 %v821, %v817
      %v1330 = vpack.c.b16 %v822, %v818
      %v1331 = vpack.c.b16 %v827, %v823
      %v1332 = vpack.c.b16 %v828, %v824
      %v1333 = vpack.c.b16 %v829, %v825
      %v1334 = vpack.c.b16 %v830, %v826
      %v1335 = vpack.c.b16 %v835, %v831
      %v1336 = vpack.c.b16 %v836, %v832
      %v1337 = vpack.c.b16 %v837, %v833
      %v1338 = vpack.c.b16 %v838, %v834
      %v1339 = vpack.c.b16 %v843, %v839
      %v1340 = vpack.c.b16 %v844, %v840
      %v1341 = vpack.c.b16 %v845, %v841
      %v1342 = vpack.c.b16 %v846, %v842
      %v1343 = vpack.c.b16 %v851, %v847
      %v1344 = vpack.c.b16 %v852, %v848
      %v1345 = vpack.c.b16 %v853, %v849
      %v1346 = vpack.c.b16 %v854, %v850
      %v1347 = vpack.c.b16 %v859, %v855
      %v1348 = vpack.c.b16 %v860, %v856
      %v1349 = vpack.c.b16 %v861, %v857
      %v1350 = vpack.c.b16 %v862, %v858
      %v1351 = vpack.c.b16 %v867, %v863
      %v1352 = vpack.c.b16 %v868, %v864
      %v1353 = vpack.c.b16 %v869, %v865
      %v1354 = vpack.c.b16 %v870, %v866
      %v1355 = vpack.c.b16 %v875, %v871
      %v1356 = vpack.c.b16 %v876, %v872
      %v1357 = vpack.c.b16 %v877, %v873
      %v1358 = vpack.c.b16 %v878, %v874
      %v1359 = vpack.c.b16 %v883, %v879
      %v1360 = vpack.c.b16 %v884, %v880
      %v1361 = vpack.c.b16 %v885, %v881
      %v1362 = vpack.c.b16 %v886, %v882
      %v1363 = vpack.c.b16 %v891, %v887
      %v1364 = vpack.c.b16 %v892, %v888
      %v1365 = vpack.c.b16 %v893, %v889
      %v1366 = vpack.c.b16 %v894, %v890
      %v1367 = vpack.c.b16 %v899, %v895
      %v1368 = vpack.c.b16 %v900, %v896
      %v1369 = vpack.c.b16 %v901, %v897
      %v1370 = vpack.c.b16 %v902, %v898
      %v1371 = vpack.c.b16 %v907, %v903
      %v1372 = vpack.c.b16 %v908, %v904
      %v1373 = vpack.c.b16 %v909, %v905
      %v1374 = vpack.c.b16 %v910, %v906
      %v1375 = vpack.c.b16 %v915, %v911
      %v1376 = vpack.c.b16 %v916, %v912
      %v1377 = vpack.c.b16 %v917, %v913
      %v1378 = vpack.c.b16 %v918, %v914
      %v1379 = vpack.c.b16 %v923, %v919
      %v1380 = vpack.c.b16 %v924, %v920
      %v1381 = vpack.c.b16 %v925, %v921
      %v1382 = vpack.c.b16 %v926, %v922
      %v1383 = vpack.c.b16 %v931, %v927
      %v1384 = vpack.c.b16 %v932, %v928
      %v1385 = vpack.c.b16 %v933, %v929
      %v1386 = vpack.c.b16 %v934, %v930
      %v1387 = vpack.c.b16 %v939, %v935
      %v1388 = vpack.c.b16 %v940, %v936
      %v1389 = vpack.c.b16 %v941, %v937
      %v1390 = vpack.c.b16 %v942, %v938
      %v1391 = vpack.c.b16 %v947, %v943
      %v1392 = vpack.c.b16 %v948, %v944
      %v1393 = vpack.c.b16 %v949, %v945
      %v1394 = vpack.c.b16 %v950, %v946
      %v1395 = vpack.c.b16 %v955, %v951
      %v1396 = vpack.c.b16 %v956, %v952
      %v1397 = vpack.c.b16 %v957, %v953
      %v1398 = vpack.c.b16 %v958, %v954
      %v1399 = vpack.c.b16 %v963, %v959
      %v1400 = vpack.c.b16 %v964, %v960
      %v1401 = vpack.c.b16 %v965, %v961
      %v1402 = vpack.c.b16 %v966, %v962
      %v1403 = vpack.c.b16 %v971, %v967
      %v1404 = vpack.c.b16 %v972, %v968
      %v1405 = vpack.c.b16 %v973, %v969
      %v1406 = vpack.c.b16 %v974, %v970
      %v1407 = vpack.c.b16 %v979, %v975
      %v1408 = vpack.c.b16 %v980, %v976
      %v1409 = vpack.c.b16 %v981, %v977
      %v1410 = vpack.c.b16 %v982, %v978
      %v1411 = vpack.c.b16 %v987, %v983
      %v1412 = vpack.c.b16 %v988, %v984
      %v1413 = vpack.c.b16 %v989, %v985
      %v1414 = vpack.c.b16 %v990, %v986
      %v1415 = vpack.c.b16 %v995, %v991
      %v1416 = vpack.c.b16 %v996, %v992
      %v1417 = vpack.c.b16 %v997, %v993
      %v1418 = vpack.c.b16 %v998, %v994
      %v1419 = vpack.c.b16 %v1003, %v999
      %v1420 = vpack.c.b16 %v1004, %v1000
      %v1421 = vpack.c.b16 %v1005, %v1001
      %v1422 = vpack.c.b16 %v1006, %v1002
      %v1423 = vpack.c.b16 %v1011, %v1007
      %v1424 = vpack.c.b16 %v1012, %v1008
      %v1425 = vpack.c.b16 %v1013, %v1009
      %v1426 = vpack.c.b16 %v1014, %v1010
      %v1427 = vpack.c.b16 %v1019, %v1015
      %v1428 = vpack.c.b16 %v1020, %v1016
      %v1429 = vpack.c.b16 %v1021, %v1017
      %v1430 = vpack.c.b16 %v1022, %v1018
      %v1431 = vpack.c.b16 %v1027, %v1023
      %v1432 = vpack.c.b16 %v1028, %v1024
      %v1433 = vpack.c.b16 %v1029, %v1025
      %v1434 = vpack.c.b16 %v1030, %v1026
      %v1435 = vpack.c.b16 %v1035, %v1031
      %v1436 = vpack.c.b16 %v1036, %v1032
      %v1437 = vpack.c.b16 %v1037, %v1033
      %v1438 = vpack.c.b16 %v1038, %v1034
      %v1439 = vpack.c.b16 %v1043, %v1039
      %v1440 = vpack.c.b16 %v1044, %v1040
      %v1441 = vpack.c.b16 %v1045, %v1041
      %v1442 = vpack.c.b16 %v1046, %v1042
      %v1443 = vpack.c.b16 %v1051, %v1047
      %v1444 = vpack.c.b16 %v1052, %v1048
      %v1445 = vpack.c.b16 %v1053, %v1049
      %v1446 = vpack.c.b16 %v1054, %v1050
      %v1447 = vpack.c.b16 %v1059, %v1055
      %v1448 = vpack.c.b16 %v1060, %v1056
      %v1449 = vpack.c.b16 %v1061, %v1057
      %v1450 = vpack.c.b16 %v1062, %v1058
      %v1451 = vpack.c.b16 %v1067, %v1063
      %v1452 = vpack.c.b16 %v1068, %v1064
      %v1453 = vpack.c.b16 %v1069, %v1065
      %v1454 = vpack.c.b16 %v1070, %v1066
      %v1455 = vpack.c.b16 %v1075, %v1071
      %v1456 = vpack.c.b16 %v1076, %v1072
      %v1457 = vpack.c.b16 %v1077, %v1073
      %v1458 = vpack.c.b16 %v1078, %v1074
      %v1459 = vpack.c.b16 %v1083, %v1079
      %v1460 = vpack.c.b16 %v1084, %v1080
      %v1461 = vpack.c.b16 %v1085, %v1081
      %v1462 = vpack.c.b16 %v1086, %v1082
      %v1463 = vpack.c.b16 %v1091, %v1087
      %v1464 = vpack.c.b16 %v1092, %v1088
      %v1465 = vpack.c.b16 %v1093, %v1089
      %v1466 = vpack.c.b16 %v1094, %v1090
      %v1467 = vpack.c.b16 %v1099, %v1095
      %v1468 = vpack.c.b16 %v1100, %v1096
      %v1469 = vpack.c.b16 %v1101, %v1097
      %v1470 = vpack.c.b16 %v1102, %v1098
      %v1471 = vpack.c.b16 %v1107, %v1103
      %v1472 = vpack.c.b16 %v1108, %v1104
      %v1473 = vpack.c.b16 %v1109, %v1105
      %v1474 = vpack.c.b16 %v1110, %v1106
      %v1475 = vpack.c.b16 %v1115, %v1111
      %v1476 = vpack.c.b16 %v1116, %v1112
      %v1477 = vpack.c.b16 %v1117, %v1113
      %v1478 = vpack.c.b16 %v1118, %v1114
      %v1479 = vpack.c.b16 %v1123, %v1119
      %v1480 = vpack.c.b16 %v1124, %v1120
      %v1481 = vpack.c.b16 %v1125, %v1121
      %v1482 = vpack.c.b16 %v1126, %v1122
      %v1483 = vpack.c.b16 %v1131, %v1127
      %v1484 = vpack.c.b16 %v1132, %v1128
      %v1485 = vpack.c.b16 %v1133, %v1129
      %v1486 = vpack.c.b16 %v1134, %v1130
      %v1487 = vpack.c.b16 %v1139, %v1135
      %v1488 = vpack.c.b16 %v1140, %v1136
      %v1489 = vpack.c.b16 %v1141, %v1137
      %v1490 = vpack.c.b16 %v1142, %v1138
      %v1491 = vpack.c.b16 %v1147, %v1143
      %v1492 = vpack.c.b16 %v1148, %v1144
      %v1493 = vpack.c.b16 %v1149, %v1145
      %v1494 = vpack.c.b16 %v1150, %v1146
      %v1495 = vpack.c.b16 %v1155, %v1151
      %v1496 = vpack.c.b16 %v1156, %v1152
      %v1497 = vpack.c.b16 %v1157, %v1153
      %v1498 = vpack.c.b16 %v1158, %v1154
      %v1499 = vpack.c.b16 %v1163, %v1159
      %v1500 = vpack.c.b16 %v1164, %v1160
      %v1501 = vpack.c.b16 %v1165, %v1161
      %v1502 = vpack.c.b16 %v1166, %v1162
      %v1503 = vpack.c.b16 %v1171, %v1167
      %v1504 = vpack.c.b16 %v1172, %v1168
      %v1505 = vpack.c.b16 %v1173, %v1169
      %v1506 = vpack.c.b16 %v1174, %v1170
      %v1507 = vpack.c.b16 %v1179, %v1175
      %v1508 = vpack.c.b16 %v1180, %v1176
      %v1509 = vpack.c.b16 %v1181, %v1177
      %v1510 = vpack.c.b16 %v1182, %v1178
      %v1511 = vpack.c.b16 %v1187, %v1183
      %v1512 = vpack.c.b16 %v1188, %v1184
      %v1513 = vpack.c.b16 %v1189, %v1185
      %v1514 = vpack.c.b16 %v1190, %v1186
      %v1515 = vpack.c.b16 %v1195, %v1191
      %v1516 = vpack.c.b16 %v1196, %v1192
      %v1517 = vpack.c.b16 %v1197, %v1193
      %v1518 = vpack.c.b16 %v1198, %v1194
      %v1519 = vpack.c.b16 %v1203, %v1199
      %v1520 = vpack.c.b16 %v1204, %v1200
      %v1521 = vpack.c.b16 %v1205, %v1201
      %v1522 = vpack.c.b16 %v1206, %v1202
      %v1523 = vpack.c.b16 %v1211, %v1207
      %v1524 = vpack.c.b16 %v1212, %v1208
      %v1525 = vpack.c.b16 %v1213, %v1209
      %v1526 = vpack.c.b16 %v1214, %v1210
      %v1527 = vpack.c.b16 %v1219, %v1215
      %v1528 = vpack.c.b16 %v1220, %v1216
      %v1529 = vpack.c.b16 %v1221, %v1217
      %v1530 = vpack.c.b16 %v1222, %v1218
      %v1531 = vpack.c.b16 %v1227, %v1223
      %v1532 = vpack.c.b16 %v1228, %v1224
      %v1533 = vpack.c.b16 %v1229, %v1225
      %v1534 = vpack.c.b16 %v1230, %v1226
      %v1535 = vpack.c.b16 %v1235, %v1231
      %v1536 = vpack.c.b16 %v1236, %v1232
      %v1537 = vpack.c.b16 %v1237, %v1233
      %v1538 = vpack.c.b16 %v1238, %v1234
      %v1539 = vpack.c.b16 %v1243, %v1239
      %v1540 = vpack.c.b16 %v1244, %v1240
      %v1541 = vpack.c.b16 %v1245, %v1241
      %v1542 = vpack.c.b16 %v1246, %v1242
      %v1543 = vpack.c.b16 %v1251, %v1247
      %v1544 = vpack.c.b16 %v1252, %v1248
      %v1545 = vpack.c.b16 %v1253, %v1249
      %v1546 = vpack.c.b16 %v1254, %v1250
      %v1547 = vpack.c.b16 %v1259, %v1255
      %v1548 = vpack.c.b16 %v1260, %v1256
      %v1549 = vpack.c.b16 %v1261, %v1257
      %v1550 = vpack.c.b16 %v1262, %v1258
      %v1551 = vpack.c.b16 %v1267, %v1263
      %v1552 = vpack.c.b16 %v1268, %v1264
      %v1553 = vpack.c.b16 %v1269, %v1265
      %v1554 = vpack.c.b16 %v1270, %v1266
      %v1555 = vpack.c.b16 %v1275, %v1271
      %v1556 = vpack.c.b16 %v1276, %v1272
      %v1557 = vpack.c.b16 %v1277, %v1273
      %v1558 = vpack.c.b16 %v1278, %v1274
      %v1559 = vpack.c.b16 %v1283, %v1279
      %v1560 = vpack.c.b16 %v1284, %v1280
      %v1561 = vpack.c.b16 %v1285, %v1281
      %v1562 = vpack.c.b16 %v1286, %v1282
      %v1563 = vpack.c.b16 %v1291, %v1287
      %v1564 = vpack.c.b16 %v1292, %v1288
      %v1565 = vpack.c.b16 %v1293, %v1289
      %v1566 = vpack.c.b16 %v1294, %v1290
      %v1567 = vpack.c.b16 %v1299, %v1295
      %v1568 = vpack.c.b16 %v1300, %v1296
      %v1569 = vpack.c.b16 %v1301, %v1297
      %v1570 = vpack.c.b16 %v1302, %v1298
      %v1571 = vpack.c.b16 %v1307, %v1303
      %v1572 = vpack.c.b16 %v1308, %v1304
      %v1573 = vpack.c.b16 %v1309, %v1305
      %v1574 = vpack.c.b16 %v1310, %v1306
      %v1575 = vpack.c.b16 %v1315, %v1311
      %v1576 = vpack.c.b16 %v1316, %v1312
      %v1577 = vpack.c.b16 %v1317, %v1313
      %v1578 = vpack.c.b16 %v1318, %v1314
      %v1579 = vpack.c.b16 %v1323, %v1319
      %v1580 = vpack.c.b16 %v1324, %v1320
      %v1581 = vpack.c.b16 %v1325, %v1321
      %v1582 = vpack.c.b16 %v1326, %v1322
      %1839 = vmatprep.subr.bf16.mxu0 %v1328
      %1840 = vmatpush1.bf16.msra.mxu0 %v1327
      %1841 = vmatprep.subr.bf16.mxu0 %v1332
      %1842 = vmatpush1.bf16.msra.mxu0 %v1331
      %1843 = vmatprep.subr.bf16.mxu0 %v1336
      %1844 = vmatpush1.bf16.msra.mxu0 %v1335
      %1845 = vmatprep.subr.bf16.mxu0 %v1340
      %1846 = vmatpush1.bf16.msra.mxu0 %v1339
      %1847 = vmatprep.subr.bf16.mxu0 %v1344
      %1848 = vmatpush1.bf16.msra.mxu0 %v1343
      %1849 = vmatprep.subr.bf16.mxu0 %v1348
      %1850 = vmatpush1.bf16.msra.mxu0 %v1347
      %1851 = vmatprep.subr.bf16.mxu0 %v1352
      %1852 = vmatpush1.bf16.msra.mxu0 %v1351
      %1853 = vmatprep.subr.bf16.mxu0 %v1356
      %1854 = vmatpush1.bf16.msra.mxu0 %v1355
      %1855 = vmatprep.subr.bf16.mxu0 %v1360
      %1856 = vmatpush1.bf16.msra.mxu0 %v1359
      %1857 = vmatprep.subr.bf16.mxu0 %v1364
      %1858 = vmatpush1.bf16.msra.mxu0 %v1363
      %1859 = vmatprep.subr.bf16.mxu0 %v1368
      %1860 = vmatpush1.bf16.msra.mxu0 %v1367
      %1861 = vmatprep.subr.bf16.mxu0 %v1372
      %1862 = vmatpush1.bf16.msra.mxu0 %v1371
      %1863 = vmatprep.subr.bf16.mxu0 %v1376
      %1864 = vmatpush1.bf16.msra.mxu0 %v1375
      %1865 = vmatprep.subr.bf16.mxu0 %v1380
      %1866 = vmatpush1.bf16.msra.mxu0 %v1379
      %1867 = vmatprep.subr.bf16.mxu0 %v1384
      %1868 = vmatpush1.bf16.msra.mxu0 %v1383
      %1869 = vmatprep.subr.bf16.mxu0 %v1388
      %1870 = vmatpush1.bf16.msra.mxu0 %v1387
      %1871 = vmatprep.mubr.bf16.mxu0 %v544
      %1872 = vmatmul.mubr.bf16.gmra.mrb[0].mxu0 %v543
      %v1873 = vpop.f32.mrb[0].mxu0
      %v1874 = vadd.f32 %v502, %v1873
      %v1875 = vpop.f32.mrb[0].mxu0
      %v1876 = vadd.f32 %v506, %v1875
      %v1877 = vpop.f32.mrb[0].mxu0
      %v1878 = vadd.f32 %v502, %v1877
      %v1879 = vpop.f32.mrb[0].mxu0
      %v1880 = vadd.f32 %v506, %v1879
      %1881 = vdwg.mxu0
      %1882 = vmatprep.subr.bf16.mxu0 %v1392
      %1883 = vmatpush1.bf16.msra.mxu0 %v1391
      %1884 = vmatprep.subr.bf16.mxu0 %v1396
      %1885 = vmatpush1.bf16.msra.mxu0 %v1395
      %1886 = vmatprep.subr.bf16.mxu0 %v1400
      %1887 = vmatpush1.bf16.msra.mxu0 %v1399
      %1888 = vmatprep.subr.bf16.mxu0 %v1404
      %1889 = vmatpush1.bf16.msra.mxu0 %v1403
      %1890 = vmatprep.subr.bf16.mxu0 %v1408
      %1891 = vmatpush1.bf16.msra.mxu0 %v1407
      %1892 = vmatprep.subr.bf16.mxu0 %v1412
      %1893 = vmatpush1.bf16.msra.mxu0 %v1411
      %1894 = vmatprep.subr.bf16.mxu0 %v1416
      %1895 = vmatpush1.bf16.msra.mxu0 %v1415
      %1896 = vmatprep.subr.bf16.mxu0 %v1420
      %1897 = vmatpush1.bf16.msra.mxu0 %v1419
      %1898 = vmatprep.subr.bf16.mxu0 %v1424
      %1899 = vmatpush1.bf16.msra.mxu0 %v1423
      %1900 = vmatprep.subr.bf16.mxu0 %v1428
      %1901 = vmatpush1.bf16.msra.mxu0 %v1427
      %1902 = vmatprep.subr.bf16.mxu0 %v1432
      %1903 = vmatpush1.bf16.msra.mxu0 %v1431
      %1904 = vmatprep.subr.bf16.mxu0 %v1436
      %1905 = vmatpush1.bf16.msra.mxu0 %v1435
      %1906 = vmatprep.subr.bf16.mxu0 %v1440
      %1907 = vmatpush1.bf16.msra.mxu0 %v1439
      %1908 = vmatprep.subr.bf16.mxu0 %v1444
      %1909 = vmatpush1.bf16.msra.mxu0 %v1443
      %1910 = vmatprep.subr.bf16.mxu0 %v1448
      %1911 = vmatpush1.bf16.msra.mxu0 %v1447
      %1912 = vmatprep.subr.bf16.mxu0 %v1452
      %1913 = vmatpush1.bf16.msra.mxu0 %v1451
      %1914 = vmatprep.mubr.bf16.mxu0 %v546
      %1915 = vmatmul.mubr.bf16.gmra.mrb[0].mxu0 %v545
      %v1916 = vpop.f32.mrb[0].mxu0
      %v1917 = vadd.f32 %v1874, %v1916
      %v1918 = vpop.f32.mrb[0].mxu0
      %v1919 = vadd.f32 %v1876, %v1918
      %v1920 = vpop.f32.mrb[0].mxu0
      %v1921 = vadd.f32 %v1878, %v1920
      %v1922 = vpop.f32.mrb[0].mxu0
      %v1923 = vadd.f32 %v1880, %v1922
      %1924 = vdwg.mxu0
      %1925 = vmatprep.subr.bf16.mxu0 %v1456
      %1926 = vmatpush1.bf16.msra.mxu0 %v1455
      %1927 = vmatprep.subr.bf16.mxu0 %v1460
      %1928 = vmatpush1.bf16.msra.mxu0 %v1459
      %1929 = vmatprep.subr.bf16.mxu0 %v1464
      %1930 = vmatpush1.bf16.msra.mxu0 %v1463
      %1931 = vmatprep.subr.bf16.mxu0 %v1468
      %1932 = vmatpush1.bf16.msra.mxu0 %v1467
      %1933 = vmatprep.subr.bf16.mxu0 %v1472
      %1934 = vmatpush1.bf16.msra.mxu0 %v1471
      %1935 = vmatprep.subr.bf16.mxu0 %v1476
      %1936 = vmatpush1.bf16.msra.mxu0 %v1475
      %1937 = vmatprep.subr.bf16.mxu0 %v1480
      %1938 = vmatpush1.bf16.msra.mxu0 %v1479
      %1939 = vmatprep.subr.bf16.mxu0 %v1484
      %1940 = vmatpush1.bf16.msra.mxu0 %v1483
      %1941 = vmatprep.subr.bf16.mxu0 %v1488
      %1942 = vmatpush1.bf16.msra.mxu0 %v1487
      %1943 = vmatprep.subr.bf16.mxu0 %v1492
      %1944 = vmatpush1.bf16.msra.mxu0 %v1491
      %1945 = vmatprep.subr.bf16.mxu0 %v1496
      %1946 = vmatpush1.bf16.msra.mxu0 %v1495
      %1947 = vmatprep.subr.bf16.mxu0 %v1500
      %1948 = vmatpush1.bf16.msra.mxu0 %v1499
      %1949 = vmatprep.subr.bf16.mxu0 %v1504
      %1950 = vmatpush1.bf16.msra.mxu0 %v1503
      %1951 = vmatprep.subr.bf16.mxu0 %v1508
      %1952 = vmatpush1.bf16.msra.mxu0 %v1507
      %1953 = vmatprep.subr.bf16.mxu0 %v1512
      %1954 = vmatpush1.bf16.msra.mxu0 %v1511
      %1955 = vmatprep.subr.bf16.mxu0 %v1516
      %1956 = vmatpush1.bf16.msra.mxu0 %v1515
      %1957 = vmatprep.mubr.bf16.mxu0 %v548
      %1958 = vmatmul.mubr.bf16.gmra.mrb[0].mxu0 %v547
      %v1959 = vpop.f32.mrb[0].mxu0
      %v1960 = vadd.f32 %v1917, %v1959
      %v1961 = vpop.f32.mrb[0].mxu0
      %v1962 = vadd.f32 %v1919, %v1961
      %v1963 = vpop.f32.mrb[0].mxu0
      %v1964 = vadd.f32 %v1921, %v1963
      %v1965 = vpop.f32.mrb[0].mxu0
      %v1966 = vadd.f32 %v1923, %v1965
      %1967 = vdwg.mxu0
      %1968 = vmatprep.subr.bf16.mxu0 %v1520
      %1969 = vmatpush1.bf16.msra.mxu0 %v1519
      %1970 = vmatprep.subr.bf16.mxu0 %v1524
      %1971 = vmatpush1.bf16.msra.mxu0 %v1523
      %1972 = vmatprep.subr.bf16.mxu0 %v1528
      %1973 = vmatpush1.bf16.msra.mxu0 %v1527
      %1974 = vmatprep.subr.bf16.mxu0 %v1532
      %1975 = vmatpush1.bf16.msra.mxu0 %v1531
      %1976 = vmatprep.subr.bf16.mxu0 %v1536
      %1977 = vmatpush1.bf16.msra.mxu0 %v1535
      %1978 = vmatprep.subr.bf16.mxu0 %v1540
      %1979 = vmatpush1.bf16.msra.mxu0 %v1539
      %1980 = vmatprep.subr.bf16.mxu0 %v1544
      %1981 = vmatpush1.bf16.msra.mxu0 %v1543
      %1982 = vmatprep.subr.bf16.mxu0 %v1548
      %1983 = vmatpush1.bf16.msra.mxu0 %v1547
      %1984 = vmatprep.subr.bf16.mxu0 %v1552
      %1985 = vmatpush1.bf16.msra.mxu0 %v1551
      %1986 = vmatprep.subr.bf16.mxu0 %v1556
      %1987 = vmatpush1.bf16.msra.mxu0 %v1555
      %1988 = vmatprep.subr.bf16.mxu0 %v1560
      %1989 = vmatpush1.bf16.msra.mxu0 %v1559
      %1990 = vmatprep.subr.bf16.mxu0 %v1564
      %1991 = vmatpush1.bf16.msra.mxu0 %v1563
      %1992 = vmatprep.subr.bf16.mxu0 %v1568
      %1993 = vmatpush1.bf16.msra.mxu0 %v1567
      %1994 = vmatprep.subr.bf16.mxu0 %v1572
      %1995 = vmatpush1.bf16.msra.mxu0 %v1571
      %1996 = vmatprep.subr.bf16.mxu0 %v1576
      %1997 = vmatpush1.bf16.msra.mxu0 %v1575
      %1998 = vmatprep.subr.bf16.mxu0 %v1580
      %1999 = vmatpush1.bf16.msra.mxu0 %v1579
      %2000 = vmatprep.mubr.bf16.mxu0 %v550
      %2001 = vmatmul.mubr.bf16.gmra.mrb[0].mxu0 %v549
      %v2002 = vpop.f32.mrb[0].mxu0
      %v2003 = vadd.f32 %v1960, %v2002
      %v2004 = vpop.f32.mrb[0].mxu0
      %v2005 = vadd.f32 %v1962, %v2004
      %v2006 = vpop.f32.mrb[0].mxu0
      %v2007 = vadd.f32 %v1964, %v2006
      %v2008 = vpop.f32.mrb[0].mxu0
      %v2009 = vadd.f32 %v1966, %v2008
      %2010 = vdwg.mxu0
      %2011 = vmatprep.subr.bf16.mxu0 %v1330
      %2012 = vmatpush1.bf16.msra.mxu0 %v1329
      %2013 = vmatprep.subr.bf16.mxu0 %v1334
      %2014 = vmatpush1.bf16.msra.mxu0 %v1333
      %2015 = vmatprep.subr.bf16.mxu0 %v1338
      %2016 = vmatpush1.bf16.msra.mxu0 %v1337
      %2017 = vmatprep.subr.bf16.mxu0 %v1342
      %2018 = vmatpush1.bf16.msra.mxu0 %v1341
      %2019 = vmatprep.subr.bf16.mxu0 %v1346
      %2020 = vmatpush1.bf16.msra.mxu0 %v1345
      %2021 = vmatprep.subr.bf16.mxu0 %v1350
      %2022 = vmatpush1.bf16.msra.mxu0 %v1349
      %2023 = vmatprep.subr.bf16.mxu0 %v1354
      %2024 = vmatpush1.bf16.msra.mxu0 %v1353
      %2025 = vmatprep.subr.bf16.mxu0 %v1358
      %2026 = vmatpush1.bf16.msra.mxu0 %v1357
      %2027 = vmatprep.subr.bf16.mxu0 %v1362
      %2028 = vmatpush1.bf16.msra.mxu0 %v1361
      %2029 = vmatprep.subr.bf16.mxu0 %v1366
      %2030 = vmatpush1.bf16.msra.mxu0 %v1365
      %2031 = vmatprep.subr.bf16.mxu0 %v1370
      %2032 = vmatpush1.bf16.msra.mxu0 %v1369
      %2033 = vmatprep.subr.bf16.mxu0 %v1374
      %2034 = vmatpush1.bf16.msra.mxu0 %v1373
      %2035 = vmatprep.subr.bf16.mxu0 %v1378
      %2036 = vmatpush1.bf16.msra.mxu0 %v1377
      %2037 = vmatprep.subr.bf16.mxu0 %v1382
      %2038 = vmatpush1.bf16.msra.mxu0 %v1381
      %2039 = vmatprep.subr.bf16.mxu0 %v1386
      %2040 = vmatpush1.bf16.msra.mxu0 %v1385
      %2041 = vmatprep.subr.bf16.mxu0 %v1390
      %2042 = vmatpush1.bf16.msra.mxu0 %v1389
      %2043 = vmatprep.mubr.bf16.mxu0 %v544
      %2044 = vmatmul.mubr.bf16.gmra.mrb[0].mxu0 %v543
      %v2045 = vpop.f32.mrb[0].mxu0
      %v2046 = vadd.f32 %v510, %v2045
      %v2047 = vpop.f32.mrb[0].mxu0
      %v2048 = vadd.f32 %v514, %v2047
      %v2049 = vpop.f32.mrb[0].mxu0
      %v2050 = vadd.f32 %v510, %v2049
      %v2051 = vpop.f32.mrb[0].mxu0
      %v2052 = vadd.f32 %v514, %v2051
      %2053 = vdwg.mxu0
      %2054 = vmatprep.subr.bf16.mxu0 %v1394
      %2055 = vmatpush1.bf16.msra.mxu0 %v1393
      %2056 = vmatprep.subr.bf16.mxu0 %v1398
      %2057 = vmatpush1.bf16.msra.mxu0 %v1397
      %2058 = vmatprep.subr.bf16.mxu0 %v1402
      %2059 = vmatpush1.bf16.msra.mxu0 %v1401
      %2060 = vmatprep.subr.bf16.mxu0 %v1406
      %2061 = vmatpush1.bf16.msra.mxu0 %v1405
      %2062 = vmatprep.subr.bf16.mxu0 %v1410
      %2063 = vmatpush1.bf16.msra.mxu0 %v1409
      %2064 = vmatprep.subr.bf16.mxu0 %v1414
      %2065 = vmatpush1.bf16.msra.mxu0 %v1413
      %2066 = vmatprep.subr.bf16.mxu0 %v1418
      %2067 = vmatpush1.bf16.msra.mxu0 %v1417
      %2068 = vmatprep.subr.bf16.mxu0 %v1422
      %2069 = vmatpush1.bf16.msra.mxu0 %v1421
      %2070 = vmatprep.subr.bf16.mxu0 %v1426
      %2071 = vmatpush1.bf16.msra.mxu0 %v1425
      %2072 = vmatprep.subr.bf16.mxu0 %v1430
      %2073 = vmatpush1.bf16.msra.mxu0 %v1429
      %2074 = vmatprep.subr.bf16.mxu0 %v1434
      %2075 = vmatpush1.bf16.msra.mxu0 %v1433
      %2076 = vmatprep.subr.bf16.mxu0 %v1438
      %2077 = vmatpush1.bf16.msra.mxu0 %v1437
      %2078 = vmatprep.subr.bf16.mxu0 %v1442
      %2079 = vmatpush1.bf16.msra.mxu0 %v1441
      %2080 = vmatprep.subr.bf16.mxu0 %v1446
      %2081 = vmatpush1.bf16.msra.mxu0 %v1445
      %2082 = vmatprep.subr.bf16.mxu0 %v1450
      %2083 = vmatpush1.bf16.msra.mxu0 %v1449
      %2084 = vmatprep.subr.bf16.mxu0 %v1454
      %2085 = vmatpush1.bf16.msra.mxu0 %v1453
      %2086 = vmatprep.mubr.bf16.mxu0 %v546
      %2087 = vmatmul.mubr.bf16.gmra.mrb[0].mxu0 %v545
      %v2088 = vpop.f32.mrb[0].mxu0
      %v2089 = vadd.f32 %v2046, %v2088
      %v2090 = vpop.f32.mrb[0].mxu0
      %v2091 = vadd.f32 %v2048, %v2090
      %v2092 = vpop.f32.mrb[0].mxu0
      %v2093 = vadd.f32 %v2050, %v2092
      %v2094 = vpop.f32.mrb[0].mxu0
      %v2095 = vadd.f32 %v2052, %v2094
      %2096 = vdwg.mxu0
      %2097 = vmatprep.subr.bf16.mxu0 %v1458
      %2098 = vmatpush1.bf16.msra.mxu0 %v1457
      %2099 = vmatprep.subr.bf16.mxu0 %v1462
      %2100 = vmatpush1.bf16.msra.mxu0 %v1461
      %2101 = vmatprep.subr.bf16.mxu0 %v1466
      %2102 = vmatpush1.bf16.msra.mxu0 %v1465
      %2103 = vmatprep.subr.bf16.mxu0 %v1470
      %2104 = vmatpush1.bf16.msra.mxu0 %v1469
      %2105 = vmatprep.subr.bf16.mxu0 %v1474
      %2106 = vmatpush1.bf16.msra.mxu0 %v1473
      %2107 = vmatprep.subr.bf16.mxu0 %v1478
      %2108 = vmatpush1.bf16.msra.mxu0 %v1477
      %2109 = vmatprep.subr.bf16.mxu0 %v1482
      %2110 = vmatpush1.bf16.msra.mxu0 %v1481
      %2111 = vmatprep.subr.bf16.mxu0 %v1486
      %2112 = vmatpush1.bf16.msra.mxu0 %v1485
      %2113 = vmatprep.subr.bf16.mxu0 %v1490
      %2114 = vmatpush1.bf16.msra.mxu0 %v1489
      %2115 = vmatprep.subr.bf16.mxu0 %v1494
      %2116 = vmatpush1.bf16.msra.mxu0 %v1493
      %2117 = vmatprep.subr.bf16.mxu0 %v1498
      %2118 = vmatpush1.bf16.msra.mxu0 %v1497
      %2119 = vmatprep.subr.bf16.mxu0 %v1502
      %2120 = vmatpush1.bf16.msra.mxu0 %v1501
      %2121 = vmatprep.subr.bf16.mxu0 %v1506
      %2122 = vmatpush1.bf16.msra.mxu0 %v1505
      %2123 = vmatprep.subr.bf16.mxu0 %v1510
      %2124 = vmatpush1.bf16.msra.mxu0 %v1509
      %2125 = vmatprep.subr.bf16.mxu0 %v1514
      %2126 = vmatpush1.bf16.msra.mxu0 %v1513
      %2127 = vmatprep.subr.bf16.mxu0 %v1518
      %2128 = vmatpush1.bf16.msra.mxu0 %v1517
      %2129 = vmatprep.mubr.bf16.mxu0 %v548
      %2130 = vmatmul.mubr.bf16.gmra.mrb[0].mxu0 %v547
      %v2131 = vpop.f32.mrb[0].mxu0
      %v2132 = vadd.f32 %v2089, %v2131
      %v2133 = vpop.f32.mrb[0].mxu0
      %v2134 = vadd.f32 %v2091, %v2133
      %v2135 = vpop.f32.mrb[0].mxu0
      %v2136 = vadd.f32 %v2093, %v2135
      %v2137 = vpop.f32.mrb[0].mxu0
      %v2138 = vadd.f32 %v2095, %v2137
      %2139 = vdwg.mxu0
      %2140 = vmatprep.subr.bf16.mxu0 %v1522
      %2141 = vmatpush1.bf16.msra.mxu0 %v1521
      %2142 = vmatprep.subr.bf16.mxu0 %v1526
      %2143 = vmatpush1.bf16.msra.mxu0 %v1525
      %2144 = vmatprep.subr.bf16.mxu0 %v1530
      %2145 = vmatpush1.bf16.msra.mxu0 %v1529
      %2146 = vmatprep.subr.bf16.mxu0 %v1534
      %2147 = vmatpush1.bf16.msra.mxu0 %v1533
      %2148 = vmatprep.subr.bf16.mxu0 %v1538
      %2149 = vmatpush1.bf16.msra.mxu0 %v1537
      %2150 = vmatprep.subr.bf16.mxu0 %v1542
      %2151 = vmatpush1.bf16.msra.mxu0 %v1541
      %2152 = vmatprep.subr.bf16.mxu0 %v1546
      %2153 = vmatpush1.bf16.msra.mxu0 %v1545
      %2154 = vmatprep.subr.bf16.mxu0 %v1550
      %2155 = vmatpush1.bf16.msra.mxu0 %v1549
      %2156 = vmatprep.subr.bf16.mxu0 %v1554
      %2157 = vmatpush1.bf16.msra.mxu0 %v1553
      %2158 = vmatprep.subr.bf16.mxu0 %v1558
      %2159 = vmatpush1.bf16.msra.mxu0 %v1557
      %2160 = vmatprep.subr.bf16.mxu0 %v1562
      %2161 = vmatpush1.bf16.msra.mxu0 %v1561
      %2162 = vmatprep.subr.bf16.mxu0 %v1566
      %2163 = vmatpush1.bf16.msra.mxu0 %v1565
      %2164 = vmatprep.subr.bf16.mxu0 %v1570
      %2165 = vmatpush1.bf16.msra.mxu0 %v1569
      %2166 = vmatprep.subr.bf16.mxu0 %v1574
      %2167 = vmatpush1.bf16.msra.mxu0 %v1573
      %2168 = vmatprep.subr.bf16.mxu0 %v1578
      %2169 = vmatpush1.bf16.msra.mxu0 %v1577
      %2170 = vmatprep.subr.bf16.mxu0 %v1582
      %2171 = vmatpush1.bf16.msra.mxu0 %v1581
      %2172 = vmatprep.mubr.bf16.mxu0 %v550
      %2173 = vmatmul.mubr.bf16.gmra.mrb[0].mxu0 %v549
      %v2174 = vpop.f32.mrb[0].mxu0
      %v2175 = vadd.f32 %v2132, %v2174
      %v2176 = vpop.f32.mrb[0].mxu0
      %v2177 = vadd.f32 %v2134, %v2176
      %v2178 = vpop.f32.mrb[0].mxu0
      %v2179 = vadd.f32 %v2136, %v2178
      %v2180 = vpop.f32.mrb[0].mxu0
      %v2181 = vadd.f32 %v2138, %v2180
      %2182 = vdwg.mxu0
      %vm2183 = vcmp.ge.f32.partialorder %v2003, 0.0
      %vm2184 = vcmp.ge.f32.partialorder %v2005, 0.0
      %vm2185 = vcmp.ge.f32.partialorder %v2175, 0.0
      %vm2186 = vcmp.ge.f32.partialorder %v2177, 0.0
      %vm2187 = vcmp.ge.f32.partialorder %v2007, 0.0
      %vm2188 = vcmp.ge.f32.partialorder %v2009, 0.0
      %vm2189 = vcmp.ge.f32.partialorder %v2179, 0.0
      %vm2190 = vcmp.ge.f32.partialorder %v2181, 0.0
      %v2191 = vmul.f32 %v2003, 0.01
      %v2192 = vmul.f32 %v2005, 0.01
      %v2193 = vmul.f32 %v2175, 0.01
      %v2194 = vmul.f32 %v2177, 0.01
      %v2195 = vmul.f32 %v2007, 0.01
      %v2196 = vmul.f32 %v2009, 0.01
      %v2197 = vmul.f32 %v2179, 0.01
      %v2198 = vmul.f32 %v2181, 0.01
      %v2199 = vsel %vm2183, %v2003, %v2191
      %v2200 = vsel %vm2184, %v2005, %v2192
      %v2201 = vsel %vm2185, %v2175, %v2193
      %v2202 = vsel %vm2186, %v2177, %v2194
      %v2203 = vsel %vm2187, %v2007, %v2195
      %v2204 = vsel %vm2188, %v2009, %v2196
      %v2205 = vsel %vm2189, %v2179, %v2197
      %v2206 = vsel %vm2190, %v2181, %v2198
      %v2207 = vpack.c.bf16 %v2203, %v2199
      %v2208 = vpack.c.bf16 %v2204, %v2200
      %v2209 = vpack.c.bf16 %v2205, %v2201
      %v2210 = vpack.c.bf16 %v2206, %v2202
      %v2211 = vld [vmem:[%s3] sm:$0xff]
      %v2212 = vld [vmem:[%s3 + $0x8] sm:$0xff]
      %v2213 = vld [vmem:[%s3 + $0x10] sm:$0xff]
      %v2214 = vld [vmem:[%s3 + $0x18] sm:$0xff]
      %v2215 = vld [vmem:[%s3 + $0x20] sm:$0xff]
      %v2216 = vld [vmem:[%s3 + $0x28] sm:$0xff]
      %v2217 = vld [vmem:[%s3 + $0x30] sm:$0xff]
      %v2218 = vld [vmem:[%s3 + $0x38] sm:$0xff]
      %v2219 = vld [vmem:[%s3 + $0x40] sm:$0xff]
      %v2220 = vld [vmem:[%s3 + $0x48] sm:$0xff]
      %v2221 = vld [vmem:[%s3 + $0x50] sm:$0xff]
      %v2222 = vld [vmem:[%s3 + $0x58] sm:$0xff]
      %v2223 = vld [vmem:[%s3 + $0x60] sm:$0xff]
      %v2224 = vld [vmem:[%s3 + $0x68] sm:$0xff]
      %v2225 = vld [vmem:[%s3 + $0x70] sm:$0xff]
      %v2226 = vld [vmem:[%s3 + $0x78] sm:$0xff]
      %v2227 = vld [vmem:[%s3 + $0x80] sm:$0xff]
      %v2228 = vld [vmem:[%s3 + $0x88] sm:$0xff]
      %v2229 = vld [vmem:[%s3 + $0x90] sm:$0xff]
      %v2230 = vld [vmem:[%s3 + $0x98] sm:$0xff]
      %v2231 = vld [vmem:[%s3 + $0xa0] sm:$0xff]
      %v2232 = vld [vmem:[%s3 + $0xa8] sm:$0xff]
      %v2233 = vld [vmem:[%s3 + $0xb0] sm:$0xff]
      %v2234 = vld [vmem:[%s3 + $0xb8] sm:$0xff]
      %v2235 = vld [vmem:[%s3 + $0xc0] sm:$0xff]
      %v2236 = vld [vmem:[%s3 + $0xc8] sm:$0xff]
      %v2237 = vld [vmem:[%s3 + $0xd0] sm:$0xff]
      %v2238 = vld [vmem:[%s3 + $0xd8] sm:$0xff]
      %v2239 = vld [vmem:[%s3 + $0xe0] sm:$0xff]
      %v2240 = vld [vmem:[%s3 + $0xe8] sm:$0xff]
      %v2241 = vld [vmem:[%s3 + $0xf0] sm:$0xff]
      %v2242 = vld [vmem:[%s3 + $0xf8] sm:$0xff]
      %v2243 = vld [vmem:[%s3 + $0x100] sm:$0xff]
      %v2244 = vld [vmem:[%s3 + $0x108] sm:$0xff]
      %v2245 = vld [vmem:[%s3 + $0x110] sm:$0xff]
      %v2246 = vld [vmem:[%s3 + $0x118] sm:$0xff]
      %v2247 = vld [vmem:[%s3 + $0x120] sm:$0xff]
      %v2248 = vld [vmem:[%s3 + $0x128] sm:$0xff]
      %v2249 = vld [vmem:[%s3 + $0x130] sm:$0xff]
      %v2250 = vld [vmem:[%s3 + $0x138] sm:$0xff]
      %v2251 = vld [vmem:[%s3 + $0x140] sm:$0xff]
      %v2252 = vld [vmem:[%s3 + $0x148] sm:$0xff]
      %v2253 = vld [vmem:[%s3 + $0x150] sm:$0xff]
      %v2254 = vld [vmem:[%s3 + $0x158] sm:$0xff]
      %v2255 = vld [vmem:[%s3 + $0x160] sm:$0xff]
      %v2256 = vld [vmem:[%s3 + $0x168] sm:$0xff]
      %v2257 = vld [vmem:[%s3 + $0x170] sm:$0xff]
      %v2258 = vld [vmem:[%s3 + $0x178] sm:$0xff]
      %v2259 = vld [vmem:[%s3 + $0x180] sm:$0xff]
      %v2260 = vld [vmem:[%s3 + $0x188] sm:$0xff]
      %v2261 = vld [vmem:[%s3 + $0x190] sm:$0xff]
      %v2262 = vld [vmem:[%s3 + $0x198] sm:$0xff]
      %v2263 = vld [vmem:[%s3 + $0x1a0] sm:$0xff]
      %v2264 = vld [vmem:[%s3 + $0x1a8] sm:$0xff]
      %v2265 = vld [vmem:[%s3 + $0x1b0] sm:$0xff]
      %v2266 = vld [vmem:[%s3 + $0x1b8] sm:$0xff]
      %v2267 = vld [vmem:[%s3 + $0x1c0] sm:$0xff]
      %v2268 = vld [vmem:[%s3 + $0x1c8] sm:$0xff]
      %v2269 = vld [vmem:[%s3 + $0x1d0] sm:$0xff]
      %v2270 = vld [vmem:[%s3 + $0x1d8] sm:$0xff]
      %v2271 = vld [vmem:[%s3 + $0x1e0] sm:$0xff]
      %v2272 = vld [vmem:[%s3 + $0x1e8] sm:$0xff]
      %v2273 = vld [vmem:[%s3 + $0x1f0] sm:$0xff]
      %v2274 = vld [vmem:[%s3 + $0x1f8] sm:$0xff]
      %v2275 = vld [vmem:[%s3 + $0x200] sm:$0xff]
      %v2276 = vld [vmem:[%s3 + $0x208] sm:$0xff]
      %v2277 = vld [vmem:[%s3 + $0x210] sm:$0xff]
      %v2278 = vld [vmem:[%s3 + $0x218] sm:$0xff]
      %v2279 = vld [vmem:[%s3 + $0x220] sm:$0xff]
      %v2280 = vld [vmem:[%s3 + $0x228] sm:$0xff]
      %v2281 = vld [vmem:[%s3 + $0x230] sm:$0xff]
      %v2282 = vld [vmem:[%s3 + $0x238] sm:$0xff]
      %v2283 = vld [vmem:[%s3 + $0x240] sm:$0xff]
      %v2284 = vld [vmem:[%s3 + $0x248] sm:$0xff]
      %v2285 = vld [vmem:[%s3 + $0x250] sm:$0xff]
      %v2286 = vld [vmem:[%s3 + $0x258] sm:$0xff]
      %v2287 = vld [vmem:[%s3 + $0x260] sm:$0xff]
      %v2288 = vld [vmem:[%s3 + $0x268] sm:$0xff]
      %v2289 = vld [vmem:[%s3 + $0x270] sm:$0xff]
      %v2290 = vld [vmem:[%s3 + $0x278] sm:$0xff]
      %v2291 = vld [vmem:[%s3 + $0x280] sm:$0xff]
      %v2292 = vld [vmem:[%s3 + $0x288] sm:$0xff]
      %v2293 = vld [vmem:[%s3 + $0x290] sm:$0xff]
      %v2294 = vld [vmem:[%s3 + $0x298] sm:$0xff]
      %v2295 = vld [vmem:[%s3 + $0x2a0] sm:$0xff]
      %v2296 = vld [vmem:[%s3 + $0x2a8] sm:$0xff]
      %v2297 = vld [vmem:[%s3 + $0x2b0] sm:$0xff]
      %v2298 = vld [vmem:[%s3 + $0x2b8] sm:$0xff]
      %v2299 = vld [vmem:[%s3 + $0x2c0] sm:$0xff]
      %v2300 = vld [vmem:[%s3 + $0x2c8] sm:$0xff]
      %v2301 = vld [vmem:[%s3 + $0x2d0] sm:$0xff]
      %v2302 = vld [vmem:[%s3 + $0x2d8] sm:$0xff]
      %v2303 = vld [vmem:[%s3 + $0x2e0] sm:$0xff]
      %v2304 = vld [vmem:[%s3 + $0x2e8] sm:$0xff]
      %v2305 = vld [vmem:[%s3 + $0x2f0] sm:$0xff]
      %v2306 = vld [vmem:[%s3 + $0x2f8] sm:$0xff]
      %v2307 = vld [vmem:[%s3 + $0x300] sm:$0xff]
      %v2308 = vld [vmem:[%s3 + $0x308] sm:$0xff]
      %v2309 = vld [vmem:[%s3 + $0x310] sm:$0xff]
      %v2310 = vld [vmem:[%s3 + $0x318] sm:$0xff]
      %v2311 = vld [vmem:[%s3 + $0x320] sm:$0xff]
      %v2312 = vld [vmem:[%s3 + $0x328] sm:$0xff]
      %v2313 = vld [vmem:[%s3 + $0x330] sm:$0xff]
      %v2314 = vld [vmem:[%s3 + $0x338] sm:$0xff]
      %v2315 = vld [vmem:[%s3 + $0x340] sm:$0xff]
      %v2316 = vld [vmem:[%s3 + $0x348] sm:$0xff]
      %v2317 = vld [vmem:[%s3 + $0x350] sm:$0xff]
      %v2318 = vld [vmem:[%s3 + $0x358] sm:$0xff]
      %v2319 = vld [vmem:[%s3 + $0x360] sm:$0xff]
      %v2320 = vld [vmem:[%s3 + $0x368] sm:$0xff]
      %v2321 = vld [vmem:[%s3 + $0x370] sm:$0xff]
      %v2322 = vld [vmem:[%s3 + $0x378] sm:$0xff]
      %v2323 = vld [vmem:[%s3 + $0x380] sm:$0xff]
      %v2324 = vld [vmem:[%s3 + $0x388] sm:$0xff]
      %v2325 = vld [vmem:[%s3 + $0x390] sm:$0xff]
      %v2326 = vld [vmem:[%s3 + $0x398] sm:$0xff]
      %v2327 = vld [vmem:[%s3 + $0x3a0] sm:$0xff]
      %v2328 = vld [vmem:[%s3 + $0x3a8] sm:$0xff]
      %v2329 = vld [vmem:[%s3 + $0x3b0] sm:$0xff]
      %v2330 = vld [vmem:[%s3 + $0x3b8] sm:$0xff]
      %v2331 = vld [vmem:[%s3 + $0x3c0] sm:$0xff]
      %v2332 = vld [vmem:[%s3 + $0x3c8] sm:$0xff]
      %v2333 = vld [vmem:[%s3 + $0x3d0] sm:$0xff]
      %v2334 = vld [vmem:[%s3 + $0x3d8] sm:$0xff]
      %v2335 = vld [vmem:[%s3 + $0x3e0] sm:$0xff]
      %v2336 = vld [vmem:[%s3 + $0x3e8] sm:$0xff]
      %v2337 = vld [vmem:[%s3 + $0x3f0] sm:$0xff]
      %v2338 = vld [vmem:[%s3 + $0x3f8] sm:$0xff]
      %v2339 = vld [vmem:[%s4] sm:$0xf]
      %v2341 = vlaneseq
      %v2342 = vshrl.u32 %v2341, 7
      %v2343 = vsub.s32 0, %v2342
      %v2344 = vrot.slane %v2339, %v2343
      %v2345 = vlaneseq
      %v2346 = vshrl.u32 %v2345, 7
      %v2347 = vsub.s32 1, %v2346
      %v2348 = vrot.slane %v2339, %v2347
      %v2349 = vlaneseq
      %v2350 = vshrl.u32 %v2349, 7
      %v2351 = vsub.s32 2, %v2350
      %v2352 = vrot.slane %v2339, %v2351
      %v2353 = vlaneseq
      %v2354 = vshrl.u32 %v2353, 7
      %v2355 = vsub.s32 3, %v2354
      %v2356 = vrot.slane %v2339, %v2355
      %v2489 = vunpack.c.l.b16 %v2211
      %v2490 = vunpack.c.h.b16 %v2211
      %v2491 = vunpack.c.l.b16 %v2212
      %v2492 = vunpack.c.h.b16 %v2212
      %v2493 = vunpack.c.l.b16 %v2213
      %v2494 = vunpack.c.h.b16 %v2213
      %v2495 = vunpack.c.l.b16 %v2214
      %v2496 = vunpack.c.h.b16 %v2214
      %v2497 = vunpack.c.l.b16 %v2215
      %v2498 = vunpack.c.h.b16 %v2215
      %v2499 = vunpack.c.l.b16 %v2216
      %v2500 = vunpack.c.h.b16 %v2216
      %v2501 = vunpack.c.l.b16 %v2217
      %v2502 = vunpack.c.h.b16 %v2217
      %v2503 = vunpack.c.l.b16 %v2218
      %v2504 = vunpack.c.h.b16 %v2218
      %v2505 = vunpack.c.l.b16 %v2219
      %v2506 = vunpack.c.h.b16 %v2219
      %v2507 = vunpack.c.l.b16 %v2220
      %v2508 = vunpack.c.h.b16 %v2220
      %v2509 = vunpack.c.l.b16 %v2221
      %v2510 = vunpack.c.h.b16 %v2221
      %v2511 = vunpack.c.l.b16 %v2222
      %v2512 = vunpack.c.h.b16 %v2222
      %v2513 = vunpack.c.l.b16 %v2223
      %v2514 = vunpack.c.h.b16 %v2223
      %v2515 = vunpack.c.l.b16 %v2224
      %v2516 = vunpack.c.h.b16 %v2224
      %v2517 = vunpack.c.l.b16 %v2225
      %v2518 = vunpack.c.h.b16 %v2225
      %v2519 = vunpack.c.l.b16 %v2226
      %v2520 = vunpack.c.h.b16 %v2226
      %v2521 = vunpack.c.l.b16 %v2227
      %v2522 = vunpack.c.h.b16 %v2227
      %v2523 = vunpack.c.l.b16 %v2228
      %v2524 = vunpack.c.h.b16 %v2228
      %v2525 = vunpack.c.l.b16 %v2229
      %v2526 = vunpack.c.h.b16 %v2229
      %v2527 = vunpack.c.l.b16 %v2230
      %v2528 = vunpack.c.h.b16 %v2230
      %v2529 = vunpack.c.l.b16 %v2231
      %v2530 = vunpack.c.h.b16 %v2231
      %v2531 = vunpack.c.l.b16 %v2232
      %v2532 = vunpack.c.h.b16 %v2232
      %v2533 = vunpack.c.l.b16 %v2233
      %v2534 = vunpack.c.h.b16 %v2233
      %v2535 = vunpack.c.l.b16 %v2234
      %v2536 = vunpack.c.h.b16 %v2234
      %v2537 = vunpack.c.l.b16 %v2235
      %v2538 = vunpack.c.h.b16 %v2235
      %v2539 = vunpack.c.l.b16 %v2236
      %v2540 = vunpack.c.h.b16 %v2236
      %v2541 = vunpack.c.l.b16 %v2237
      %v2542 = vunpack.c.h.b16 %v2237
      %v2543 = vunpack.c.l.b16 %v2238
      %v2544 = vunpack.c.h.b16 %v2238
      %v2545 = vunpack.c.l.b16 %v2239
      %v2546 = vunpack.c.h.b16 %v2239
      %v2547 = vunpack.c.l.b16 %v2240
      %v2548 = vunpack.c.h.b16 %v2240
      %v2549 = vunpack.c.l.b16 %v2241
      %v2550 = vunpack.c.h.b16 %v2241
      %v2551 = vunpack.c.l.b16 %v2242
      %v2552 = vunpack.c.h.b16 %v2242
      %v2553 = vunpack.c.l.b16 %v2243
      %v2554 = vunpack.c.h.b16 %v2243
      %v2555 = vunpack.c.l.b16 %v2244
      %v2556 = vunpack.c.h.b16 %v2244
      %v2557 = vunpack.c.l.b16 %v2245
      %v2558 = vunpack.c.h.b16 %v2245
      %v2559 = vunpack.c.l.b16 %v2246
      %v2560 = vunpack.c.h.b16 %v2246
      %v2561 = vunpack.c.l.b16 %v2247
      %v2562 = vunpack.c.h.b16 %v2247
      %v2563 = vunpack.c.l.b16 %v2248
      %v2564 = vunpack.c.h.b16 %v2248
      %v2565 = vunpack.c.l.b16 %v2249
      %v2566 = vunpack.c.h.b16 %v2249
      %v2567 = vunpack.c.l.b16 %v2250
      %v2568 = vunpack.c.h.b16 %v2250
      %v2569 = vunpack.c.l.b16 %v2251
      %v2570 = vunpack.c.h.b16 %v2251
      %v2571 = vunpack.c.l.b16 %v2252
      %v2572 = vunpack.c.h.b16 %v2252
      %v2573 = vunpack.c.l.b16 %v2253
      %v2574 = vunpack.c.h.b16 %v2253
      %v2575 = vunpack.c.l.b16 %v2254
      %v2576 = vunpack.c.h.b16 %v2254
      %v2577 = vunpack.c.l.b16 %v2255
      %v2578 = vunpack.c.h.b16 %v2255
      %v2579 = vunpack.c.l.b16 %v2256
      %v2580 = vunpack.c.h.b16 %v2256
      %v2581 = vunpack.c.l.b16 %v2257
      %v2582 = vunpack.c.h.b16 %v2257
      %v2583 = vunpack.c.l.b16 %v2258
      %v2584 = vunpack.c.h.b16 %v2258
      %v2585 = vunpack.c.l.b16 %v2259
      %v2586 = vunpack.c.h.b16 %v2259
      %v2587 = vunpack.c.l.b16 %v2260
      %v2588 = vunpack.c.h.b16 %v2260
      %v2589 = vunpack.c.l.b16 %v2261
      %v2590 = vunpack.c.h.b16 %v2261
      %v2591 = vunpack.c.l.b16 %v2262
      %v2592 = vunpack.c.h.b16 %v2262
      %v2593 = vunpack.c.l.b16 %v2263
      %v2594 = vunpack.c.h.b16 %v2263
      %v2595 = vunpack.c.l.b16 %v2264
      %v2596 = vunpack.c.h.b16 %v2264
      %v2597 = vunpack.c.l.b16 %v2265
      %v2598 = vunpack.c.h.b16 %v2265
      %v2599 = vunpack.c.l.b16 %v2266
      %v2600 = vunpack.c.h.b16 %v2266
      %v2601 = vunpack.c.l.b16 %v2267
      %v2602 = vunpack.c.h.b16 %v2267
      %v2603 = vunpack.c.l.b16 %v2268
      %v2604 = vunpack.c.h.b16 %v2268
      %v2605 = vunpack.c.l.b16 %v2269
      %v2606 = vunpack.c.h.b16 %v2269
      %v2607 = vunpack.c.l.b16 %v2270
      %v2608 = vunpack.c.h.b16 %v2270
      %v2609 = vunpack.c.l.b16 %v2271
      %v2610 = vunpack.c.h.b16 %v2271
      %v2611 = vunpack.c.l.b16 %v2272
      %v2612 = vunpack.c.h.b16 %v2272
      %v2613 = vunpack.c.l.b16 %v2273
      %v2614 = vunpack.c.h.b16 %v2273
      %v2615 = vunpack.c.l.b16 %v2274
      %v2616 = vunpack.c.h.b16 %v2274
      %v2617 = vunpack.c.l.b16 %v2275
      %v2618 = vunpack.c.h.b16 %v2275
      %v2619 = vunpack.c.l.b16 %v2276
      %v2620 = vunpack.c.h.b16 %v2276
      %v2621 = vunpack.c.l.b16 %v2277
      %v2622 = vunpack.c.h.b16 %v2277
      %v2623 = vunpack.c.l.b16 %v2278
      %v2624 = vunpack.c.h.b16 %v2278
      %v2625 = vunpack.c.l.b16 %v2279
      %v2626 = vunpack.c.h.b16 %v2279
      %v2627 = vunpack.c.l.b16 %v2280
      %v2628 = vunpack.c.h.b16 %v2280
      %v2629 = vunpack.c.l.b16 %v2281
      %v2630 = vunpack.c.h.b16 %v2281
      %v2631 = vunpack.c.l.b16 %v2282
      %v2632 = vunpack.c.h.b16 %v2282
      %v2633 = vunpack.c.l.b16 %v2283
      %v2634 = vunpack.c.h.b16 %v2283
      %v2635 = vunpack.c.l.b16 %v2284
      %v2636 = vunpack.c.h.b16 %v2284
      %v2637 = vunpack.c.l.b16 %v2285
      %v2638 = vunpack.c.h.b16 %v2285
      %v2639 = vunpack.c.l.b16 %v2286
      %v2640 = vunpack.c.h.b16 %v2286
      %v2641 = vunpack.c.l.b16 %v2287
      %v2642 = vunpack.c.h.b16 %v2287
      %v2643 = vunpack.c.l.b16 %v2288
      %v2644 = vunpack.c.h.b16 %v2288
      %v2645 = vunpack.c.l.b16 %v2289
      %v2646 = vunpack.c.h.b16 %v2289
      %v2647 = vunpack.c.l.b16 %v2290
      %v2648 = vunpack.c.h.b16 %v2290
      %v2649 = vunpack.c.l.b16 %v2291
      %v2650 = vunpack.c.h.b16 %v2291
      %v2651 = vunpack.c.l.b16 %v2292
      %v2652 = vunpack.c.h.b16 %v2292
      %v2653 = vunpack.c.l.b16 %v2293
      %v2654 = vunpack.c.h.b16 %v2293
      %v2655 = vunpack.c.l.b16 %v2294
      %v2656 = vunpack.c.h.b16 %v2294
      %v2657 = vunpack.c.l.b16 %v2295
      %v2658 = vunpack.c.h.b16 %v2295
      %v2659 = vunpack.c.l.b16 %v2296
      %v2660 = vunpack.c.h.b16 %v2296
      %v2661 = vunpack.c.l.b16 %v2297
      %v2662 = vunpack.c.h.b16 %v2297
      %v2663 = vunpack.c.l.b16 %v2298
      %v2664 = vunpack.c.h.b16 %v2298
      %v2665 = vunpack.c.l.b16 %v2299
      %v2666 = vunpack.c.h.b16 %v2299
      %v2667 = vunpack.c.l.b16 %v2300
      %v2668 = vunpack.c.h.b16 %v2300
      %v2669 = vunpack.c.l.b16 %v2301
      %v2670 = vunpack.c.h.b16 %v2301
      %v2671 = vunpack.c.l.b16 %v2302
      %v2672 = vunpack.c.h.b16 %v2302
      %v2673 = vunpack.c.l.b16 %v2303
      %v2674 = vunpack.c.h.b16 %v2303
      %v2675 = vunpack.c.l.b16 %v2304
      %v2676 = vunpack.c.h.b16 %v2304
      %v2677 = vunpack.c.l.b16 %v2305
      %v2678 = vunpack.c.h.b16 %v2305
      %v2679 = vunpack.c.l.b16 %v2306
      %v2680 = vunpack.c.h.b16 %v2306
      %v2681 = vunpack.c.l.b16 %v2307
      %v2682 = vunpack.c.h.b16 %v2307
      %v2683 = vunpack.c.l.b16 %v2308
      %v2684 = vunpack.c.h.b16 %v2308
      %v2685 = vunpack.c.l.b16 %v2309
      %v2686 = vunpack.c.h.b16 %v2309
      %v2687 = vunpack.c.l.b16 %v2310
      %v2688 = vunpack.c.h.b16 %v2310
      %v2689 = vunpack.c.l.b16 %v2311
      %v2690 = vunpack.c.h.b16 %v2311
      %v2691 = vunpack.c.l.b16 %v2312
      %v2692 = vunpack.c.h.b16 %v2312
      %v2693 = vunpack.c.l.b16 %v2313
      %v2694 = vunpack.c.h.b16 %v2313
      %v2695 = vunpack.c.l.b16 %v2314
      %v2696 = vunpack.c.h.b16 %v2314
      %v2697 = vunpack.c.l.b16 %v2315
      %v2698 = vunpack.c.h.b16 %v2315
      %v2699 = vunpack.c.l.b16 %v2316
      %v2700 = vunpack.c.h.b16 %v2316
      %v2701 = vunpack.c.l.b16 %v2317
      %v2702 = vunpack.c.h.b16 %v2317
      %v2703 = vunpack.c.l.b16 %v2318
      %v2704 = vunpack.c.h.b16 %v2318
      %v2705 = vunpack.c.l.b16 %v2319
      %v2706 = vunpack.c.h.b16 %v2319
      %v2707 = vunpack.c.l.b16 %v2320
      %v2708 = vunpack.c.h.b16 %v2320
      %v2709 = vunpack.c.l.b16 %v2321
      %v2710 = vunpack.c.h.b16 %v2321
      %v2711 = vunpack.c.l.b16 %v2322
      %v2712 = vunpack.c.h.b16 %v2322
      %v2713 = vunpack.c.l.b16 %v2323
      %v2714 = vunpack.c.h.b16 %v2323
      %v2715 = vunpack.c.l.b16 %v2324
      %v2716 = vunpack.c.h.b16 %v2324
      %v2717 = vunpack.c.l.b16 %v2325
      %v2718 = vunpack.c.h.b16 %v2325
      %v2719 = vunpack.c.l.b16 %v2326
      %v2720 = vunpack.c.h.b16 %v2326
      %v2721 = vunpack.c.l.b16 %v2327
      %v2722 = vunpack.c.h.b16 %v2327
      %v2723 = vunpack.c.l.b16 %v2328
      %v2724 = vunpack.c.h.b16 %v2328
      %v2725 = vunpack.c.l.b16 %v2329
      %v2726 = vunpack.c.h.b16 %v2329
      %v2727 = vunpack.c.l.b16 %v2330
      %v2728 = vunpack.c.h.b16 %v2330
      %v2729 = vunpack.c.l.b16 %v2331
      %v2730 = vunpack.c.h.b16 %v2331
      %v2731 = vunpack.c.l.b16 %v2332
      %v2732 = vunpack.c.h.b16 %v2332
      %v2733 = vunpack.c.l.b16 %v2333
      %v2734 = vunpack.c.h.b16 %v2333
      %v2735 = vunpack.c.l.b16 %v2334
      %v2736 = vunpack.c.h.b16 %v2334
      %v2737 = vunpack.c.l.b16 %v2335
      %v2738 = vunpack.c.h.b16 %v2335
      %v2739 = vunpack.c.l.b16 %v2336
      %v2740 = vunpack.c.h.b16 %v2336
      %v2741 = vunpack.c.l.b16 %v2337
      %v2742 = vunpack.c.h.b16 %v2337
      %v2743 = vunpack.c.l.b16 %v2338
      %v2744 = vunpack.c.h.b16 %v2338
      %v2745 = vpack.c.b16 %v2493, %v2489
      %v2746 = vpack.c.b16 %v2494, %v2490
      %v2747 = vpack.c.b16 %v2495, %v2491
      %v2748 = vpack.c.b16 %v2496, %v2492
      %v2749 = vpack.c.b16 %v2501, %v2497
      %v2750 = vpack.c.b16 %v2502, %v2498
      %v2751 = vpack.c.b16 %v2503, %v2499
      %v2752 = vpack.c.b16 %v2504, %v2500
      %v2753 = vpack.c.b16 %v2509, %v2505
      %v2754 = vpack.c.b16 %v2510, %v2506
      %v2755 = vpack.c.b16 %v2511, %v2507
      %v2756 = vpack.c.b16 %v2512, %v2508
      %v2757 = vpack.c.b16 %v2517, %v2513
      %v2758 = vpack.c.b16 %v2518, %v2514
      %v2759 = vpack.c.b16 %v2519, %v2515
      %v2760 = vpack.c.b16 %v2520, %v2516
      %v2761 = vpack.c.b16 %v2525, %v2521
      %v2762 = vpack.c.b16 %v2526, %v2522
      %v2763 = vpack.c.b16 %v2527, %v2523
      %v2764 = vpack.c.b16 %v2528, %v2524
      %v2765 = vpack.c.b16 %v2533, %v2529
      %v2766 = vpack.c.b16 %v2534, %v2530
      %v2767 = vpack.c.b16 %v2535, %v2531
      %v2768 = vpack.c.b16 %v2536, %v2532
      %v2769 = vpack.c.b16 %v2541, %v2537
      %v2770 = vpack.c.b16 %v2542, %v2538
      %v2771 = vpack.c.b16 %v2543, %v2539
      %v2772 = vpack.c.b16 %v2544, %v2540
      %v2773 = vpack.c.b16 %v2549, %v2545
      %v2774 = vpack.c.b16 %v2550, %v2546
      %v2775 = vpack.c.b16 %v2551, %v2547
      %v2776 = vpack.c.b16 %v2552, %v2548
      %v2777 = vpack.c.b16 %v2557, %v2553
      %v2778 = vpack.c.b16 %v2558, %v2554
      %v2779 = vpack.c.b16 %v2559, %v2555
      %v2780 = vpack.c.b16 %v2560, %v2556
      %v2781 = vpack.c.b16 %v2565, %v2561
      %v2782 = vpack.c.b16 %v2566, %v2562
      %v2783 = vpack.c.b16 %v2567, %v2563
      %v2784 = vpack.c.b16 %v2568, %v2564
      %v2785 = vpack.c.b16 %v2573, %v2569
      %v2786 = vpack.c.b16 %v2574, %v2570
      %v2787 = vpack.c.b16 %v2575, %v2571
      %v2788 = vpack.c.b16 %v2576, %v2572
      %v2789 = vpack.c.b16 %v2581, %v2577
      %v2790 = vpack.c.b16 %v2582, %v2578
      %v2791 = vpack.c.b16 %v2583, %v2579
      %v2792 = vpack.c.b16 %v2584, %v2580
      %v2793 = vpack.c.b16 %v2589, %v2585
      %v2794 = vpack.c.b16 %v2590, %v2586
      %v2795 = vpack.c.b16 %v2591, %v2587
      %v2796 = vpack.c.b16 %v2592, %v2588
      %v2797 = vpack.c.b16 %v2597, %v2593
      %v2798 = vpack.c.b16 %v2598, %v2594
      %v2799 = vpack.c.b16 %v2599, %v2595
      %v2800 = vpack.c.b16 %v2600, %v2596
      %v2801 = vpack.c.b16 %v2605, %v2601
      %v2802 = vpack.c.b16 %v2606, %v2602
      %v2803 = vpack.c.b16 %v2607, %v2603
      %v2804 = vpack.c.b16 %v2608, %v2604
      %v2805 = vpack.c.b16 %v2613, %v2609
      %v2806 = vpack.c.b16 %v2614, %v2610
      %v2807 = vpack.c.b16 %v2615, %v2611
      %v2808 = vpack.c.b16 %v2616, %v2612
      %v2809 = vpack.c.b16 %v2621, %v2617
      %v2810 = vpack.c.b16 %v2622, %v2618
      %v2811 = vpack.c.b16 %v2623, %v2619
      %v2812 = vpack.c.b16 %v2624, %v2620
      %v2813 = vpack.c.b16 %v2629, %v2625
      %v2814 = vpack.c.b16 %v2630, %v2626
      %v2815 = vpack.c.b16 %v2631, %v2627
      %v2816 = vpack.c.b16 %v2632, %v2628
      %v2817 = vpack.c.b16 %v2637, %v2633
      %v2818 = vpack.c.b16 %v2638, %v2634
      %v2819 = vpack.c.b16 %v2639, %v2635
      %v2820 = vpack.c.b16 %v2640, %v2636
      %v2821 = vpack.c.b16 %v2645, %v2641
      %v2822 = vpack.c.b16 %v2646, %v2642
      %v2823 = vpack.c.b16 %v2647, %v2643
      %v2824 = vpack.c.b16 %v2648, %v2644
      %v2825 = vpack.c.b16 %v2653, %v2649
      %v2826 = vpack.c.b16 %v2654, %v2650
      %v2827 = vpack.c.b16 %v2655, %v2651
      %v2828 = vpack.c.b16 %v2656, %v2652
      %v2829 = vpack.c.b16 %v2661, %v2657
      %v2830 = vpack.c.b16 %v2662, %v2658
      %v2831 = vpack.c.b16 %v2663, %v2659
      %v2832 = vpack.c.b16 %v2664, %v2660
      %v2833 = vpack.c.b16 %v2669, %v2665
      %v2834 = vpack.c.b16 %v2670, %v2666
      %v2835 = vpack.c.b16 %v2671, %v2667
      %v2836 = vpack.c.b16 %v2672, %v2668
      %v2837 = vpack.c.b16 %v2677, %v2673
      %v2838 = vpack.c.b16 %v2678, %v2674
      %v2839 = vpack.c.b16 %v2679, %v2675
      %v2840 = vpack.c.b16 %v2680, %v2676
      %v2841 = vpack.c.b16 %v2685, %v2681
      %v2842 = vpack.c.b16 %v2686, %v2682
      %v2843 = vpack.c.b16 %v2687, %v2683
      %v2844 = vpack.c.b16 %v2688, %v2684
      %v2845 = vpack.c.b16 %v2693, %v2689
      %v2846 = vpack.c.b16 %v2694, %v2690
      %v2847 = vpack.c.b16 %v2695, %v2691
      %v2848 = vpack.c.b16 %v2696, %v2692
      %v2849 = vpack.c.b16 %v2701, %v2697
      %v2850 = vpack.c.b16 %v2702, %v2698
      %v2851 = vpack.c.b16 %v2703, %v2699
      %v2852 = vpack.c.b16 %v2704, %v2700
      %v2853 = vpack.c.b16 %v2709, %v2705
      %v2854 = vpack.c.b16 %v2710, %v2706
      %v2855 = vpack.c.b16 %v2711, %v2707
      %v2856 = vpack.c.b16 %v2712, %v2708
      %v2857 = vpack.c.b16 %v2717, %v2713
      %v2858 = vpack.c.b16 %v2718, %v2714
      %v2859 = vpack.c.b16 %v2719, %v2715
      %v2860 = vpack.c.b16 %v2720, %v2716
      %v2861 = vpack.c.b16 %v2725, %v2721
      %v2862 = vpack.c.b16 %v2726, %v2722
      %v2863 = vpack.c.b16 %v2727, %v2723
      %v2864 = vpack.c.b16 %v2728, %v2724
      %v2865 = vpack.c.b16 %v2733, %v2729
      %v2866 = vpack.c.b16 %v2734, %v2730
      %v2867 = vpack.c.b16 %v2735, %v2731
      %v2868 = vpack.c.b16 %v2736, %v2732
      %v2869 = vpack.c.b16 %v2741, %v2737
      %v2870 = vpack.c.b16 %v2742, %v2738
      %v2871 = vpack.c.b16 %v2743, %v2739
      %v2872 = vpack.c.b16 %v2744, %v2740
      %3001 = vmatprep.subr.bf16.mxu0 %v2746
      %3002 = vmatpush1.bf16.msra.mxu0 %v2745
      %3003 = vmatprep.subr.bf16.mxu0 %v2750
      %3004 = vmatpush1.bf16.msra.mxu0 %v2749
      %3005 = vmatprep.subr.bf16.mxu0 %v2754
      %3006 = vmatpush1.bf16.msra.mxu0 %v2753
      %3007 = vmatprep.subr.bf16.mxu0 %v2758
      %3008 = vmatpush1.bf16.msra.mxu0 %v2757
      %3009 = vmatprep.subr.bf16.mxu0 %v2762
      %3010 = vmatpush1.bf16.msra.mxu0 %v2761
      %3011 = vmatprep.subr.bf16.mxu0 %v2766
      %3012 = vmatpush1.bf16.msra.mxu0 %v2765
      %3013 = vmatprep.subr.bf16.mxu0 %v2770
      %3014 = vmatpush1.bf16.msra.mxu0 %v2769
      %3015 = vmatprep.subr.bf16.mxu0 %v2774
      %3016 = vmatpush1.bf16.msra.mxu0 %v2773
      %3017 = vmatprep.subr.bf16.mxu0 %v2778
      %3018 = vmatpush1.bf16.msra.mxu0 %v2777
      %3019 = vmatprep.subr.bf16.mxu0 %v2782
      %3020 = vmatpush1.bf16.msra.mxu0 %v2781
      %3021 = vmatprep.subr.bf16.mxu0 %v2786
      %3022 = vmatpush1.bf16.msra.mxu0 %v2785
      %3023 = vmatprep.subr.bf16.mxu0 %v2790
      %3024 = vmatpush1.bf16.msra.mxu0 %v2789
      %3025 = vmatprep.subr.bf16.mxu0 %v2794
      %3026 = vmatpush1.bf16.msra.mxu0 %v2793
      %3027 = vmatprep.subr.bf16.mxu0 %v2798
      %3028 = vmatpush1.bf16.msra.mxu0 %v2797
      %3029 = vmatprep.subr.bf16.mxu0 %v2802
      %3030 = vmatpush1.bf16.msra.mxu0 %v2801
      %3031 = vmatprep.subr.bf16.mxu0 %v2806
      %3032 = vmatpush1.bf16.msra.mxu0 %v2805
      %3033 = vmatprep.mubr.bf16.mxu0 %v2208
      %3034 = vmatmul.mubr.bf16.gmra.mrb[0].mxu0 %v2207
      %v3035 = vpop.f32.mrb[0].mxu0
      %v3036 = vadd.f32 %v2344, %v3035
      %v3037 = vpop.f32.mrb[0].mxu0
      %v3038 = vadd.f32 %v2348, %v3037
      %v3039 = vpop.f32.mrb[0].mxu0
      %v3040 = vadd.f32 %v2344, %v3039
      %v3041 = vpop.f32.mrb[0].mxu0
      %v3042 = vadd.f32 %v2348, %v3041
      %3043 = vdwg.mxu0
      %3044 = vmatprep.subr.bf16.mxu0 %v2810
      %3045 = vmatpush1.bf16.msra.mxu0 %v2809
      %3046 = vmatprep.subr.bf16.mxu0 %v2814
      %3047 = vmatpush1.bf16.msra.mxu0 %v2813
      %3048 = vmatprep.subr.bf16.mxu0 %v2818
      %3049 = vmatpush1.bf16.msra.mxu0 %v2817
      %3050 = vmatprep.subr.bf16.mxu0 %v2822
      %3051 = vmatpush1.bf16.msra.mxu0 %v2821
      %3052 = vmatprep.subr.bf16.mxu0 %v2826
      %3053 = vmatpush1.bf16.msra.mxu0 %v2825
      %3054 = vmatprep.subr.bf16.mxu0 %v2830
      %3055 = vmatpush1.bf16.msra.mxu0 %v2829
      %3056 = vmatprep.subr.bf16.mxu0 %v2834
      %3057 = vmatpush1.bf16.msra.mxu0 %v2833
      %3058 = vmatprep.subr.bf16.mxu0 %v2838
      %3059 = vmatpush1.bf16.msra.mxu0 %v2837
      %3060 = vmatprep.subr.bf16.mxu0 %v2842
      %3061 = vmatpush1.bf16.msra.mxu0 %v2841
      %3062 = vmatprep.subr.bf16.mxu0 %v2846
      %3063 = vmatpush1.bf16.msra.mxu0 %v2845
      %3064 = vmatprep.subr.bf16.mxu0 %v2850
      %3065 = vmatpush1.bf16.msra.mxu0 %v2849
      %3066 = vmatprep.subr.bf16.mxu0 %v2854
      %3067 = vmatpush1.bf16.msra.mxu0 %v2853
      %3068 = vmatprep.subr.bf16.mxu0 %v2858
      %3069 = vmatpush1.bf16.msra.mxu0 %v2857
      %3070 = vmatprep.subr.bf16.mxu0 %v2862
      %3071 = vmatpush1.bf16.msra.mxu0 %v2861
      %3072 = vmatprep.subr.bf16.mxu0 %v2866
      %3073 = vmatpush1.bf16.msra.mxu0 %v2865
      %3074 = vmatprep.subr.bf16.mxu0 %v2870
      %3075 = vmatpush1.bf16.msra.mxu0 %v2869
      %3076 = vmatprep.mubr.bf16.mxu0 %v2210
      %3077 = vmatmul.mubr.bf16.gmra.mrb[0].mxu0 %v2209
      %v3078 = vpop.f32.mrb[0].mxu0
      %v3079 = vadd.f32 %v3036, %v3078
      %v3080 = vpop.f32.mrb[0].mxu0
      %v3081 = vadd.f32 %v3038, %v3080
      %v3082 = vpop.f32.mrb[0].mxu0
      %v3083 = vadd.f32 %v3040, %v3082
      %v3084 = vpop.f32.mrb[0].mxu0
      %v3085 = vadd.f32 %v3042, %v3084
      %3086 = vdwg.mxu0
      %3087 = vmatprep.subr.bf16.mxu0 %v2748
      %3088 = vmatpush1.bf16.msra.mxu0 %v2747
      %3089 = vmatprep.subr.bf16.mxu0 %v2752
      %3090 = vmatpush1.bf16.msra.mxu0 %v2751
      %3091 = vmatprep.subr.bf16.mxu0 %v2756
      %3092 = vmatpush1.bf16.msra.mxu0 %v2755
      %3093 = vmatprep.subr.bf16.mxu0 %v2760
      %3094 = vmatpush1.bf16.msra.mxu0 %v2759
      %3095 = vmatprep.subr.bf16.mxu0 %v2764
      %3096 = vmatpush1.bf16.msra.mxu0 %v2763
      %3097 = vmatprep.subr.bf16.mxu0 %v2768
      %3098 = vmatpush1.bf16.msra.mxu0 %v2767
      %3099 = vmatprep.subr.bf16.mxu0 %v2772
      %3100 = vmatpush1.bf16.msra.mxu0 %v2771
      %3101 = vmatprep.subr.bf16.mxu0 %v2776
      %3102 = vmatpush1.bf16.msra.mxu0 %v2775
      %3103 = vmatprep.subr.bf16.mxu0 %v2780
      %3104 = vmatpush1.bf16.msra.mxu0 %v2779
      %3105 = vmatprep.subr.bf16.mxu0 %v2784
      %3106 = vmatpush1.bf16.msra.mxu0 %v2783
      %3107 = vmatprep.subr.bf16.mxu0 %v2788
      %3108 = vmatpush1.bf16.msra.mxu0 %v2787
      %3109 = vmatprep.subr.bf16.mxu0 %v2792
      %3110 = vmatpush1.bf16.msra.mxu0 %v2791
      %3111 = vmatprep.subr.bf16.mxu0 %v2796
      %3112 = vmatpush1.bf16.msra.mxu0 %v2795
      %3113 = vmatprep.subr.bf16.mxu0 %v2800
      %3114 = vmatpush1.bf16.msra.mxu0 %v2799
      %3115 = vmatprep.subr.bf16.mxu0 %v2804
      %3116 = vmatpush1.bf16.msra.mxu0 %v2803
      %3117 = vmatprep.subr.bf16.mxu0 %v2808
      %3118 = vmatpush1.bf16.msra.mxu0 %v2807
      %3119 = vmatprep.mubr.bf16.mxu0 %v2208
      %3120 = vmatmul.mubr.bf16.gmra.mrb[0].mxu0 %v2207
      %v3121 = vpop.f32.mrb[0].mxu0
      %v3122 = vadd.f32 %v2352, %v3121
      %v3123 = vpop.f32.mrb[0].mxu0
      %v3124 = vadd.f32 %v2356, %v3123
      %v3125 = vpop.f32.mrb[0].mxu0
      %v3126 = vadd.f32 %v2352, %v3125
      %v3127 = vpop.f32.mrb[0].mxu0
      %v3128 = vadd.f32 %v2356, %v3127
      %3129 = vdwg.mxu0
      %3130 = vmatprep.subr.bf16.mxu0 %v2812
      %3131 = vmatpush1.bf16.msra.mxu0 %v2811
      %3132 = vmatprep.subr.bf16.mxu0 %v2816
      %3133 = vmatpush1.bf16.msra.mxu0 %v2815
      %3134 = vmatprep.subr.bf16.mxu0 %v2820
      %3135 = vmatpush1.bf16.msra.mxu0 %v2819
      %3136 = vmatprep.subr.bf16.mxu0 %v2824
      %3137 = vmatpush1.bf16.msra.mxu0 %v2823
      %3138 = vmatprep.subr.bf16.mxu0 %v2828
      %3139 = vmatpush1.bf16.msra.mxu0 %v2827
      %3140 = vmatprep.subr.bf16.mxu0 %v2832
      %3141 = vmatpush1.bf16.msra.mxu0 %v2831
      %3142 = vmatprep.subr.bf16.mxu0 %v2836
      %3143 = vmatpush1.bf16.msra.mxu0 %v2835
      %3144 = vmatprep.subr.bf16.mxu0 %v2840
      %3145 = vmatpush1.bf16.msra.mxu0 %v2839
      %3146 = vmatprep.subr.bf16.mxu0 %v2844
      %3147 = vmatpush1.bf16.msra.mxu0 %v2843
      %3148 = vmatprep.subr.bf16.mxu0 %v2848
      %3149 = vmatpush1.bf16.msra.mxu0 %v2847
      %3150 = vmatprep.subr.bf16.mxu0 %v2852
      %3151 = vmatpush1.bf16.msra.mxu0 %v2851
      %3152 = vmatprep.subr.bf16.mxu0 %v2856
      %3153 = vmatpush1.bf16.msra.mxu0 %v2855
      %3154 = vmatprep.subr.bf16.mxu0 %v2860
      %3155 = vmatpush1.bf16.msra.mxu0 %v2859
      %3156 = vmatprep.subr.bf16.mxu0 %v2864
      %3157 = vmatpush1.bf16.msra.mxu0 %v2863
      %3158 = vmatprep.subr.bf16.mxu0 %v2868
      %3159 = vmatpush1.bf16.msra.mxu0 %v2867
      %3160 = vmatprep.subr.bf16.mxu0 %v2872
      %3161 = vmatpush1.bf16.msra.mxu0 %v2871
      %3162 = vmatprep.mubr.bf16.mxu0 %v2210
      %3163 = vmatmul.mubr.bf16.gmra.mrb[0].mxu0 %v2209
      %v3164 = vpop.f32.mrb[0].mxu0
      %v3165 = vadd.f32 %v3122, %v3164
      %v3166 = vpop.f32.mrb[0].mxu0
      %v3167 = vadd.f32 %v3124, %v3166
      %v3168 = vpop.f32.mrb[0].mxu0
      %v3169 = vadd.f32 %v3126, %v3168
      %v3170 = vpop.f32.mrb[0].mxu0
      %v3171 = vadd.f32 %v3128, %v3170
      %3172 = vdwg.mxu0
      %vm3173 = vcmp.ge.f32.partialorder %v3079, 0.0
      %vm3174 = vcmp.ge.f32.partialorder %v3081, 0.0
      %vm3175 = vcmp.ge.f32.partialorder %v3165, 0.0
      %vm3176 = vcmp.ge.f32.partialorder %v3167, 0.0
      %vm3177 = vcmp.ge.f32.partialorder %v3083, 0.0
      %vm3178 = vcmp.ge.f32.partialorder %v3085, 0.0
      %vm3179 = vcmp.ge.f32.partialorder %v3169, 0.0
      %vm3180 = vcmp.ge.f32.partialorder %v3171, 0.0
      %v3181 = vmul.f32 %v3079, 0.01
      %v3182 = vmul.f32 %v3081, 0.01
      %v3183 = vmul.f32 %v3165, 0.01
      %v3184 = vmul.f32 %v3167, 0.01
      %v3185 = vmul.f32 %v3083, 0.01
      %v3186 = vmul.f32 %v3085, 0.01
      %v3187 = vmul.f32 %v3169, 0.01
      %v3188 = vmul.f32 %v3171, 0.01
      %v3189 = vsel %vm3173, %v3079, %v3181
      %v3190 = vsel %vm3174, %v3081, %v3182
      %v3191 = vsel %vm3175, %v3165, %v3183
      %v3192 = vsel %vm3176, %v3167, %v3184
      %v3193 = vsel %vm3177, %v3083, %v3185
      %v3194 = vsel %vm3178, %v3085, %v3186
      %v3195 = vsel %vm3179, %v3169, %v3187
      %v3196 = vsel %vm3180, %v3171, %v3188
      %v3197 = vpack.c.bf16 %v3193, %v3189
      %v3198 = vpack.c.bf16 %v3194, %v3190
      %v3199 = vpack.c.bf16 %v3195, %v3191
      %v3200 = vpack.c.bf16 %v3196, %v3192
      %v3205 = vunpack.c.l.b16 %v3197
      %v3206 = vunpack.c.l.b16 %v3198
      %v3207 = vunpack.c.l.b16 %v3199
      %v3208 = vunpack.c.l.b16 %v3200
      %v3209 = vunpack.c.h.b16 %v3197
      %v3210 = vunpack.c.h.b16 %v3198
      %v3211 = vunpack.c.h.b16 %v3199
      %v3212 = vunpack.c.h.b16 %v3200
      %v3213 = vpack.c.b16 %v3206, %v3205
      %v3214 = vpack.c.b16 %v3208, %v3207
      %v3215 = vpack.c.b16 %v3210, %v3209
      %v3216 = vpack.c.b16 %v3212, %v3211
      %3221 = vst [vmem:[%s231] sm:$0xff] %v3213
      %3222 = vst [vmem:[%s231 + $0x8] sm:$0xff] %v3214
      %3223 = vst [vmem:[%s231 + $0x10] sm:$0xff] %v3215
      %3224 = vst [vmem:[%s231 + $0x18] sm:$0xff] %v3216
      %s3225 = smul.u32 2, %s16
      %p3226 = scmp.lt.s32.totalorder %s3225, 3
      %s3227 = scalar_select %p3226, %s3225, 3
      %s3228 = smul.addr %s3227, 4
      %s3229 = smul.addr %s3228, 4
      %s3230 = scalar_lea.vmem %s5, %s3229
      // Predicated region
      $region41: #{discriminator_forward.8} parent=39 // pred_check
        %p3231 = pneg %p144
      $region42: #{discriminator_forward.8} parent=39 // pred_check_branch
        %3233 = sbr.rel (%p3231) target = $region44
      $region43: #{discriminator_forward.8} parent=39 // pred_region
        %s3234 = smul.u32 2, %s16
      $region44: #{discriminator_forward.8} parent=39 // pred_fallthru
        _
    $region40: #{discriminator_forward.8} parent=5 // pred_fallthru
      _
    %p3235 = scmp.le.s32.totalorder 2, %s11
    // Predicated region
    $region45: #{discriminator_forward.8} parent=5 // pred_check
      %p3236 = pneg %p3235
    $region46: #{discriminator_forward.8} parent=5 // pred_check_branch
      %3238 = sbr.rel (%p3236) target = $region48
    $region47: #{discriminator_forward.8} parent=5 // pred_region
      %s3239 = ssub.s32 %s11, 2
      // Predicated region
      $region49: #{discriminator_forward.8} parent=47 // pred_check
        %p3240 = pneg %p150
      $region50: #{discriminator_forward.8} parent=47 // pred_check_branch
        %3242 = sbr.rel (%p3240) target = $region52
      $region51: #{discriminator_forward.8} parent=47 // pred_region
        %s3243 = smul.u32 2, %s17
        %p3244 = scmp.lt.s32.totalorder %s3243, 3
        %s3245 = scalar_select %p3244, %s3243, 3
        %s3246 = smul.addr %s3245, 4
        %s3247 = smul.addr %s3246, 4
        %s3248 = scalar_lea.vmem %s5, %s3247
      $region52: #{discriminator_forward.8} parent=47 // pred_fallthru
        _
    $region48: #{discriminator_forward.8} parent=5 // pred_fallthru
      _
  $region6: #{discriminator_forward.8} parent=0 // loop_footer
    %s15 = sadd.s32 1, %s11
  $region7: #{discriminator_forward.8} parent=0 // loop_footer_branch
    %10 = sbr.rel target = $region3
  $region8: #{discriminator_forward.8} parent=0 // loop_exit
    _

// kernel: discriminator_forward.9
$region0: #{discriminator_forward.9}
  #allocation0 [shape = 'u32[]', space=smem, size = 0x4, offset = 0x4, fixed_abs, tag = 'smem constant byte address 0x4 - core index']
  #allocation1 [shape = 'u32[144,128]{1,0:T(1,128)}', space=vmem, size = 0x12000, scoped, tag = 'internal scratch']
  #allocation2 [shape = 'f32[1,1]{1,0:T(1,128)S(1)}', space=vmem, size = 0x200, scoped, tag = 'scoped memory for discriminator_forward.9']
  %s0 = inlined_call_operand.vmem [shape: bf16[8,2048], index: 0, kind: input, shape index: {}]
  %s1 = inlined_call_operand.vmem [shape: bf16[2048,32], index: 1, kind: input, shape index: {}]
  %s2 = inlined_call_operand.vmem [shape: f32[1,32], index: 2, kind: input, shape index: {}]
  %s3 = inlined_call_operand.vmem [shape: bf16[32,3], index: 3, kind: input, shape index: {}]
  %s4 = inlined_call_operand.vmem [shape: f32[1,3], index: 4, kind: input, shape index: {}]
  %s5 = inlined_call_operand.vmem [shape: bf16[8,3], index: 5, kind: input, shape index: {}]
  %s6 = inlined_call_operand.vmem [shape: f32[1,3], index: 6, kind: input, shape index: {}]
  %s7 = inlined_call_operand.vmem [shape: f32[1,3], index: 7, kind: input, shape index: {}]
  %s8 = inlined_call_operand.<no memory space> [shape: f32[1,1], index: 8, kind: input, shape index: {}]
  %s9 = inlined_call_operand.vmem [shape: f32[8,1], index: 9, kind: output, shape index: {}]
  %s10 = sld [smem:[#allocation0]]
  $region46: #{discriminator_forward.9} parent=0
    _
  %s12 = ssub.s32 1, %s10
  %s13 = scalar_select 0, %s12, %s10
  %v14 = vstv %s8
  %15 = vst [vmem:[#allocation2] sm:$0x1] %v14
  // Predicated region
  $region2: #{discriminator_forward.9} parent=0 // pred_check
    _
  $region3: #{discriminator_forward.9} parent=0 // pred_check_branch
    %17 = sbr.rel (0) target = $region5
  $region4: #{discriminator_forward.9} parent=0 // pred_region
    _
  $region5: #{discriminator_forward.9} parent=0 // pred_fallthru
    _
  // Predicated region
  $region6: #{discriminator_forward.9} parent=0 // pred_check
    _
  $region7: #{discriminator_forward.9} parent=0 // pred_check_branch
    %19 = sbr.rel (0) target = $region9
  $region8: #{discriminator_forward.9} parent=0 // pred_region
    _
  $region9: #{discriminator_forward.9} parent=0 // pred_fallthru
    _
  // Predicated region
  $region10: #{discriminator_forward.9} parent=0 // pred_check
    _
  $region11: #{discriminator_forward.9} parent=0 // pred_check_branch
    %21 = sbr.rel (0) target = $region13
  $region12: #{discriminator_forward.9} parent=0 // pred_region
    _
  $region13: #{discriminator_forward.9} parent=0 // pred_fallthru
    _
  // Predicated region
  $region14: #{discriminator_forward.9} parent=0 // pred_check
    _
  $region15: #{discriminator_forward.9} parent=0 // pred_check_branch
    %23 = sbr.rel (0) target = $region17
  $region16: #{discriminator_forward.9} parent=0 // pred_region
    _
  $region17: #{discriminator_forward.9} parent=0 // pred_fallthru
    _
  // Predicated region
  $region18: #{discriminator_forward.9} parent=0 // pred_check
    _
  $region19: #{discriminator_forward.9} parent=0 // pred_check_branch
    %25 = sbr.rel (0) target = $region21
  $region20: #{discriminator_forward.9} parent=0 // pred_region
    _
  $region21: #{discriminator_forward.9} parent=0 // pred_fallthru
    _
  // Predicated region
  $region22: #{discriminator_forward.9} parent=0 // pred_check
    _
  $region23: #{discriminator_forward.9} parent=0 // pred_check_branch
    %27 = sbr.rel (0) target = $region25
  $region24: #{discriminator_forward.9} parent=0 // pred_region
    _
  $region25: #{discriminator_forward.9} parent=0 // pred_fallthru
    _
  // Predicated region
  $region26: #{discriminator_forward.9} parent=0 // pred_check
    _
  $region27: #{discriminator_forward.9} parent=0 // pred_check_branch
    %29 = sbr.rel (0) target = $region29
  $region28: #{discriminator_forward.9} parent=0 // pred_region
    _
  $region29: #{discriminator_forward.9} parent=0 // pred_fallthru
    _
  // Predicated region
  $region30: #{discriminator_forward.9} parent=0 // pred_check
    _
  $region31: #{discriminator_forward.9} parent=0 // pred_check_branch
    %31 = sbr.rel (0) target = $region33
  $region32: #{discriminator_forward.9} parent=0 // pred_region
    _
  $region33: #{discriminator_forward.9} parent=0 // pred_fallthru
    _
  // Predicated region
  $region34: #{discriminator_forward.9} parent=0 // pred_check
    _
  $region35: #{discriminator_forward.9} parent=0 // pred_check_branch
    %33 = sbr.rel (0) target = $region37
  $region36: #{discriminator_forward.9} parent=0 // pred_region
    _
  $region37: #{discriminator_forward.9} parent=0 // pred_fallthru
    _
  %v35 = vld [vmem:[%s0] sm:$0xff]
  %v36 = vld [vmem:[%s0 + $0x8] sm:$0xff]
  %v37 = vld [vmem:[%s0 + $0x10] sm:$0xff]
  %v38 = vld [vmem:[%s0 + $0x18] sm:$0xff]
  %v39 = vld [vmem:[%s0 + $0x20] sm:$0xff]
  %v40 = vld [vmem:[%s0 + $0x28] sm:$0xff]
  %v41 = vld [vmem:[%s0 + $0x30] sm:$0xff]
  %v42 = vld [vmem:[%s0 + $0x38] sm:$0xff]
  %v43 = vld [vmem:[%s1] sm:$0xf]
  %v44 = vld [vmem:[%s1 + $0x4] sm:$0xf]
  %v45 = vld [vmem:[%s1 + $0x8] sm:$0xf]
  %v46 = vld [vmem:[%s1 + $0xc] sm:$0xf]
  %v47 = vld [vmem:[%s1 + $0x10] sm:$0xf]
  %v48 = vld [vmem:[%s1 + $0x14] sm:$0xf]
  %v49 = vld [vmem:[%s1 + $0x18] sm:$0xf]
  %v50 = vld [vmem:[%s1 + $0x1c] sm:$0xf]
  %v51 = vld [vmem:[%s1 + $0x20] sm:$0xf]
  %v52 = vld [vmem:[%s1 + $0x24] sm:$0xf]
  %v53 = vld [vmem:[%s1 + $0x28] sm:$0xf]
  %v54 = vld [vmem:[%s1 + $0x2c] sm:$0xf]
  %v55 = vld [vmem:[%s1 + $0x30] sm:$0xf]
  %v56 = vld [vmem:[%s1 + $0x34] sm:$0xf]
  %v57 = vld [vmem:[%s1 + $0x38] sm:$0xf]
  %v58 = vld [vmem:[%s1 + $0x3c] sm:$0xf]
  %v59 = vld [vmem:[%s1 + $0x40] sm:$0xf]
  %v60 = vld [vmem:[%s1 + $0x44] sm:$0xf]
  %v61 = vld [vmem:[%s1 + $0x48] sm:$0xf]
  %v62 = vld [vmem:[%s1 + $0x4c] sm:$0xf]
  %v63 = vld [vmem:[%s1 + $0x50] sm:$0xf]
  %v64 = vld [vmem:[%s1 + $0x54] sm:$0xf]
  %v65 = vld [vmem:[%s1 + $0x58] sm:$0xf]
  %v66 = vld [vmem:[%s1 + $0x5c] sm:$0xf]
  %v67 = vld [vmem:[%s1 + $0x60] sm:$0xf]
  %v68 = vld [vmem:[%s1 + $0x64] sm:$0xf]
  %v69 = vld [vmem:[%s1 + $0x68] sm:$0xf]
  %v70 = vld [vmem:[%s1 + $0x6c] sm:$0xf]
  %v71 = vld [vmem:[%s1 + $0x70] sm:$0xf]
  %v72 = vld [vmem:[%s1 + $0x74] sm:$0xf]
  %v73 = vld [vmem:[%s1 + $0x78] sm:$0xf]
  %v74 = vld [vmem:[%s1 + $0x7c] sm:$0xf]
  %v75 = vld [vmem:[%s1 + $0x80] sm:$0xf]
  %v76 = vld [vmem:[%s1 + $0x84] sm:$0xf]
  %v77 = vld [vmem:[%s1 + $0x88] sm:$0xf]
  %v78 = vld [vmem:[%s1 + $0x8c] sm:$0xf]
  %v79 = vld [vmem:[%s1 + $0x90] sm:$0xf]
  %v80 = vld [vmem:[%s1 + $0x94] sm:$0xf]
  %v81 = vld [vmem:[%s1 + $0x98] sm:$0xf]
  %v82 = vld [vmem:[%s1 + $0x9c] sm:$0xf]
  %v83 = vld [vmem:[%s1 + $0xa0] sm:$0xf]
  %v84 = vld [vmem:[%s1 + $0xa4] sm:$0xf]
  %v85 = vld [vmem:[%s1 + $0xa8] sm:$0xf]
  %v86 = vld [vmem:[%s1 + $0xac] sm:$0xf]
  %v87 = vld [vmem:[%s1 + $0xb0] sm:$0xf]
  %v88 = vld [vmem:[%s1 + $0xb4] sm:$0xf]
  %v89 = vld [vmem:[%s1 + $0xb8] sm:$0xf]
  %v90 = vld [vmem:[%s1 + $0xbc] sm:$0xf]
  %v91 = vld [vmem:[%s1 + $0xc0] sm:$0xf]
  %v92 = vld [vmem:[%s1 + $0xc4] sm:$0xf]
  %v93 = vld [vmem:[%s1 + $0xc8] sm:$0xf]
  %v94 = vld [vmem:[%s1 + $0xcc] sm:$0xf]
  %v95 = vld [vmem:[%s1 + $0xd0] sm:$0xf]
  %v96 = vld [vmem:[%s1 + $0xd4] sm:$0xf]
  %v97 = vld [vmem:[%s1 + $0xd8] sm:$0xf]
  %v98 = vld [vmem:[%s1 + $0xdc] sm:$0xf]
  %v99 = vld [vmem:[%s1 + $0xe0] sm:$0xf]
  %v100 = vld [vmem:[%s1 + $0xe4] sm:$0xf]
  %v101 = vld [vmem:[%s1 + $0xe8] sm:$0xf]
  %v102 = vld [vmem:[%s1 + $0xec] sm:$0xf]
  %v103 = vld [vmem:[%s1 + $0xf0] sm:$0xf]
  %v104 = vld [vmem:[%s1 + $0xf4] sm:$0xf]
  %v105 = vld [vmem:[%s1 + $0xf8] sm:$0xf]
  %v106 = vld [vmem:[%s1 + $0xfc] sm:$0xf]
  %v107 = vld [vmem:[%s1 + $0x100] sm:$0xf]
  %v108 = vld [vmem:[%s1 + $0x104] sm:$0xf]
  %v109 = vld [vmem:[%s1 + $0x108] sm:$0xf]
  %v110 = vld [vmem:[%s1 + $0x10c] sm:$0xf]
  %v111 = vld [vmem:[%s1 + $0x110] sm:$0xf]
  %v112 = vld [vmem:[%s1 + $0x114] sm:$0xf]
  %v113 = vld [vmem:[%s1 + $0x118] sm:$0xf]
  %v114 = vld [vmem:[%s1 + $0x11c] sm:$0xf]
  %v115 = vld [vmem:[%s1 + $0x120] sm:$0xf]
  %v116 = vld [vmem:[%s1 + $0x124] sm:$0xf]
  %v117 = vld [vmem:[%s1 + $0x128] sm:$0xf]
  %v118 = vld [vmem:[%s1 + $0x12c] sm:$0xf]
  %v119 = vld [vmem:[%s1 + $0x130] sm:$0xf]
  %v120 = vld [vmem:[%s1 + $0x134] sm:$0xf]
  %v121 = vld [vmem:[%s1 + $0x138] sm:$0xf]
  %v122 = vld [vmem:[%s1 + $0x13c] sm:$0xf]
  %v123 = vld [vmem:[%s1 + $0x140] sm:$0xf]
  %v124 = vld [vmem:[%s1 + $0x144] sm:$0xf]
  %v125 = vld [vmem:[%s1 + $0x148] sm:$0xf]
  %v126 = vld [vmem:[%s1 + $0x14c] sm:$0xf]
  %v127 = vld [vmem:[%s1 + $0x150] sm:$0xf]
  %v128 = vld [vmem:[%s1 + $0x154] sm:$0xf]
  %v129 = vld [vmem:[%s1 + $0x158] sm:$0xf]
  %v130 = vld [vmem:[%s1 + $0x15c] sm:$0xf]
  %v131 = vld [vmem:[%s1 + $0x160] sm:$0xf]
  %v132 = vld [vmem:[%s1 + $0x164] sm:$0xf]
  %v133 = vld [vmem:[%s1 + $0x168] sm:$0xf]
  %v134 = vld [vmem:[%s1 + $0x16c] sm:$0xf]
  %v135 = vld [vmem:[%s1 + $0x170] sm:$0xf]
  %v136 = vld [vmem:[%s1 + $0x174] sm:$0xf]
  %v137 = vld [vmem:[%s1 + $0x178] sm:$0xf]
  %v138 = vld [vmem:[%s1 + $0x17c] sm:$0xf]
  %v139 = vld [vmem:[%s1 + $0x180] sm:$0xf]
  %v140 = vld [vmem:[%s1 + $0x184] sm:$0xf]
  %v141 = vld [vmem:[%s1 + $0x188] sm:$0xf]
  %v142 = vld [vmem:[%s1 + $0x18c] sm:$0xf]
  %v143 = vld [vmem:[%s1 + $0x190] sm:$0xf]
  %v144 = vld [vmem:[%s1 + $0x194] sm:$0xf]
  %v145 = vld [vmem:[%s1 + $0x198] sm:$0xf]
  %v146 = vld [vmem:[%s1 + $0x19c] sm:$0xf]
  %v147 = vld [vmem:[%s1 + $0x1a0] sm:$0xf]
  %v148 = vld [vmem:[%s1 + $0x1a4] sm:$0xf]
  %v149 = vld [vmem:[%s1 + $0x1a8] sm:$0xf]
  %v150 = vld [vmem:[%s1 + $0x1ac] sm:$0xf]
  %v151 = vld [vmem:[%s1 + $0x1b0] sm:$0xf]
  %v152 = vld [vmem:[%s1 + $0x1b4] sm:$0xf]
  %v153 = vld [vmem:[%s1 + $0x1b8] sm:$0xf]
  %v154 = vld [vmem:[%s1 + $0x1bc] sm:$0xf]
  %v155 = vld [vmem:[%s1 + $0x1c0] sm:$0xf]
  %v156 = vld [vmem:[%s1 + $0x1c4] sm:$0xf]
  %v157 = vld [vmem:[%s1 + $0x1c8] sm:$0xf]
  %v158 = vld [vmem:[%s1 + $0x1cc] sm:$0xf]
  %v159 = vld [vmem:[%s1 + $0x1d0] sm:$0xf]
  %v160 = vld [vmem:[%s1 + $0x1d4] sm:$0xf]
  %v161 = vld [vmem:[%s1 + $0x1d8] sm:$0xf]
  %v162 = vld [vmem:[%s1 + $0x1dc] sm:$0xf]
  %v163 = vld [vmem:[%s1 + $0x1e0] sm:$0xf]
  %v164 = vld [vmem:[%s1 + $0x1e4] sm:$0xf]
  %v165 = vld [vmem:[%s1 + $0x1e8] sm:$0xf]
  %v166 = vld [vmem:[%s1 + $0x1ec] sm:$0xf]
  %v167 = vld [vmem:[%s1 + $0x1f0] sm:$0xf]
  %v168 = vld [vmem:[%s1 + $0x1f4] sm:$0xf]
  %v169 = vld [vmem:[%s1 + $0x1f8] sm:$0xf]
  %v170 = vld [vmem:[%s1 + $0x1fc] sm:$0xf]
  %v171 = vld [vmem:[%s1 + $0x200] sm:$0xf]
  %v172 = vld [vmem:[%s1 + $0x204] sm:$0xf]
  %v173 = vld [vmem:[%s1 + $0x208] sm:$0xf]
  %v174 = vld [vmem:[%s1 + $0x20c] sm:$0xf]
  %v175 = vld [vmem:[%s1 + $0x210] sm:$0xf]
  %v176 = vld [vmem:[%s1 + $0x214] sm:$0xf]
  %v177 = vld [vmem:[%s1 + $0x218] sm:$0xf]
  %v178 = vld [vmem:[%s1 + $0x21c] sm:$0xf]
  %v179 = vld [vmem:[%s1 + $0x220] sm:$0xf]
  %v180 = vld [vmem:[%s1 + $0x224] sm:$0xf]
  %v181 = vld [vmem:[%s1 + $0x228] sm:$0xf]
  %v182 = vld [vmem:[%s1 + $0x22c] sm:$0xf]
  %v183 = vld [vmem:[%s1 + $0x230] sm:$0xf]
  %v184 = vld [vmem:[%s1 + $0x234] sm:$0xf]
  %v185 = vld [vmem:[%s1 + $0x238] sm:$0xf]
  %v186 = vld [vmem:[%s1 + $0x23c] sm:$0xf]
  %v187 = vld [vmem:[%s1 + $0x240] sm:$0xf]
  %v188 = vld [vmem:[%s1 + $0x244] sm:$0xf]
  %v189 = vld [vmem:[%s1 + $0x248] sm:$0xf]
  %v190 = vld [vmem:[%s1 + $0x24c] sm:$0xf]
  %v191 = vld [vmem:[%s1 + $0x250] sm:$0xf]
  %v192 = vld [vmem:[%s1 + $0x254] sm:$0xf]
  %v193 = vld [vmem:[%s1 + $0x258] sm:$0xf]
  %v194 = vld [vmem:[%s1 + $0x25c] sm:$0xf]
  %v195 = vld [vmem:[%s1 + $0x260] sm:$0xf]
  %v196 = vld [vmem:[%s1 + $0x264] sm:$0xf]
  %v197 = vld [vmem:[%s1 + $0x268] sm:$0xf]
  %v198 = vld [vmem:[%s1 + $0x26c] sm:$0xf]
  %v199 = vld [vmem:[%s1 + $0x270] sm:$0xf]
  %v200 = vld [vmem:[%s1 + $0x274] sm:$0xf]
  %v201 = vld [vmem:[%s1 + $0x278] sm:$0xf]
  %v202 = vld [vmem:[%s1 + $0x27c] sm:$0xf]
  %v203 = vld [vmem:[%s1 + $0x280] sm:$0xf]
  %v204 = vld [vmem:[%s1 + $0x284] sm:$0xf]
  %v205 = vld [vmem:[%s1 + $0x288] sm:$0xf]
  %v206 = vld [vmem:[%s1 + $0x28c] sm:$0xf]
  %v207 = vld [vmem:[%s1 + $0x290] sm:$0xf]
  %v208 = vld [vmem:[%s1 + $0x294] sm:$0xf]
  %v209 = vld [vmem:[%s1 + $0x298] sm:$0xf]
  %v210 = vld [vmem:[%s1 + $0x29c] sm:$0xf]
  %v211 = vld [vmem:[%s1 + $0x2a0] sm:$0xf]
  %v212 = vld [vmem:[%s1 + $0x2a4] sm:$0xf]
  %v213 = vld [vmem:[%s1 + $0x2a8] sm:$0xf]
  %v214 = vld [vmem:[%s1 + $0x2ac] sm:$0xf]
  %v215 = vld [vmem:[%s1 + $0x2b0] sm:$0xf]
  %v216 = vld [vmem:[%s1 + $0x2b4] sm:$0xf]
  %v217 = vld [vmem:[%s1 + $0x2b8] sm:$0xf]
  %v218 = vld [vmem:[%s1 + $0x2bc] sm:$0xf]
  %v219 = vld [vmem:[%s1 + $0x2c0] sm:$0xf]
  %v220 = vld [vmem:[%s1 + $0x2c4] sm:$0xf]
  %v221 = vld [vmem:[%s1 + $0x2c8] sm:$0xf]
  %v222 = vld [vmem:[%s1 + $0x2cc] sm:$0xf]
  %v223 = vld [vmem:[%s1 + $0x2d0] sm:$0xf]
  %v224 = vld [vmem:[%s1 + $0x2d4] sm:$0xf]
  %v225 = vld [vmem:[%s1 + $0x2d8] sm:$0xf]
  %v226 = vld [vmem:[%s1 + $0x2dc] sm:$0xf]
  %v227 = vld [vmem:[%s1 + $0x2e0] sm:$0xf]
  %v228 = vld [vmem:[%s1 + $0x2e4] sm:$0xf]
  %v229 = vld [vmem:[%s1 + $0x2e8] sm:$0xf]
  %v230 = vld [vmem:[%s1 + $0x2ec] sm:$0xf]
  %v231 = vld [vmem:[%s1 + $0x2f0] sm:$0xf]
  %v232 = vld [vmem:[%s1 + $0x2f4] sm:$0xf]
  %v233 = vld [vmem:[%s1 + $0x2f8] sm:$0xf]
  %v234 = vld [vmem:[%s1 + $0x2fc] sm:$0xf]
  %v235 = vld [vmem:[%s1 + $0x300] sm:$0xf]
  %v236 = vld [vmem:[%s1 + $0x304] sm:$0xf]
  %v237 = vld [vmem:[%s1 + $0x308] sm:$0xf]
  %v238 = vld [vmem:[%s1 + $0x30c] sm:$0xf]
  %v239 = vld [vmem:[%s1 + $0x310] sm:$0xf]
  %v240 = vld [vmem:[%s1 + $0x314] sm:$0xf]
  %v241 = vld [vmem:[%s1 + $0x318] sm:$0xf]
  %v242 = vld [vmem:[%s1 + $0x31c] sm:$0xf]
  %v243 = vld [vmem:[%s1 + $0x320] sm:$0xf]
  %v244 = vld [vmem:[%s1 + $0x324] sm:$0xf]
  %v245 = vld [vmem:[%s1 + $0x328] sm:$0xf]
  %v246 = vld [vmem:[%s1 + $0x32c] sm:$0xf]
  %v247 = vld [vmem:[%s1 + $0x330] sm:$0xf]
  %v248 = vld [vmem:[%s1 + $0x334] sm:$0xf]
  %v249 = vld [vmem:[%s1 + $0x338] sm:$0xf]
  %v250 = vld [vmem:[%s1 + $0x33c] sm:$0xf]
  %v251 = vld [vmem:[%s1 + $0x340] sm:$0xf]
  %v252 = vld [vmem:[%s1 + $0x344] sm:$0xf]
  %v253 = vld [vmem:[%s1 + $0x348] sm:$0xf]
  %v254 = vld [vmem:[%s1 + $0x34c] sm:$0xf]
  %v255 = vld [vmem:[%s1 + $0x350] sm:$0xf]
  %v256 = vld [vmem:[%s1 + $0x354] sm:$0xf]
  %v257 = vld [vmem:[%s1 + $0x358] sm:$0xf]
  %v258 = vld [vmem:[%s1 + $0x35c] sm:$0xf]
  %v259 = vld [vmem:[%s1 + $0x360] sm:$0xf]
  %v260 = vld [vmem:[%s1 + $0x364] sm:$0xf]
  %v261 = vld [vmem:[%s1 + $0x368] sm:$0xf]
  %v262 = vld [vmem:[%s1 + $0x36c] sm:$0xf]
  %v263 = vld [vmem:[%s1 + $0x370] sm:$0xf]
  %v264 = vld [vmem:[%s1 + $0x374] sm:$0xf]
  %v265 = vld [vmem:[%s1 + $0x378] sm:$0xf]
  %v266 = vld [vmem:[%s1 + $0x37c] sm:$0xf]
  %v267 = vld [vmem:[%s1 + $0x380] sm:$0xf]
  %v268 = vld [vmem:[%s1 + $0x384] sm:$0xf]
  %v269 = vld [vmem:[%s1 + $0x388] sm:$0xf]
  %v270 = vld [vmem:[%s1 + $0x38c] sm:$0xf]
  %v271 = vld [vmem:[%s1 + $0x390] sm:$0xf]
  %v272 = vld [vmem:[%s1 + $0x394] sm:$0xf]
  %v273 = vld [vmem:[%s1 + $0x398] sm:$0xf]
  %v274 = vld [vmem:[%s1 + $0x39c] sm:$0xf]
  %v275 = vld [vmem:[%s1 + $0x3a0] sm:$0xf]
  %v276 = vld [vmem:[%s1 + $0x3a4] sm:$0xf]
  %v277 = vld [vmem:[%s1 + $0x3a8] sm:$0xf]
  %v278 = vld [vmem:[%s1 + $0x3ac] sm:$0xf]
  %v279 = vld [vmem:[%s1 + $0x3b0] sm:$0xf]
  %v280 = vld [vmem:[%s1 + $0x3b4] sm:$0xf]
  %v281 = vld [vmem:[%s1 + $0x3b8] sm:$0xf]
  %v282 = vld [vmem:[%s1 + $0x3bc] sm:$0xf]
  %v283 = vld [vmem:[%s1 + $0x3c0] sm:$0xf]
  %v284 = vld [vmem:[%s1 + $0x3c4] sm:$0xf]
  %v285 = vld [vmem:[%s1 + $0x3c8] sm:$0xf]
  %v286 = vld [vmem:[%s1 + $0x3cc] sm:$0xf]
  %v287 = vld [vmem:[%s1 + $0x3d0] sm:$0xf]
  %v288 = vld [vmem:[%s1 + $0x3d4] sm:$0xf]
  %v289 = vld [vmem:[%s1 + $0x3d8] sm:$0xf]
  %v290 = vld [vmem:[%s1 + $0x3dc] sm:$0xf]
  %v291 = vld [vmem:[%s1 + $0x3e0] sm:$0xf]
  %v292 = vld [vmem:[%s1 + $0x3e4] sm:$0xf]
  %v293 = vld [vmem:[%s1 + $0x3e8] sm:$0xf]
  %v294 = vld [vmem:[%s1 + $0x3ec] sm:$0xf]
  %v295 = vld [vmem:[%s1 + $0x3f0] sm:$0xf]
  %v296 = vld [vmem:[%s1 + $0x3f4] sm:$0xf]
  %v297 = vld [vmem:[%s1 + $0x3f8] sm:$0xf]
  %v298 = vld [vmem:[%s1 + $0x3fc] sm:$0xf]
  %v299 = vld [vmem:[%s2] sm:$0x1]
  %v301 = vlaneseq
  %v302 = vshrl.u32 %v301, 7
  %v303 = vsub.s32 0, %v302
  %v304 = vrot.slane %v299, %v303
  %v314 = vunpack.c.l.b16 %v35
  %v315 = vunpack.c.h.b16 %v35
  %v316 = vunpack.c.l.b16 %v36
  %v317 = vunpack.c.h.b16 %v36
  %v318 = vunpack.c.l.b16 %v37
  %v319 = vunpack.c.h.b16 %v37
  %v320 = vunpack.c.l.b16 %v38
  %v321 = vunpack.c.h.b16 %v38
  %v322 = vunpack.c.l.b16 %v39
  %v323 = vunpack.c.h.b16 %v39
  %v324 = vunpack.c.l.b16 %v40
  %v325 = vunpack.c.h.b16 %v40
  %v326 = vunpack.c.l.b16 %v41
  %v327 = vunpack.c.h.b16 %v41
  %v328 = vunpack.c.l.b16 %v42
  %v329 = vunpack.c.h.b16 %v42
  %v330 = vpack.c.b16 %v314, %v314
  %v331 = vpack.c.b16 %v315, %v315
  %v332 = vpack.c.b16 %v316, %v316
  %v333 = vpack.c.b16 %v317, %v317
  %v334 = vpack.c.b16 %v318, %v318
  %v335 = vpack.c.b16 %v319, %v319
  %v336 = vpack.c.b16 %v320, %v320
  %v337 = vpack.c.b16 %v321, %v321
  %v338 = vpack.c.b16 %v322, %v322
  %v339 = vpack.c.b16 %v323, %v323
  %v340 = vpack.c.b16 %v324, %v324
  %v341 = vpack.c.b16 %v325, %v325
  %v342 = vpack.c.b16 %v326, %v326
  %v343 = vpack.c.b16 %v327, %v327
  %v344 = vpack.c.b16 %v328, %v328
  %v345 = vpack.c.b16 %v329, %v329
  %v618 = vunpack.c.l.b16 %v43
  %v619 = vunpack.c.l.b16 %v44
  %v620 = vunpack.c.l.b16 %v45
  %v621 = vunpack.c.l.b16 %v46
  %v622 = vunpack.c.l.b16 %v47
  %v623 = vunpack.c.l.b16 %v48
  %v624 = vunpack.c.l.b16 %v49
  %v625 = vunpack.c.l.b16 %v50
  %v626 = vunpack.c.l.b16 %v51
  %v627 = vunpack.c.l.b16 %v52
  %v628 = vunpack.c.l.b16 %v53
  %v629 = vunpack.c.l.b16 %v54
  %v630 = vunpack.c.l.b16 %v55
  %v631 = vunpack.c.l.b16 %v56
  %v632 = vunpack.c.l.b16 %v57
  %v633 = vunpack.c.l.b16 %v58
  %v634 = vunpack.c.l.b16 %v59
  %v635 = vunpack.c.l.b16 %v60
  %v636 = vunpack.c.l.b16 %v61
  %v637 = vunpack.c.l.b16 %v62
  %v638 = vunpack.c.l.b16 %v63
  %v639 = vunpack.c.l.b16 %v64
  %v640 = vunpack.c.l.b16 %v65
  %v641 = vunpack.c.l.b16 %v66
  %v642 = vunpack.c.l.b16 %v67
  %v643 = vunpack.c.l.b16 %v68
  %v644 = vunpack.c.l.b16 %v69
  %v645 = vunpack.c.l.b16 %v70
  %v646 = vunpack.c.l.b16 %v71
  %v647 = vunpack.c.l.b16 %v72
  %v648 = vunpack.c.l.b16 %v73
  %v649 = vunpack.c.l.b16 %v74
  %v650 = vunpack.c.l.b16 %v75
  %v651 = vunpack.c.l.b16 %v76
  %v652 = vunpack.c.l.b16 %v77
  %v653 = vunpack.c.l.b16 %v78
  %v654 = vunpack.c.l.b16 %v79
  %v655 = vunpack.c.l.b16 %v80
  %v656 = vunpack.c.l.b16 %v81
  %v657 = vunpack.c.l.b16 %v82
  %v658 = vunpack.c.l.b16 %v83
  %v659 = vunpack.c.l.b16 %v84
  %v660 = vunpack.c.l.b16 %v85
  %v661 = vunpack.c.l.b16 %v86
  %v662 = vunpack.c.l.b16 %v87
  %v663 = vunpack.c.l.b16 %v88
  %v664 = vunpack.c.l.b16 %v89
  %v665 = vunpack.c.l.b16 %v90
  %v666 = vunpack.c.l.b16 %v91
  %v667 = vunpack.c.l.b16 %v92
  %v668 = vunpack.c.l.b16 %v93
  %v669 = vunpack.c.l.b16 %v94
  %v670 = vunpack.c.l.b16 %v95
  %v671 = vunpack.c.l.b16 %v96
  %v672 = vunpack.c.l.b16 %v97
  %v673 = vunpack.c.l.b16 %v98
  %v674 = vunpack.c.l.b16 %v99
  %v675 = vunpack.c.l.b16 %v100
  %v676 = vunpack.c.l.b16 %v101
  %v677 = vunpack.c.l.b16 %v102
  %v678 = vunpack.c.l.b16 %v103
  %v679 = vunpack.c.l.b16 %v104
  %v680 = vunpack.c.l.b16 %v105
  %v681 = vunpack.c.l.b16 %v106
  %v682 = vunpack.c.l.b16 %v107
  %v683 = vunpack.c.l.b16 %v108
  %v684 = vunpack.c.l.b16 %v109
  %v685 = vunpack.c.l.b16 %v110
  %v686 = vunpack.c.l.b16 %v111
  %v687 = vunpack.c.l.b16 %v112
  %v688 = vunpack.c.l.b16 %v113
  %v689 = vunpack.c.l.b16 %v114
  %v690 = vunpack.c.l.b16 %v115
  %v691 = vunpack.c.l.b16 %v116
  %v692 = vunpack.c.l.b16 %v117
  %v693 = vunpack.c.l.b16 %v118
  %v694 = vunpack.c.l.b16 %v119
  %v695 = vunpack.c.l.b16 %v120
  %v696 = vunpack.c.l.b16 %v121
  %v697 = vunpack.c.l.b16 %v122
  %v698 = vunpack.c.l.b16 %v123
  %v699 = vunpack.c.l.b16 %v124
  %v700 = vunpack.c.l.b16 %v125
  %v701 = vunpack.c.l.b16 %v126
  %v702 = vunpack.c.l.b16 %v127
  %v703 = vunpack.c.l.b16 %v128
  %v704 = vunpack.c.l.b16 %v129
  %v705 = vunpack.c.l.b16 %v130
  %v706 = vunpack.c.l.b16 %v131
  %v707 = vunpack.c.l.b16 %v132
  %v708 = vunpack.c.l.b16 %v133
  %v709 = vunpack.c.l.b16 %v134
  %v710 = vunpack.c.l.b16 %v135
  %v711 = vunpack.c.l.b16 %v136
  %v712 = vunpack.c.l.b16 %v137
  %v713 = vunpack.c.l.b16 %v138
  %v714 = vunpack.c.l.b16 %v139
  %v715 = vunpack.c.l.b16 %v140
  %v716 = vunpack.c.l.b16 %v141
  %v717 = vunpack.c.l.b16 %v142
  %v718 = vunpack.c.l.b16 %v143
  %v719 = vunpack.c.l.b16 %v144
  %v720 = vunpack.c.l.b16 %v145
  %v721 = vunpack.c.l.b16 %v146
  %v722 = vunpack.c.l.b16 %v147
  %v723 = vunpack.c.l.b16 %v148
  %v724 = vunpack.c.l.b16 %v149
  %v725 = vunpack.c.l.b16 %v150
  %v726 = vunpack.c.l.b16 %v151
  %v727 = vunpack.c.l.b16 %v152
  %v728 = vunpack.c.l.b16 %v153
  %v729 = vunpack.c.l.b16 %v154
  %v730 = vunpack.c.l.b16 %v155
  %v731 = vunpack.c.l.b16 %v156
  %v732 = vunpack.c.l.b16 %v157
  %v733 = vunpack.c.l.b16 %v158
  %v734 = vunpack.c.l.b16 %v159
  %v735 = vunpack.c.l.b16 %v160
  %v736 = vunpack.c.l.b16 %v161
  %v737 = vunpack.c.l.b16 %v162
  %v738 = vunpack.c.l.b16 %v163
  %v739 = vunpack.c.l.b16 %v164
  %v740 = vunpack.c.l.b16 %v165
  %v741 = vunpack.c.l.b16 %v166
  %v742 = vunpack.c.l.b16 %v167
  %v743 = vunpack.c.l.b16 %v168
  %v744 = vunpack.c.l.b16 %v169
  %v745 = vunpack.c.l.b16 %v170
  %v746 = vunpack.c.l.b16 %v171
  %v747 = vunpack.c.l.b16 %v172
  %v748 = vunpack.c.l.b16 %v173
  %v749 = vunpack.c.l.b16 %v174
  %v750 = vunpack.c.l.b16 %v175
  %v751 = vunpack.c.l.b16 %v176
  %v752 = vunpack.c.l.b16 %v177
  %v753 = vunpack.c.l.b16 %v178
  %v754 = vunpack.c.l.b16 %v179
  %v755 = vunpack.c.l.b16 %v180
  %v756 = vunpack.c.l.b16 %v181
  %v757 = vunpack.c.l.b16 %v182
  %v758 = vunpack.c.l.b16 %v183
  %v759 = vunpack.c.l.b16 %v184
  %v760 = vunpack.c.l.b16 %v185
  %v761 = vunpack.c.l.b16 %v186
  %v762 = vunpack.c.l.b16 %v187
  %v763 = vunpack.c.l.b16 %v188
  %v764 = vunpack.c.l.b16 %v189
  %v765 = vunpack.c.l.b16 %v190
  %v766 = vunpack.c.l.b16 %v191
  %v767 = vunpack.c.l.b16 %v192
  %v768 = vunpack.c.l.b16 %v193
  %v769 = vunpack.c.l.b16 %v194
  %v770 = vunpack.c.l.b16 %v195
  %v771 = vunpack.c.l.b16 %v196
  %v772 = vunpack.c.l.b16 %v197
  %v773 = vunpack.c.l.b16 %v198
  %v774 = vunpack.c.l.b16 %v199
  %v775 = vunpack.c.l.b16 %v200
  %v776 = vunpack.c.l.b16 %v201
  %v777 = vunpack.c.l.b16 %v202
  %v778 = vunpack.c.l.b16 %v203
  %v779 = vunpack.c.l.b16 %v204
  %v780 = vunpack.c.l.b16 %v205
  %v781 = vunpack.c.l.b16 %v206
  %v782 = vunpack.c.l.b16 %v207
  %v783 = vunpack.c.l.b16 %v208
  %v784 = vunpack.c.l.b16 %v209
  %v785 = vunpack.c.l.b16 %v210
  %v786 = vunpack.c.l.b16 %v211
  %v787 = vunpack.c.l.b16 %v212
  %v788 = vunpack.c.l.b16 %v213
  %v789 = vunpack.c.l.b16 %v214
  %v790 = vunpack.c.l.b16 %v215
  %v791 = vunpack.c.l.b16 %v216
  %v792 = vunpack.c.l.b16 %v217
  %v793 = vunpack.c.l.b16 %v218
  %v794 = vunpack.c.l.b16 %v219
  %v795 = vunpack.c.l.b16 %v220
  %v796 = vunpack.c.l.b16 %v221
  %v797 = vunpack.c.l.b16 %v222
  %v798 = vunpack.c.l.b16 %v223
  %v799 = vunpack.c.l.b16 %v224
  %v800 = vunpack.c.l.b16 %v225
  %v801 = vunpack.c.l.b16 %v226
  %v802 = vunpack.c.l.b16 %v227
  %v803 = vunpack.c.l.b16 %v228
  %v804 = vunpack.c.l.b16 %v229
  %v805 = vunpack.c.l.b16 %v230
  %v806 = vunpack.c.l.b16 %v231
  %v807 = vunpack.c.l.b16 %v232
  %v808 = vunpack.c.l.b16 %v233
  %v809 = vunpack.c.l.b16 %v234
  %v810 = vunpack.c.l.b16 %v235
  %v811 = vunpack.c.l.b16 %v236
  %v812 = vunpack.c.l.b16 %v237
  %v813 = vunpack.c.l.b16 %v238
  %v814 = vunpack.c.l.b16 %v239
  %v815 = vunpack.c.l.b16 %v240
  %v816 = vunpack.c.l.b16 %v241
  %v817 = vunpack.c.l.b16 %v242
  %v818 = vunpack.c.l.b16 %v243
  %v819 = vunpack.c.l.b16 %v244
  %v820 = vunpack.c.l.b16 %v245
  %v821 = vunpack.c.l.b16 %v246
  %v822 = vunpack.c.l.b16 %v247
  %v823 = vunpack.c.l.b16 %v248
  %v824 = vunpack.c.l.b16 %v249
  %v825 = vunpack.c.l.b16 %v250
  %v826 = vunpack.c.l.b16 %v251
  %v827 = vunpack.c.l.b16 %v252
  %v828 = vunpack.c.l.b16 %v253
  %v829 = vunpack.c.l.b16 %v254
  %v830 = vunpack.c.l.b16 %v255
  %v831 = vunpack.c.l.b16 %v256
  %v832 = vunpack.c.l.b16 %v257
  %v833 = vunpack.c.l.b16 %v258
  %v834 = vunpack.c.l.b16 %v259
  %v835 = vunpack.c.l.b16 %v260
  %v836 = vunpack.c.l.b16 %v261
  %v837 = vunpack.c.l.b16 %v262
  %v838 = vunpack.c.l.b16 %v263
  %v839 = vunpack.c.l.b16 %v264
  %v840 = vunpack.c.l.b16 %v265
  %v841 = vunpack.c.l.b16 %v266
  %v842 = vunpack.c.l.b16 %v267
  %v843 = vunpack.c.l.b16 %v268
  %v844 = vunpack.c.l.b16 %v269
  %v845 = vunpack.c.l.b16 %v270
  %v846 = vunpack.c.l.b16 %v271
  %v847 = vunpack.c.l.b16 %v272
  %v848 = vunpack.c.l.b16 %v273
  %v849 = vunpack.c.l.b16 %v274
  %v850 = vunpack.c.l.b16 %v275
  %v851 = vunpack.c.l.b16 %v276
  %v852 = vunpack.c.l.b16 %v277
  %v853 = vunpack.c.l.b16 %v278
  %v854 = vunpack.c.l.b16 %v279
  %v855 = vunpack.c.l.b16 %v280
  %v856 = vunpack.c.l.b16 %v281
  %v857 = vunpack.c.l.b16 %v282
  %v858 = vunpack.c.l.b16 %v283
  %v859 = vunpack.c.l.b16 %v284
  %v860 = vunpack.c.l.b16 %v285
  %v861 = vunpack.c.l.b16 %v286
  %v862 = vunpack.c.l.b16 %v287
  %v863 = vunpack.c.l.b16 %v288
  %v864 = vunpack.c.l.b16 %v289
  %v865 = vunpack.c.l.b16 %v290
  %v866 = vunpack.c.l.b16 %v291
  %v867 = vunpack.c.l.b16 %v292
  %v868 = vunpack.c.l.b16 %v293
  %v869 = vunpack.c.l.b16 %v294
  %v870 = vunpack.c.l.b16 %v295
  %v871 = vunpack.c.l.b16 %v296
  %v872 = vunpack.c.l.b16 %v297
  %v873 = vunpack.c.l.b16 %v298
  %v874 = vpack.c.b16 %v619, %v618
  %v875 = vpack.c.b16 %v621, %v620
  %v876 = vpack.c.b16 %v623, %v622
  %v877 = vpack.c.b16 %v625, %v624
  %v878 = vpack.c.b16 %v627, %v626
  %v879 = vpack.c.b16 %v629, %v628
  %v880 = vpack.c.b16 %v631, %v630
  %v881 = vpack.c.b16 %v633, %v632
  %v882 = vpack.c.b16 %v635, %v634
  %v883 = vpack.c.b16 %v637, %v636
  %v884 = vpack.c.b16 %v639, %v638
  %v885 = vpack.c.b16 %v641, %v640
  %v886 = vpack.c.b16 %v643, %v642
  %v887 = vpack.c.b16 %v645, %v644
  %v888 = vpack.c.b16 %v647, %v646
  %v889 = vpack.c.b16 %v649, %v648
  %v890 = vpack.c.b16 %v651, %v650
  %v891 = vpack.c.b16 %v653, %v652
  %v892 = vpack.c.b16 %v655, %v654
  %v893 = vpack.c.b16 %v657, %v656
  %v894 = vpack.c.b16 %v659, %v658
  %v895 = vpack.c.b16 %v661, %v660
  %v896 = vpack.c.b16 %v663, %v662
  %v897 = vpack.c.b16 %v665, %v664
  %v898 = vpack.c.b16 %v667, %v666
  %v899 = vpack.c.b16 %v669, %v668
  %v900 = vpack.c.b16 %v671, %v670
  %v901 = vpack.c.b16 %v673, %v672
  %v902 = vpack.c.b16 %v675, %v674
  %v903 = vpack.c.b16 %v677, %v676
  %v904 = vpack.c.b16 %v679, %v678
  %v905 = vpack.c.b16 %v681, %v680
  %v906 = vpack.c.b16 %v683, %v682
  %v907 = vpack.c.b16 %v685, %v684
  %v908 = vpack.c.b16 %v687, %v686
  %v909 = vpack.c.b16 %v689, %v688
  %v910 = vpack.c.b16 %v691, %v690
  %v911 = vpack.c.b16 %v693, %v692
  %v912 = vpack.c.b16 %v695, %v694
  %v913 = vpack.c.b16 %v697, %v696
  %v914 = vpack.c.b16 %v699, %v698
  %v915 = vpack.c.b16 %v701, %v700
  %v916 = vpack.c.b16 %v703, %v702
  %v917 = vpack.c.b16 %v705, %v704
  %v918 = vpack.c.b16 %v707, %v706
  %v919 = vpack.c.b16 %v709, %v708
  %v920 = vpack.c.b16 %v711, %v710
  %v921 = vpack.c.b16 %v713, %v712
  %v922 = vpack.c.b16 %v715, %v714
  %v923 = vpack.c.b16 %v717, %v716
  %v924 = vpack.c.b16 %v719, %v718
  %v925 = vpack.c.b16 %v721, %v720
  %v926 = vpack.c.b16 %v723, %v722
  %v927 = vpack.c.b16 %v725, %v724
  %v928 = vpack.c.b16 %v727, %v726
  %v929 = vpack.c.b16 %v729, %v728
  %v930 = vpack.c.b16 %v731, %v730
  %v931 = vpack.c.b16 %v733, %v732
  %v932 = vpack.c.b16 %v735, %v734
  %v933 = vpack.c.b16 %v737, %v736
  %v934 = vpack.c.b16 %v739, %v738
  %v935 = vpack.c.b16 %v741, %v740
  %v936 = vpack.c.b16 %v743, %v742
  %v937 = vpack.c.b16 %v745, %v744
  %v938 = vpack.c.b16 %v747, %v746
  %v939 = vpack.c.b16 %v749, %v748
  %v940 = vpack.c.b16 %v751, %v750
  %v941 = vpack.c.b16 %v753, %v752
  %v942 = vpack.c.b16 %v755, %v754
  %v943 = vpack.c.b16 %v757, %v756
  %v944 = vpack.c.b16 %v759, %v758
  %v945 = vpack.c.b16 %v761, %v760
  %v946 = vpack.c.b16 %v763, %v762
  %v947 = vpack.c.b16 %v765, %v764
  %v948 = vpack.c.b16 %v767, %v766
  %v949 = vpack.c.b16 %v769, %v768
  %v950 = vpack.c.b16 %v771, %v770
  %v951 = vpack.c.b16 %v773, %v772
  %v952 = vpack.c.b16 %v775, %v774
  %v953 = vpack.c.b16 %v777, %v776
  %v954 = vpack.c.b16 %v779, %v778
  %v955 = vpack.c.b16 %v781, %v780
  %v956 = vpack.c.b16 %v783, %v782
  %v957 = vpack.c.b16 %v785, %v784
  %v958 = vpack.c.b16 %v787, %v786
  %v959 = vpack.c.b16 %v789, %v788
  %v960 = vpack.c.b16 %v791, %v790
  %v961 = vpack.c.b16 %v793, %v792
  %v962 = vpack.c.b16 %v795, %v794
  %v963 = vpack.c.b16 %v797, %v796
  %v964 = vpack.c.b16 %v799, %v798
  %v965 = vpack.c.b16 %v801, %v800
  %v966 = vpack.c.b16 %v803, %v802
  %v967 = vpack.c.b16 %v805, %v804
  %v968 = vpack.c.b16 %v807, %v806
  %v969 = vpack.c.b16 %v809, %v808
  %v970 = vpack.c.b16 %v811, %v810
  %v971 = vpack.c.b16 %v813, %v812
  %v972 = vpack.c.b16 %v815, %v814
  %v973 = vpack.c.b16 %v817, %v816
  %v974 = vpack.c.b16 %v819, %v818
  %v975 = vpack.c.b16 %v821, %v820
  %v976 = vpack.c.b16 %v823, %v822
  %v977 = vpack.c.b16 %v825, %v824
  %v978 = vpack.c.b16 %v827, %v826
  %v979 = vpack.c.b16 %v829, %v828
  %v980 = vpack.c.b16 %v831, %v830
  %v981 = vpack.c.b16 %v833, %v832
  %v982 = vpack.c.b16 %v835, %v834
  %v983 = vpack.c.b16 %v837, %v836
  %v984 = vpack.c.b16 %v839, %v838
  %v985 = vpack.c.b16 %v841, %v840
  %v986 = vpack.c.b16 %v843, %v842
  %v987 = vpack.c.b16 %v845, %v844
  %v988 = vpack.c.b16 %v847, %v846
  %v989 = vpack.c.b16 %v849, %v848
  %v990 = vpack.c.b16 %v851, %v850
  %v991 = vpack.c.b16 %v853, %v852
  %v992 = vpack.c.b16 %v855, %v854
  %v993 = vpack.c.b16 %v857, %v856
  %v994 = vpack.c.b16 %v859, %v858
  %v995 = vpack.c.b16 %v861, %v860
  %v996 = vpack.c.b16 %v863, %v862
  %v997 = vpack.c.b16 %v865, %v864
  %v998 = vpack.c.b16 %v867, %v866
  %v999 = vpack.c.b16 %v869, %v868
  %v1000 = vpack.c.b16 %v871, %v870
  %v1001 = vpack.c.b16 %v873, %v872
  %1130 = vmatprep.subr.bf16.mxu0 0
  %1131 = vmatpush1.bf16.msra.mxu0 %v874
  %1132 = vmatprep.subr.bf16.mxu0 0
  %1133 = vmatpush1.bf16.msra.mxu0 %v875
  %1134 = vmatprep.subr.bf16.mxu0 0
  %1135 = vmatpush1.bf16.msra.mxu0 %v876
  %1136 = vmatprep.subr.bf16.mxu0 0
  %1137 = vmatpush1.bf16.msra.mxu0 %v877
  %1138 = vmatprep.subr.bf16.mxu0 0
  %1139 = vmatpush1.bf16.msra.mxu0 %v878
  %1140 = vmatprep.subr.bf16.mxu0 0
  %1141 = vmatpush1.bf16.msra.mxu0 %v879
  %1142 = vmatprep.subr.bf16.mxu0 0
  %1143 = vmatpush1.bf16.msra.mxu0 %v880
  %1144 = vmatprep.subr.bf16.mxu0 0
  %1145 = vmatpush1.bf16.msra.mxu0 %v881
  %1146 = vmatprep.subr.bf16.mxu0 0
  %1147 = vmatpush1.bf16.msra.mxu0 %v882
  %1148 = vmatprep.subr.bf16.mxu0 0
  %1149 = vmatpush1.bf16.msra.mxu0 %v883
  %1150 = vmatprep.subr.bf16.mxu0 0
  %1151 = vmatpush1.bf16.msra.mxu0 %v884
  %1152 = vmatprep.subr.bf16.mxu0 0
  %1153 = vmatpush1.bf16.msra.mxu0 %v885
  %1154 = vmatprep.subr.bf16.mxu0 0
  %1155 = vmatpush1.bf16.msra.mxu0 %v886
  %1156 = vmatprep.subr.bf16.mxu0 0
  %1157 = vmatpush1.bf16.msra.mxu0 %v887
  %1158 = vmatprep.subr.bf16.mxu0 0
  %1159 = vmatpush1.bf16.msra.mxu0 %v888
  %1160 = vmatprep.subr.bf16.mxu0 0
  %1161 = vmatpush1.bf16.msra.mxu0 %v889
  %1162 = vmatprep.mubr.bf16.mxu0 %v331
  %1163 = vmatmul.mubr.bf16.gmra.mrb[0].mxu0 %v330
  %v1164 = vpop.f32.mrb[0].mxu0
  %v1165 = vadd.f32 %v304, %v1164
  %v1166 = vpop.f32.mrb[0].mxu0
  %v1167 = vpop.f32.mrb[0].mxu0
  %v1168 = vpop.f32.mrb[0].mxu0
  %1169 = vdwg.mxu0
  %1170 = vmatprep.subr.bf16.mxu0 0
  %1171 = vmatpush1.bf16.msra.mxu0 %v890
  %1172 = vmatprep.subr.bf16.mxu0 0
  %1173 = vmatpush1.bf16.msra.mxu0 %v891
  %1174 = vmatprep.subr.bf16.mxu0 0
  %1175 = vmatpush1.bf16.msra.mxu0 %v892
  %1176 = vmatprep.subr.bf16.mxu0 0
  %1177 = vmatpush1.bf16.msra.mxu0 %v893
  %1178 = vmatprep.subr.bf16.mxu0 0
  %1179 = vmatpush1.bf16.msra.mxu0 %v894
  %1180 = vmatprep.subr.bf16.mxu0 0
  %1181 = vmatpush1.bf16.msra.mxu0 %v895
  %1182 = vmatprep.subr.bf16.mxu0 0
  %1183 = vmatpush1.bf16.msra.mxu0 %v896
  %1184 = vmatprep.subr.bf16.mxu0 0
  %1185 = vmatpush1.bf16.msra.mxu0 %v897
  %1186 = vmatprep.subr.bf16.mxu0 0
  %1187 = vmatpush1.bf16.msra.mxu0 %v898
  %1188 = vmatprep.subr.bf16.mxu0 0
  %1189 = vmatpush1.bf16.msra.mxu0 %v899
  %1190 = vmatprep.subr.bf16.mxu0 0
  %1191 = vmatpush1.bf16.msra.mxu0 %v900
  %1192 = vmatprep.subr.bf16.mxu0 0
  %1193 = vmatpush1.bf16.msra.mxu0 %v901
  %1194 = vmatprep.subr.bf16.mxu0 0
  %1195 = vmatpush1.bf16.msra.mxu0 %v902
  %1196 = vmatprep.subr.bf16.mxu0 0
  %1197 = vmatpush1.bf16.msra.mxu0 %v903
  %1198 = vmatprep.subr.bf16.mxu0 0
  %1199 = vmatpush1.bf16.msra.mxu0 %v904
  %1200 = vmatprep.subr.bf16.mxu0 0
  %1201 = vmatpush1.bf16.msra.mxu0 %v905
  %1202 = vmatprep.mubr.bf16.mxu0 %v333
  %1203 = vmatmul.mubr.bf16.gmra.mrb[0].mxu0 %v332
  %v1204 = vpop.f32.mrb[0].mxu0
  %v1205 = vadd.f32 %v1165, %v1204
  %v1206 = vpop.f32.mrb[0].mxu0
  %v1207 = vpop.f32.mrb[0].mxu0
  %v1208 = vpop.f32.mrb[0].mxu0
  %1209 = vdwg.mxu0
  %1210 = vmatprep.subr.bf16.mxu0 0
  %1211 = vmatpush1.bf16.msra.mxu0 %v906
  %1212 = vmatprep.subr.bf16.mxu0 0
  %1213 = vmatpush1.bf16.msra.mxu0 %v907
  %1214 = vmatprep.subr.bf16.mxu0 0
  %1215 = vmatpush1.bf16.msra.mxu0 %v908
  %1216 = vmatprep.subr.bf16.mxu0 0
  %1217 = vmatpush1.bf16.msra.mxu0 %v909
  %1218 = vmatprep.subr.bf16.mxu0 0
  %1219 = vmatpush1.bf16.msra.mxu0 %v910
  %1220 = vmatprep.subr.bf16.mxu0 0
  %1221 = vmatpush1.bf16.msra.mxu0 %v911
  %1222 = vmatprep.subr.bf16.mxu0 0
  %1223 = vmatpush1.bf16.msra.mxu0 %v912
  %1224 = vmatprep.subr.bf16.mxu0 0
  %1225 = vmatpush1.bf16.msra.mxu0 %v913
  %1226 = vmatprep.subr.bf16.mxu0 0
  %1227 = vmatpush1.bf16.msra.mxu0 %v914
  %1228 = vmatprep.subr.bf16.mxu0 0
  %1229 = vmatpush1.bf16.msra.mxu0 %v915
  %1230 = vmatprep.subr.bf16.mxu0 0
  %1231 = vmatpush1.bf16.msra.mxu0 %v916
  %1232 = vmatprep.subr.bf16.mxu0 0
  %1233 = vmatpush1.bf16.msra.mxu0 %v917
  %1234 = vmatprep.subr.bf16.mxu0 0
  %1235 = vmatpush1.bf16.msra.mxu0 %v918
  %1236 = vmatprep.subr.bf16.mxu0 0
  %1237 = vmatpush1.bf16.msra.mxu0 %v919
  %1238 = vmatprep.subr.bf16.mxu0 0
  %1239 = vmatpush1.bf16.msra.mxu0 %v920
  %1240 = vmatprep.subr.bf16.mxu0 0
  %1241 = vmatpush1.bf16.msra.mxu0 %v921
  %1242 = vmatprep.mubr.bf16.mxu0 %v335
  %1243 = vmatmul.mubr.bf16.gmra.mrb[0].mxu0 %v334
  %v1244 = vpop.f32.mrb[0].mxu0
  %v1245 = vadd.f32 %v1205, %v1244
  %v1246 = vpop.f32.mrb[0].mxu0
  %v1247 = vpop.f32.mrb[0].mxu0
  %v1248 = vpop.f32.mrb[0].mxu0
  %1249 = vdwg.mxu0
  %1250 = vmatprep.subr.bf16.mxu0 0
  %1251 = vmatpush1.bf16.msra.mxu0 %v922
  %1252 = vmatprep.subr.bf16.mxu0 0
  %1253 = vmatpush1.bf16.msra.mxu0 %v923
  %1254 = vmatprep.subr.bf16.mxu0 0
  %1255 = vmatpush1.bf16.msra.mxu0 %v924
  %1256 = vmatprep.subr.bf16.mxu0 0
  %1257 = vmatpush1.bf16.msra.mxu0 %v925
  %1258 = vmatprep.subr.bf16.mxu0 0
  %1259 = vmatpush1.bf16.msra.mxu0 %v926
  %1260 = vmatprep.subr.bf16.mxu0 0
  %1261 = vmatpush1.bf16.msra.mxu0 %v927
  %1262 = vmatprep.subr.bf16.mxu0 0
  %1263 = vmatpush1.bf16.msra.mxu0 %v928
  %1264 = vmatprep.subr.bf16.mxu0 0
  %1265 = vmatpush1.bf16.msra.mxu0 %v929
  %1266 = vmatprep.subr.bf16.mxu0 0
  %1267 = vmatpush1.bf16.msra.mxu0 %v930
  %1268 = vmatprep.subr.bf16.mxu0 0
  %1269 = vmatpush1.bf16.msra.mxu0 %v931
  %1270 = vmatprep.subr.bf16.mxu0 0
  %1271 = vmatpush1.bf16.msra.mxu0 %v932
  %1272 = vmatprep.subr.bf16.mxu0 0
  %1273 = vmatpush1.bf16.msra.mxu0 %v933
  %1274 = vmatprep.subr.bf16.mxu0 0
  %1275 = vmatpush1.bf16.msra.mxu0 %v934
  %1276 = vmatprep.subr.bf16.mxu0 0
  %1277 = vmatpush1.bf16.msra.mxu0 %v935
  %1278 = vmatprep.subr.bf16.mxu0 0
  %1279 = vmatpush1.bf16.msra.mxu0 %v936
  %1280 = vmatprep.subr.bf16.mxu0 0
  %1281 = vmatpush1.bf16.msra.mxu0 %v937
  %1282 = vmatprep.mubr.bf16.mxu0 %v337
  %1283 = vmatmul.mubr.bf16.gmra.mrb[0].mxu0 %v336
  %v1284 = vpop.f32.mrb[0].mxu0
  %v1285 = vadd.f32 %v1245, %v1284
  %v1286 = vpop.f32.mrb[0].mxu0
  %v1287 = vpop.f32.mrb[0].mxu0
  %v1288 = vpop.f32.mrb[0].mxu0
  %1289 = vdwg.mxu0
  %1290 = vmatprep.subr.bf16.mxu0 0
  %1291 = vmatpush1.bf16.msra.mxu0 %v938
  %1292 = vmatprep.subr.bf16.mxu0 0
  %1293 = vmatpush1.bf16.msra.mxu0 %v939
  %1294 = vmatprep.subr.bf16.mxu0 0
  %1295 = vmatpush1.bf16.msra.mxu0 %v940
  %1296 = vmatprep.subr.bf16.mxu0 0
  %1297 = vmatpush1.bf16.msra.mxu0 %v941
  %1298 = vmatprep.subr.bf16.mxu0 0
  %1299 = vmatpush1.bf16.msra.mxu0 %v942
  %1300 = vmatprep.subr.bf16.mxu0 0
  %1301 = vmatpush1.bf16.msra.mxu0 %v943
  %1302 = vmatprep.subr.bf16.mxu0 0
  %1303 = vmatpush1.bf16.msra.mxu0 %v944
  %1304 = vmatprep.subr.bf16.mxu0 0
  %1305 = vmatpush1.bf16.msra.mxu0 %v945
  %1306 = vmatprep.subr.bf16.mxu0 0
  %1307 = vmatpush1.bf16.msra.mxu0 %v946
  %1308 = vmatprep.subr.bf16.mxu0 0
  %1309 = vmatpush1.bf16.msra.mxu0 %v947
  %1310 = vmatprep.subr.bf16.mxu0 0
  %1311 = vmatpush1.bf16.msra.mxu0 %v948
  %1312 = vmatprep.subr.bf16.mxu0 0
  %1313 = vmatpush1.bf16.msra.mxu0 %v949
  %1314 = vmatprep.subr.bf16.mxu0 0
  %1315 = vmatpush1.bf16.msra.mxu0 %v950
  %1316 = vmatprep.subr.bf16.mxu0 0
  %1317 = vmatpush1.bf16.msra.mxu0 %v951
  %1318 = vmatprep.subr.bf16.mxu0 0
  %1319 = vmatpush1.bf16.msra.mxu0 %v952
  %1320 = vmatprep.subr.bf16.mxu0 0
  %1321 = vmatpush1.bf16.msra.mxu0 %v953
  %1322 = vmatprep.mubr.bf16.mxu0 %v339
  %1323 = vmatmul.mubr.bf16.gmra.mrb[0].mxu0 %v338
  %v1324 = vpop.f32.mrb[0].mxu0
  %v1325 = vadd.f32 %v1285, %v1324
  %v1326 = vpop.f32.mrb[0].mxu0
  %v1327 = vpop.f32.mrb[0].mxu0
  %v1328 = vpop.f32.mrb[0].mxu0
  %1329 = vdwg.mxu0
  %1330 = vmatprep.subr.bf16.mxu0 0
  %1331 = vmatpush1.bf16.msra.mxu0 %v954
  %1332 = vmatprep.subr.bf16.mxu0 0
  %1333 = vmatpush1.bf16.msra.mxu0 %v955
  %1334 = vmatprep.subr.bf16.mxu0 0
  %1335 = vmatpush1.bf16.msra.mxu0 %v956
  %1336 = vmatprep.subr.bf16.mxu0 0
  %1337 = vmatpush1.bf16.msra.mxu0 %v957
  %1338 = vmatprep.subr.bf16.mxu0 0
  %1339 = vmatpush1.bf16.msra.mxu0 %v958
  %1340 = vmatprep.subr.bf16.mxu0 0
  %1341 = vmatpush1.bf16.msra.mxu0 %v959
  %1342 = vmatprep.subr.bf16.mxu0 0
  %1343 = vmatpush1.bf16.msra.mxu0 %v960
  %1344 = vmatprep.subr.bf16.mxu0 0
  %1345 = vmatpush1.bf16.msra.mxu0 %v961
  %1346 = vmatprep.subr.bf16.mxu0 0
  %1347 = vmatpush1.bf16.msra.mxu0 %v962
  %1348 = vmatprep.subr.bf16.mxu0 0
  %1349 = vmatpush1.bf16.msra.mxu0 %v963
  %1350 = vmatprep.subr.bf16.mxu0 0
  %1351 = vmatpush1.bf16.msra.mxu0 %v964
  %1352 = vmatprep.subr.bf16.mxu0 0
  %1353 = vmatpush1.bf16.msra.mxu0 %v965
  %1354 = vmatprep.subr.bf16.mxu0 0
  %1355 = vmatpush1.bf16.msra.mxu0 %v966
  %1356 = vmatprep.subr.bf16.mxu0 0
  %1357 = vmatpush1.bf16.msra.mxu0 %v967
  %1358 = vmatprep.subr.bf16.mxu0 0
  %1359 = vmatpush1.bf16.msra.mxu0 %v968
  %1360 = vmatprep.subr.bf16.mxu0 0
  %1361 = vmatpush1.bf16.msra.mxu0 %v969
  %1362 = vmatprep.mubr.bf16.mxu0 %v341
  %1363 = vmatmul.mubr.bf16.gmra.mrb[0].mxu0 %v340
  %v1364 = vpop.f32.mrb[0].mxu0
  %v1365 = vadd.f32 %v1325, %v1364
  %v1366 = vpop.f32.mrb[0].mxu0
  %v1367 = vpop.f32.mrb[0].mxu0
  %v1368 = vpop.f32.mrb[0].mxu0
  %1369 = vdwg.mxu0
  %1370 = vmatprep.subr.bf16.mxu0 0
  %1371 = vmatpush1.bf16.msra.mxu0 %v970
  %1372 = vmatprep.subr.bf16.mxu0 0
  %1373 = vmatpush1.bf16.msra.mxu0 %v971
  %1374 = vmatprep.subr.bf16.mxu0 0
  %1375 = vmatpush1.bf16.msra.mxu0 %v972
  %1376 = vmatprep.subr.bf16.mxu0 0
  %1377 = vmatpush1.bf16.msra.mxu0 %v973
  %1378 = vmatprep.subr.bf16.mxu0 0
  %1379 = vmatpush1.bf16.msra.mxu0 %v974
  %1380 = vmatprep.subr.bf16.mxu0 0
  %1381 = vmatpush1.bf16.msra.mxu0 %v975
  %1382 = vmatprep.subr.bf16.mxu0 0
  %1383 = vmatpush1.bf16.msra.mxu0 %v976
  %1384 = vmatprep.subr.bf16.mxu0 0
  %1385 = vmatpush1.bf16.msra.mxu0 %v977
  %1386 = vmatprep.subr.bf16.mxu0 0
  %1387 = vmatpush1.bf16.msra.mxu0 %v978
  %1388 = vmatprep.subr.bf16.mxu0 0
  %1389 = vmatpush1.bf16.msra.mxu0 %v979
  %1390 = vmatprep.subr.bf16.mxu0 0
  %1391 = vmatpush1.bf16.msra.mxu0 %v980
  %1392 = vmatprep.subr.bf16.mxu0 0
  %1393 = vmatpush1.bf16.msra.mxu0 %v981
  %1394 = vmatprep.subr.bf16.mxu0 0
  %1395 = vmatpush1.bf16.msra.mxu0 %v982
  %1396 = vmatprep.subr.bf16.mxu0 0
  %1397 = vmatpush1.bf16.msra.mxu0 %v983
  %1398 = vmatprep.subr.bf16.mxu0 0
  %1399 = vmatpush1.bf16.msra.mxu0 %v984
  %1400 = vmatprep.subr.bf16.mxu0 0
  %1401 = vmatpush1.bf16.msra.mxu0 %v985
  %1402 = vmatprep.mubr.bf16.mxu0 %v343
  %1403 = vmatmul.mubr.bf16.gmra.mrb[0].mxu0 %v342
  %v1404 = vpop.f32.mrb[0].mxu0
  %v1405 = vadd.f32 %v1365, %v1404
  %v1406 = vpop.f32.mrb[0].mxu0
  %v1407 = vpop.f32.mrb[0].mxu0
  %v1408 = vpop.f32.mrb[0].mxu0
  %1409 = vdwg.mxu0
  %1410 = vmatprep.subr.bf16.mxu0 0
  %1411 = vmatpush1.bf16.msra.mxu0 %v986
  %1412 = vmatprep.subr.bf16.mxu0 0
  %1413 = vmatpush1.bf16.msra.mxu0 %v987
  %1414 = vmatprep.subr.bf16.mxu0 0
  %1415 = vmatpush1.bf16.msra.mxu0 %v988
  %1416 = vmatprep.subr.bf16.mxu0 0
  %1417 = vmatpush1.bf16.msra.mxu0 %v989
  %1418 = vmatprep.subr.bf16.mxu0 0
  %1419 = vmatpush1.bf16.msra.mxu0 %v990
  %1420 = vmatprep.subr.bf16.mxu0 0
  %1421 = vmatpush1.bf16.msra.mxu0 %v991
  %1422 = vmatprep.subr.bf16.mxu0 0
  %1423 = vmatpush1.bf16.msra.mxu0 %v992
  %1424 = vmatprep.subr.bf16.mxu0 0
  %1425 = vmatpush1.bf16.msra.mxu0 %v993
  %1426 = vmatprep.subr.bf16.mxu0 0
  %1427 = vmatpush1.bf16.msra.mxu0 %v994
  %1428 = vmatprep.subr.bf16.mxu0 0
  %1429 = vmatpush1.bf16.msra.mxu0 %v995
  %1430 = vmatprep.subr.bf16.mxu0 0
  %1431 = vmatpush1.bf16.msra.mxu0 %v996
  %1432 = vmatprep.subr.bf16.mxu0 0
  %1433 = vmatpush1.bf16.msra.mxu0 %v997
  %1434 = vmatprep.subr.bf16.mxu0 0
  %1435 = vmatpush1.bf16.msra.mxu0 %v998
  %1436 = vmatprep.subr.bf16.mxu0 0
  %1437 = vmatpush1.bf16.msra.mxu0 %v999
  %1438 = vmatprep.subr.bf16.mxu0 0
  %1439 = vmatpush1.bf16.msra.mxu0 %v1000
  %1440 = vmatprep.subr.bf16.mxu0 0
  %1441 = vmatpush1.bf16.msra.mxu0 %v1001
  %1442 = vmatprep.mubr.bf16.mxu0 %v345
  %1443 = vmatmul.mubr.bf16.gmra.mrb[0].mxu0 %v344
  %v1444 = vpop.f32.mrb[0].mxu0
  %v1445 = vadd.f32 %v1405, %v1444
  %v1446 = vpop.f32.mrb[0].mxu0
  %v1447 = vpop.f32.mrb[0].mxu0
  %v1448 = vpop.f32.mrb[0].mxu0
  %1449 = vdwg.mxu0
  %vm1450 = vcmp.ge.f32.partialorder %v1445, 0.0
  %v1451 = vmul.f32 %v1445, 0.01
  %v1452 = vsel %vm1450, %v1445, %v1451
  %v1453 = vpack.c.bf16 %v1452, %v1452
  %v1454 = vld [vmem:[%s3] sm:$0xf]
  %v1455 = vld [vmem:[%s3 + $0x4] sm:$0xf]
  %v1456 = vld [vmem:[%s3 + $0x8] sm:$0xf]
  %v1457 = vld [vmem:[%s3 + $0xc] sm:$0xf]
  %v1458 = vld [vmem:[%s4] sm:$0x1]
  %v1460 = vlaneseq
  %v1461 = vshrl.u32 %v1460, 7
  %v1462 = vsub.s32 0, %v1461
  %v1463 = vrot.slane %v1458, %v1462
  %v1469 = vunpack.c.l.b16 %v1454
  %v1470 = vunpack.c.l.b16 %v1455
  %v1471 = vunpack.c.l.b16 %v1456
  %v1472 = vunpack.c.l.b16 %v1457
  %v1473 = vpack.c.b16 %v1470, %v1469
  %v1474 = vpack.c.b16 %v1472, %v1471
  %vm1477 = vcmask 261120
  %v1479 = vsel %vm1477, %v1453, 0
  %1481 = vmatprep.subr.bf16.mxu0 0
  %1482 = vmatpush1.bf16.msra.mxu0 %v1473
  %1483 = vmatprep.subr.bf16.mxu0 0
  %1484 = vmatpush1.bf16.msra.mxu0 %v1474
  %1485 = vmatprep.subr.bf16.mxu0 0
  %1486 = vmatpush1.bf16.msra.mxu0 0
  %1487 = vmatprep.subr.bf16.mxu0 0
  %1488 = vmatpush1.bf16.msra.mxu0 0
  %1489 = vmatprep.subr.bf16.mxu0 0
  %1490 = vmatpush1.bf16.msra.mxu0 0
  %1491 = vmatprep.subr.bf16.mxu0 0
  %1492 = vmatpush1.bf16.msra.mxu0 0
  %1493 = vmatprep.subr.bf16.mxu0 0
  %1494 = vmatpush1.bf16.msra.mxu0 0
  %1495 = vmatprep.subr.bf16.mxu0 0
  %1496 = vmatpush1.bf16.msra.mxu0 0
  %1497 = vmatprep.subr.bf16.mxu0 0
  %1498 = vmatpush1.bf16.msra.mxu0 0
  %1499 = vmatprep.subr.bf16.mxu0 0
  %1500 = vmatpush1.bf16.msra.mxu0 0
  %1501 = vmatprep.subr.bf16.mxu0 0
  %1502 = vmatpush1.bf16.msra.mxu0 0
  %1503 = vmatprep.subr.bf16.mxu0 0
  %1504 = vmatpush1.bf16.msra.mxu0 0
  %1505 = vmatprep.subr.bf16.mxu0 0
  %1506 = vmatpush1.bf16.msra.mxu0 0
  %1507 = vmatprep.subr.bf16.mxu0 0
  %1508 = vmatpush1.bf16.msra.mxu0 0
  %1509 = vmatprep.subr.bf16.mxu0 0
  %1510 = vmatpush1.bf16.msra.mxu0 0
  %1511 = vmatprep.subr.bf16.mxu0 0
  %1512 = vmatpush1.bf16.msra.mxu0 0
  %1513 = vmatprep.mubr.bf16.mxu0 0
  %1514 = vmatmul.mubr.bf16.gmra.mrb[0].mxu0 %v1479
  %v1515 = vpop.f32.mrb[0].mxu0
  %v1516 = vadd.f32 %v1463, %v1515
  %v1517 = vpop.f32.mrb[0].mxu0
  %v1518 = vpop.f32.mrb[0].mxu0
  %v1519 = vpop.f32.mrb[0].mxu0
  %1520 = vdwg.mxu0
  %vm1521 = vcmp.ge.f32.partialorder %v1516, 0.0
  %v1522 = vmul.f32 %v1516, 0.01
  %v1523 = vsel %vm1521, %v1516, %v1522
  %v1524 = vpack.c.bf16 %v1523, %v1523
  %v1525 = vunpack.c.l.bf16 %v1524
  %v1526 = vld [vmem:[%s5] sm:$0xf]
  %v1527 = vunpack.c.l.bf16 %v1526
  %v1528 = vld [vmem:[%s6] sm:$0x1]
  %v1530 = vlaneseq
  %v1531 = vshrl.u32 %v1530, 7
  %v1532 = vsub.s32 0, %v1531
  %v1533 = vrot.slane %v1528, %v1532
  %v1535 = vmul.f32 %v1527, %v1533
  %vm1536 = vcmask 23552
  %v1537 = vsel %vm1536, %v1535, 0.0
  %1538 = vadd.xlane.f32.xlu0 %v1537
  %v1539 = vpop.xlane.xlu0 %1538
  %v1540 = vld [vmem:[%s7] sm:$0x1]
  %v1542 = vlaneseq
  %v1543 = vshrl.u32 %v1542, 7
  %v1544 = vsub.s32 0, %v1543
  %v1545 = vrot.slane %v1540, %v1544
  %v1547 = vmul.f32 %v1525, %v1545
  %v1548 = vsel %vm1536, %v1547, 0.0
  %1549 = vadd.xlane.f32.xlu0 %v1548
  %v1550 = vpop.xlane.xlu0 %1549
  %v1551 = vadd.f32 %v1539, %v1550
  %v1552 = vld [vmem:[#allocation2] sm:$0x1]
  %v1554 = vlaneseq
  %v1555 = vshrl.u32 %v1554, 7
  %v1556 = vsub.s32 0, %v1555
  %v1557 = vrot.slane %v1552, %v1556
  %v1559 = vadd.f32 %v1551, %v1557
  %vm1560 = vcmask 7168
  %1561 = vst.msk [vmem:[%s9] sm:$0xff] %vm1560, %v1559
  // Predicated region
  $region38: #{discriminator_forward.9} parent=0 // pred_check
    _
  $region39: #{discriminator_forward.9} parent=0 // pred_check_branch
    %1563 = sbr.rel (0) target = $region41
  $region40: #{discriminator_forward.9} parent=0 // pred_region
    _
  $region41: #{discriminator_forward.9} parent=0 // pred_fallthru
    _
  // Predicated region
  $region42: #{discriminator_forward.9} parent=0 // pred_check
    _
  $region43: #{discriminator_forward.9} parent=0 // pred_check_branch
    %1565 = sbr.rel (0) target = $region45
  $region44: #{discriminator_forward.9} parent=0 // pred_region
    _
  $region45: #{discriminator_forward.9} parent=0 // pred_fallthru
    _

</llo_original>
